<compile_context>
chip_gen: v7x
topology: tpu7x:2x2x1
jax: 0.10.0
libtpu: 0.0.40
codegen_flags: <defaults>
</compile_context>

<pallas_src>
import functools

import jax
import jax.numpy as jnp
from jax.experimental import pallas as pl
from jax.experimental.pallas import tpu as pltpu


def _round_up(x, m):
    return (x + m - 1) // m * m


def _tc_per_chip():
    """Generation heuristic: v7x exposes 2 TensorCores behind one device."""
    try:
        kind = jax.devices()[0].device_kind.lower()
    except Exception:
        return 1
    return 2 if "v7" in kind else 1


_NUM_TC = _tc_per_chip()


# ----------------------------------------------------------------------------
# Pallas kernel: fused relu(A @ W + b); bf16 operands, f32 accumulate, dtype-
# configurable epilogue store (bf16 for inter-layer activations, f32 at end).
# ----------------------------------------------------------------------------
def _matmul_bias_relu_kernel(a_ref, w_ref, b_ref, o_ref):
    acc = jnp.dot(a_ref[...], w_ref[...], preferred_element_type=jnp.float32)
    acc = jnp.maximum(acc + b_ref[...], 0.0)    # (tm, tn) f32 + (1, tn) f32
    o_ref[...] = acc.astype(o_ref.dtype)        # single full-tile store


def matmul_bias_relu(a, w, b2, out_dtype):
    """relu(a @ w + b).  a: (M, K) bf16, w: (K, N) bf16, b2: (1, N) f32."""
    M, K = a.shape
    K2, N = w.shape
    assert K == K2 and b2.shape == (1, N)

    # ---- Cout tiling: lane-dense 128/256 tiles when divisible, otherwise a
    #      single full-extent block (allowed by Mosaic; e.g. Cout=64).
    if N % 128 == 0:
        if N % 256 == 0 and _NUM_TC == 1:
            tn = 256          # v5e/v6e: full MXU output width, 1 grid step
        else:
            tn = 128          # v7x: >=2 lane tiles feed both TensorCores
    else:
        tn = N
    n_blocks = N // tn

    # ---- M tiling: a single full-extent block for small M (no pad, no slice).
    #      On 2-TC chips split a lone big M block in two so core 1 gets work.
    if M <= 512:
        if _NUM_TC == 2 and n_blocks == 1 and M >= 64:
            tm = _round_up((M + 1) // 2, 16)    # 16: bf16 sublane packing
            mp = 2 * tm
        else:
            tm = M
            mp = M
    else:
        tm = 256
        mp = _round_up(M, tm)

    a_p = a if mp == M else jnp.pad(a, ((0, mp - M), (0, 0)))

    out = pl.pallas_call(
        _matmul_bias_relu_kernel,
        out_shape=jax.ShapeDtypeStruct((mp, N), out_dtype),
        grid_spec=pltpu.PrefetchScalarGridSpec(
            num_scalar_prefetch=0,
            grid=(mp // tm, N // tn),
            in_specs=[
                pl.BlockSpec((tm, K), lambda i, j: (i, 0)),   # A row block
                pl.BlockSpec((K, tn), lambda i, j: (0, j)),   # W col block (full K)
                pl.BlockSpec((1, tn), lambda i, j: (0, j)),   # bias row
            ],
            out_specs=pl.BlockSpec((tm, tn), lambda i, j: (i, j)),
        ),
        compiler_params=pltpu.CompilerParams(
            dimension_semantics=("parallel", "parallel"),
            vmem_limit_bytes=32 * 1024 * 1024),
    )(a_p, w, b2)

    return out if mp == M else out[:M]


# ----------------------------------------------------------------------------
# FCN module: configs, params, one-time weight layout, forward
# ----------------------------------------------------------------------------
CHAN_LIST = [64, 128, 256, 128]
CONV_CFG = [  # (kernel, stride, pad)
    (12, 6, 6),
    (8, 4, 4),
    (5, 2, 2),
    (3, 1, 1),
]


def init_fcn_params(in_channels, key):
    """Deterministic init, PyTorch-style U(-1/sqrt(fan_in), 1/sqrt(fan_in))."""
    params = []
    cin = in_channels
    for cout, (k, _, _) in zip(CHAN_LIST, CONV_CFG):
        key, kw_, kb_ = jax.random.split(key, 3)
        fan_in = cin * k * k
        bound = 1.0 / jnp.sqrt(float(fan_in))
        w = jax.random.uniform(kw_, (cout, cin, k, k), jnp.float32, -bound, bound)
        b = jax.random.uniform(kb_, (cout,), jnp.float32, -bound, bound)
        params.append((w, b))
        cin = cout
    return params


def prepare_fcn_params(params):
    """One-time kernel layout (runs at init, NOT inside the jitted forward):
    (Cout, Cin, kh, kw) f32 -> (K, Cout) bf16 with K ordered (cin, kh, kw),
    matching lax.conv_general_dilated_patches' collapsed channel; bias as
    (1, Cout) f32."""
    prepped = []
    for w_oihw, b in params:
        cout = w_oihw.shape[0]
        wmat = jnp.asarray(w_oihw).reshape(cout, -1).T.astype(jnp.bfloat16)
        b2 = jnp.asarray(b).reshape(1, cout).astype(jnp.float32)
        prepped.append((wmat, b2))
    return prepped


def avg_pool2d_nchw(x, k, stride, pad):
    """PyTorch AvgPool2d semantics (count_include_pad=True, ceil_mode=False)."""
    s = jax.lax.reduce_window(
        x, 0.0, jax.lax.add,
        window_dimensions=(1, 1, k, k),
        window_strides=(1, 1, stride, stride),
        padding=((0, 0), (0, 0), (pad, pad), (pad, pad)))
    return s / float(k * k)


def fcn_forward(x_nchw, prepped, scale):
    """Pallas-backed forward. Input/output NCHW like the PyTorch module."""
    x = x_nchw
    if scale > 1:
        x = avg_pool2d_nchw(x, scale, scale, scale // 2)
    x = x.astype(jnp.bfloat16)                 # single cast; bf16 end-to-end
    n_layers = len(prepped)
    for li, ((wmat, b2), (k, s, p)) in enumerate(zip(prepped, CONV_CFG)):
        nb = x.shape[0]
        # One XLA op per layer instead of k*k slices+concat.  Output (N, K,
        # Ho, Wo) with K ordered (cin, kh, kw) — matches wmat's row order.
        patches = jax.lax.conv_general_dilated_patches(
            x, filter_shape=(k, k), window_strides=(s, s),
            padding=((p, p), (p, p)))
        _, kdim, ho, wo = patches.shape
        a = jnp.transpose(patches, (0, 2, 3, 1)).reshape(nb * ho * wo, kdim)
        out_dtype = jnp.float32 if li == n_layers - 1 else jnp.bfloat16
        o = matmul_bias_relu(a, wmat, b2, out_dtype)       # Pallas hot path
        cout = wmat.shape[1]
        x = jnp.transpose(o.reshape(nb, ho, wo, cout), (0, 3, 1, 2))
    return x


# ----------------------------------------------------------------------------
# Pure-XLA reference (for correctness check only)
# ----------------------------------------------------------------------------
def fcn_reference(x_nchw, params, scale):
    x = x_nchw
    if scale > 1:
        x = avg_pool2d_nchw(x, scale, scale, scale // 2)
    for (w, b), (k, s, p) in zip(params, CONV_CFG):
        x = jax.lax.conv_general_dilated(
            x, w, window_strides=(s, s), padding=((p, p), (p, p)),
            dimension_numbers=("NCHW", "OIHW", "NCHW"),
            precision=jax.lax.Precision.HIGHEST)
        x = jnp.maximum(x + b.reshape(1, -1, 1, 1), 0.0)
    return x


if __name__ == "__main__":
    key = jax.random.PRNGKey(0)
    k_x, k_p = jax.random.split(key)

    in_channels = 4
    scale = 2
    # NCHW input, consistent with the PyTorch module.
    x = jax.random.normal(k_x, (2, in_channels, 96, 96), jnp.float32)
    params = init_fcn_params(in_channels, k_p)
    prepped = prepare_fcn_params(params)       # weight layout done ONCE

    fwd = jax.jit(functools.partial(fcn_forward, scale=scale))
    out = jax.block_until_ready(fwd(x, prepped))

    ref = fcn_reference(x, params, scale)
    assert out.shape == ref.shape, (out.shape, ref.shape)
    assert jnp.allclose(out, ref, rtol=5e-2, atol=5e-2), (
        float(jnp.max(jnp.abs(out - ref))))

    print("KERNEL_OK")
</pallas_src>

<mosaic_0001>
module attributes {stable_mosaic.version = 11 : i64} {
  func.func @_matmul_bias_relu_kernel(%arg0: i32, %arg1: i32, %arg2: memref<162x576xbf16, #tpu.memory_space<vmem>>, %arg3: memref<576x64xbf16, #tpu.memory_space<vmem>>, %arg4: memref<1x64xf32, #tpu.memory_space<vmem>>, %arg5: memref<162x64xbf16, #tpu.memory_space<vmem>>) attributes {dimension_semantics = [#tpu.dimension_semantics<parallel>, #tpu.dimension_semantics<parallel>], iteration_bounds = array<i64: 1, 1>, scalar_prefetch = 0 : i64, scratch_operands = 0 : i64, tpu.core_type = #tpu.core_type<tc>, window_params = [{transform_indices = @transform_0, window_bounds = array<i64: 162, 576>}, {transform_indices = @transform_1, window_bounds = array<i64: 576, 64>}, {transform_indices = @transform_2, window_bounds = array<i64: 1, 64>}, {transform_indices = @transform_3, window_bounds = array<i64: 162, 64>}]} {
    %c0 = arith.constant 0 : index
    %c0_0 = arith.constant 0 : index
    %0 = vector.load %arg2[%c0, %c0_0] : memref<162x576xbf16, #tpu.memory_space<vmem>>, vector<162x576xbf16>
    %c0_1 = arith.constant 0 : index
    %c0_2 = arith.constant 0 : index
    %1 = vector.load %arg3[%c0_1, %c0_2] : memref<576x64xbf16, #tpu.memory_space<vmem>>, vector<576x64xbf16>
    %cst = arith.constant dense<0.000000e+00> : vector<162x64xf32>
    %2 = tpu.matmul %0, %1, %cst {dimension_numbers = #tpu.dot_dimension_numbers<[1], [0], [0], [1], [0, 0, 1, 1], [], []>} : vector<162x576xbf16>, vector<576x64xbf16>, vector<162x64xf32> -> vector<162x64xf32>
    %c0_3 = arith.constant 0 : index
    %c0_4 = arith.constant 0 : index
    %3 = vector.load %arg4[%c0_3, %c0_4] : memref<1x64xf32, #tpu.memory_space<vmem>>, vector<1x64xf32>
    %4 = vector.broadcast %3 : vector<1x64xf32> to vector<162x64xf32>
    %5 = arith.addf %2, %4 : vector<162x64xf32>
    %cst_5 = arith.constant 0.000000e+00 : f32
    %6 = vector.broadcast %cst_5 : f32 to vector<162x64xf32>
    %7 = arith.maximumf %5, %6 : vector<162x64xf32>
    %8 = arith.truncf %7 : vector<162x64xf32> to vector<162x64xbf16>
    %c0_6 = arith.constant 0 : index
    %c0_7 = arith.constant 0 : index
    %9 = vector.load %arg5[%c0_6, %c0_7] : memref<162x64xbf16, #tpu.memory_space<vmem>>, vector<162x64xbf16>
    tpu.vector_store %arg5[%c0_6, %c0_7], %8 {strides = array<i32>} : memref<162x64xbf16, #tpu.memory_space<vmem>>, vector<162x64xbf16>,
    return
  }
  func.func @transform_0(%arg0: i32, %arg1: i32) -> (i32, i32) {
    %c0_i32 = arith.constant 0 : i32
    %c0_i32_0 = arith.constant 0 : i32
    return %arg0, %c0_i32 : i32, i32
  }
  func.func @transform_1(%arg0: i32, %arg1: i32) -> (i32, i32) {
    %c0_i32 = arith.constant 0 : i32
    %c0_i32_0 = arith.constant 0 : i32
    return %c0_i32, %arg1 : i32, i32
  }
  func.func @transform_2(%arg0: i32, %arg1: i32) -> (i32, i32) {
    %c0_i32 = arith.constant 0 : i32
    %c0_i32_0 = arith.constant 0 : i32
    return %c0_i32, %arg1 : i32, i32
  }
  func.func @transform_3(%arg0: i32, %arg1: i32) -> (i32, i32) {
    %c0_i32 = arith.constant 0 : i32
    return %arg0, %arg1 : i32, i32
  }
}

module attributes {stable_mosaic.version = 11 : i64} {
  func.func @_matmul_bias_relu_kernel(%arg0: i32, %arg1: i32, %arg2: memref<18x4096xbf16, #tpu.memory_space<vmem>>, %arg3: memref<4096x128xbf16, #tpu.memory_space<vmem>>, %arg4: memref<1x128xf32, #tpu.memory_space<vmem>>, %arg5: memref<18x128xbf16, #tpu.memory_space<vmem>>) attributes {dimension_semantics = [#tpu.dimension_semantics<parallel>, #tpu.dimension_semantics<parallel>], iteration_bounds = array<i64: 1, 1>, scalar_prefetch = 0 : i64, scratch_operands = 0 : i64, tpu.core_type = #tpu.core_type<tc>, window_params = [{transform_indices = @transform_0, window_bounds = array<i64: 18, 4096>}, {transform_indices = @transform_1, window_bounds = array<i64: 4096, 128>}, {transform_indices = @transform_2, window_bounds = array<i64: 1, 128>}, {transform_indices = @transform_3, window_bounds = array<i64: 18, 128>}]} {
    %c0 = arith.constant 0 : index
    %c0_0 = arith.constant 0 : index
    %0 = vector.load %arg2[%c0, %c0_0] : memref<18x4096xbf16, #tpu.memory_space<vmem>>, vector<18x4096xbf16>
    %c0_1 = arith.constant 0 : index
    %c0_2 = arith.constant 0 : index
    %1 = vector.load %arg3[%c0_1, %c0_2] : memref<4096x128xbf16, #tpu.memory_space<vmem>>, vector<4096x128xbf16>
    %cst = arith.constant dense<0.000000e+00> : vector<18x128xf32>
    %2 = tpu.matmul %0, %1, %cst {dimension_numbers = #tpu.dot_dimension_numbers<[1], [0], [0], [1], [0, 0, 1, 1], [], []>} : vector<18x4096xbf16>, vector<4096x128xbf16>, vector<18x128xf32> -> vector<18x128xf32>
    %c0_3 = arith.constant 0 : index
    %c0_4 = arith.constant 0 : index
    %3 = vector.load %arg4[%c0_3, %c0_4] : memref<1x128xf32, #tpu.memory_space<vmem>>, vector<1x128xf32>
    %4 = vector.broadcast %3 : vector<1x128xf32> to vector<18x128xf32>
    %5 = arith.addf %2, %4 : vector<18x128xf32>
    %cst_5 = arith.constant 0.000000e+00 : f32
    %6 = vector.broadcast %cst_5 : f32 to vector<18x128xf32>
    %7 = arith.maximumf %5, %6 : vector<18x128xf32>
    %8 = arith.truncf %7 : vector<18x128xf32> to vector<18x128xbf16>
    %c0_6 = arith.constant 0 : index
    %c0_7 = arith.constant 0 : index
    %9 = vector.load %arg5[%c0_6, %c0_7] : memref<18x128xbf16, #tpu.memory_space<vmem>>, vector<18x128xbf16>
    tpu.vector_store %arg5[%c0_6, %c0_7], %8 {strides = array<i32>} : memref<18x128xbf16, #tpu.memory_space<vmem>>, vector<18x128xbf16>,
    return
  }
  func.func @transform_0(%arg0: i32, %arg1: i32) -> (i32, i32) {
    %c0_i32 = arith.constant 0 : i32
    %c0_i32_0 = arith.constant 0 : i32
    return %arg0, %c0_i32 : i32, i32
  }
  func.func @transform_1(%arg0: i32, %arg1: i32) -> (i32, i32) {
    %c0_i32 = arith.constant 0 : i32
    %c0_i32_0 = arith.constant 0 : i32
    return %c0_i32, %arg1 : i32, i32
  }
  func.func @transform_2(%arg0: i32, %arg1: i32) -> (i32, i32) {
    %c0_i32 = arith.constant 0 : i32
    %c0_i32_0 = arith.constant 0 : i32
    return %c0_i32, %arg1 : i32, i32
  }
  func.func @transform_3(%arg0: i32, %arg1: i32) -> (i32, i32) {
    %c0_i32 = arith.constant 0 : i32
    return %arg0, %arg1 : i32, i32
  }
}

module attributes {stable_mosaic.version = 11 : i64} {
  func.func @_matmul_bias_relu_kernel(%arg0: i32, %arg1: i32, %arg2: memref<8x3200xbf16, #tpu.memory_space<vmem>>, %arg3: memref<3200x256xbf16, #tpu.memory_space<vmem>>, %arg4: memref<1x256xf32, #tpu.memory_space<vmem>>, %arg5: memref<8x256xbf16, #tpu.memory_space<vmem>>) attributes {dimension_semantics = [#tpu.dimension_semantics<parallel>, #tpu.dimension_semantics<parallel>], iteration_bounds = array<i64: 1, 1>, scalar_prefetch = 0 : i64, scratch_operands = 0 : i64, tpu.core_type = #tpu.core_type<tc>, window_params = [{transform_indices = @transform_0, window_bounds = array<i64: 8, 3200>}, {transform_indices = @transform_1, window_bounds = array<i64: 3200, 256>}, {transform_indices = @transform_2, window_bounds = array<i64: 1, 256>}, {transform_indices = @transform_3, window_bounds = array<i64: 8, 256>}]} {
    %c0 = arith.constant 0 : index
    %c0_0 = arith.constant 0 : index
    %0 = vector.load %arg2[%c0, %c0_0] : memref<8x3200xbf16, #tpu.memory_space<vmem>>, vector<8x3200xbf16>
    %c0_1 = arith.constant 0 : index
    %c0_2 = arith.constant 0 : index
    %1 = vector.load %arg3[%c0_1, %c0_2] : memref<3200x256xbf16, #tpu.memory_space<vmem>>, vector<3200x256xbf16>
    %cst = arith.constant dense<0.000000e+00> : vector<8x256xf32>
    %2 = tpu.matmul %0, %1, %cst {dimension_numbers = #tpu.dot_dimension_numbers<[1], [0], [0], [1], [0, 0, 1, 1], [], []>} : vector<8x3200xbf16>, vector<3200x256xbf16>, vector<8x256xf32> -> vector<8x256xf32>
    %c0_3 = arith.constant 0 : index
    %c0_4 = arith.constant 0 : index
    %3 = vector.load %arg4[%c0_3, %c0_4] : memref<1x256xf32, #tpu.memory_space<vmem>>, vector<1x256xf32>
    %4 = vector.broadcast %3 : vector<1x256xf32> to vector<8x256xf32>
    %5 = arith.addf %2, %4 : vector<8x256xf32>
    %cst_5 = arith.constant 0.000000e+00 : f32
    %6 = vector.broadcast %cst_5 : f32 to vector<8x256xf32>
    %7 = arith.maximumf %5, %6 : vector<8x256xf32>
    %8 = arith.truncf %7 : vector<8x256xf32> to vector<8x256xbf16>
    %c0_6 = arith.constant 0 : index
    %c0_7 = arith.constant 0 : index
    %9 = vector.load %arg5[%c0_6, %c0_7] : memref<8x256xbf16, #tpu.memory_space<vmem>>, vector<8x256xbf16>
    tpu.vector_store %arg5[%c0_6, %c0_7], %8 {strides = array<i32>} : memref<8x256xbf16, #tpu.memory_space<vmem>>, vector<8x256xbf16>,
    return
  }
  func.func @transform_0(%arg0: i32, %arg1: i32) -> (i32, i32) {
    %c0_i32 = arith.constant 0 : i32
    %c0_i32_0 = arith.constant 0 : i32
    return %arg0, %c0_i32 : i32, i32
  }
  func.func @transform_1(%arg0: i32, %arg1: i32) -> (i32, i32) {
    %c0_i32 = arith.constant 0 : i32
    %c0_i32_0 = arith.constant 0 : i32
    return %c0_i32, %arg1 : i32, i32
  }
  func.func @transform_2(%arg0: i32, %arg1: i32) -> (i32, i32) {
    %c0_i32 = arith.constant 0 : i32
    %c0_i32_0 = arith.constant 0 : i32
    return %c0_i32, %arg1 : i32, i32
  }
  func.func @transform_3(%arg0: i32, %arg1: i32) -> (i32, i32) {
    %c0_i32 = arith.constant 0 : i32
    return %arg0, %arg1 : i32, i32
  }
}

module attributes {stable_mosaic.version = 11 : i64} {
  func.func @_matmul_bias_relu_kernel(%arg0: i32, %arg1: i32, %arg2: memref<8x2304xbf16, #tpu.memory_space<vmem>>, %arg3: memref<2304x128xbf16, #tpu.memory_space<vmem>>, %arg4: memref<1x128xf32, #tpu.memory_space<vmem>>, %arg5: memref<8x128xf32, #tpu.memory_space<vmem>>) attributes {dimension_semantics = [#tpu.dimension_semantics<parallel>, #tpu.dimension_semantics<parallel>], iteration_bounds = array<i64: 1, 1>, scalar_prefetch = 0 : i64, scratch_operands = 0 : i64, tpu.core_type = #tpu.core_type<tc>, window_params = [{transform_indices = @transform_0, window_bounds = array<i64: 8, 2304>}, {transform_indices = @transform_1, window_bounds = array<i64: 2304, 128>}, {transform_indices = @transform_2, window_bounds = array<i64: 1, 128>}, {transform_indices = @transform_3, window_bounds = array<i64: 8, 128>}]} {
    %c0 = arith.constant 0 : index
    %c0_0 = arith.constant 0 : index
    %0 = vector.load %arg2[%c0, %c0_0] : memref<8x2304xbf16, #tpu.memory_space<vmem>>, vector<8x2304xbf16>
    %c0_1 = arith.constant 0 : index
    %c0_2 = arith.constant 0 : index
    %1 = vector.load %arg3[%c0_1, %c0_2] : memref<2304x128xbf16, #tpu.memory_space<vmem>>, vector<2304x128xbf16>
    %cst = arith.constant dense<0.000000e+00> : vector<8x128xf32>
    %2 = tpu.matmul %0, %1, %cst {dimension_numbers = #tpu.dot_dimension_numbers<[1], [0], [0], [1], [0, 0, 1, 1], [], []>} : vector<8x2304xbf16>, vector<2304x128xbf16>, vector<8x128xf32> -> vector<8x128xf32>
    %c0_3 = arith.constant 0 : index
    %c0_4 = arith.constant 0 : index
    %3 = vector.load %arg4[%c0_3, %c0_4] : memref<1x128xf32, #tpu.memory_space<vmem>>, vector<1x128xf32>
    %4 = vector.broadcast %3 : vector<1x128xf32> to vector<8x128xf32>
    %5 = arith.addf %2, %4 : vector<8x128xf32>
    %cst_5 = arith.constant 0.000000e+00 : f32
    %6 = vector.broadcast %cst_5 : f32 to vector<8x128xf32>
    %7 = arith.maximumf %5, %6 : vector<8x128xf32>
    %c0_6 = arith.constant 0 : index
    %c0_7 = arith.constant 0 : index
    %8 = vector.load %arg5[%c0_6, %c0_7] : memref<8x128xf32, #tpu.memory_space<vmem>>, vector<8x128xf32>
    tpu.vector_store %arg5[%c0_6, %c0_7], %7 {strides = array<i32>} : memref<8x128xf32, #tpu.memory_space<vmem>>, vector<8x128xf32>,
    return
  }
  func.func @transform_0(%arg0: i32, %arg1: i32) -> (i32, i32) {
    %c0_i32 = arith.constant 0 : i32
    %c0_i32_0 = arith.constant 0 : i32
    return %arg0, %c0_i32 : i32, i32
  }
  func.func @transform_1(%arg0: i32, %arg1: i32) -> (i32, i32) {
    %c0_i32 = arith.constant 0 : i32
    %c0_i32_0 = arith.constant 0 : i32
    return %c0_i32, %arg1 : i32, i32
  }
  func.func @transform_2(%arg0: i32, %arg1: i32) -> (i32, i32) {
    %c0_i32 = arith.constant 0 : i32
    %c0_i32_0 = arith.constant 0 : i32
    return %c0_i32, %arg1 : i32, i32
  }
  func.func @transform_3(%arg0: i32, %arg1: i32) -> (i32, i32) {
    %c0_i32 = arith.constant 0 : i32
    return %arg0, %arg1 : i32, i32
  }
}

</mosaic_0001>

<llo_original>
// kernel: fcn_forward.4
$region0: #{fcn_forward.4}
  #allocation0 [shape = 'u32[]', space=smem, size = 0x4, offset = 0x4, fixed_abs, tag = 'smem constant byte address 0x4 - core index']
  #allocation1 [shape = 'u32[144,128]{1,0:T(1,128)}', space=vmem, size = 0x12000, scoped, tag = 'internal scratch']
  %s0 = inlined_call_operand.vmem [shape: bf16[162,576], index: 0, kind: input, shape index: {}]
  %s1 = inlined_call_operand.vmem [shape: bf16[576,64], index: 1, kind: input, shape index: {}]
  %s2 = inlined_call_operand.vmem [shape: f32[1,64], index: 2, kind: input, shape index: {}]
  %s3 = inlined_call_operand.vmem [shape: bf16[162,64], index: 3, kind: output, shape index: {}]
  %s4 = sld [smem:[#allocation0]]
  $region22: #{fcn_forward.4} parent=0
    _
  %s6 = ssub.s32 1, %s4
  %s7 = scalar_select 0, %s6, %s4
  // Predicated region
  $region2: #{fcn_forward.4} parent=0 // pred_check
    _
  $region3: #{fcn_forward.4} parent=0 // pred_check_branch
    %9 = sbr.rel (0) target = $region5
  $region4: #{fcn_forward.4} parent=0 // pred_region
    _
  $region5: #{fcn_forward.4} parent=0 // pred_fallthru
    _
  // Predicated region
  $region6: #{fcn_forward.4} parent=0 // pred_check
    _
  $region7: #{fcn_forward.4} parent=0 // pred_check_branch
    %11 = sbr.rel (0) target = $region9
  $region8: #{fcn_forward.4} parent=0 // pred_region
    _
  $region9: #{fcn_forward.4} parent=0 // pred_fallthru
    _
  // Predicated region
  $region10: #{fcn_forward.4} parent=0 // pred_check
    _
  $region11: #{fcn_forward.4} parent=0 // pred_check_branch
    %13 = sbr.rel (0) target = $region13
  $region12: #{fcn_forward.4} parent=0 // pred_region
    _
  $region13: #{fcn_forward.4} parent=0 // pred_fallthru
    _
  %v15 = vld [vmem:[%s0] sm:$0xff]
  %v16 = vld [vmem:[%s0 + $0x8] sm:$0xff]
  %v17 = vld [vmem:[%s0 + $0x10] sm:$0xf]
  %v18 = vld [vmem:[%s0 + $0x14] sm:$0xff]
  %v19 = vld [vmem:[%s0 + $0x1c] sm:$0xff]
  %v20 = vld [vmem:[%s0 + $0x24] sm:$0xf]
  %v21 = vld [vmem:[%s0 + $0x28] sm:$0xff]
  %v22 = vld [vmem:[%s0 + $0x30] sm:$0xff]
  %v23 = vld [vmem:[%s0 + $0x38] sm:$0xf]
  %v24 = vld [vmem:[%s0 + $0x3c] sm:$0xff]
  %v25 = vld [vmem:[%s0 + $0x44] sm:$0xff]
  %v26 = vld [vmem:[%s0 + $0x4c] sm:$0xf]
  %v27 = vld [vmem:[%s0 + $0x50] sm:$0xff]
  %v28 = vld [vmem:[%s0 + $0x58] sm:$0xff]
  %v29 = vld [vmem:[%s0 + $0x60] sm:$0xf]
  %v30 = vld [vmem:[%s0 + $0x64] sm:$0xff]
  %v31 = vld [vmem:[%s0 + $0x6c] sm:$0xff]
  %v32 = vld [vmem:[%s0 + $0x74] sm:$0xf]
  %v33 = vld [vmem:[%s0 + $0x78] sm:$0xff]
  %v34 = vld [vmem:[%s0 + $0x80] sm:$0xff]
  %v35 = vld [vmem:[%s0 + $0x88] sm:$0xf]
  %v36 = vld [vmem:[%s0 + $0x8c] sm:$0xff]
  %v37 = vld [vmem:[%s0 + $0x94] sm:$0xff]
  %v38 = vld [vmem:[%s0 + $0x9c] sm:$0xf]
  %v39 = vld [vmem:[%s0 + $0xa0] sm:$0xff]
  %v40 = vld [vmem:[%s0 + $0xa8] sm:$0xff]
  %v41 = vld [vmem:[%s0 + $0xb0] sm:$0xf]
  %v42 = vld [vmem:[%s0 + $0xb4] sm:$0xff]
  %v43 = vld [vmem:[%s0 + $0xbc] sm:$0xff]
  %v44 = vld [vmem:[%s0 + $0xc4] sm:$0xf]
  %v45 = vld [vmem:[%s0 + $0xc8] sm:$0xff]
  %v46 = vld [vmem:[%s0 + $0xd0] sm:$0xff]
  %v47 = vld [vmem:[%s0 + $0xd8] sm:$0xf]
  %v48 = vld [vmem:[%s0 + $0xdc] sm:$0xff]
  %v49 = vld [vmem:[%s0 + $0xe4] sm:$0xff]
  %v50 = vld [vmem:[%s0 + $0xec] sm:$0xf]
  %v51 = vld [vmem:[%s0 + $0xf0] sm:$0xff]
  %v52 = vld [vmem:[%s0 + $0xf8] sm:$0xff]
  %v53 = vld [vmem:[%s0 + $0x100] sm:$0xf]
  %v54 = vld [vmem:[%s0 + $0x104] sm:$0xff]
  %v55 = vld [vmem:[%s0 + $0x10c] sm:$0xff]
  %v56 = vld [vmem:[%s0 + $0x114] sm:$0xf]
  %v57 = vld [vmem:[%s0 + $0x118] sm:$0xff]
  %v58 = vld [vmem:[%s0 + $0x120] sm:$0xff]
  %v59 = vld [vmem:[%s0 + $0x128] sm:$0xf]
  %v60 = vld [vmem:[%s0 + $0x12c] sm:$0xff]
  %v61 = vld [vmem:[%s0 + $0x134] sm:$0xff]
  %v62 = vld [vmem:[%s0 + $0x13c] sm:$0xf]
  %v63 = vld [vmem:[%s0 + $0x140] sm:$0xff]
  %v64 = vld [vmem:[%s0 + $0x148] sm:$0xff]
  %v65 = vld [vmem:[%s0 + $0x150] sm:$0xf]
  %v66 = vld [vmem:[%s0 + $0x154] sm:$0xff]
  %v67 = vld [vmem:[%s0 + $0x15c] sm:$0xff]
  %v68 = vld [vmem:[%s0 + $0x164] sm:$0xf]
  %v69 = vld [vmem:[%s0 + $0x168] sm:$0xff]
  %v70 = vld [vmem:[%s0 + $0x170] sm:$0xff]
  %v71 = vld [vmem:[%s0 + $0x178] sm:$0xf]
  %v72 = vld [vmem:[%s0 + $0x17c] sm:$0xff]
  %v73 = vld [vmem:[%s0 + $0x184] sm:$0xff]
  %v74 = vld [vmem:[%s0 + $0x18c] sm:$0xf]
  %v75 = vld [vmem:[%s0 + $0x190] sm:$0x11]
  %v76 = vld [vmem:[%s0 + $0x198] sm:$0x11]
  %v77 = vld [vmem:[%s0 + $0x1a0] sm:$0x1]
  %v78 = vld [vmem:[%s1] sm:$0xf]
  %v79 = vld [vmem:[%s1 + $0x4] sm:$0xf]
  %v80 = vld [vmem:[%s1 + $0x8] sm:$0xf]
  %v81 = vld [vmem:[%s1 + $0xc] sm:$0xf]
  %v82 = vld [vmem:[%s1 + $0x10] sm:$0xf]
  %v83 = vld [vmem:[%s1 + $0x14] sm:$0xf]
  %v84 = vld [vmem:[%s1 + $0x18] sm:$0xf]
  %v85 = vld [vmem:[%s1 + $0x1c] sm:$0xf]
  %v86 = vld [vmem:[%s1 + $0x20] sm:$0xf]
  %v87 = vld [vmem:[%s1 + $0x24] sm:$0xf]
  %v88 = vld [vmem:[%s1 + $0x28] sm:$0xf]
  %v89 = vld [vmem:[%s1 + $0x2c] sm:$0xf]
  %v90 = vld [vmem:[%s1 + $0x30] sm:$0xf]
  %v91 = vld [vmem:[%s1 + $0x34] sm:$0xf]
  %v92 = vld [vmem:[%s1 + $0x38] sm:$0xf]
  %v93 = vld [vmem:[%s1 + $0x3c] sm:$0xf]
  %v94 = vld [vmem:[%s1 + $0x40] sm:$0xf]
  %v95 = vld [vmem:[%s1 + $0x44] sm:$0xf]
  %v96 = vld [vmem:[%s1 + $0x48] sm:$0xf]
  %v97 = vld [vmem:[%s1 + $0x4c] sm:$0xf]
  %v98 = vld [vmem:[%s1 + $0x50] sm:$0xf]
  %v99 = vld [vmem:[%s1 + $0x54] sm:$0xf]
  %v100 = vld [vmem:[%s1 + $0x58] sm:$0xf]
  %v101 = vld [vmem:[%s1 + $0x5c] sm:$0xf]
  %v102 = vld [vmem:[%s1 + $0x60] sm:$0xf]
  %v103 = vld [vmem:[%s1 + $0x64] sm:$0xf]
  %v104 = vld [vmem:[%s1 + $0x68] sm:$0xf]
  %v105 = vld [vmem:[%s1 + $0x6c] sm:$0xf]
  %v106 = vld [vmem:[%s1 + $0x70] sm:$0xf]
  %v107 = vld [vmem:[%s1 + $0x74] sm:$0xf]
  %v108 = vld [vmem:[%s1 + $0x78] sm:$0xf]
  %v109 = vld [vmem:[%s1 + $0x7c] sm:$0xf]
  %v110 = vld [vmem:[%s1 + $0x80] sm:$0xf]
  %v111 = vld [vmem:[%s1 + $0x84] sm:$0xf]
  %v112 = vld [vmem:[%s1 + $0x88] sm:$0xf]
  %v113 = vld [vmem:[%s1 + $0x8c] sm:$0xf]
  %v114 = vld [vmem:[%s1 + $0x90] sm:$0xf]
  %v115 = vld [vmem:[%s1 + $0x94] sm:$0xf]
  %v116 = vld [vmem:[%s1 + $0x98] sm:$0xf]
  %v117 = vld [vmem:[%s1 + $0x9c] sm:$0xf]
  %v118 = vld [vmem:[%s1 + $0xa0] sm:$0xf]
  %v119 = vld [vmem:[%s1 + $0xa4] sm:$0xf]
  %v120 = vld [vmem:[%s1 + $0xa8] sm:$0xf]
  %v121 = vld [vmem:[%s1 + $0xac] sm:$0xf]
  %v122 = vld [vmem:[%s1 + $0xb0] sm:$0xf]
  %v123 = vld [vmem:[%s1 + $0xb4] sm:$0xf]
  %v124 = vld [vmem:[%s1 + $0xb8] sm:$0xf]
  %v125 = vld [vmem:[%s1 + $0xbc] sm:$0xf]
  %v126 = vld [vmem:[%s1 + $0xc0] sm:$0xf]
  %v127 = vld [vmem:[%s1 + $0xc4] sm:$0xf]
  %v128 = vld [vmem:[%s1 + $0xc8] sm:$0xf]
  %v129 = vld [vmem:[%s1 + $0xcc] sm:$0xf]
  %v130 = vld [vmem:[%s1 + $0xd0] sm:$0xf]
  %v131 = vld [vmem:[%s1 + $0xd4] sm:$0xf]
  %v132 = vld [vmem:[%s1 + $0xd8] sm:$0xf]
  %v133 = vld [vmem:[%s1 + $0xdc] sm:$0xf]
  %v134 = vld [vmem:[%s1 + $0xe0] sm:$0xf]
  %v135 = vld [vmem:[%s1 + $0xe4] sm:$0xf]
  %v136 = vld [vmem:[%s1 + $0xe8] sm:$0xf]
  %v137 = vld [vmem:[%s1 + $0xec] sm:$0xf]
  %v138 = vld [vmem:[%s1 + $0xf0] sm:$0xf]
  %v139 = vld [vmem:[%s1 + $0xf4] sm:$0xf]
  %v140 = vld [vmem:[%s1 + $0xf8] sm:$0xf]
  %v141 = vld [vmem:[%s1 + $0xfc] sm:$0xf]
  %v142 = vld [vmem:[%s1 + $0x100] sm:$0xf]
  %v143 = vld [vmem:[%s1 + $0x104] sm:$0xf]
  %v144 = vld [vmem:[%s1 + $0x108] sm:$0xf]
  %v145 = vld [vmem:[%s1 + $0x10c] sm:$0xf]
  %v146 = vld [vmem:[%s1 + $0x110] sm:$0xf]
  %v147 = vld [vmem:[%s1 + $0x114] sm:$0xf]
  %v148 = vld [vmem:[%s1 + $0x118] sm:$0xf]
  %v149 = vld [vmem:[%s1 + $0x11c] sm:$0xf]
  %v150 = vld [vmem:[%s2] sm:$0x1]
  %v152 = vlaneseq
  %v153 = vshrl.u32 %v152, 7
  %v154 = vsub.s32 0, %v153
  %v155 = vrot.slane %v150, %v154
  %v220 = vunpack.c.l.b16 %v15
  %v221 = vunpack.c.h.b16 %v15
  %v222 = vunpack.c.l.b16 %v16
  %v223 = vunpack.c.h.b16 %v16
  %v224 = vunpack.c.l.b16 %v17
  %v225 = vunpack.c.l.b16 %v18
  %v226 = vunpack.c.h.b16 %v18
  %v227 = vunpack.c.l.b16 %v19
  %v228 = vunpack.c.h.b16 %v19
  %v229 = vunpack.c.l.b16 %v20
  %v230 = vunpack.c.l.b16 %v21
  %v231 = vunpack.c.h.b16 %v21
  %v232 = vunpack.c.l.b16 %v22
  %v233 = vunpack.c.h.b16 %v22
  %v234 = vunpack.c.l.b16 %v23
  %v235 = vunpack.c.l.b16 %v24
  %v236 = vunpack.c.h.b16 %v24
  %v237 = vunpack.c.l.b16 %v25
  %v238 = vunpack.c.h.b16 %v25
  %v239 = vunpack.c.l.b16 %v26
  %v240 = vunpack.c.l.b16 %v27
  %v241 = vunpack.c.h.b16 %v27
  %v242 = vunpack.c.l.b16 %v28
  %v243 = vunpack.c.h.b16 %v28
  %v244 = vunpack.c.l.b16 %v29
  %v245 = vunpack.c.l.b16 %v30
  %v246 = vunpack.c.h.b16 %v30
  %v247 = vunpack.c.l.b16 %v31
  %v248 = vunpack.c.h.b16 %v31
  %v249 = vunpack.c.l.b16 %v32
  %v250 = vunpack.c.l.b16 %v33
  %v251 = vunpack.c.h.b16 %v33
  %v252 = vunpack.c.l.b16 %v34
  %v253 = vunpack.c.h.b16 %v34
  %v254 = vunpack.c.l.b16 %v35
  %v255 = vunpack.c.l.b16 %v36
  %v256 = vunpack.c.h.b16 %v36
  %v257 = vunpack.c.l.b16 %v37
  %v258 = vunpack.c.h.b16 %v37
  %v259 = vunpack.c.l.b16 %v38
  %v260 = vunpack.c.l.b16 %v39
  %v261 = vunpack.c.h.b16 %v39
  %v262 = vunpack.c.l.b16 %v40
  %v263 = vunpack.c.h.b16 %v40
  %v264 = vunpack.c.l.b16 %v41
  %v265 = vunpack.c.l.b16 %v42
  %v266 = vunpack.c.h.b16 %v42
  %v267 = vunpack.c.l.b16 %v43
  %v268 = vunpack.c.h.b16 %v43
  %v269 = vunpack.c.l.b16 %v44
  %v270 = vunpack.c.l.b16 %v45
  %v271 = vunpack.c.h.b16 %v45
  %v272 = vunpack.c.l.b16 %v46
  %v273 = vunpack.c.h.b16 %v46
  %v274 = vunpack.c.l.b16 %v47
  %v275 = vunpack.c.l.b16 %v48
  %v276 = vunpack.c.h.b16 %v48
  %v277 = vunpack.c.l.b16 %v49
  %v278 = vunpack.c.h.b16 %v49
  %v279 = vunpack.c.l.b16 %v50
  %v280 = vunpack.c.l.b16 %v51
  %v281 = vunpack.c.h.b16 %v51
  %v282 = vunpack.c.l.b16 %v52
  %v283 = vunpack.c.h.b16 %v52
  %v284 = vunpack.c.l.b16 %v53
  %v285 = vunpack.c.l.b16 %v54
  %v286 = vunpack.c.h.b16 %v54
  %v287 = vunpack.c.l.b16 %v55
  %v288 = vunpack.c.h.b16 %v55
  %v289 = vunpack.c.l.b16 %v56
  %v290 = vunpack.c.l.b16 %v57
  %v291 = vunpack.c.h.b16 %v57
  %v292 = vunpack.c.l.b16 %v58
  %v293 = vunpack.c.h.b16 %v58
  %v294 = vunpack.c.l.b16 %v59
  %v295 = vunpack.c.l.b16 %v60
  %v296 = vunpack.c.h.b16 %v60
  %v297 = vunpack.c.l.b16 %v61
  %v298 = vunpack.c.h.b16 %v61
  %v299 = vunpack.c.l.b16 %v62
  %v300 = vunpack.c.l.b16 %v63
  %v301 = vunpack.c.h.b16 %v63
  %v302 = vunpack.c.l.b16 %v64
  %v303 = vunpack.c.h.b16 %v64
  %v304 = vunpack.c.l.b16 %v65
  %v305 = vunpack.c.l.b16 %v66
  %v306 = vunpack.c.h.b16 %v66
  %v307 = vunpack.c.l.b16 %v67
  %v308 = vunpack.c.h.b16 %v67
  %v309 = vunpack.c.l.b16 %v68
  %v310 = vunpack.c.l.b16 %v69
  %v311 = vunpack.c.h.b16 %v69
  %v312 = vunpack.c.l.b16 %v70
  %v313 = vunpack.c.h.b16 %v70
  %v314 = vunpack.c.l.b16 %v71
  %v315 = vunpack.c.l.b16 %v72
  %v316 = vunpack.c.h.b16 %v72
  %v317 = vunpack.c.l.b16 %v73
  %v318 = vunpack.c.h.b16 %v73
  %v319 = vunpack.c.l.b16 %v74
  %v320 = vunpack.c.l.b16 %v75
  %v321 = vunpack.c.h.b16 %v75
  %v322 = vunpack.c.l.b16 %v76
  %v323 = vunpack.c.h.b16 %v76
  %v324 = vunpack.c.l.b16 %v77
  %v325 = vpack.c.b16 %v225, %v220
  %v326 = vpack.c.b16 %v226, %v221
  %v327 = vpack.c.b16 %v227, %v222
  %v328 = vpack.c.b16 %v228, %v223
  %v329 = vpack.c.b16 %v229, %v224
  %v330 = vpack.c.b16 %v235, %v230
  %v331 = vpack.c.b16 %v236, %v231
  %v332 = vpack.c.b16 %v237, %v232
  %v333 = vpack.c.b16 %v238, %v233
  %v334 = vpack.c.b16 %v239, %v234
  %v335 = vpack.c.b16 %v245, %v240
  %v336 = vpack.c.b16 %v246, %v241
  %v337 = vpack.c.b16 %v247, %v242
  %v338 = vpack.c.b16 %v248, %v243
  %v339 = vpack.c.b16 %v249, %v244
  %v340 = vpack.c.b16 %v255, %v250
  %v341 = vpack.c.b16 %v256, %v251
  %v342 = vpack.c.b16 %v257, %v252
  %v343 = vpack.c.b16 %v258, %v253
  %v344 = vpack.c.b16 %v259, %v254
  %v345 = vpack.c.b16 %v265, %v260
  %v346 = vpack.c.b16 %v266, %v261
  %v347 = vpack.c.b16 %v267, %v262
  %v348 = vpack.c.b16 %v268, %v263
  %v349 = vpack.c.b16 %v269, %v264
  %v350 = vpack.c.b16 %v275, %v270
  %v351 = vpack.c.b16 %v276, %v271
  %v352 = vpack.c.b16 %v277, %v272
  %v353 = vpack.c.b16 %v278, %v273
  %v354 = vpack.c.b16 %v279, %v274
  %v355 = vpack.c.b16 %v285, %v280
  %v356 = vpack.c.b16 %v286, %v281
  %v357 = vpack.c.b16 %v287, %v282
  %v358 = vpack.c.b16 %v288, %v283
  %v359 = vpack.c.b16 %v289, %v284
  %v360 = vpack.c.b16 %v295, %v290
  %v361 = vpack.c.b16 %v296, %v291
  %v362 = vpack.c.b16 %v297, %v292
  %v363 = vpack.c.b16 %v298, %v293
  %v364 = vpack.c.b16 %v299, %v294
  %v365 = vpack.c.b16 %v305, %v300
  %v366 = vpack.c.b16 %v306, %v301
  %v367 = vpack.c.b16 %v307, %v302
  %v368 = vpack.c.b16 %v308, %v303
  %v369 = vpack.c.b16 %v309, %v304
  %v370 = vpack.c.b16 %v315, %v310
  %v371 = vpack.c.b16 %v316, %v311
  %v372 = vpack.c.b16 %v317, %v312
  %v373 = vpack.c.b16 %v318, %v313
  %v374 = vpack.c.b16 %v319, %v314
  %v375 = vpack.c.b16 %v320, %v320
  %v376 = vpack.c.b16 %v321, %v321
  %v377 = vpack.c.b16 %v322, %v322
  %v378 = vpack.c.b16 %v323, %v323
  %v379 = vpack.c.b16 %v324, %v324
  %v496 = vunpack.c.l.b16 %v78
  %v497 = vunpack.c.l.b16 %v79
  %v498 = vunpack.c.l.b16 %v80
  %v499 = vunpack.c.l.b16 %v81
  %v500 = vunpack.c.l.b16 %v82
  %v501 = vunpack.c.l.b16 %v83
  %v502 = vunpack.c.l.b16 %v84
  %v503 = vunpack.c.l.b16 %v85
  %v504 = vunpack.c.l.b16 %v86
  %v505 = vunpack.c.l.b16 %v87
  %v506 = vunpack.c.l.b16 %v88
  %v507 = vunpack.c.l.b16 %v89
  %v508 = vunpack.c.l.b16 %v90
  %v509 = vunpack.c.l.b16 %v91
  %v510 = vunpack.c.l.b16 %v92
  %v511 = vunpack.c.l.b16 %v93
  %v512 = vunpack.c.l.b16 %v94
  %v513 = vunpack.c.l.b16 %v95
  %v514 = vunpack.c.l.b16 %v96
  %v515 = vunpack.c.l.b16 %v97
  %v516 = vunpack.c.l.b16 %v98
  %v517 = vunpack.c.l.b16 %v99
  %v518 = vunpack.c.l.b16 %v100
  %v519 = vunpack.c.l.b16 %v101
  %v520 = vunpack.c.l.b16 %v102
  %v521 = vunpack.c.l.b16 %v103
  %v522 = vunpack.c.l.b16 %v104
  %v523 = vunpack.c.l.b16 %v105
  %v524 = vunpack.c.l.b16 %v106
  %v525 = vunpack.c.l.b16 %v107
  %v526 = vunpack.c.l.b16 %v108
  %v527 = vunpack.c.l.b16 %v109
  %v528 = vunpack.c.l.b16 %v110
  %v529 = vunpack.c.l.b16 %v111
  %v530 = vunpack.c.l.b16 %v112
  %v531 = vunpack.c.l.b16 %v113
  %v532 = vunpack.c.l.b16 %v114
  %v533 = vunpack.c.l.b16 %v115
  %v534 = vunpack.c.l.b16 %v116
  %v535 = vunpack.c.l.b16 %v117
  %v536 = vunpack.c.l.b16 %v118
  %v537 = vunpack.c.l.b16 %v119
  %v538 = vunpack.c.l.b16 %v120
  %v539 = vunpack.c.l.b16 %v121
  %v540 = vunpack.c.l.b16 %v122
  %v541 = vunpack.c.l.b16 %v123
  %v542 = vunpack.c.l.b16 %v124
  %v543 = vunpack.c.l.b16 %v125
  %v544 = vunpack.c.l.b16 %v126
  %v545 = vunpack.c.l.b16 %v127
  %v546 = vunpack.c.l.b16 %v128
  %v547 = vunpack.c.l.b16 %v129
  %v548 = vunpack.c.l.b16 %v130
  %v549 = vunpack.c.l.b16 %v131
  %v550 = vunpack.c.l.b16 %v132
  %v551 = vunpack.c.l.b16 %v133
  %v552 = vunpack.c.l.b16 %v134
  %v553 = vunpack.c.l.b16 %v135
  %v554 = vunpack.c.l.b16 %v136
  %v555 = vunpack.c.l.b16 %v137
  %v556 = vunpack.c.l.b16 %v138
  %v557 = vunpack.c.l.b16 %v139
  %v558 = vunpack.c.l.b16 %v140
  %v559 = vunpack.c.l.b16 %v141
  %v560 = vunpack.c.l.b16 %v142
  %v561 = vunpack.c.l.b16 %v143
  %v562 = vunpack.c.l.b16 %v144
  %v563 = vunpack.c.l.b16 %v145
  %v564 = vunpack.c.l.b16 %v146
  %v565 = vunpack.c.l.b16 %v147
  %v566 = vunpack.c.l.b16 %v148
  %v567 = vunpack.c.l.b16 %v149
  %v568 = vpack.c.b16 %v497, %v496
  %v569 = vpack.c.b16 %v499, %v498
  %v570 = vpack.c.b16 %v501, %v500
  %v571 = vpack.c.b16 %v503, %v502
  %v572 = vpack.c.b16 %v505, %v504
  %v573 = vpack.c.b16 %v507, %v506
  %v574 = vpack.c.b16 %v509, %v508
  %v575 = vpack.c.b16 %v511, %v510
  %v576 = vpack.c.b16 %v513, %v512
  %v577 = vpack.c.b16 %v515, %v514
  %v578 = vpack.c.b16 %v517, %v516
  %v579 = vpack.c.b16 %v519, %v518
  %v580 = vpack.c.b16 %v521, %v520
  %v581 = vpack.c.b16 %v523, %v522
  %v582 = vpack.c.b16 %v525, %v524
  %v583 = vpack.c.b16 %v527, %v526
  %v584 = vpack.c.b16 %v529, %v528
  %v585 = vpack.c.b16 %v531, %v530
  %v586 = vpack.c.b16 %v533, %v532
  %v587 = vpack.c.b16 %v535, %v534
  %v588 = vpack.c.b16 %v537, %v536
  %v589 = vpack.c.b16 %v539, %v538
  %v590 = vpack.c.b16 %v541, %v540
  %v591 = vpack.c.b16 %v543, %v542
  %v592 = vpack.c.b16 %v545, %v544
  %v593 = vpack.c.b16 %v547, %v546
  %v594 = vpack.c.b16 %v549, %v548
  %v595 = vpack.c.b16 %v551, %v550
  %v596 = vpack.c.b16 %v553, %v552
  %v597 = vpack.c.b16 %v555, %v554
  %v598 = vpack.c.b16 %v557, %v556
  %v599 = vpack.c.b16 %v559, %v558
  %v600 = vpack.c.b16 %v561, %v560
  %v601 = vpack.c.b16 %v563, %v562
  %v602 = vpack.c.b16 %v565, %v564
  %v603 = vpack.c.b16 %v567, %v566
  %vm640 = vcmask 523264
  %v642 = vsel %vm640, %v329, 0
  %v645 = vsel %vm640, %v334, 0
  %v648 = vsel %vm640, %v339, 0
  %v651 = vsel %vm640, %v344, 0
  %v654 = vsel %vm640, %v349, 0
  %v657 = vsel %vm640, %v354, 0
  %v660 = vsel %vm640, %v359, 0
  %v663 = vsel %vm640, %v364, 0
  %v666 = vsel %vm640, %v369, 0
  %v669 = vsel %vm640, %v374, 0
  %v672 = vsel %vm640, %v379, 0
  %674 = vmatprep.subr.bf16.mxu0 0
  %675 = vmatpush1.bf16.msra.mxu0 %v568
  %676 = vmatprep.subr.bf16.mxu0 0
  %677 = vmatpush1.bf16.msra.mxu0 %v569
  %678 = vmatprep.subr.bf16.mxu0 0
  %679 = vmatpush1.bf16.msra.mxu0 %v570
  %680 = vmatprep.subr.bf16.mxu0 0
  %681 = vmatpush1.bf16.msra.mxu0 %v571
  %682 = vmatprep.subr.bf16.mxu0 0
  %683 = vmatpush1.bf16.msra.mxu0 %v572
  %684 = vmatprep.subr.bf16.mxu0 0
  %685 = vmatpush1.bf16.msra.mxu0 %v573
  %686 = vmatprep.subr.bf16.mxu0 0
  %687 = vmatpush1.bf16.msra.mxu0 %v574
  %688 = vmatprep.subr.bf16.mxu0 0
  %689 = vmatpush1.bf16.msra.mxu0 %v575
  %690 = vmatprep.subr.bf16.mxu0 0
  %691 = vmatpush1.bf16.msra.mxu0 %v576
  %692 = vmatprep.subr.bf16.mxu0 0
  %693 = vmatpush1.bf16.msra.mxu0 %v577
  %694 = vmatprep.subr.bf16.mxu0 0
  %695 = vmatpush1.bf16.msra.mxu0 %v578
  %696 = vmatprep.subr.bf16.mxu0 0
  %697 = vmatpush1.bf16.msra.mxu0 %v579
  %698 = vmatprep.subr.bf16.mxu0 0
  %699 = vmatpush1.bf16.msra.mxu0 %v580
  %700 = vmatprep.subr.bf16.mxu0 0
  %701 = vmatpush1.bf16.msra.mxu0 %v581
  %702 = vmatprep.subr.bf16.mxu0 0
  %703 = vmatpush1.bf16.msra.mxu0 %v582
  %704 = vmatprep.subr.bf16.mxu0 0
  %705 = vmatpush1.bf16.msra.mxu0 %v583
  %706 = vmatprep.mubr.bf16.mxu0 %v326
  %707 = vmatmul.mubr.bf16.gmra.mrb[0].mxu0 %v325
  %v708 = vpop.f32.mrb[0].mxu0
  %v709 = vadd.f32 %v155, %v708
  %v710 = vpop.f32.mrb[0].mxu0
  %v711 = vpop.f32.mrb[0].mxu0
  %v712 = vadd.f32 %v155, %v711
  %v713 = vpop.f32.mrb[0].mxu0
  %714 = vmatprep.mubr.bf16.mxu0 %v331
  %715 = vmatmul.mubr.bf16.gmra.mrb[0].mxu0 %v330
  %v716 = vpop.f32.mrb[0].mxu0
  %v717 = vadd.f32 %v155, %v716
  %v718 = vpop.f32.mrb[0].mxu0
  %v719 = vpop.f32.mrb[0].mxu0
  %v720 = vadd.f32 %v155, %v719
  %v721 = vpop.f32.mrb[0].mxu0
  %722 = vmatprep.mubr.bf16.mxu0 %v336
  %723 = vmatmul.mubr.bf16.gmra.mrb[0].mxu0 %v335
  %v724 = vpop.f32.mrb[0].mxu0
  %v725 = vadd.f32 %v155, %v724
  %v726 = vpop.f32.mrb[0].mxu0
  %v727 = vpop.f32.mrb[0].mxu0
  %v728 = vadd.f32 %v155, %v727
  %v729 = vpop.f32.mrb[0].mxu0
  %730 = vmatprep.mubr.bf16.mxu0 %v341
  %731 = vmatmul.mubr.bf16.gmra.mrb[0].mxu0 %v340
  %v732 = vpop.f32.mrb[0].mxu0
  %v733 = vadd.f32 %v155, %v732
  %v734 = vpop.f32.mrb[0].mxu0
  %v735 = vpop.f32.mrb[0].mxu0
  %v736 = vadd.f32 %v155, %v735
  %v737 = vpop.f32.mrb[0].mxu0
  %738 = vmatprep.mubr.bf16.mxu0 %v346
  %739 = vmatmul.mubr.bf16.gmra.mrb[0].mxu0 %v345
  %v740 = vpop.f32.mrb[0].mxu0
  %v741 = vadd.f32 %v155, %v740
  %v742 = vpop.f32.mrb[0].mxu0
  %v743 = vpop.f32.mrb[0].mxu0
  %v744 = vadd.f32 %v155, %v743
  %v745 = vpop.f32.mrb[0].mxu0
  %746 = vmatprep.mubr.bf16.mxu0 %v351
  %747 = vmatmul.mubr.bf16.gmra.mrb[0].mxu0 %v350
  %v748 = vpop.f32.mrb[0].mxu0
  %v749 = vadd.f32 %v155, %v748
  %v750 = vpop.f32.mrb[0].mxu0
  %v751 = vpop.f32.mrb[0].mxu0
  %v752 = vadd.f32 %v155, %v751
  %v753 = vpop.f32.mrb[0].mxu0
  %754 = vmatprep.mubr.bf16.mxu0 %v356
  %755 = vmatmul.mubr.bf16.gmra.mrb[0].mxu0 %v355
  %v756 = vpop.f32.mrb[0].mxu0
  %v757 = vadd.f32 %v155, %v756
  %v758 = vpop.f32.mrb[0].mxu0
  %v759 = vpop.f32.mrb[0].mxu0
  %v760 = vadd.f32 %v155, %v759
  %v761 = vpop.f32.mrb[0].mxu0
  %762 = vmatprep.mubr.bf16.mxu0 %v361
  %763 = vmatmul.mubr.bf16.gmra.mrb[0].mxu0 %v360
  %v764 = vpop.f32.mrb[0].mxu0
  %v765 = vadd.f32 %v155, %v764
  %v766 = vpop.f32.mrb[0].mxu0
  %v767 = vpop.f32.mrb[0].mxu0
  %v768 = vadd.f32 %v155, %v767
  %v769 = vpop.f32.mrb[0].mxu0
  %770 = vmatprep.mubr.bf16.mxu0 %v366
  %771 = vmatmul.mubr.bf16.gmra.mrb[0].mxu0 %v365
  %v772 = vpop.f32.mrb[0].mxu0
  %v773 = vadd.f32 %v155, %v772
  %v774 = vpop.f32.mrb[0].mxu0
  %v775 = vpop.f32.mrb[0].mxu0
  %v776 = vadd.f32 %v155, %v775
  %v777 = vpop.f32.mrb[0].mxu0
  %778 = vmatprep.mubr.bf16.mxu0 %v371
  %779 = vmatmul.mubr.bf16.gmra.mrb[0].mxu0 %v370
  %v780 = vpop.f32.mrb[0].mxu0
  %v781 = vadd.f32 %v155, %v780
  %v782 = vpop.f32.mrb[0].mxu0
  %v783 = vpop.f32.mrb[0].mxu0
  %v784 = vadd.f32 %v155, %v783
  %v785 = vpop.f32.mrb[0].mxu0
  %786 = vmatprep.mubr.bf16.mxu0 %v376
  %787 = vmatmul.mubr.bf16.gmra.mrb[0].mxu0 %v375
  %v788 = vpop.f32.mrb[0].mxu0
  %v789 = vadd.f32 %v155, %v788
  %v790 = vpop.f32.mrb[0].mxu0
  %v791 = vpop.f32.mrb[0].mxu0
  %v792 = vpop.f32.mrb[0].mxu0
  %793 = vdwg.mxu0
  %794 = vmatprep.subr.bf16.mxu0 0
  %795 = vmatpush1.bf16.msra.mxu0 %v584
  %796 = vmatprep.subr.bf16.mxu0 0
  %797 = vmatpush1.bf16.msra.mxu0 %v585
  %798 = vmatprep.subr.bf16.mxu0 0
  %799 = vmatpush1.bf16.msra.mxu0 %v586
  %800 = vmatprep.subr.bf16.mxu0 0
  %801 = vmatpush1.bf16.msra.mxu0 %v587
  %802 = vmatprep.subr.bf16.mxu0 0
  %803 = vmatpush1.bf16.msra.mxu0 %v588
  %804 = vmatprep.subr.bf16.mxu0 0
  %805 = vmatpush1.bf16.msra.mxu0 %v589
  %806 = vmatprep.subr.bf16.mxu0 0
  %807 = vmatpush1.bf16.msra.mxu0 %v590
  %808 = vmatprep.subr.bf16.mxu0 0
  %809 = vmatpush1.bf16.msra.mxu0 %v591
  %810 = vmatprep.subr.bf16.mxu0 0
  %811 = vmatpush1.bf16.msra.mxu0 %v592
  %812 = vmatprep.subr.bf16.mxu0 0
  %813 = vmatpush1.bf16.msra.mxu0 %v593
  %814 = vmatprep.subr.bf16.mxu0 0
  %815 = vmatpush1.bf16.msra.mxu0 %v594
  %816 = vmatprep.subr.bf16.mxu0 0
  %817 = vmatpush1.bf16.msra.mxu0 %v595
  %818 = vmatprep.subr.bf16.mxu0 0
  %819 = vmatpush1.bf16.msra.mxu0 %v596
  %820 = vmatprep.subr.bf16.mxu0 0
  %821 = vmatpush1.bf16.msra.mxu0 %v597
  %822 = vmatprep.subr.bf16.mxu0 0
  %823 = vmatpush1.bf16.msra.mxu0 %v598
  %824 = vmatprep.subr.bf16.mxu0 0
  %825 = vmatpush1.bf16.msra.mxu0 %v599
  %826 = vmatprep.mubr.bf16.mxu0 %v328
  %827 = vmatmul.mubr.bf16.gmra.mrb[0].mxu0 %v327
  %v828 = vpop.f32.mrb[0].mxu0
  %v829 = vadd.f32 %v709, %v828
  %v830 = vpop.f32.mrb[0].mxu0
  %v831 = vpop.f32.mrb[0].mxu0
  %v832 = vadd.f32 %v712, %v831
  %v833 = vpop.f32.mrb[0].mxu0
  %834 = vmatprep.mubr.bf16.mxu0 %v333
  %835 = vmatmul.mubr.bf16.gmra.mrb[0].mxu0 %v332
  %v836 = vpop.f32.mrb[0].mxu0
  %v837 = vadd.f32 %v717, %v836
  %v838 = vpop.f32.mrb[0].mxu0
  %v839 = vpop.f32.mrb[0].mxu0
  %v840 = vadd.f32 %v720, %v839
  %v841 = vpop.f32.mrb[0].mxu0
  %842 = vmatprep.mubr.bf16.mxu0 %v338
  %843 = vmatmul.mubr.bf16.gmra.mrb[0].mxu0 %v337
  %v844 = vpop.f32.mrb[0].mxu0
  %v845 = vadd.f32 %v725, %v844
  %v846 = vpop.f32.mrb[0].mxu0
  %v847 = vpop.f32.mrb[0].mxu0
  %v848 = vadd.f32 %v728, %v847
  %v849 = vpop.f32.mrb[0].mxu0
  %850 = vmatprep.mubr.bf16.mxu0 %v343
  %851 = vmatmul.mubr.bf16.gmra.mrb[0].mxu0 %v342
  %v852 = vpop.f32.mrb[0].mxu0
  %v853 = vadd.f32 %v733, %v852
  %v854 = vpop.f32.mrb[0].mxu0
  %v855 = vpop.f32.mrb[0].mxu0
  %v856 = vadd.f32 %v736, %v855
  %v857 = vpop.f32.mrb[0].mxu0
  %858 = vmatprep.mubr.bf16.mxu0 %v348
  %859 = vmatmul.mubr.bf16.gmra.mrb[0].mxu0 %v347
  %v860 = vpop.f32.mrb[0].mxu0
  %v861 = vadd.f32 %v741, %v860
  %v862 = vpop.f32.mrb[0].mxu0
  %v863 = vpop.f32.mrb[0].mxu0
  %v864 = vadd.f32 %v744, %v863
  %v865 = vpop.f32.mrb[0].mxu0
  %866 = vmatprep.mubr.bf16.mxu0 %v353
  %867 = vmatmul.mubr.bf16.gmra.mrb[0].mxu0 %v352
  %v868 = vpop.f32.mrb[0].mxu0
  %v869 = vadd.f32 %v749, %v868
  %v870 = vpop.f32.mrb[0].mxu0
  %v871 = vpop.f32.mrb[0].mxu0
  %v872 = vadd.f32 %v752, %v871
  %v873 = vpop.f32.mrb[0].mxu0
  %874 = vmatprep.mubr.bf16.mxu0 %v358
  %875 = vmatmul.mubr.bf16.gmra.mrb[0].mxu0 %v357
  %v876 = vpop.f32.mrb[0].mxu0
  %v877 = vadd.f32 %v757, %v876
  %v878 = vpop.f32.mrb[0].mxu0
  %v879 = vpop.f32.mrb[0].mxu0
  %v880 = vadd.f32 %v760, %v879
  %v881 = vpop.f32.mrb[0].mxu0
  %882 = vmatprep.mubr.bf16.mxu0 %v363
  %883 = vmatmul.mubr.bf16.gmra.mrb[0].mxu0 %v362
  %v884 = vpop.f32.mrb[0].mxu0
  %v885 = vadd.f32 %v765, %v884
  %v886 = vpop.f32.mrb[0].mxu0
  %v887 = vpop.f32.mrb[0].mxu0
  %v888 = vadd.f32 %v768, %v887
  %v889 = vpop.f32.mrb[0].mxu0
  %890 = vmatprep.mubr.bf16.mxu0 %v368
  %891 = vmatmul.mubr.bf16.gmra.mrb[0].mxu0 %v367
  %v892 = vpop.f32.mrb[0].mxu0
  %v893 = vadd.f32 %v773, %v892
  %v894 = vpop.f32.mrb[0].mxu0
  %v895 = vpop.f32.mrb[0].mxu0
  %v896 = vadd.f32 %v776, %v895
  %v897 = vpop.f32.mrb[0].mxu0
  %898 = vmatprep.mubr.bf16.mxu0 %v373
  %899 = vmatmul.mubr.bf16.gmra.mrb[0].mxu0 %v372
  %v900 = vpop.f32.mrb[0].mxu0
  %v901 = vadd.f32 %v781, %v900
  %v902 = vpop.f32.mrb[0].mxu0
  %v903 = vpop.f32.mrb[0].mxu0
  %v904 = vadd.f32 %v784, %v903
  %v905 = vpop.f32.mrb[0].mxu0
  %906 = vmatprep.mubr.bf16.mxu0 %v378
  %907 = vmatmul.mubr.bf16.gmra.mrb[0].mxu0 %v377
  %v908 = vpop.f32.mrb[0].mxu0
  %v909 = vadd.f32 %v789, %v908
  %v910 = vpop.f32.mrb[0].mxu0
  %v911 = vpop.f32.mrb[0].mxu0
  %v912 = vpop.f32.mrb[0].mxu0
  %913 = vdwg.mxu0
  %914 = vmatprep.subr.bf16.mxu0 0
  %915 = vmatpush1.bf16.msra.mxu0 %v600
  %916 = vmatprep.subr.bf16.mxu0 0
  %917 = vmatpush1.bf16.msra.mxu0 %v601
  %918 = vmatprep.subr.bf16.mxu0 0
  %919 = vmatpush1.bf16.msra.mxu0 %v602
  %920 = vmatprep.subr.bf16.mxu0 0
  %921 = vmatpush1.bf16.msra.mxu0 %v603
  %922 = vmatprep.subr.bf16.mxu0 0
  %923 = vmatpush1.bf16.msra.mxu0 0
  %924 = vmatprep.subr.bf16.mxu0 0
  %925 = vmatpush1.bf16.msra.mxu0 0
  %926 = vmatprep.subr.bf16.mxu0 0
  %927 = vmatpush1.bf16.msra.mxu0 0
  %928 = vmatprep.subr.bf16.mxu0 0
  %929 = vmatpush1.bf16.msra.mxu0 0
  %930 = vmatprep.subr.bf16.mxu0 0
  %931 = vmatpush1.bf16.msra.mxu0 0
  %932 = vmatprep.subr.bf16.mxu0 0
  %933 = vmatpush1.bf16.msra.mxu0 0
  %934 = vmatprep.subr.bf16.mxu0 0
  %935 = vmatpush1.bf16.msra.mxu0 0
  %936 = vmatprep.subr.bf16.mxu0 0
  %937 = vmatpush1.bf16.msra.mxu0 0
  %938 = vmatprep.subr.bf16.mxu0 0
  %939 = vmatpush1.bf16.msra.mxu0 0
  %940 = vmatprep.subr.bf16.mxu0 0
  %941 = vmatpush1.bf16.msra.mxu0 0
  %942 = vmatprep.subr.bf16.mxu0 0
  %943 = vmatpush1.bf16.msra.mxu0 0
  %944 = vmatprep.subr.bf16.mxu0 0
  %945 = vmatpush1.bf16.msra.mxu0 0
  %946 = vmatprep.mubr.bf16.mxu0 0
  %947 = vmatmul.mubr.bf16.gmra.mrb[0].mxu0 %v642
  %v948 = vpop.f32.mrb[0].mxu0
  %v949 = vadd.f32 %v829, %v948
  %v950 = vpop.f32.mrb[0].mxu0
  %v951 = vpop.f32.mrb[0].mxu0
  %v952 = vadd.f32 %v832, %v951
  %v953 = vpop.f32.mrb[0].mxu0
  %954 = vmatprep.mubr.bf16.mxu0 0
  %955 = vmatmul.mubr.bf16.gmra.mrb[0].mxu0 %v645
  %v956 = vpop.f32.mrb[0].mxu0
  %v957 = vadd.f32 %v837, %v956
  %v958 = vpop.f32.mrb[0].mxu0
  %v959 = vpop.f32.mrb[0].mxu0
  %v960 = vadd.f32 %v840, %v959
  %v961 = vpop.f32.mrb[0].mxu0
  %962 = vmatprep.mubr.bf16.mxu0 0
  %963 = vmatmul.mubr.bf16.gmra.mrb[0].mxu0 %v648
  %v964 = vpop.f32.mrb[0].mxu0
  %v965 = vadd.f32 %v845, %v964
  %v966 = vpop.f32.mrb[0].mxu0
  %v967 = vpop.f32.mrb[0].mxu0
  %v968 = vadd.f32 %v848, %v967
  %v969 = vpop.f32.mrb[0].mxu0
  %970 = vmatprep.mubr.bf16.mxu0 0
  %971 = vmatmul.mubr.bf16.gmra.mrb[0].mxu0 %v651
  %v972 = vpop.f32.mrb[0].mxu0
  %v973 = vadd.f32 %v853, %v972
  %v974 = vpop.f32.mrb[0].mxu0
  %v975 = vpop.f32.mrb[0].mxu0
  %v976 = vadd.f32 %v856, %v975
  %v977 = vpop.f32.mrb[0].mxu0
  %978 = vmatprep.mubr.bf16.mxu0 0
  %979 = vmatmul.mubr.bf16.gmra.mrb[0].mxu0 %v654
  %v980 = vpop.f32.mrb[0].mxu0
  %v981 = vadd.f32 %v861, %v980
  %v982 = vpop.f32.mrb[0].mxu0
  %v983 = vpop.f32.mrb[0].mxu0
  %v984 = vadd.f32 %v864, %v983
  %v985 = vpop.f32.mrb[0].mxu0
  %986 = vmatprep.mubr.bf16.mxu0 0
  %987 = vmatmul.mubr.bf16.gmra.mrb[0].mxu0 %v657
  %v988 = vpop.f32.mrb[0].mxu0
  %v989 = vadd.f32 %v869, %v988
  %v990 = vpop.f32.mrb[0].mxu0
  %v991 = vpop.f32.mrb[0].mxu0
  %v992 = vadd.f32 %v872, %v991
  %v993 = vpop.f32.mrb[0].mxu0
  %994 = vmatprep.mubr.bf16.mxu0 0
  %995 = vmatmul.mubr.bf16.gmra.mrb[0].mxu0 %v660
  %v996 = vpop.f32.mrb[0].mxu0
  %v997 = vadd.f32 %v877, %v996
  %v998 = vpop.f32.mrb[0].mxu0
  %v999 = vpop.f32.mrb[0].mxu0
  %v1000 = vadd.f32 %v880, %v999
  %v1001 = vpop.f32.mrb[0].mxu0
  %1002 = vmatprep.mubr.bf16.mxu0 0
  %1003 = vmatmul.mubr.bf16.gmra.mrb[0].mxu0 %v663
  %v1004 = vpop.f32.mrb[0].mxu0
  %v1005 = vadd.f32 %v885, %v1004
  %v1006 = vpop.f32.mrb[0].mxu0
  %v1007 = vpop.f32.mrb[0].mxu0
  %v1008 = vadd.f32 %v888, %v1007
  %v1009 = vpop.f32.mrb[0].mxu0
  %1010 = vmatprep.mubr.bf16.mxu0 0
  %1011 = vmatmul.mubr.bf16.gmra.mrb[0].mxu0 %v666
  %v1012 = vpop.f32.mrb[0].mxu0
  %v1013 = vadd.f32 %v893, %v1012
  %v1014 = vpop.f32.mrb[0].mxu0
  %v1015 = vpop.f32.mrb[0].mxu0
  %v1016 = vadd.f32 %v896, %v1015
  %v1017 = vpop.f32.mrb[0].mxu0
  %1018 = vmatprep.mubr.bf16.mxu0 0
  %1019 = vmatmul.mubr.bf16.gmra.mrb[0].mxu0 %v669
  %v1020 = vpop.f32.mrb[0].mxu0
  %v1021 = vadd.f32 %v901, %v1020
  %v1022 = vpop.f32.mrb[0].mxu0
  %v1023 = vpop.f32.mrb[0].mxu0
  %v1024 = vadd.f32 %v904, %v1023
  %v1025 = vpop.f32.mrb[0].mxu0
  %1026 = vmatprep.mubr.bf16.mxu0 0
  %1027 = vmatmul.mubr.bf16.gmra.mrb[0].mxu0 %v672
  %v1028 = vpop.f32.mrb[0].mxu0
  %v1029 = vadd.f32 %v909, %v1028
  %v1030 = vpop.f32.mrb[0].mxu0
  %v1031 = vpop.f32.mrb[0].mxu0
  %v1032 = vpop.f32.mrb[0].mxu0
  %1033 = vdwg.mxu0
  %v1034 = vmax.f32 %v949, 0.0
  %v1035 = vmax.f32 %v952, 0.0
  %v1036 = vmax.f32 %v957, 0.0
  %v1037 = vmax.f32 %v960, 0.0
  %v1038 = vmax.f32 %v965, 0.0
  %v1039 = vmax.f32 %v968, 0.0
  %v1040 = vmax.f32 %v973, 0.0
  %v1041 = vmax.f32 %v976, 0.0
  %v1042 = vmax.f32 %v981, 0.0
  %v1043 = vmax.f32 %v984, 0.0
  %v1044 = vmax.f32 %v989, 0.0
  %v1045 = vmax.f32 %v992, 0.0
  %v1046 = vmax.f32 %v997, 0.0
  %v1047 = vmax.f32 %v1000, 0.0
  %v1048 = vmax.f32 %v1005, 0.0
  %v1049 = vmax.f32 %v1008, 0.0
  %v1050 = vmax.f32 %v1013, 0.0
  %v1051 = vmax.f32 %v1016, 0.0
  %v1052 = vmax.f32 %v1021, 0.0
  %v1053 = vmax.f32 %v1024, 0.0
  %v1054 = vmax.f32 %v1029, 0.0
  %v1055 = vpack.c.bf16 %v1035, %v1034
  %v1056 = vpack.c.bf16 %v1037, %v1036
  %v1057 = vpack.c.bf16 %v1039, %v1038
  %v1058 = vpack.c.bf16 %v1041, %v1040
  %v1059 = vpack.c.bf16 %v1043, %v1042
  %v1060 = vpack.c.bf16 %v1045, %v1044
  %v1061 = vpack.c.bf16 %v1047, %v1046
  %v1062 = vpack.c.bf16 %v1049, %v1048
  %v1063 = vpack.c.bf16 %v1051, %v1050
  %v1064 = vpack.c.bf16 %v1053, %v1052
  %v1065 = vpack.c.bf16 %v1054, %v1054
  %v1077 = vunpack.c.l.b16 %v1055
  %v1078 = vunpack.c.h.b16 %v1055
  %v1079 = vunpack.c.l.b16 %v1056
  %v1080 = vunpack.c.h.b16 %v1056
  %v1081 = vunpack.c.l.b16 %v1057
  %v1082 = vunpack.c.h.b16 %v1057
  %v1083 = vunpack.c.l.b16 %v1058
  %v1084 = vunpack.c.h.b16 %v1058
  %v1085 = vunpack.c.l.b16 %v1059
  %v1086 = vunpack.c.h.b16 %v1059
  %v1087 = vunpack.c.l.b16 %v1060
  %v1088 = vunpack.c.h.b16 %v1060
  %v1089 = vunpack.c.l.b16 %v1061
  %v1090 = vunpack.c.h.b16 %v1061
  %v1091 = vunpack.c.l.b16 %v1062
  %v1092 = vunpack.c.h.b16 %v1062
  %v1093 = vunpack.c.l.b16 %v1063
  %v1094 = vunpack.c.h.b16 %v1063
  %v1095 = vunpack.c.l.b16 %v1064
  %v1096 = vunpack.c.h.b16 %v1064
  %v1097 = vunpack.c.l.b16 %v1065
  %v1098 = vpack.c.b16 %v1077, %v1077
  %v1099 = vpack.c.b16 %v1078, %v1078
  %v1100 = vpack.c.b16 %v1079, %v1079
  %v1101 = vpack.c.b16 %v1080, %v1080
  %v1102 = vpack.c.b16 %v1081, %v1081
  %v1103 = vpack.c.b16 %v1082, %v1082
  %v1104 = vpack.c.b16 %v1083, %v1083
  %v1105 = vpack.c.b16 %v1084, %v1084
  %v1106 = vpack.c.b16 %v1085, %v1085
  %v1107 = vpack.c.b16 %v1086, %v1086
  %v1108 = vpack.c.b16 %v1087, %v1087
  %v1109 = vpack.c.b16 %v1088, %v1088
  %v1110 = vpack.c.b16 %v1089, %v1089
  %v1111 = vpack.c.b16 %v1090, %v1090
  %v1112 = vpack.c.b16 %v1091, %v1091
  %v1113 = vpack.c.b16 %v1092, %v1092
  %v1114 = vpack.c.b16 %v1093, %v1093
  %v1115 = vpack.c.b16 %v1094, %v1094
  %v1116 = vpack.c.b16 %v1095, %v1095
  %v1117 = vpack.c.b16 %v1096, %v1096
  %v1118 = vpack.c.b16 %v1097, %v1097
  %vm1140 = vcmask 519168
  %1141 = vst.msk [vmem:[%s3] sm:$0xf] %vm1140, %v1098
  %1142 = vst.msk [vmem:[%s3 + $0x4] sm:$0xf] %vm1140, %v1099
  %1143 = vst.msk [vmem:[%s3 + $0x8] sm:$0xf] %vm1140, %v1100
  %1144 = vst.msk [vmem:[%s3 + $0xc] sm:$0xf] %vm1140, %v1101
  %1145 = vst.msk [vmem:[%s3 + $0x10] sm:$0xf] %vm1140, %v1102
  %1146 = vst.msk [vmem:[%s3 + $0x14] sm:$0xf] %vm1140, %v1103
  %1147 = vst.msk [vmem:[%s3 + $0x18] sm:$0xf] %vm1140, %v1104
  %1148 = vst.msk [vmem:[%s3 + $0x1c] sm:$0xf] %vm1140, %v1105
  %1149 = vst.msk [vmem:[%s3 + $0x20] sm:$0xf] %vm1140, %v1106
  %1150 = vst.msk [vmem:[%s3 + $0x24] sm:$0xf] %vm1140, %v1107
  %1151 = vst.msk [vmem:[%s3 + $0x28] sm:$0xf] %vm1140, %v1108
  %1152 = vst.msk [vmem:[%s3 + $0x2c] sm:$0xf] %vm1140, %v1109
  %1153 = vst.msk [vmem:[%s3 + $0x30] sm:$0xf] %vm1140, %v1110
  %1154 = vst.msk [vmem:[%s3 + $0x34] sm:$0xf] %vm1140, %v1111
  %1155 = vst.msk [vmem:[%s3 + $0x38] sm:$0xf] %vm1140, %v1112
  %1156 = vst.msk [vmem:[%s3 + $0x3c] sm:$0xf] %vm1140, %v1113
  %1157 = vst.msk [vmem:[%s3 + $0x40] sm:$0xf] %vm1140, %v1114
  %1158 = vst.msk [vmem:[%s3 + $0x44] sm:$0xf] %vm1140, %v1115
  %1159 = vst.msk [vmem:[%s3 + $0x48] sm:$0xf] %vm1140, %v1116
  %1160 = vst.msk [vmem:[%s3 + $0x4c] sm:$0xf] %vm1140, %v1117
  %vm1161 = vcmask 516096
  %1162 = vst.msk [vmem:[%s3 + $0x50] sm:$0x1] %vm1161, %v1118
  // Predicated region
  $region14: #{fcn_forward.4} parent=0 // pred_check
    _
  $region15: #{fcn_forward.4} parent=0 // pred_check_branch
    %1164 = sbr.rel (0) target = $region17
  $region16: #{fcn_forward.4} parent=0 // pred_region
    _
  $region17: #{fcn_forward.4} parent=0 // pred_fallthru
    _
  // Predicated region
  $region18: #{fcn_forward.4} parent=0 // pred_check
    _
  $region19: #{fcn_forward.4} parent=0 // pred_check_branch
    %1166 = sbr.rel (0) target = $region21
  $region20: #{fcn_forward.4} parent=0 // pred_region
    _
  $region21: #{fcn_forward.4} parent=0 // pred_fallthru
    _

// kernel: fcn_forward.5
$region0: #{fcn_forward.5}
  #allocation0 [shape = 'u32[]', space=smem, size = 0x4, offset = 0x4, fixed_abs, tag = 'smem constant byte address 0x4 - core index']
  #allocation1 [shape = 'u32[144,128]{1,0:T(1,128)}', space=vmem, size = 0x12000, scoped, tag = 'internal scratch']
  %s0 = inlined_call_operand.vmem [shape: bf16[18,4096], index: 0, kind: input, shape index: {}]
  %s1 = inlined_call_operand.vmem [shape: bf16[4096,128], index: 1, kind: input, shape index: {}]
  %s2 = inlined_call_operand.vmem [shape: f32[1,128], index: 2, kind: input, shape index: {}]
  %s3 = inlined_call_operand.vmem [shape: bf16[18,128], index: 3, kind: output, shape index: {}]
  %s4 = sld [smem:[#allocation0]]
  $region22: #{fcn_forward.5} parent=0
    _
  %s6 = ssub.s32 1, %s4
  %s7 = scalar_select 0, %s6, %s4
  // Predicated region
  $region2: #{fcn_forward.5} parent=0 // pred_check
    _
  $region3: #{fcn_forward.5} parent=0 // pred_check_branch
    %9 = sbr.rel (0) target = $region5
  $region4: #{fcn_forward.5} parent=0 // pred_region
    _
  $region5: #{fcn_forward.5} parent=0 // pred_fallthru
    _
  // Predicated region
  $region6: #{fcn_forward.5} parent=0 // pred_check
    _
  $region7: #{fcn_forward.5} parent=0 // pred_check_branch
    %11 = sbr.rel (0) target = $region9
  $region8: #{fcn_forward.5} parent=0 // pred_region
    _
  $region9: #{fcn_forward.5} parent=0 // pred_fallthru
    _
  // Predicated region
  $region10: #{fcn_forward.5} parent=0 // pred_check
    _
  $region11: #{fcn_forward.5} parent=0 // pred_check_branch
    %13 = sbr.rel (0) target = $region13
  $region12: #{fcn_forward.5} parent=0 // pred_region
    _
  $region13: #{fcn_forward.5} parent=0 // pred_fallthru
    _
  %v15 = vld [vmem:[%s0] sm:$0xff]
  %v16 = vld [vmem:[%s0 + $0x8] sm:$0xff]
  %v17 = vld [vmem:[%s0 + $0x10] sm:$0xff]
  %v18 = vld [vmem:[%s0 + $0x18] sm:$0xff]
  %v19 = vld [vmem:[%s0 + $0x20] sm:$0xff]
  %v20 = vld [vmem:[%s0 + $0x28] sm:$0xff]
  %v21 = vld [vmem:[%s0 + $0x30] sm:$0xff]
  %v22 = vld [vmem:[%s0 + $0x38] sm:$0xff]
  %v23 = vld [vmem:[%s0 + $0x40] sm:$0xff]
  %v24 = vld [vmem:[%s0 + $0x48] sm:$0xff]
  %v25 = vld [vmem:[%s0 + $0x50] sm:$0xff]
  %v26 = vld [vmem:[%s0 + $0x58] sm:$0xff]
  %v27 = vld [vmem:[%s0 + $0x60] sm:$0xff]
  %v28 = vld [vmem:[%s0 + $0x68] sm:$0xff]
  %v29 = vld [vmem:[%s0 + $0x70] sm:$0xff]
  %v30 = vld [vmem:[%s0 + $0x78] sm:$0xff]
  %v31 = vld [vmem:[%s0 + $0x80] sm:$0xff]
  %v32 = vld [vmem:[%s0 + $0x88] sm:$0xff]
  %v33 = vld [vmem:[%s0 + $0x90] sm:$0xff]
  %v34 = vld [vmem:[%s0 + $0x98] sm:$0xff]
  %v35 = vld [vmem:[%s0 + $0xa0] sm:$0xff]
  %v36 = vld [vmem:[%s0 + $0xa8] sm:$0xff]
  %v37 = vld [vmem:[%s0 + $0xb0] sm:$0xff]
  %v38 = vld [vmem:[%s0 + $0xb8] sm:$0xff]
  %v39 = vld [vmem:[%s0 + $0xc0] sm:$0xff]
  %v40 = vld [vmem:[%s0 + $0xc8] sm:$0xff]
  %v41 = vld [vmem:[%s0 + $0xd0] sm:$0xff]
  %v42 = vld [vmem:[%s0 + $0xd8] sm:$0xff]
  %v43 = vld [vmem:[%s0 + $0xe0] sm:$0xff]
  %v44 = vld [vmem:[%s0 + $0xe8] sm:$0xff]
  %v45 = vld [vmem:[%s0 + $0xf0] sm:$0xff]
  %v46 = vld [vmem:[%s0 + $0xf8] sm:$0xff]
  %v47 = vld [vmem:[%s0 + $0x100] sm:$0x11]
  %v48 = vld [vmem:[%s0 + $0x108] sm:$0x11]
  %v49 = vld [vmem:[%s0 + $0x110] sm:$0x11]
  %v50 = vld [vmem:[%s0 + $0x118] sm:$0x11]
  %v51 = vld [vmem:[%s0 + $0x120] sm:$0x11]
  %v52 = vld [vmem:[%s0 + $0x128] sm:$0x11]
  %v53 = vld [vmem:[%s0 + $0x130] sm:$0x11]
  %v54 = vld [vmem:[%s0 + $0x138] sm:$0x11]
  %v55 = vld [vmem:[%s0 + $0x140] sm:$0x11]
  %v56 = vld [vmem:[%s0 + $0x148] sm:$0x11]
  %v57 = vld [vmem:[%s0 + $0x150] sm:$0x11]
  %v58 = vld [vmem:[%s0 + $0x158] sm:$0x11]
  %v59 = vld [vmem:[%s0 + $0x160] sm:$0x11]
  %v60 = vld [vmem:[%s0 + $0x168] sm:$0x11]
  %v61 = vld [vmem:[%s0 + $0x170] sm:$0x11]
  %v62 = vld [vmem:[%s0 + $0x178] sm:$0x11]
  %v63 = vld [vmem:[%s1] sm:$0xf]
  %v64 = vld [vmem:[%s1 + $0x4] sm:$0xf]
  %v65 = vld [vmem:[%s1 + $0x8] sm:$0xf]
  %v66 = vld [vmem:[%s1 + $0xc] sm:$0xf]
  %v67 = vld [vmem:[%s1 + $0x10] sm:$0xf]
  %v68 = vld [vmem:[%s1 + $0x14] sm:$0xf]
  %v69 = vld [vmem:[%s1 + $0x18] sm:$0xf]
  %v70 = vld [vmem:[%s1 + $0x1c] sm:$0xf]
  %v71 = vld [vmem:[%s1 + $0x20] sm:$0xf]
  %v72 = vld [vmem:[%s1 + $0x24] sm:$0xf]
  %v73 = vld [vmem:[%s1 + $0x28] sm:$0xf]
  %v74 = vld [vmem:[%s1 + $0x2c] sm:$0xf]
  %v75 = vld [vmem:[%s1 + $0x30] sm:$0xf]
  %v76 = vld [vmem:[%s1 + $0x34] sm:$0xf]
  %v77 = vld [vmem:[%s1 + $0x38] sm:$0xf]
  %v78 = vld [vmem:[%s1 + $0x3c] sm:$0xf]
  %v79 = vld [vmem:[%s1 + $0x40] sm:$0xf]
  %v80 = vld [vmem:[%s1 + $0x44] sm:$0xf]
  %v81 = vld [vmem:[%s1 + $0x48] sm:$0xf]
  %v82 = vld [vmem:[%s1 + $0x4c] sm:$0xf]
  %v83 = vld [vmem:[%s1 + $0x50] sm:$0xf]
  %v84 = vld [vmem:[%s1 + $0x54] sm:$0xf]
  %v85 = vld [vmem:[%s1 + $0x58] sm:$0xf]
  %v86 = vld [vmem:[%s1 + $0x5c] sm:$0xf]
  %v87 = vld [vmem:[%s1 + $0x60] sm:$0xf]
  %v88 = vld [vmem:[%s1 + $0x64] sm:$0xf]
  %v89 = vld [vmem:[%s1 + $0x68] sm:$0xf]
  %v90 = vld [vmem:[%s1 + $0x6c] sm:$0xf]
  %v91 = vld [vmem:[%s1 + $0x70] sm:$0xf]
  %v92 = vld [vmem:[%s1 + $0x74] sm:$0xf]
  %v93 = vld [vmem:[%s1 + $0x78] sm:$0xf]
  %v94 = vld [vmem:[%s1 + $0x7c] sm:$0xf]
  %v95 = vld [vmem:[%s1 + $0x80] sm:$0xf]
  %v96 = vld [vmem:[%s1 + $0x84] sm:$0xf]
  %v97 = vld [vmem:[%s1 + $0x88] sm:$0xf]
  %v98 = vld [vmem:[%s1 + $0x8c] sm:$0xf]
  %v99 = vld [vmem:[%s1 + $0x90] sm:$0xf]
  %v100 = vld [vmem:[%s1 + $0x94] sm:$0xf]
  %v101 = vld [vmem:[%s1 + $0x98] sm:$0xf]
  %v102 = vld [vmem:[%s1 + $0x9c] sm:$0xf]
  %v103 = vld [vmem:[%s1 + $0xa0] sm:$0xf]
  %v104 = vld [vmem:[%s1 + $0xa4] sm:$0xf]
  %v105 = vld [vmem:[%s1 + $0xa8] sm:$0xf]
  %v106 = vld [vmem:[%s1 + $0xac] sm:$0xf]
  %v107 = vld [vmem:[%s1 + $0xb0] sm:$0xf]
  %v108 = vld [vmem:[%s1 + $0xb4] sm:$0xf]
  %v109 = vld [vmem:[%s1 + $0xb8] sm:$0xf]
  %v110 = vld [vmem:[%s1 + $0xbc] sm:$0xf]
  %v111 = vld [vmem:[%s1 + $0xc0] sm:$0xf]
  %v112 = vld [vmem:[%s1 + $0xc4] sm:$0xf]
  %v113 = vld [vmem:[%s1 + $0xc8] sm:$0xf]
  %v114 = vld [vmem:[%s1 + $0xcc] sm:$0xf]
  %v115 = vld [vmem:[%s1 + $0xd0] sm:$0xf]
  %v116 = vld [vmem:[%s1 + $0xd4] sm:$0xf]
  %v117 = vld [vmem:[%s1 + $0xd8] sm:$0xf]
  %v118 = vld [vmem:[%s1 + $0xdc] sm:$0xf]
  %v119 = vld [vmem:[%s1 + $0xe0] sm:$0xf]
  %v120 = vld [vmem:[%s1 + $0xe4] sm:$0xf]
  %v121 = vld [vmem:[%s1 + $0xe8] sm:$0xf]
  %v122 = vld [vmem:[%s1 + $0xec] sm:$0xf]
  %v123 = vld [vmem:[%s1 + $0xf0] sm:$0xf]
  %v124 = vld [vmem:[%s1 + $0xf4] sm:$0xf]
  %v125 = vld [vmem:[%s1 + $0xf8] sm:$0xf]
  %v126 = vld [vmem:[%s1 + $0xfc] sm:$0xf]
  %v127 = vld [vmem:[%s1 + $0x100] sm:$0xf]
  %v128 = vld [vmem:[%s1 + $0x104] sm:$0xf]
  %v129 = vld [vmem:[%s1 + $0x108] sm:$0xf]
  %v130 = vld [vmem:[%s1 + $0x10c] sm:$0xf]
  %v131 = vld [vmem:[%s1 + $0x110] sm:$0xf]
  %v132 = vld [vmem:[%s1 + $0x114] sm:$0xf]
  %v133 = vld [vmem:[%s1 + $0x118] sm:$0xf]
  %v134 = vld [vmem:[%s1 + $0x11c] sm:$0xf]
  %v135 = vld [vmem:[%s1 + $0x120] sm:$0xf]
  %v136 = vld [vmem:[%s1 + $0x124] sm:$0xf]
  %v137 = vld [vmem:[%s1 + $0x128] sm:$0xf]
  %v138 = vld [vmem:[%s1 + $0x12c] sm:$0xf]
  %v139 = vld [vmem:[%s1 + $0x130] sm:$0xf]
  %v140 = vld [vmem:[%s1 + $0x134] sm:$0xf]
  %v141 = vld [vmem:[%s1 + $0x138] sm:$0xf]
  %v142 = vld [vmem:[%s1 + $0x13c] sm:$0xf]
  %v143 = vld [vmem:[%s1 + $0x140] sm:$0xf]
  %v144 = vld [vmem:[%s1 + $0x144] sm:$0xf]
  %v145 = vld [vmem:[%s1 + $0x148] sm:$0xf]
  %v146 = vld [vmem:[%s1 + $0x14c] sm:$0xf]
  %v147 = vld [vmem:[%s1 + $0x150] sm:$0xf]
  %v148 = vld [vmem:[%s1 + $0x154] sm:$0xf]
  %v149 = vld [vmem:[%s1 + $0x158] sm:$0xf]
  %v150 = vld [vmem:[%s1 + $0x15c] sm:$0xf]
  %v151 = vld [vmem:[%s1 + $0x160] sm:$0xf]
  %v152 = vld [vmem:[%s1 + $0x164] sm:$0xf]
  %v153 = vld [vmem:[%s1 + $0x168] sm:$0xf]
  %v154 = vld [vmem:[%s1 + $0x16c] sm:$0xf]
  %v155 = vld [vmem:[%s1 + $0x170] sm:$0xf]
  %v156 = vld [vmem:[%s1 + $0x174] sm:$0xf]
  %v157 = vld [vmem:[%s1 + $0x178] sm:$0xf]
  %v158 = vld [vmem:[%s1 + $0x17c] sm:$0xf]
  %v159 = vld [vmem:[%s1 + $0x180] sm:$0xf]
  %v160 = vld [vmem:[%s1 + $0x184] sm:$0xf]
  %v161 = vld [vmem:[%s1 + $0x188] sm:$0xf]
  %v162 = vld [vmem:[%s1 + $0x18c] sm:$0xf]
  %v163 = vld [vmem:[%s1 + $0x190] sm:$0xf]
  %v164 = vld [vmem:[%s1 + $0x194] sm:$0xf]
  %v165 = vld [vmem:[%s1 + $0x198] sm:$0xf]
  %v166 = vld [vmem:[%s1 + $0x19c] sm:$0xf]
  %v167 = vld [vmem:[%s1 + $0x1a0] sm:$0xf]
  %v168 = vld [vmem:[%s1 + $0x1a4] sm:$0xf]
  %v169 = vld [vmem:[%s1 + $0x1a8] sm:$0xf]
  %v170 = vld [vmem:[%s1 + $0x1ac] sm:$0xf]
  %v171 = vld [vmem:[%s1 + $0x1b0] sm:$0xf]
  %v172 = vld [vmem:[%s1 + $0x1b4] sm:$0xf]
  %v173 = vld [vmem:[%s1 + $0x1b8] sm:$0xf]
  %v174 = vld [vmem:[%s1 + $0x1bc] sm:$0xf]
  %v175 = vld [vmem:[%s1 + $0x1c0] sm:$0xf]
  %v176 = vld [vmem:[%s1 + $0x1c4] sm:$0xf]
  %v177 = vld [vmem:[%s1 + $0x1c8] sm:$0xf]
  %v178 = vld [vmem:[%s1 + $0x1cc] sm:$0xf]
  %v179 = vld [vmem:[%s1 + $0x1d0] sm:$0xf]
  %v180 = vld [vmem:[%s1 + $0x1d4] sm:$0xf]
  %v181 = vld [vmem:[%s1 + $0x1d8] sm:$0xf]
  %v182 = vld [vmem:[%s1 + $0x1dc] sm:$0xf]
  %v183 = vld [vmem:[%s1 + $0x1e0] sm:$0xf]
  %v184 = vld [vmem:[%s1 + $0x1e4] sm:$0xf]
  %v185 = vld [vmem:[%s1 + $0x1e8] sm:$0xf]
  %v186 = vld [vmem:[%s1 + $0x1ec] sm:$0xf]
  %v187 = vld [vmem:[%s1 + $0x1f0] sm:$0xf]
  %v188 = vld [vmem:[%s1 + $0x1f4] sm:$0xf]
  %v189 = vld [vmem:[%s1 + $0x1f8] sm:$0xf]
  %v190 = vld [vmem:[%s1 + $0x1fc] sm:$0xf]
  %v191 = vld [vmem:[%s1 + $0x200] sm:$0xf]
  %v192 = vld [vmem:[%s1 + $0x204] sm:$0xf]
  %v193 = vld [vmem:[%s1 + $0x208] sm:$0xf]
  %v194 = vld [vmem:[%s1 + $0x20c] sm:$0xf]
  %v195 = vld [vmem:[%s1 + $0x210] sm:$0xf]
  %v196 = vld [vmem:[%s1 + $0x214] sm:$0xf]
  %v197 = vld [vmem:[%s1 + $0x218] sm:$0xf]
  %v198 = vld [vmem:[%s1 + $0x21c] sm:$0xf]
  %v199 = vld [vmem:[%s1 + $0x220] sm:$0xf]
  %v200 = vld [vmem:[%s1 + $0x224] sm:$0xf]
  %v201 = vld [vmem:[%s1 + $0x228] sm:$0xf]
  %v202 = vld [vmem:[%s1 + $0x22c] sm:$0xf]
  %v203 = vld [vmem:[%s1 + $0x230] sm:$0xf]
  %v204 = vld [vmem:[%s1 + $0x234] sm:$0xf]
  %v205 = vld [vmem:[%s1 + $0x238] sm:$0xf]
  %v206 = vld [vmem:[%s1 + $0x23c] sm:$0xf]
  %v207 = vld [vmem:[%s1 + $0x240] sm:$0xf]
  %v208 = vld [vmem:[%s1 + $0x244] sm:$0xf]
  %v209 = vld [vmem:[%s1 + $0x248] sm:$0xf]
  %v210 = vld [vmem:[%s1 + $0x24c] sm:$0xf]
  %v211 = vld [vmem:[%s1 + $0x250] sm:$0xf]
  %v212 = vld [vmem:[%s1 + $0x254] sm:$0xf]
  %v213 = vld [vmem:[%s1 + $0x258] sm:$0xf]
  %v214 = vld [vmem:[%s1 + $0x25c] sm:$0xf]
  %v215 = vld [vmem:[%s1 + $0x260] sm:$0xf]
  %v216 = vld [vmem:[%s1 + $0x264] sm:$0xf]
  %v217 = vld [vmem:[%s1 + $0x268] sm:$0xf]
  %v218 = vld [vmem:[%s1 + $0x26c] sm:$0xf]
  %v219 = vld [vmem:[%s1 + $0x270] sm:$0xf]
  %v220 = vld [vmem:[%s1 + $0x274] sm:$0xf]
  %v221 = vld [vmem:[%s1 + $0x278] sm:$0xf]
  %v222 = vld [vmem:[%s1 + $0x27c] sm:$0xf]
  %v223 = vld [vmem:[%s1 + $0x280] sm:$0xf]
  %v224 = vld [vmem:[%s1 + $0x284] sm:$0xf]
  %v225 = vld [vmem:[%s1 + $0x288] sm:$0xf]
  %v226 = vld [vmem:[%s1 + $0x28c] sm:$0xf]
  %v227 = vld [vmem:[%s1 + $0x290] sm:$0xf]
  %v228 = vld [vmem:[%s1 + $0x294] sm:$0xf]
  %v229 = vld [vmem:[%s1 + $0x298] sm:$0xf]
  %v230 = vld [vmem:[%s1 + $0x29c] sm:$0xf]
  %v231 = vld [vmem:[%s1 + $0x2a0] sm:$0xf]
  %v232 = vld [vmem:[%s1 + $0x2a4] sm:$0xf]
  %v233 = vld [vmem:[%s1 + $0x2a8] sm:$0xf]
  %v234 = vld [vmem:[%s1 + $0x2ac] sm:$0xf]
  %v235 = vld [vmem:[%s1 + $0x2b0] sm:$0xf]
  %v236 = vld [vmem:[%s1 + $0x2b4] sm:$0xf]
  %v237 = vld [vmem:[%s1 + $0x2b8] sm:$0xf]
  %v238 = vld [vmem:[%s1 + $0x2bc] sm:$0xf]
  %v239 = vld [vmem:[%s1 + $0x2c0] sm:$0xf]
  %v240 = vld [vmem:[%s1 + $0x2c4] sm:$0xf]
  %v241 = vld [vmem:[%s1 + $0x2c8] sm:$0xf]
  %v242 = vld [vmem:[%s1 + $0x2cc] sm:$0xf]
  %v243 = vld [vmem:[%s1 + $0x2d0] sm:$0xf]
  %v244 = vld [vmem:[%s1 + $0x2d4] sm:$0xf]
  %v245 = vld [vmem:[%s1 + $0x2d8] sm:$0xf]
  %v246 = vld [vmem:[%s1 + $0x2dc] sm:$0xf]
  %v247 = vld [vmem:[%s1 + $0x2e0] sm:$0xf]
  %v248 = vld [vmem:[%s1 + $0x2e4] sm:$0xf]
  %v249 = vld [vmem:[%s1 + $0x2e8] sm:$0xf]
  %v250 = vld [vmem:[%s1 + $0x2ec] sm:$0xf]
  %v251 = vld [vmem:[%s1 + $0x2f0] sm:$0xf]
  %v252 = vld [vmem:[%s1 + $0x2f4] sm:$0xf]
  %v253 = vld [vmem:[%s1 + $0x2f8] sm:$0xf]
  %v254 = vld [vmem:[%s1 + $0x2fc] sm:$0xf]
  %v255 = vld [vmem:[%s1 + $0x300] sm:$0xf]
  %v256 = vld [vmem:[%s1 + $0x304] sm:$0xf]
  %v257 = vld [vmem:[%s1 + $0x308] sm:$0xf]
  %v258 = vld [vmem:[%s1 + $0x30c] sm:$0xf]
  %v259 = vld [vmem:[%s1 + $0x310] sm:$0xf]
  %v260 = vld [vmem:[%s1 + $0x314] sm:$0xf]
  %v261 = vld [vmem:[%s1 + $0x318] sm:$0xf]
  %v262 = vld [vmem:[%s1 + $0x31c] sm:$0xf]
  %v263 = vld [vmem:[%s1 + $0x320] sm:$0xf]
  %v264 = vld [vmem:[%s1 + $0x324] sm:$0xf]
  %v265 = vld [vmem:[%s1 + $0x328] sm:$0xf]
  %v266 = vld [vmem:[%s1 + $0x32c] sm:$0xf]
  %v267 = vld [vmem:[%s1 + $0x330] sm:$0xf]
  %v268 = vld [vmem:[%s1 + $0x334] sm:$0xf]
  %v269 = vld [vmem:[%s1 + $0x338] sm:$0xf]
  %v270 = vld [vmem:[%s1 + $0x33c] sm:$0xf]
  %v271 = vld [vmem:[%s1 + $0x340] sm:$0xf]
  %v272 = vld [vmem:[%s1 + $0x344] sm:$0xf]
  %v273 = vld [vmem:[%s1 + $0x348] sm:$0xf]
  %v274 = vld [vmem:[%s1 + $0x34c] sm:$0xf]
  %v275 = vld [vmem:[%s1 + $0x350] sm:$0xf]
  %v276 = vld [vmem:[%s1 + $0x354] sm:$0xf]
  %v277 = vld [vmem:[%s1 + $0x358] sm:$0xf]
  %v278 = vld [vmem:[%s1 + $0x35c] sm:$0xf]
  %v279 = vld [vmem:[%s1 + $0x360] sm:$0xf]
  %v280 = vld [vmem:[%s1 + $0x364] sm:$0xf]
  %v281 = vld [vmem:[%s1 + $0x368] sm:$0xf]
  %v282 = vld [vmem:[%s1 + $0x36c] sm:$0xf]
  %v283 = vld [vmem:[%s1 + $0x370] sm:$0xf]
  %v284 = vld [vmem:[%s1 + $0x374] sm:$0xf]
  %v285 = vld [vmem:[%s1 + $0x378] sm:$0xf]
  %v286 = vld [vmem:[%s1 + $0x37c] sm:$0xf]
  %v287 = vld [vmem:[%s1 + $0x380] sm:$0xf]
  %v288 = vld [vmem:[%s1 + $0x384] sm:$0xf]
  %v289 = vld [vmem:[%s1 + $0x388] sm:$0xf]
  %v290 = vld [vmem:[%s1 + $0x38c] sm:$0xf]
  %v291 = vld [vmem:[%s1 + $0x390] sm:$0xf]
  %v292 = vld [vmem:[%s1 + $0x394] sm:$0xf]
  %v293 = vld [vmem:[%s1 + $0x398] sm:$0xf]
  %v294 = vld [vmem:[%s1 + $0x39c] sm:$0xf]
  %v295 = vld [vmem:[%s1 + $0x3a0] sm:$0xf]
  %v296 = vld [vmem:[%s1 + $0x3a4] sm:$0xf]
  %v297 = vld [vmem:[%s1 + $0x3a8] sm:$0xf]
  %v298 = vld [vmem:[%s1 + $0x3ac] sm:$0xf]
  %v299 = vld [vmem:[%s1 + $0x3b0] sm:$0xf]
  %v300 = vld [vmem:[%s1 + $0x3b4] sm:$0xf]
  %v301 = vld [vmem:[%s1 + $0x3b8] sm:$0xf]
  %v302 = vld [vmem:[%s1 + $0x3bc] sm:$0xf]
  %v303 = vld [vmem:[%s1 + $0x3c0] sm:$0xf]
  %v304 = vld [vmem:[%s1 + $0x3c4] sm:$0xf]
  %v305 = vld [vmem:[%s1 + $0x3c8] sm:$0xf]
  %v306 = vld [vmem:[%s1 + $0x3cc] sm:$0xf]
  %v307 = vld [vmem:[%s1 + $0x3d0] sm:$0xf]
  %v308 = vld [vmem:[%s1 + $0x3d4] sm:$0xf]
  %v309 = vld [vmem:[%s1 + $0x3d8] sm:$0xf]
  %v310 = vld [vmem:[%s1 + $0x3dc] sm:$0xf]
  %v311 = vld [vmem:[%s1 + $0x3e0] sm:$0xf]
  %v312 = vld [vmem:[%s1 + $0x3e4] sm:$0xf]
  %v313 = vld [vmem:[%s1 + $0x3e8] sm:$0xf]
  %v314 = vld [vmem:[%s1 + $0x3ec] sm:$0xf]
  %v315 = vld [vmem:[%s1 + $0x3f0] sm:$0xf]
  %v316 = vld [vmem:[%s1 + $0x3f4] sm:$0xf]
  %v317 = vld [vmem:[%s1 + $0x3f8] sm:$0xf]
  %v318 = vld [vmem:[%s1 + $0x3fc] sm:$0xf]
  %v319 = vld [vmem:[%s1 + $0x400] sm:$0xf]
  %v320 = vld [vmem:[%s1 + $0x404] sm:$0xf]
  %v321 = vld [vmem:[%s1 + $0x408] sm:$0xf]
  %v322 = vld [vmem:[%s1 + $0x40c] sm:$0xf]
  %v323 = vld [vmem:[%s1 + $0x410] sm:$0xf]
  %v324 = vld [vmem:[%s1 + $0x414] sm:$0xf]
  %v325 = vld [vmem:[%s1 + $0x418] sm:$0xf]
  %v326 = vld [vmem:[%s1 + $0x41c] sm:$0xf]
  %v327 = vld [vmem:[%s1 + $0x420] sm:$0xf]
  %v328 = vld [vmem:[%s1 + $0x424] sm:$0xf]
  %v329 = vld [vmem:[%s1 + $0x428] sm:$0xf]
  %v330 = vld [vmem:[%s1 + $0x42c] sm:$0xf]
  %v331 = vld [vmem:[%s1 + $0x430] sm:$0xf]
  %v332 = vld [vmem:[%s1 + $0x434] sm:$0xf]
  %v333 = vld [vmem:[%s1 + $0x438] sm:$0xf]
  %v334 = vld [vmem:[%s1 + $0x43c] sm:$0xf]
  %v335 = vld [vmem:[%s1 + $0x440] sm:$0xf]
  %v336 = vld [vmem:[%s1 + $0x444] sm:$0xf]
  %v337 = vld [vmem:[%s1 + $0x448] sm:$0xf]
  %v338 = vld [vmem:[%s1 + $0x44c] sm:$0xf]
  %v339 = vld [vmem:[%s1 + $0x450] sm:$0xf]
  %v340 = vld [vmem:[%s1 + $0x454] sm:$0xf]
  %v341 = vld [vmem:[%s1 + $0x458] sm:$0xf]
  %v342 = vld [vmem:[%s1 + $0x45c] sm:$0xf]
  %v343 = vld [vmem:[%s1 + $0x460] sm:$0xf]
  %v344 = vld [vmem:[%s1 + $0x464] sm:$0xf]
  %v345 = vld [vmem:[%s1 + $0x468] sm:$0xf]
  %v346 = vld [vmem:[%s1 + $0x46c] sm:$0xf]
  %v347 = vld [vmem:[%s1 + $0x470] sm:$0xf]
  %v348 = vld [vmem:[%s1 + $0x474] sm:$0xf]
  %v349 = vld [vmem:[%s1 + $0x478] sm:$0xf]
  %v350 = vld [vmem:[%s1 + $0x47c] sm:$0xf]
  %v351 = vld [vmem:[%s1 + $0x480] sm:$0xf]
  %v352 = vld [vmem:[%s1 + $0x484] sm:$0xf]
  %v353 = vld [vmem:[%s1 + $0x488] sm:$0xf]
  %v354 = vld [vmem:[%s1 + $0x48c] sm:$0xf]
  %v355 = vld [vmem:[%s1 + $0x490] sm:$0xf]
  %v356 = vld [vmem:[%s1 + $0x494] sm:$0xf]
  %v357 = vld [vmem:[%s1 + $0x498] sm:$0xf]
  %v358 = vld [vmem:[%s1 + $0x49c] sm:$0xf]
  %v359 = vld [vmem:[%s1 + $0x4a0] sm:$0xf]
  %v360 = vld [vmem:[%s1 + $0x4a4] sm:$0xf]
  %v361 = vld [vmem:[%s1 + $0x4a8] sm:$0xf]
  %v362 = vld [vmem:[%s1 + $0x4ac] sm:$0xf]
  %v363 = vld [vmem:[%s1 + $0x4b0] sm:$0xf]
  %v364 = vld [vmem:[%s1 + $0x4b4] sm:$0xf]
  %v365 = vld [vmem:[%s1 + $0x4b8] sm:$0xf]
  %v366 = vld [vmem:[%s1 + $0x4bc] sm:$0xf]
  %v367 = vld [vmem:[%s1 + $0x4c0] sm:$0xf]
  %v368 = vld [vmem:[%s1 + $0x4c4] sm:$0xf]
  %v369 = vld [vmem:[%s1 + $0x4c8] sm:$0xf]
  %v370 = vld [vmem:[%s1 + $0x4cc] sm:$0xf]
  %v371 = vld [vmem:[%s1 + $0x4d0] sm:$0xf]
  %v372 = vld [vmem:[%s1 + $0x4d4] sm:$0xf]
  %v373 = vld [vmem:[%s1 + $0x4d8] sm:$0xf]
  %v374 = vld [vmem:[%s1 + $0x4dc] sm:$0xf]
  %v375 = vld [vmem:[%s1 + $0x4e0] sm:$0xf]
  %v376 = vld [vmem:[%s1 + $0x4e4] sm:$0xf]
  %v377 = vld [vmem:[%s1 + $0x4e8] sm:$0xf]
  %v378 = vld [vmem:[%s1 + $0x4ec] sm:$0xf]
  %v379 = vld [vmem:[%s1 + $0x4f0] sm:$0xf]
  %v380 = vld [vmem:[%s1 + $0x4f4] sm:$0xf]
  %v381 = vld [vmem:[%s1 + $0x4f8] sm:$0xf]
  %v382 = vld [vmem:[%s1 + $0x4fc] sm:$0xf]
  %v383 = vld [vmem:[%s1 + $0x500] sm:$0xf]
  %v384 = vld [vmem:[%s1 + $0x504] sm:$0xf]
  %v385 = vld [vmem:[%s1 + $0x508] sm:$0xf]
  %v386 = vld [vmem:[%s1 + $0x50c] sm:$0xf]
  %v387 = vld [vmem:[%s1 + $0x510] sm:$0xf]
  %v388 = vld [vmem:[%s1 + $0x514] sm:$0xf]
  %v389 = vld [vmem:[%s1 + $0x518] sm:$0xf]
  %v390 = vld [vmem:[%s1 + $0x51c] sm:$0xf]
  %v391 = vld [vmem:[%s1 + $0x520] sm:$0xf]
  %v392 = vld [vmem:[%s1 + $0x524] sm:$0xf]
  %v393 = vld [vmem:[%s1 + $0x528] sm:$0xf]
  %v394 = vld [vmem:[%s1 + $0x52c] sm:$0xf]
  %v395 = vld [vmem:[%s1 + $0x530] sm:$0xf]
  %v396 = vld [vmem:[%s1 + $0x534] sm:$0xf]
  %v397 = vld [vmem:[%s1 + $0x538] sm:$0xf]
  %v398 = vld [vmem:[%s1 + $0x53c] sm:$0xf]
  %v399 = vld [vmem:[%s1 + $0x540] sm:$0xf]
  %v400 = vld [vmem:[%s1 + $0x544] sm:$0xf]
  %v401 = vld [vmem:[%s1 + $0x548] sm:$0xf]
  %v402 = vld [vmem:[%s1 + $0x54c] sm:$0xf]
  %v403 = vld [vmem:[%s1 + $0x550] sm:$0xf]
  %v404 = vld [vmem:[%s1 + $0x554] sm:$0xf]
  %v405 = vld [vmem:[%s1 + $0x558] sm:$0xf]
  %v406 = vld [vmem:[%s1 + $0x55c] sm:$0xf]
  %v407 = vld [vmem:[%s1 + $0x560] sm:$0xf]
  %v408 = vld [vmem:[%s1 + $0x564] sm:$0xf]
  %v409 = vld [vmem:[%s1 + $0x568] sm:$0xf]
  %v410 = vld [vmem:[%s1 + $0x56c] sm:$0xf]
  %v411 = vld [vmem:[%s1 + $0x570] sm:$0xf]
  %v412 = vld [vmem:[%s1 + $0x574] sm:$0xf]
  %v413 = vld [vmem:[%s1 + $0x578] sm:$0xf]
  %v414 = vld [vmem:[%s1 + $0x57c] sm:$0xf]
  %v415 = vld [vmem:[%s1 + $0x580] sm:$0xf]
  %v416 = vld [vmem:[%s1 + $0x584] sm:$0xf]
  %v417 = vld [vmem:[%s1 + $0x588] sm:$0xf]
  %v418 = vld [vmem:[%s1 + $0x58c] sm:$0xf]
  %v419 = vld [vmem:[%s1 + $0x590] sm:$0xf]
  %v420 = vld [vmem:[%s1 + $0x594] sm:$0xf]
  %v421 = vld [vmem:[%s1 + $0x598] sm:$0xf]
  %v422 = vld [vmem:[%s1 + $0x59c] sm:$0xf]
  %v423 = vld [vmem:[%s1 + $0x5a0] sm:$0xf]
  %v424 = vld [vmem:[%s1 + $0x5a4] sm:$0xf]
  %v425 = vld [vmem:[%s1 + $0x5a8] sm:$0xf]
  %v426 = vld [vmem:[%s1 + $0x5ac] sm:$0xf]
  %v427 = vld [vmem:[%s1 + $0x5b0] sm:$0xf]
  %v428 = vld [vmem:[%s1 + $0x5b4] sm:$0xf]
  %v429 = vld [vmem:[%s1 + $0x5b8] sm:$0xf]
  %v430 = vld [vmem:[%s1 + $0x5bc] sm:$0xf]
  %v431 = vld [vmem:[%s1 + $0x5c0] sm:$0xf]
  %v432 = vld [vmem:[%s1 + $0x5c4] sm:$0xf]
  %v433 = vld [vmem:[%s1 + $0x5c8] sm:$0xf]
  %v434 = vld [vmem:[%s1 + $0x5cc] sm:$0xf]
  %v435 = vld [vmem:[%s1 + $0x5d0] sm:$0xf]
  %v436 = vld [vmem:[%s1 + $0x5d4] sm:$0xf]
  %v437 = vld [vmem:[%s1 + $0x5d8] sm:$0xf]
  %v438 = vld [vmem:[%s1 + $0x5dc] sm:$0xf]
  %v439 = vld [vmem:[%s1 + $0x5e0] sm:$0xf]
  %v440 = vld [vmem:[%s1 + $0x5e4] sm:$0xf]
  %v441 = vld [vmem:[%s1 + $0x5e8] sm:$0xf]
  %v442 = vld [vmem:[%s1 + $0x5ec] sm:$0xf]
  %v443 = vld [vmem:[%s1 + $0x5f0] sm:$0xf]
  %v444 = vld [vmem:[%s1 + $0x5f4] sm:$0xf]
  %v445 = vld [vmem:[%s1 + $0x5f8] sm:$0xf]
  %v446 = vld [vmem:[%s1 + $0x5fc] sm:$0xf]
  %v447 = vld [vmem:[%s1 + $0x600] sm:$0xf]
  %v448 = vld [vmem:[%s1 + $0x604] sm:$0xf]
  %v449 = vld [vmem:[%s1 + $0x608] sm:$0xf]
  %v450 = vld [vmem:[%s1 + $0x60c] sm:$0xf]
  %v451 = vld [vmem:[%s1 + $0x610] sm:$0xf]
  %v452 = vld [vmem:[%s1 + $0x614] sm:$0xf]
  %v453 = vld [vmem:[%s1 + $0x618] sm:$0xf]
  %v454 = vld [vmem:[%s1 + $0x61c] sm:$0xf]
  %v455 = vld [vmem:[%s1 + $0x620] sm:$0xf]
  %v456 = vld [vmem:[%s1 + $0x624] sm:$0xf]
  %v457 = vld [vmem:[%s1 + $0x628] sm:$0xf]
  %v458 = vld [vmem:[%s1 + $0x62c] sm:$0xf]
  %v459 = vld [vmem:[%s1 + $0x630] sm:$0xf]
  %v460 = vld [vmem:[%s1 + $0x634] sm:$0xf]
  %v461 = vld [vmem:[%s1 + $0x638] sm:$0xf]
  %v462 = vld [vmem:[%s1 + $0x63c] sm:$0xf]
  %v463 = vld [vmem:[%s1 + $0x640] sm:$0xf]
  %v464 = vld [vmem:[%s1 + $0x644] sm:$0xf]
  %v465 = vld [vmem:[%s1 + $0x648] sm:$0xf]
  %v466 = vld [vmem:[%s1 + $0x64c] sm:$0xf]
  %v467 = vld [vmem:[%s1 + $0x650] sm:$0xf]
  %v468 = vld [vmem:[%s1 + $0x654] sm:$0xf]
  %v469 = vld [vmem:[%s1 + $0x658] sm:$0xf]
  %v470 = vld [vmem:[%s1 + $0x65c] sm:$0xf]
  %v471 = vld [vmem:[%s1 + $0x660] sm:$0xf]
  %v472 = vld [vmem:[%s1 + $0x664] sm:$0xf]
  %v473 = vld [vmem:[%s1 + $0x668] sm:$0xf]
  %v474 = vld [vmem:[%s1 + $0x66c] sm:$0xf]
  %v475 = vld [vmem:[%s1 + $0x670] sm:$0xf]
  %v476 = vld [vmem:[%s1 + $0x674] sm:$0xf]
  %v477 = vld [vmem:[%s1 + $0x678] sm:$0xf]
  %v478 = vld [vmem:[%s1 + $0x67c] sm:$0xf]
  %v479 = vld [vmem:[%s1 + $0x680] sm:$0xf]
  %v480 = vld [vmem:[%s1 + $0x684] sm:$0xf]
  %v481 = vld [vmem:[%s1 + $0x688] sm:$0xf]
  %v482 = vld [vmem:[%s1 + $0x68c] sm:$0xf]
  %v483 = vld [vmem:[%s1 + $0x690] sm:$0xf]
  %v484 = vld [vmem:[%s1 + $0x694] sm:$0xf]
  %v485 = vld [vmem:[%s1 + $0x698] sm:$0xf]
  %v486 = vld [vmem:[%s1 + $0x69c] sm:$0xf]
  %v487 = vld [vmem:[%s1 + $0x6a0] sm:$0xf]
  %v488 = vld [vmem:[%s1 + $0x6a4] sm:$0xf]
  %v489 = vld [vmem:[%s1 + $0x6a8] sm:$0xf]
  %v490 = vld [vmem:[%s1 + $0x6ac] sm:$0xf]
  %v491 = vld [vmem:[%s1 + $0x6b0] sm:$0xf]
  %v492 = vld [vmem:[%s1 + $0x6b4] sm:$0xf]
  %v493 = vld [vmem:[%s1 + $0x6b8] sm:$0xf]
  %v494 = vld [vmem:[%s1 + $0x6bc] sm:$0xf]
  %v495 = vld [vmem:[%s1 + $0x6c0] sm:$0xf]
  %v496 = vld [vmem:[%s1 + $0x6c4] sm:$0xf]
  %v497 = vld [vmem:[%s1 + $0x6c8] sm:$0xf]
  %v498 = vld [vmem:[%s1 + $0x6cc] sm:$0xf]
  %v499 = vld [vmem:[%s1 + $0x6d0] sm:$0xf]
  %v500 = vld [vmem:[%s1 + $0x6d4] sm:$0xf]
  %v501 = vld [vmem:[%s1 + $0x6d8] sm:$0xf]
  %v502 = vld [vmem:[%s1 + $0x6dc] sm:$0xf]
  %v503 = vld [vmem:[%s1 + $0x6e0] sm:$0xf]
  %v504 = vld [vmem:[%s1 + $0x6e4] sm:$0xf]
  %v505 = vld [vmem:[%s1 + $0x6e8] sm:$0xf]
  %v506 = vld [vmem:[%s1 + $0x6ec] sm:$0xf]
  %v507 = vld [vmem:[%s1 + $0x6f0] sm:$0xf]
  %v508 = vld [vmem:[%s1 + $0x6f4] sm:$0xf]
  %v509 = vld [vmem:[%s1 + $0x6f8] sm:$0xf]
  %v510 = vld [vmem:[%s1 + $0x6fc] sm:$0xf]
  %v511 = vld [vmem:[%s1 + $0x700] sm:$0xf]
  %v512 = vld [vmem:[%s1 + $0x704] sm:$0xf]
  %v513 = vld [vmem:[%s1 + $0x708] sm:$0xf]
  %v514 = vld [vmem:[%s1 + $0x70c] sm:$0xf]
  %v515 = vld [vmem:[%s1 + $0x710] sm:$0xf]
  %v516 = vld [vmem:[%s1 + $0x714] sm:$0xf]
  %v517 = vld [vmem:[%s1 + $0x718] sm:$0xf]
  %v518 = vld [vmem:[%s1 + $0x71c] sm:$0xf]
  %v519 = vld [vmem:[%s1 + $0x720] sm:$0xf]
  %v520 = vld [vmem:[%s1 + $0x724] sm:$0xf]
  %v521 = vld [vmem:[%s1 + $0x728] sm:$0xf]
  %v522 = vld [vmem:[%s1 + $0x72c] sm:$0xf]
  %v523 = vld [vmem:[%s1 + $0x730] sm:$0xf]
  %v524 = vld [vmem:[%s1 + $0x734] sm:$0xf]
  %v525 = vld [vmem:[%s1 + $0x738] sm:$0xf]
  %v526 = vld [vmem:[%s1 + $0x73c] sm:$0xf]
  %v527 = vld [vmem:[%s1 + $0x740] sm:$0xf]
  %v528 = vld [vmem:[%s1 + $0x744] sm:$0xf]
  %v529 = vld [vmem:[%s1 + $0x748] sm:$0xf]
  %v530 = vld [vmem:[%s1 + $0x74c] sm:$0xf]
  %v531 = vld [vmem:[%s1 + $0x750] sm:$0xf]
  %v532 = vld [vmem:[%s1 + $0x754] sm:$0xf]
  %v533 = vld [vmem:[%s1 + $0x758] sm:$0xf]
  %v534 = vld [vmem:[%s1 + $0x75c] sm:$0xf]
  %v535 = vld [vmem:[%s1 + $0x760] sm:$0xf]
  %v536 = vld [vmem:[%s1 + $0x764] sm:$0xf]
  %v537 = vld [vmem:[%s1 + $0x768] sm:$0xf]
  %v538 = vld [vmem:[%s1 + $0x76c] sm:$0xf]
  %v539 = vld [vmem:[%s1 + $0x770] sm:$0xf]
  %v540 = vld [vmem:[%s1 + $0x774] sm:$0xf]
  %v541 = vld [vmem:[%s1 + $0x778] sm:$0xf]
  %v542 = vld [vmem:[%s1 + $0x77c] sm:$0xf]
  %v543 = vld [vmem:[%s1 + $0x780] sm:$0xf]
  %v544 = vld [vmem:[%s1 + $0x784] sm:$0xf]
  %v545 = vld [vmem:[%s1 + $0x788] sm:$0xf]
  %v546 = vld [vmem:[%s1 + $0x78c] sm:$0xf]
  %v547 = vld [vmem:[%s1 + $0x790] sm:$0xf]
  %v548 = vld [vmem:[%s1 + $0x794] sm:$0xf]
  %v549 = vld [vmem:[%s1 + $0x798] sm:$0xf]
  %v550 = vld [vmem:[%s1 + $0x79c] sm:$0xf]
  %v551 = vld [vmem:[%s1 + $0x7a0] sm:$0xf]
  %v552 = vld [vmem:[%s1 + $0x7a4] sm:$0xf]
  %v553 = vld [vmem:[%s1 + $0x7a8] sm:$0xf]
  %v554 = vld [vmem:[%s1 + $0x7ac] sm:$0xf]
  %v555 = vld [vmem:[%s1 + $0x7b0] sm:$0xf]
  %v556 = vld [vmem:[%s1 + $0x7b4] sm:$0xf]
  %v557 = vld [vmem:[%s1 + $0x7b8] sm:$0xf]
  %v558 = vld [vmem:[%s1 + $0x7bc] sm:$0xf]
  %v559 = vld [vmem:[%s1 + $0x7c0] sm:$0xf]
  %v560 = vld [vmem:[%s1 + $0x7c4] sm:$0xf]
  %v561 = vld [vmem:[%s1 + $0x7c8] sm:$0xf]
  %v562 = vld [vmem:[%s1 + $0x7cc] sm:$0xf]
  %v563 = vld [vmem:[%s1 + $0x7d0] sm:$0xf]
  %v564 = vld [vmem:[%s1 + $0x7d4] sm:$0xf]
  %v565 = vld [vmem:[%s1 + $0x7d8] sm:$0xf]
  %v566 = vld [vmem:[%s1 + $0x7dc] sm:$0xf]
  %v567 = vld [vmem:[%s1 + $0x7e0] sm:$0xf]
  %v568 = vld [vmem:[%s1 + $0x7e4] sm:$0xf]
  %v569 = vld [vmem:[%s1 + $0x7e8] sm:$0xf]
  %v570 = vld [vmem:[%s1 + $0x7ec] sm:$0xf]
  %v571 = vld [vmem:[%s1 + $0x7f0] sm:$0xf]
  %v572 = vld [vmem:[%s1 + $0x7f4] sm:$0xf]
  %v573 = vld [vmem:[%s1 + $0x7f8] sm:$0xf]
  %v574 = vld [vmem:[%s1 + $0x7fc] sm:$0xf]
  %v575 = vld [vmem:[%s2] sm:$0x1]
  %v577 = vlaneseq
  %v578 = vshrl.u32 %v577, 7
  %v579 = vsub.s32 0, %v578
  %v580 = vrot.slane %v575, %v579
  %v630 = vunpack.c.l.b16 %v15
  %v631 = vunpack.c.h.b16 %v15
  %v632 = vunpack.c.l.b16 %v16
  %v633 = vunpack.c.h.b16 %v16
  %v634 = vunpack.c.l.b16 %v17
  %v635 = vunpack.c.h.b16 %v17
  %v636 = vunpack.c.l.b16 %v18
  %v637 = vunpack.c.h.b16 %v18
  %v638 = vunpack.c.l.b16 %v19
  %v639 = vunpack.c.h.b16 %v19
  %v640 = vunpack.c.l.b16 %v20
  %v641 = vunpack.c.h.b16 %v20
  %v642 = vunpack.c.l.b16 %v21
  %v643 = vunpack.c.h.b16 %v21
  %v644 = vunpack.c.l.b16 %v22
  %v645 = vunpack.c.h.b16 %v22
  %v646 = vunpack.c.l.b16 %v23
  %v647 = vunpack.c.h.b16 %v23
  %v648 = vunpack.c.l.b16 %v24
  %v649 = vunpack.c.h.b16 %v24
  %v650 = vunpack.c.l.b16 %v25
  %v651 = vunpack.c.h.b16 %v25
  %v652 = vunpack.c.l.b16 %v26
  %v653 = vunpack.c.h.b16 %v26
  %v654 = vunpack.c.l.b16 %v27
  %v655 = vunpack.c.h.b16 %v27
  %v656 = vunpack.c.l.b16 %v28
  %v657 = vunpack.c.h.b16 %v28
  %v658 = vunpack.c.l.b16 %v29
  %v659 = vunpack.c.h.b16 %v29
  %v660 = vunpack.c.l.b16 %v30
  %v661 = vunpack.c.h.b16 %v30
  %v662 = vunpack.c.l.b16 %v31
  %v663 = vunpack.c.h.b16 %v31
  %v664 = vunpack.c.l.b16 %v32
  %v665 = vunpack.c.h.b16 %v32
  %v666 = vunpack.c.l.b16 %v33
  %v667 = vunpack.c.h.b16 %v33
  %v668 = vunpack.c.l.b16 %v34
  %v669 = vunpack.c.h.b16 %v34
  %v670 = vunpack.c.l.b16 %v35
  %v671 = vunpack.c.h.b16 %v35
  %v672 = vunpack.c.l.b16 %v36
  %v673 = vunpack.c.h.b16 %v36
  %v674 = vunpack.c.l.b16 %v37
  %v675 = vunpack.c.h.b16 %v37
  %v676 = vunpack.c.l.b16 %v38
  %v677 = vunpack.c.h.b16 %v38
  %v678 = vunpack.c.l.b16 %v39
  %v679 = vunpack.c.h.b16 %v39
  %v680 = vunpack.c.l.b16 %v40
  %v681 = vunpack.c.h.b16 %v40
  %v682 = vunpack.c.l.b16 %v41
  %v683 = vunpack.c.h.b16 %v41
  %v684 = vunpack.c.l.b16 %v42
  %v685 = vunpack.c.h.b16 %v42
  %v686 = vunpack.c.l.b16 %v43
  %v687 = vunpack.c.h.b16 %v43
  %v688 = vunpack.c.l.b16 %v44
  %v689 = vunpack.c.h.b16 %v44
  %v690 = vunpack.c.l.b16 %v45
  %v691 = vunpack.c.h.b16 %v45
  %v692 = vunpack.c.l.b16 %v46
  %v693 = vunpack.c.h.b16 %v46
  %v694 = vunpack.c.l.b16 %v47
  %v695 = vunpack.c.h.b16 %v47
  %v696 = vunpack.c.l.b16 %v48
  %v697 = vunpack.c.h.b16 %v48
  %v698 = vunpack.c.l.b16 %v49
  %v699 = vunpack.c.h.b16 %v49
  %v700 = vunpack.c.l.b16 %v50
  %v701 = vunpack.c.h.b16 %v50
  %v702 = vunpack.c.l.b16 %v51
  %v703 = vunpack.c.h.b16 %v51
  %v704 = vunpack.c.l.b16 %v52
  %v705 = vunpack.c.h.b16 %v52
  %v706 = vunpack.c.l.b16 %v53
  %v707 = vunpack.c.h.b16 %v53
  %v708 = vunpack.c.l.b16 %v54
  %v709 = vunpack.c.h.b16 %v54
  %v710 = vunpack.c.l.b16 %v55
  %v711 = vunpack.c.h.b16 %v55
  %v712 = vunpack.c.l.b16 %v56
  %v713 = vunpack.c.h.b16 %v56
  %v714 = vunpack.c.l.b16 %v57
  %v715 = vunpack.c.h.b16 %v57
  %v716 = vunpack.c.l.b16 %v58
  %v717 = vunpack.c.h.b16 %v58
  %v718 = vunpack.c.l.b16 %v59
  %v719 = vunpack.c.h.b16 %v59
  %v720 = vunpack.c.l.b16 %v60
  %v721 = vunpack.c.h.b16 %v60
  %v722 = vunpack.c.l.b16 %v61
  %v723 = vunpack.c.h.b16 %v61
  %v724 = vunpack.c.l.b16 %v62
  %v725 = vunpack.c.h.b16 %v62
  %v726 = vpack.c.b16 %v662, %v630
  %v727 = vpack.c.b16 %v663, %v631
  %v728 = vpack.c.b16 %v664, %v632
  %v729 = vpack.c.b16 %v665, %v633
  %v730 = vpack.c.b16 %v666, %v634
  %v731 = vpack.c.b16 %v667, %v635
  %v732 = vpack.c.b16 %v668, %v636
  %v733 = vpack.c.b16 %v669, %v637
  %v734 = vpack.c.b16 %v670, %v638
  %v735 = vpack.c.b16 %v671, %v639
  %v736 = vpack.c.b16 %v672, %v640
  %v737 = vpack.c.b16 %v673, %v641
  %v738 = vpack.c.b16 %v674, %v642
  %v739 = vpack.c.b16 %v675, %v643
  %v740 = vpack.c.b16 %v676, %v644
  %v741 = vpack.c.b16 %v677, %v645
  %v742 = vpack.c.b16 %v678, %v646
  %v743 = vpack.c.b16 %v679, %v647
  %v744 = vpack.c.b16 %v680, %v648
  %v745 = vpack.c.b16 %v681, %v649
  %v746 = vpack.c.b16 %v682, %v650
  %v747 = vpack.c.b16 %v683, %v651
  %v748 = vpack.c.b16 %v684, %v652
  %v749 = vpack.c.b16 %v685, %v653
  %v750 = vpack.c.b16 %v686, %v654
  %v751 = vpack.c.b16 %v687, %v655
  %v752 = vpack.c.b16 %v688, %v656
  %v753 = vpack.c.b16 %v689, %v657
  %v754 = vpack.c.b16 %v690, %v658
  %v755 = vpack.c.b16 %v691, %v659
  %v756 = vpack.c.b16 %v692, %v660
  %v757 = vpack.c.b16 %v693, %v661
  %v758 = vpack.c.b16 %v694, %v694
  %v759 = vpack.c.b16 %v695, %v695
  %v760 = vpack.c.b16 %v696, %v696
  %v761 = vpack.c.b16 %v697, %v697
  %v762 = vpack.c.b16 %v698, %v698
  %v763 = vpack.c.b16 %v699, %v699
  %v764 = vpack.c.b16 %v700, %v700
  %v765 = vpack.c.b16 %v701, %v701
  %v766 = vpack.c.b16 %v702, %v702
  %v767 = vpack.c.b16 %v703, %v703
  %v768 = vpack.c.b16 %v704, %v704
  %v769 = vpack.c.b16 %v705, %v705
  %v770 = vpack.c.b16 %v706, %v706
  %v771 = vpack.c.b16 %v707, %v707
  %v772 = vpack.c.b16 %v708, %v708
  %v773 = vpack.c.b16 %v709, %v709
  %v774 = vpack.c.b16 %v710, %v710
  %v775 = vpack.c.b16 %v711, %v711
  %v776 = vpack.c.b16 %v712, %v712
  %v777 = vpack.c.b16 %v713, %v713
  %v778 = vpack.c.b16 %v714, %v714
  %v779 = vpack.c.b16 %v715, %v715
  %v780 = vpack.c.b16 %v716, %v716
  %v781 = vpack.c.b16 %v717, %v717
  %v782 = vpack.c.b16 %v718, %v718
  %v783 = vpack.c.b16 %v719, %v719
  %v784 = vpack.c.b16 %v720, %v720
  %v785 = vpack.c.b16 %v721, %v721
  %v786 = vpack.c.b16 %v722, %v722
  %v787 = vpack.c.b16 %v723, %v723
  %v788 = vpack.c.b16 %v724, %v724
  %v789 = vpack.c.b16 %v725, %v725
  %v1366 = vunpack.c.l.b16 %v63
  %v1367 = vunpack.c.l.b16 %v64
  %v1368 = vunpack.c.l.b16 %v65
  %v1369 = vunpack.c.l.b16 %v66
  %v1370 = vunpack.c.l.b16 %v67
  %v1371 = vunpack.c.l.b16 %v68
  %v1372 = vunpack.c.l.b16 %v69
  %v1373 = vunpack.c.l.b16 %v70
  %v1374 = vunpack.c.l.b16 %v71
  %v1375 = vunpack.c.l.b16 %v72
  %v1376 = vunpack.c.l.b16 %v73
  %v1377 = vunpack.c.l.b16 %v74
  %v1378 = vunpack.c.l.b16 %v75
  %v1379 = vunpack.c.l.b16 %v76
  %v1380 = vunpack.c.l.b16 %v77
  %v1381 = vunpack.c.l.b16 %v78
  %v1382 = vunpack.c.l.b16 %v79
  %v1383 = vunpack.c.l.b16 %v80
  %v1384 = vunpack.c.l.b16 %v81
  %v1385 = vunpack.c.l.b16 %v82
  %v1386 = vunpack.c.l.b16 %v83
  %v1387 = vunpack.c.l.b16 %v84
  %v1388 = vunpack.c.l.b16 %v85
  %v1389 = vunpack.c.l.b16 %v86
  %v1390 = vunpack.c.l.b16 %v87
  %v1391 = vunpack.c.l.b16 %v88
  %v1392 = vunpack.c.l.b16 %v89
  %v1393 = vunpack.c.l.b16 %v90
  %v1394 = vunpack.c.l.b16 %v91
  %v1395 = vunpack.c.l.b16 %v92
  %v1396 = vunpack.c.l.b16 %v93
  %v1397 = vunpack.c.l.b16 %v94
  %v1398 = vunpack.c.l.b16 %v95
  %v1399 = vunpack.c.l.b16 %v96
  %v1400 = vunpack.c.l.b16 %v97
  %v1401 = vunpack.c.l.b16 %v98
  %v1402 = vunpack.c.l.b16 %v99
  %v1403 = vunpack.c.l.b16 %v100
  %v1404 = vunpack.c.l.b16 %v101
  %v1405 = vunpack.c.l.b16 %v102
  %v1406 = vunpack.c.l.b16 %v103
  %v1407 = vunpack.c.l.b16 %v104
  %v1408 = vunpack.c.l.b16 %v105
  %v1409 = vunpack.c.l.b16 %v106
  %v1410 = vunpack.c.l.b16 %v107
  %v1411 = vunpack.c.l.b16 %v108
  %v1412 = vunpack.c.l.b16 %v109
  %v1413 = vunpack.c.l.b16 %v110
  %v1414 = vunpack.c.l.b16 %v111
  %v1415 = vunpack.c.l.b16 %v112
  %v1416 = vunpack.c.l.b16 %v113
  %v1417 = vunpack.c.l.b16 %v114
  %v1418 = vunpack.c.l.b16 %v115
  %v1419 = vunpack.c.l.b16 %v116
  %v1420 = vunpack.c.l.b16 %v117
  %v1421 = vunpack.c.l.b16 %v118
  %v1422 = vunpack.c.l.b16 %v119
  %v1423 = vunpack.c.l.b16 %v120
  %v1424 = vunpack.c.l.b16 %v121
  %v1425 = vunpack.c.l.b16 %v122
  %v1426 = vunpack.c.l.b16 %v123
  %v1427 = vunpack.c.l.b16 %v124
  %v1428 = vunpack.c.l.b16 %v125
  %v1429 = vunpack.c.l.b16 %v126
  %v1430 = vunpack.c.l.b16 %v127
  %v1431 = vunpack.c.l.b16 %v128
  %v1432 = vunpack.c.l.b16 %v129
  %v1433 = vunpack.c.l.b16 %v130
  %v1434 = vunpack.c.l.b16 %v131
  %v1435 = vunpack.c.l.b16 %v132
  %v1436 = vunpack.c.l.b16 %v133
  %v1437 = vunpack.c.l.b16 %v134
  %v1438 = vunpack.c.l.b16 %v135
  %v1439 = vunpack.c.l.b16 %v136
  %v1440 = vunpack.c.l.b16 %v137
  %v1441 = vunpack.c.l.b16 %v138
  %v1442 = vunpack.c.l.b16 %v139
  %v1443 = vunpack.c.l.b16 %v140
  %v1444 = vunpack.c.l.b16 %v141
  %v1445 = vunpack.c.l.b16 %v142
  %v1446 = vunpack.c.l.b16 %v143
  %v1447 = vunpack.c.l.b16 %v144
  %v1448 = vunpack.c.l.b16 %v145
  %v1449 = vunpack.c.l.b16 %v146
  %v1450 = vunpack.c.l.b16 %v147
  %v1451 = vunpack.c.l.b16 %v148
  %v1452 = vunpack.c.l.b16 %v149
  %v1453 = vunpack.c.l.b16 %v150
  %v1454 = vunpack.c.l.b16 %v151
  %v1455 = vunpack.c.l.b16 %v152
  %v1456 = vunpack.c.l.b16 %v153
  %v1457 = vunpack.c.l.b16 %v154
  %v1458 = vunpack.c.l.b16 %v155
  %v1459 = vunpack.c.l.b16 %v156
  %v1460 = vunpack.c.l.b16 %v157
  %v1461 = vunpack.c.l.b16 %v158
  %v1462 = vunpack.c.l.b16 %v159
  %v1463 = vunpack.c.l.b16 %v160
  %v1464 = vunpack.c.l.b16 %v161
  %v1465 = vunpack.c.l.b16 %v162
  %v1466 = vunpack.c.l.b16 %v163
  %v1467 = vunpack.c.l.b16 %v164
  %v1468 = vunpack.c.l.b16 %v165
  %v1469 = vunpack.c.l.b16 %v166
  %v1470 = vunpack.c.l.b16 %v167
  %v1471 = vunpack.c.l.b16 %v168
  %v1472 = vunpack.c.l.b16 %v169
  %v1473 = vunpack.c.l.b16 %v170
  %v1474 = vunpack.c.l.b16 %v171
  %v1475 = vunpack.c.l.b16 %v172
  %v1476 = vunpack.c.l.b16 %v173
  %v1477 = vunpack.c.l.b16 %v174
  %v1478 = vunpack.c.l.b16 %v175
  %v1479 = vunpack.c.l.b16 %v176
  %v1480 = vunpack.c.l.b16 %v177
  %v1481 = vunpack.c.l.b16 %v178
  %v1482 = vunpack.c.l.b16 %v179
  %v1483 = vunpack.c.l.b16 %v180
  %v1484 = vunpack.c.l.b16 %v181
  %v1485 = vunpack.c.l.b16 %v182
  %v1486 = vunpack.c.l.b16 %v183
  %v1487 = vunpack.c.l.b16 %v184
  %v1488 = vunpack.c.l.b16 %v185
  %v1489 = vunpack.c.l.b16 %v186
  %v1490 = vunpack.c.l.b16 %v187
  %v1491 = vunpack.c.l.b16 %v188
  %v1492 = vunpack.c.l.b16 %v189
  %v1493 = vunpack.c.l.b16 %v190
  %v1494 = vunpack.c.l.b16 %v191
  %v1495 = vunpack.c.l.b16 %v192
  %v1496 = vunpack.c.l.b16 %v193
  %v1497 = vunpack.c.l.b16 %v194
  %v1498 = vunpack.c.l.b16 %v195
  %v1499 = vunpack.c.l.b16 %v196
  %v1500 = vunpack.c.l.b16 %v197
  %v1501 = vunpack.c.l.b16 %v198
  %v1502 = vunpack.c.l.b16 %v199
  %v1503 = vunpack.c.l.b16 %v200
  %v1504 = vunpack.c.l.b16 %v201
  %v1505 = vunpack.c.l.b16 %v202
  %v1506 = vunpack.c.l.b16 %v203
  %v1507 = vunpack.c.l.b16 %v204
  %v1508 = vunpack.c.l.b16 %v205
  %v1509 = vunpack.c.l.b16 %v206
  %v1510 = vunpack.c.l.b16 %v207
  %v1511 = vunpack.c.l.b16 %v208
  %v1512 = vunpack.c.l.b16 %v209
  %v1513 = vunpack.c.l.b16 %v210
  %v1514 = vunpack.c.l.b16 %v211
  %v1515 = vunpack.c.l.b16 %v212
  %v1516 = vunpack.c.l.b16 %v213
  %v1517 = vunpack.c.l.b16 %v214
  %v1518 = vunpack.c.l.b16 %v215
  %v1519 = vunpack.c.l.b16 %v216
  %v1520 = vunpack.c.l.b16 %v217
  %v1521 = vunpack.c.l.b16 %v218
  %v1522 = vunpack.c.l.b16 %v219
  %v1523 = vunpack.c.l.b16 %v220
  %v1524 = vunpack.c.l.b16 %v221
  %v1525 = vunpack.c.l.b16 %v222
  %v1526 = vunpack.c.l.b16 %v223
  %v1527 = vunpack.c.l.b16 %v224
  %v1528 = vunpack.c.l.b16 %v225
  %v1529 = vunpack.c.l.b16 %v226
  %v1530 = vunpack.c.l.b16 %v227
  %v1531 = vunpack.c.l.b16 %v228
  %v1532 = vunpack.c.l.b16 %v229
  %v1533 = vunpack.c.l.b16 %v230
  %v1534 = vunpack.c.l.b16 %v231
  %v1535 = vunpack.c.l.b16 %v232
  %v1536 = vunpack.c.l.b16 %v233
  %v1537 = vunpack.c.l.b16 %v234
  %v1538 = vunpack.c.l.b16 %v235
  %v1539 = vunpack.c.l.b16 %v236
  %v1540 = vunpack.c.l.b16 %v237
  %v1541 = vunpack.c.l.b16 %v238
  %v1542 = vunpack.c.l.b16 %v239
  %v1543 = vunpack.c.l.b16 %v240
  %v1544 = vunpack.c.l.b16 %v241
  %v1545 = vunpack.c.l.b16 %v242
  %v1546 = vunpack.c.l.b16 %v243
  %v1547 = vunpack.c.l.b16 %v244
  %v1548 = vunpack.c.l.b16 %v245
  %v1549 = vunpack.c.l.b16 %v246
  %v1550 = vunpack.c.l.b16 %v247
  %v1551 = vunpack.c.l.b16 %v248
  %v1552 = vunpack.c.l.b16 %v249
  %v1553 = vunpack.c.l.b16 %v250
  %v1554 = vunpack.c.l.b16 %v251
  %v1555 = vunpack.c.l.b16 %v252
  %v1556 = vunpack.c.l.b16 %v253
  %v1557 = vunpack.c.l.b16 %v254
  %v1558 = vunpack.c.l.b16 %v255
  %v1559 = vunpack.c.l.b16 %v256
  %v1560 = vunpack.c.l.b16 %v257
  %v1561 = vunpack.c.l.b16 %v258
  %v1562 = vunpack.c.l.b16 %v259
  %v1563 = vunpack.c.l.b16 %v260
  %v1564 = vunpack.c.l.b16 %v261
  %v1565 = vunpack.c.l.b16 %v262
  %v1566 = vunpack.c.l.b16 %v263
  %v1567 = vunpack.c.l.b16 %v264
  %v1568 = vunpack.c.l.b16 %v265
  %v1569 = vunpack.c.l.b16 %v266
  %v1570 = vunpack.c.l.b16 %v267
  %v1571 = vunpack.c.l.b16 %v268
  %v1572 = vunpack.c.l.b16 %v269
  %v1573 = vunpack.c.l.b16 %v270
  %v1574 = vunpack.c.l.b16 %v271
  %v1575 = vunpack.c.l.b16 %v272
  %v1576 = vunpack.c.l.b16 %v273
  %v1577 = vunpack.c.l.b16 %v274
  %v1578 = vunpack.c.l.b16 %v275
  %v1579 = vunpack.c.l.b16 %v276
  %v1580 = vunpack.c.l.b16 %v277
  %v1581 = vunpack.c.l.b16 %v278
  %v1582 = vunpack.c.l.b16 %v279
  %v1583 = vunpack.c.l.b16 %v280
  %v1584 = vunpack.c.l.b16 %v281
  %v1585 = vunpack.c.l.b16 %v282
  %v1586 = vunpack.c.l.b16 %v283
  %v1587 = vunpack.c.l.b16 %v284
  %v1588 = vunpack.c.l.b16 %v285
  %v1589 = vunpack.c.l.b16 %v286
  %v1590 = vunpack.c.l.b16 %v287
  %v1591 = vunpack.c.l.b16 %v288
  %v1592 = vunpack.c.l.b16 %v289
  %v1593 = vunpack.c.l.b16 %v290
  %v1594 = vunpack.c.l.b16 %v291
  %v1595 = vunpack.c.l.b16 %v292
  %v1596 = vunpack.c.l.b16 %v293
  %v1597 = vunpack.c.l.b16 %v294
  %v1598 = vunpack.c.l.b16 %v295
  %v1599 = vunpack.c.l.b16 %v296
  %v1600 = vunpack.c.l.b16 %v297
  %v1601 = vunpack.c.l.b16 %v298
  %v1602 = vunpack.c.l.b16 %v299
  %v1603 = vunpack.c.l.b16 %v300
  %v1604 = vunpack.c.l.b16 %v301
  %v1605 = vunpack.c.l.b16 %v302
  %v1606 = vunpack.c.l.b16 %v303
  %v1607 = vunpack.c.l.b16 %v304
  %v1608 = vunpack.c.l.b16 %v305
  %v1609 = vunpack.c.l.b16 %v306
  %v1610 = vunpack.c.l.b16 %v307
  %v1611 = vunpack.c.l.b16 %v308
  %v1612 = vunpack.c.l.b16 %v309
  %v1613 = vunpack.c.l.b16 %v310
  %v1614 = vunpack.c.l.b16 %v311
  %v1615 = vunpack.c.l.b16 %v312
  %v1616 = vunpack.c.l.b16 %v313
  %v1617 = vunpack.c.l.b16 %v314
  %v1618 = vunpack.c.l.b16 %v315
  %v1619 = vunpack.c.l.b16 %v316
  %v1620 = vunpack.c.l.b16 %v317
  %v1621 = vunpack.c.l.b16 %v318
  %v1622 = vunpack.c.l.b16 %v319
  %v1623 = vunpack.c.l.b16 %v320
  %v1624 = vunpack.c.l.b16 %v321
  %v1625 = vunpack.c.l.b16 %v322
  %v1626 = vunpack.c.l.b16 %v323
  %v1627 = vunpack.c.l.b16 %v324
  %v1628 = vunpack.c.l.b16 %v325
  %v1629 = vunpack.c.l.b16 %v326
  %v1630 = vunpack.c.l.b16 %v327
  %v1631 = vunpack.c.l.b16 %v328
  %v1632 = vunpack.c.l.b16 %v329
  %v1633 = vunpack.c.l.b16 %v330
  %v1634 = vunpack.c.l.b16 %v331
  %v1635 = vunpack.c.l.b16 %v332
  %v1636 = vunpack.c.l.b16 %v333
  %v1637 = vunpack.c.l.b16 %v334
  %v1638 = vunpack.c.l.b16 %v335
  %v1639 = vunpack.c.l.b16 %v336
  %v1640 = vunpack.c.l.b16 %v337
  %v1641 = vunpack.c.l.b16 %v338
  %v1642 = vunpack.c.l.b16 %v339
  %v1643 = vunpack.c.l.b16 %v340
  %v1644 = vunpack.c.l.b16 %v341
  %v1645 = vunpack.c.l.b16 %v342
  %v1646 = vunpack.c.l.b16 %v343
  %v1647 = vunpack.c.l.b16 %v344
  %v1648 = vunpack.c.l.b16 %v345
  %v1649 = vunpack.c.l.b16 %v346
  %v1650 = vunpack.c.l.b16 %v347
  %v1651 = vunpack.c.l.b16 %v348
  %v1652 = vunpack.c.l.b16 %v349
  %v1653 = vunpack.c.l.b16 %v350
  %v1654 = vunpack.c.l.b16 %v351
  %v1655 = vunpack.c.l.b16 %v352
  %v1656 = vunpack.c.l.b16 %v353
  %v1657 = vunpack.c.l.b16 %v354
  %v1658 = vunpack.c.l.b16 %v355
  %v1659 = vunpack.c.l.b16 %v356
  %v1660 = vunpack.c.l.b16 %v357
  %v1661 = vunpack.c.l.b16 %v358
  %v1662 = vunpack.c.l.b16 %v359
  %v1663 = vunpack.c.l.b16 %v360
  %v1664 = vunpack.c.l.b16 %v361
  %v1665 = vunpack.c.l.b16 %v362
  %v1666 = vunpack.c.l.b16 %v363
  %v1667 = vunpack.c.l.b16 %v364
  %v1668 = vunpack.c.l.b16 %v365
  %v1669 = vunpack.c.l.b16 %v366
  %v1670 = vunpack.c.l.b16 %v367
  %v1671 = vunpack.c.l.b16 %v368
  %v1672 = vunpack.c.l.b16 %v369
  %v1673 = vunpack.c.l.b16 %v370
  %v1674 = vunpack.c.l.b16 %v371
  %v1675 = vunpack.c.l.b16 %v372
  %v1676 = vunpack.c.l.b16 %v373
  %v1677 = vunpack.c.l.b16 %v374
  %v1678 = vunpack.c.l.b16 %v375
  %v1679 = vunpack.c.l.b16 %v376
  %v1680 = vunpack.c.l.b16 %v377
  %v1681 = vunpack.c.l.b16 %v378
  %v1682 = vunpack.c.l.b16 %v379
  %v1683 = vunpack.c.l.b16 %v380
  %v1684 = vunpack.c.l.b16 %v381
  %v1685 = vunpack.c.l.b16 %v382
  %v1686 = vunpack.c.l.b16 %v383
  %v1687 = vunpack.c.l.b16 %v384
  %v1688 = vunpack.c.l.b16 %v385
  %v1689 = vunpack.c.l.b16 %v386
  %v1690 = vunpack.c.l.b16 %v387
  %v1691 = vunpack.c.l.b16 %v388
  %v1692 = vunpack.c.l.b16 %v389
  %v1693 = vunpack.c.l.b16 %v390
  %v1694 = vunpack.c.l.b16 %v391
  %v1695 = vunpack.c.l.b16 %v392
  %v1696 = vunpack.c.l.b16 %v393
  %v1697 = vunpack.c.l.b16 %v394
  %v1698 = vunpack.c.l.b16 %v395
  %v1699 = vunpack.c.l.b16 %v396
  %v1700 = vunpack.c.l.b16 %v397
  %v1701 = vunpack.c.l.b16 %v398
  %v1702 = vunpack.c.l.b16 %v399
  %v1703 = vunpack.c.l.b16 %v400
  %v1704 = vunpack.c.l.b16 %v401
  %v1705 = vunpack.c.l.b16 %v402
  %v1706 = vunpack.c.l.b16 %v403
  %v1707 = vunpack.c.l.b16 %v404
  %v1708 = vunpack.c.l.b16 %v405
  %v1709 = vunpack.c.l.b16 %v406
  %v1710 = vunpack.c.l.b16 %v407
  %v1711 = vunpack.c.l.b16 %v408
  %v1712 = vunpack.c.l.b16 %v409
  %v1713 = vunpack.c.l.b16 %v410
  %v1714 = vunpack.c.l.b16 %v411
  %v1715 = vunpack.c.l.b16 %v412
  %v1716 = vunpack.c.l.b16 %v413
  %v1717 = vunpack.c.l.b16 %v414
  %v1718 = vunpack.c.l.b16 %v415
  %v1719 = vunpack.c.l.b16 %v416
  %v1720 = vunpack.c.l.b16 %v417
  %v1721 = vunpack.c.l.b16 %v418
  %v1722 = vunpack.c.l.b16 %v419
  %v1723 = vunpack.c.l.b16 %v420
  %v1724 = vunpack.c.l.b16 %v421
  %v1725 = vunpack.c.l.b16 %v422
  %v1726 = vunpack.c.l.b16 %v423
  %v1727 = vunpack.c.l.b16 %v424
  %v1728 = vunpack.c.l.b16 %v425
  %v1729 = vunpack.c.l.b16 %v426
  %v1730 = vunpack.c.l.b16 %v427
  %v1731 = vunpack.c.l.b16 %v428
  %v1732 = vunpack.c.l.b16 %v429
  %v1733 = vunpack.c.l.b16 %v430
  %v1734 = vunpack.c.l.b16 %v431
  %v1735 = vunpack.c.l.b16 %v432
  %v1736 = vunpack.c.l.b16 %v433
  %v1737 = vunpack.c.l.b16 %v434
  %v1738 = vunpack.c.l.b16 %v435
  %v1739 = vunpack.c.l.b16 %v436
  %v1740 = vunpack.c.l.b16 %v437
  %v1741 = vunpack.c.l.b16 %v438
  %v1742 = vunpack.c.l.b16 %v439
  %v1743 = vunpack.c.l.b16 %v440
  %v1744 = vunpack.c.l.b16 %v441
  %v1745 = vunpack.c.l.b16 %v442
  %v1746 = vunpack.c.l.b16 %v443
  %v1747 = vunpack.c.l.b16 %v444
  %v1748 = vunpack.c.l.b16 %v445
  %v1749 = vunpack.c.l.b16 %v446
  %v1750 = vunpack.c.l.b16 %v447
  %v1751 = vunpack.c.l.b16 %v448
  %v1752 = vunpack.c.l.b16 %v449
  %v1753 = vunpack.c.l.b16 %v450
  %v1754 = vunpack.c.l.b16 %v451
  %v1755 = vunpack.c.l.b16 %v452
  %v1756 = vunpack.c.l.b16 %v453
  %v1757 = vunpack.c.l.b16 %v454
  %v1758 = vunpack.c.l.b16 %v455
  %v1759 = vunpack.c.l.b16 %v456
  %v1760 = vunpack.c.l.b16 %v457
  %v1761 = vunpack.c.l.b16 %v458
  %v1762 = vunpack.c.l.b16 %v459
  %v1763 = vunpack.c.l.b16 %v460
  %v1764 = vunpack.c.l.b16 %v461
  %v1765 = vunpack.c.l.b16 %v462
  %v1766 = vunpack.c.l.b16 %v463
  %v1767 = vunpack.c.l.b16 %v464
  %v1768 = vunpack.c.l.b16 %v465
  %v1769 = vunpack.c.l.b16 %v466
  %v1770 = vunpack.c.l.b16 %v467
  %v1771 = vunpack.c.l.b16 %v468
  %v1772 = vunpack.c.l.b16 %v469
  %v1773 = vunpack.c.l.b16 %v470
  %v1774 = vunpack.c.l.b16 %v471
  %v1775 = vunpack.c.l.b16 %v472
  %v1776 = vunpack.c.l.b16 %v473
  %v1777 = vunpack.c.l.b16 %v474
  %v1778 = vunpack.c.l.b16 %v475
  %v1779 = vunpack.c.l.b16 %v476
  %v1780 = vunpack.c.l.b16 %v477
  %v1781 = vunpack.c.l.b16 %v478
  %v1782 = vunpack.c.l.b16 %v479
  %v1783 = vunpack.c.l.b16 %v480
  %v1784 = vunpack.c.l.b16 %v481
  %v1785 = vunpack.c.l.b16 %v482
  %v1786 = vunpack.c.l.b16 %v483
  %v1787 = vunpack.c.l.b16 %v484
  %v1788 = vunpack.c.l.b16 %v485
  %v1789 = vunpack.c.l.b16 %v486
  %v1790 = vunpack.c.l.b16 %v487
  %v1791 = vunpack.c.l.b16 %v488
  %v1792 = vunpack.c.l.b16 %v489
  %v1793 = vunpack.c.l.b16 %v490
  %v1794 = vunpack.c.l.b16 %v491
  %v1795 = vunpack.c.l.b16 %v492
  %v1796 = vunpack.c.l.b16 %v493
  %v1797 = vunpack.c.l.b16 %v494
  %v1798 = vunpack.c.l.b16 %v495
  %v1799 = vunpack.c.l.b16 %v496
  %v1800 = vunpack.c.l.b16 %v497
  %v1801 = vunpack.c.l.b16 %v498
  %v1802 = vunpack.c.l.b16 %v499
  %v1803 = vunpack.c.l.b16 %v500
  %v1804 = vunpack.c.l.b16 %v501
  %v1805 = vunpack.c.l.b16 %v502
  %v1806 = vunpack.c.l.b16 %v503
  %v1807 = vunpack.c.l.b16 %v504
  %v1808 = vunpack.c.l.b16 %v505
  %v1809 = vunpack.c.l.b16 %v506
  %v1810 = vunpack.c.l.b16 %v507
  %v1811 = vunpack.c.l.b16 %v508
  %v1812 = vunpack.c.l.b16 %v509
  %v1813 = vunpack.c.l.b16 %v510
  %v1814 = vunpack.c.l.b16 %v511
  %v1815 = vunpack.c.l.b16 %v512
  %v1816 = vunpack.c.l.b16 %v513
  %v1817 = vunpack.c.l.b16 %v514
  %v1818 = vunpack.c.l.b16 %v515
  %v1819 = vunpack.c.l.b16 %v516
  %v1820 = vunpack.c.l.b16 %v517
  %v1821 = vunpack.c.l.b16 %v518
  %v1822 = vunpack.c.l.b16 %v519
  %v1823 = vunpack.c.l.b16 %v520
  %v1824 = vunpack.c.l.b16 %v521
  %v1825 = vunpack.c.l.b16 %v522
  %v1826 = vunpack.c.l.b16 %v523
  %v1827 = vunpack.c.l.b16 %v524
  %v1828 = vunpack.c.l.b16 %v525
  %v1829 = vunpack.c.l.b16 %v526
  %v1830 = vunpack.c.l.b16 %v527
  %v1831 = vunpack.c.l.b16 %v528
  %v1832 = vunpack.c.l.b16 %v529
  %v1833 = vunpack.c.l.b16 %v530
  %v1834 = vunpack.c.l.b16 %v531
  %v1835 = vunpack.c.l.b16 %v532
  %v1836 = vunpack.c.l.b16 %v533
  %v1837 = vunpack.c.l.b16 %v534
  %v1838 = vunpack.c.l.b16 %v535
  %v1839 = vunpack.c.l.b16 %v536
  %v1840 = vunpack.c.l.b16 %v537
  %v1841 = vunpack.c.l.b16 %v538
  %v1842 = vunpack.c.l.b16 %v539
  %v1843 = vunpack.c.l.b16 %v540
  %v1844 = vunpack.c.l.b16 %v541
  %v1845 = vunpack.c.l.b16 %v542
  %v1846 = vunpack.c.l.b16 %v543
  %v1847 = vunpack.c.l.b16 %v544
  %v1848 = vunpack.c.l.b16 %v545
  %v1849 = vunpack.c.l.b16 %v546
  %v1850 = vunpack.c.l.b16 %v547
  %v1851 = vunpack.c.l.b16 %v548
  %v1852 = vunpack.c.l.b16 %v549
  %v1853 = vunpack.c.l.b16 %v550
  %v1854 = vunpack.c.l.b16 %v551
  %v1855 = vunpack.c.l.b16 %v552
  %v1856 = vunpack.c.l.b16 %v553
  %v1857 = vunpack.c.l.b16 %v554
  %v1858 = vunpack.c.l.b16 %v555
  %v1859 = vunpack.c.l.b16 %v556
  %v1860 = vunpack.c.l.b16 %v557
  %v1861 = vunpack.c.l.b16 %v558
  %v1862 = vunpack.c.l.b16 %v559
  %v1863 = vunpack.c.l.b16 %v560
  %v1864 = vunpack.c.l.b16 %v561
  %v1865 = vunpack.c.l.b16 %v562
  %v1866 = vunpack.c.l.b16 %v563
  %v1867 = vunpack.c.l.b16 %v564
  %v1868 = vunpack.c.l.b16 %v565
  %v1869 = vunpack.c.l.b16 %v566
  %v1870 = vunpack.c.l.b16 %v567
  %v1871 = vunpack.c.l.b16 %v568
  %v1872 = vunpack.c.l.b16 %v569
  %v1873 = vunpack.c.l.b16 %v570
  %v1874 = vunpack.c.l.b16 %v571
  %v1875 = vunpack.c.l.b16 %v572
  %v1876 = vunpack.c.l.b16 %v573
  %v1877 = vunpack.c.l.b16 %v574
  %v1878 = vpack.c.b16 %v1367, %v1366
  %v1879 = vpack.c.b16 %v1369, %v1368
  %v1880 = vpack.c.b16 %v1371, %v1370
  %v1881 = vpack.c.b16 %v1373, %v1372
  %v1882 = vpack.c.b16 %v1375, %v1374
  %v1883 = vpack.c.b16 %v1377, %v1376
  %v1884 = vpack.c.b16 %v1379, %v1378
  %v1885 = vpack.c.b16 %v1381, %v1380
  %v1886 = vpack.c.b16 %v1383, %v1382
  %v1887 = vpack.c.b16 %v1385, %v1384
  %v1888 = vpack.c.b16 %v1387, %v1386
  %v1889 = vpack.c.b16 %v1389, %v1388
  %v1890 = vpack.c.b16 %v1391, %v1390
  %v1891 = vpack.c.b16 %v1393, %v1392
  %v1892 = vpack.c.b16 %v1395, %v1394
  %v1893 = vpack.c.b16 %v1397, %v1396
  %v1894 = vpack.c.b16 %v1399, %v1398
  %v1895 = vpack.c.b16 %v1401, %v1400
  %v1896 = vpack.c.b16 %v1403, %v1402
  %v1897 = vpack.c.b16 %v1405, %v1404
  %v1898 = vpack.c.b16 %v1407, %v1406
  %v1899 = vpack.c.b16 %v1409, %v1408
  %v1900 = vpack.c.b16 %v1411, %v1410
  %v1901 = vpack.c.b16 %v1413, %v1412
  %v1902 = vpack.c.b16 %v1415, %v1414
  %v1903 = vpack.c.b16 %v1417, %v1416
  %v1904 = vpack.c.b16 %v1419, %v1418
  %v1905 = vpack.c.b16 %v1421, %v1420
  %v1906 = vpack.c.b16 %v1423, %v1422
  %v1907 = vpack.c.b16 %v1425, %v1424
  %v1908 = vpack.c.b16 %v1427, %v1426
  %v1909 = vpack.c.b16 %v1429, %v1428
  %v1910 = vpack.c.b16 %v1431, %v1430
  %v1911 = vpack.c.b16 %v1433, %v1432
  %v1912 = vpack.c.b16 %v1435, %v1434
  %v1913 = vpack.c.b16 %v1437, %v1436
  %v1914 = vpack.c.b16 %v1439, %v1438
  %v1915 = vpack.c.b16 %v1441, %v1440
  %v1916 = vpack.c.b16 %v1443, %v1442
  %v1917 = vpack.c.b16 %v1445, %v1444
  %v1918 = vpack.c.b16 %v1447, %v1446
  %v1919 = vpack.c.b16 %v1449, %v1448
  %v1920 = vpack.c.b16 %v1451, %v1450
  %v1921 = vpack.c.b16 %v1453, %v1452
  %v1922 = vpack.c.b16 %v1455, %v1454
  %v1923 = vpack.c.b16 %v1457, %v1456
  %v1924 = vpack.c.b16 %v1459, %v1458
  %v1925 = vpack.c.b16 %v1461, %v1460
  %v1926 = vpack.c.b16 %v1463, %v1462
  %v1927 = vpack.c.b16 %v1465, %v1464
  %v1928 = vpack.c.b16 %v1467, %v1466
  %v1929 = vpack.c.b16 %v1469, %v1468
  %v1930 = vpack.c.b16 %v1471, %v1470
  %v1931 = vpack.c.b16 %v1473, %v1472
  %v1932 = vpack.c.b16 %v1475, %v1474
  %v1933 = vpack.c.b16 %v1477, %v1476
  %v1934 = vpack.c.b16 %v1479, %v1478
  %v1935 = vpack.c.b16 %v1481, %v1480
  %v1936 = vpack.c.b16 %v1483, %v1482
  %v1937 = vpack.c.b16 %v1485, %v1484
  %v1938 = vpack.c.b16 %v1487, %v1486
  %v1939 = vpack.c.b16 %v1489, %v1488
  %v1940 = vpack.c.b16 %v1491, %v1490
  %v1941 = vpack.c.b16 %v1493, %v1492
  %v1942 = vpack.c.b16 %v1495, %v1494
  %v1943 = vpack.c.b16 %v1497, %v1496
  %v1944 = vpack.c.b16 %v1499, %v1498
  %v1945 = vpack.c.b16 %v1501, %v1500
  %v1946 = vpack.c.b16 %v1503, %v1502
  %v1947 = vpack.c.b16 %v1505, %v1504
  %v1948 = vpack.c.b16 %v1507, %v1506
  %v1949 = vpack.c.b16 %v1509, %v1508
  %v1950 = vpack.c.b16 %v1511, %v1510
  %v1951 = vpack.c.b16 %v1513, %v1512
  %v1952 = vpack.c.b16 %v1515, %v1514
  %v1953 = vpack.c.b16 %v1517, %v1516
  %v1954 = vpack.c.b16 %v1519, %v1518
  %v1955 = vpack.c.b16 %v1521, %v1520
  %v1956 = vpack.c.b16 %v1523, %v1522
  %v1957 = vpack.c.b16 %v1525, %v1524
  %v1958 = vpack.c.b16 %v1527, %v1526
  %v1959 = vpack.c.b16 %v1529, %v1528
  %v1960 = vpack.c.b16 %v1531, %v1530
  %v1961 = vpack.c.b16 %v1533, %v1532
  %v1962 = vpack.c.b16 %v1535, %v1534
  %v1963 = vpack.c.b16 %v1537, %v1536
  %v1964 = vpack.c.b16 %v1539, %v1538
  %v1965 = vpack.c.b16 %v1541, %v1540
  %v1966 = vpack.c.b16 %v1543, %v1542
  %v1967 = vpack.c.b16 %v1545, %v1544
  %v1968 = vpack.c.b16 %v1547, %v1546
  %v1969 = vpack.c.b16 %v1549, %v1548
  %v1970 = vpack.c.b16 %v1551, %v1550
  %v1971 = vpack.c.b16 %v1553, %v1552
  %v1972 = vpack.c.b16 %v1555, %v1554
  %v1973 = vpack.c.b16 %v1557, %v1556
  %v1974 = vpack.c.b16 %v1559, %v1558
  %v1975 = vpack.c.b16 %v1561, %v1560
  %v1976 = vpack.c.b16 %v1563, %v1562
  %v1977 = vpack.c.b16 %v1565, %v1564
  %v1978 = vpack.c.b16 %v1567, %v1566
  %v1979 = vpack.c.b16 %v1569, %v1568
  %v1980 = vpack.c.b16 %v1571, %v1570
  %v1981 = vpack.c.b16 %v1573, %v1572
  %v1982 = vpack.c.b16 %v1575, %v1574
  %v1983 = vpack.c.b16 %v1577, %v1576
  %v1984 = vpack.c.b16 %v1579, %v1578
  %v1985 = vpack.c.b16 %v1581, %v1580
  %v1986 = vpack.c.b16 %v1583, %v1582
  %v1987 = vpack.c.b16 %v1585, %v1584
  %v1988 = vpack.c.b16 %v1587, %v1586
  %v1989 = vpack.c.b16 %v1589, %v1588
  %v1990 = vpack.c.b16 %v1591, %v1590
  %v1991 = vpack.c.b16 %v1593, %v1592
  %v1992 = vpack.c.b16 %v1595, %v1594
  %v1993 = vpack.c.b16 %v1597, %v1596
  %v1994 = vpack.c.b16 %v1599, %v1598
  %v1995 = vpack.c.b16 %v1601, %v1600
  %v1996 = vpack.c.b16 %v1603, %v1602
  %v1997 = vpack.c.b16 %v1605, %v1604
  %v1998 = vpack.c.b16 %v1607, %v1606
  %v1999 = vpack.c.b16 %v1609, %v1608
  %v2000 = vpack.c.b16 %v1611, %v1610
  %v2001 = vpack.c.b16 %v1613, %v1612
  %v2002 = vpack.c.b16 %v1615, %v1614
  %v2003 = vpack.c.b16 %v1617, %v1616
  %v2004 = vpack.c.b16 %v1619, %v1618
  %v2005 = vpack.c.b16 %v1621, %v1620
  %v2006 = vpack.c.b16 %v1623, %v1622
  %v2007 = vpack.c.b16 %v1625, %v1624
  %v2008 = vpack.c.b16 %v1627, %v1626
  %v2009 = vpack.c.b16 %v1629, %v1628
  %v2010 = vpack.c.b16 %v1631, %v1630
  %v2011 = vpack.c.b16 %v1633, %v1632
  %v2012 = vpack.c.b16 %v1635, %v1634
  %v2013 = vpack.c.b16 %v1637, %v1636
  %v2014 = vpack.c.b16 %v1639, %v1638
  %v2015 = vpack.c.b16 %v1641, %v1640
  %v2016 = vpack.c.b16 %v1643, %v1642
  %v2017 = vpack.c.b16 %v1645, %v1644
  %v2018 = vpack.c.b16 %v1647, %v1646
  %v2019 = vpack.c.b16 %v1649, %v1648
  %v2020 = vpack.c.b16 %v1651, %v1650
  %v2021 = vpack.c.b16 %v1653, %v1652
  %v2022 = vpack.c.b16 %v1655, %v1654
  %v2023 = vpack.c.b16 %v1657, %v1656
  %v2024 = vpack.c.b16 %v1659, %v1658
  %v2025 = vpack.c.b16 %v1661, %v1660
  %v2026 = vpack.c.b16 %v1663, %v1662
  %v2027 = vpack.c.b16 %v1665, %v1664
  %v2028 = vpack.c.b16 %v1667, %v1666
  %v2029 = vpack.c.b16 %v1669, %v1668
  %v2030 = vpack.c.b16 %v1671, %v1670
  %v2031 = vpack.c.b16 %v1673, %v1672
  %v2032 = vpack.c.b16 %v1675, %v1674
  %v2033 = vpack.c.b16 %v1677, %v1676
  %v2034 = vpack.c.b16 %v1679, %v1678
  %v2035 = vpack.c.b16 %v1681, %v1680
  %v2036 = vpack.c.b16 %v1683, %v1682
  %v2037 = vpack.c.b16 %v1685, %v1684
  %v2038 = vpack.c.b16 %v1687, %v1686
  %v2039 = vpack.c.b16 %v1689, %v1688
  %v2040 = vpack.c.b16 %v1691, %v1690
  %v2041 = vpack.c.b16 %v1693, %v1692
  %v2042 = vpack.c.b16 %v1695, %v1694
  %v2043 = vpack.c.b16 %v1697, %v1696
  %v2044 = vpack.c.b16 %v1699, %v1698
  %v2045 = vpack.c.b16 %v1701, %v1700
  %v2046 = vpack.c.b16 %v1703, %v1702
  %v2047 = vpack.c.b16 %v1705, %v1704
  %v2048 = vpack.c.b16 %v1707, %v1706
  %v2049 = vpack.c.b16 %v1709, %v1708
  %v2050 = vpack.c.b16 %v1711, %v1710
  %v2051 = vpack.c.b16 %v1713, %v1712
  %v2052 = vpack.c.b16 %v1715, %v1714
  %v2053 = vpack.c.b16 %v1717, %v1716
  %v2054 = vpack.c.b16 %v1719, %v1718
  %v2055 = vpack.c.b16 %v1721, %v1720
  %v2056 = vpack.c.b16 %v1723, %v1722
  %v2057 = vpack.c.b16 %v1725, %v1724
  %v2058 = vpack.c.b16 %v1727, %v1726
  %v2059 = vpack.c.b16 %v1729, %v1728
  %v2060 = vpack.c.b16 %v1731, %v1730
  %v2061 = vpack.c.b16 %v1733, %v1732
  %v2062 = vpack.c.b16 %v1735, %v1734
  %v2063 = vpack.c.b16 %v1737, %v1736
  %v2064 = vpack.c.b16 %v1739, %v1738
  %v2065 = vpack.c.b16 %v1741, %v1740
  %v2066 = vpack.c.b16 %v1743, %v1742
  %v2067 = vpack.c.b16 %v1745, %v1744
  %v2068 = vpack.c.b16 %v1747, %v1746
  %v2069 = vpack.c.b16 %v1749, %v1748
  %v2070 = vpack.c.b16 %v1751, %v1750
  %v2071 = vpack.c.b16 %v1753, %v1752
  %v2072 = vpack.c.b16 %v1755, %v1754
  %v2073 = vpack.c.b16 %v1757, %v1756
  %v2074 = vpack.c.b16 %v1759, %v1758
  %v2075 = vpack.c.b16 %v1761, %v1760
  %v2076 = vpack.c.b16 %v1763, %v1762
  %v2077 = vpack.c.b16 %v1765, %v1764
  %v2078 = vpack.c.b16 %v1767, %v1766
  %v2079 = vpack.c.b16 %v1769, %v1768
  %v2080 = vpack.c.b16 %v1771, %v1770
  %v2081 = vpack.c.b16 %v1773, %v1772
  %v2082 = vpack.c.b16 %v1775, %v1774
  %v2083 = vpack.c.b16 %v1777, %v1776
  %v2084 = vpack.c.b16 %v1779, %v1778
  %v2085 = vpack.c.b16 %v1781, %v1780
  %v2086 = vpack.c.b16 %v1783, %v1782
  %v2087 = vpack.c.b16 %v1785, %v1784
  %v2088 = vpack.c.b16 %v1787, %v1786
  %v2089 = vpack.c.b16 %v1789, %v1788
  %v2090 = vpack.c.b16 %v1791, %v1790
  %v2091 = vpack.c.b16 %v1793, %v1792
  %v2092 = vpack.c.b16 %v1795, %v1794
  %v2093 = vpack.c.b16 %v1797, %v1796
  %v2094 = vpack.c.b16 %v1799, %v1798
  %v2095 = vpack.c.b16 %v1801, %v1800
  %v2096 = vpack.c.b16 %v1803, %v1802
  %v2097 = vpack.c.b16 %v1805, %v1804
  %v2098 = vpack.c.b16 %v1807, %v1806
  %v2099 = vpack.c.b16 %v1809, %v1808
  %v2100 = vpack.c.b16 %v1811, %v1810
  %v2101 = vpack.c.b16 %v1813, %v1812
  %v2102 = vpack.c.b16 %v1815, %v1814
  %v2103 = vpack.c.b16 %v1817, %v1816
  %v2104 = vpack.c.b16 %v1819, %v1818
  %v2105 = vpack.c.b16 %v1821, %v1820
  %v2106 = vpack.c.b16 %v1823, %v1822
  %v2107 = vpack.c.b16 %v1825, %v1824
  %v2108 = vpack.c.b16 %v1827, %v1826
  %v2109 = vpack.c.b16 %v1829, %v1828
  %v2110 = vpack.c.b16 %v1831, %v1830
  %v2111 = vpack.c.b16 %v1833, %v1832
  %v2112 = vpack.c.b16 %v1835, %v1834
  %v2113 = vpack.c.b16 %v1837, %v1836
  %v2114 = vpack.c.b16 %v1839, %v1838
  %v2115 = vpack.c.b16 %v1841, %v1840
  %v2116 = vpack.c.b16 %v1843, %v1842
  %v2117 = vpack.c.b16 %v1845, %v1844
  %v2118 = vpack.c.b16 %v1847, %v1846
  %v2119 = vpack.c.b16 %v1849, %v1848
  %v2120 = vpack.c.b16 %v1851, %v1850
  %v2121 = vpack.c.b16 %v1853, %v1852
  %v2122 = vpack.c.b16 %v1855, %v1854
  %v2123 = vpack.c.b16 %v1857, %v1856
  %v2124 = vpack.c.b16 %v1859, %v1858
  %v2125 = vpack.c.b16 %v1861, %v1860
  %v2126 = vpack.c.b16 %v1863, %v1862
  %v2127 = vpack.c.b16 %v1865, %v1864
  %v2128 = vpack.c.b16 %v1867, %v1866
  %v2129 = vpack.c.b16 %v1869, %v1868
  %v2130 = vpack.c.b16 %v1871, %v1870
  %v2131 = vpack.c.b16 %v1873, %v1872
  %v2132 = vpack.c.b16 %v1875, %v1874
  %v2133 = vpack.c.b16 %v1877, %v1876
  %2390 = vmatprep.subr.bf16.mxu0 0
  %2391 = vmatpush1.bf16.msra.mxu0 %v1878
  %2392 = vmatprep.subr.bf16.mxu0 0
  %2393 = vmatpush1.bf16.msra.mxu0 %v1879
  %2394 = vmatprep.subr.bf16.mxu0 0
  %2395 = vmatpush1.bf16.msra.mxu0 %v1880
  %2396 = vmatprep.subr.bf16.mxu0 0
  %2397 = vmatpush1.bf16.msra.mxu0 %v1881
  %2398 = vmatprep.subr.bf16.mxu0 0
  %2399 = vmatpush1.bf16.msra.mxu0 %v1882
  %2400 = vmatprep.subr.bf16.mxu0 0
  %2401 = vmatpush1.bf16.msra.mxu0 %v1883
  %2402 = vmatprep.subr.bf16.mxu0 0
  %2403 = vmatpush1.bf16.msra.mxu0 %v1884
  %2404 = vmatprep.subr.bf16.mxu0 0
  %2405 = vmatpush1.bf16.msra.mxu0 %v1885
  %2406 = vmatprep.subr.bf16.mxu0 0
  %2407 = vmatpush1.bf16.msra.mxu0 %v1886
  %2408 = vmatprep.subr.bf16.mxu0 0
  %2409 = vmatpush1.bf16.msra.mxu0 %v1887
  %2410 = vmatprep.subr.bf16.mxu0 0
  %2411 = vmatpush1.bf16.msra.mxu0 %v1888
  %2412 = vmatprep.subr.bf16.mxu0 0
  %2413 = vmatpush1.bf16.msra.mxu0 %v1889
  %2414 = vmatprep.subr.bf16.mxu0 0
  %2415 = vmatpush1.bf16.msra.mxu0 %v1890
  %2416 = vmatprep.subr.bf16.mxu0 0
  %2417 = vmatpush1.bf16.msra.mxu0 %v1891
  %2418 = vmatprep.subr.bf16.mxu0 0
  %2419 = vmatpush1.bf16.msra.mxu0 %v1892
  %2420 = vmatprep.subr.bf16.mxu0 0
  %2421 = vmatpush1.bf16.msra.mxu0 %v1893
  %2422 = vmatprep.mubr.bf16.mxu0 %v727
  %2423 = vmatmul.mubr.bf16.gmra.mrb[0].mxu0 %v726
  %v2424 = vpop.f32.mrb[0].mxu0
  %v2425 = vadd.f32 %v580, %v2424
  %v2426 = vpop.f32.mrb[0].mxu0
  %v2427 = vpop.f32.mrb[0].mxu0
  %v2428 = vadd.f32 %v580, %v2427
  %v2429 = vpop.f32.mrb[0].mxu0
  %2430 = vmatprep.mubr.bf16.mxu0 %v759
  %2431 = vmatmul.mubr.bf16.gmra.mrb[0].mxu0 %v758
  %v2432 = vpop.f32.mrb[0].mxu0
  %v2433 = vadd.f32 %v580, %v2432
  %v2434 = vpop.f32.mrb[0].mxu0
  %v2435 = vpop.f32.mrb[0].mxu0
  %v2436 = vpop.f32.mrb[0].mxu0
  %2437 = vdwg.mxu0
  %2438 = vmatprep.subr.bf16.mxu0 0
  %2439 = vmatpush1.bf16.msra.mxu0 %v1894
  %2440 = vmatprep.subr.bf16.mxu0 0
  %2441 = vmatpush1.bf16.msra.mxu0 %v1895
  %2442 = vmatprep.subr.bf16.mxu0 0
  %2443 = vmatpush1.bf16.msra.mxu0 %v1896
  %2444 = vmatprep.subr.bf16.mxu0 0
  %2445 = vmatpush1.bf16.msra.mxu0 %v1897
  %2446 = vmatprep.subr.bf16.mxu0 0
  %2447 = vmatpush1.bf16.msra.mxu0 %v1898
  %2448 = vmatprep.subr.bf16.mxu0 0
  %2449 = vmatpush1.bf16.msra.mxu0 %v1899
  %2450 = vmatprep.subr.bf16.mxu0 0
  %2451 = vmatpush1.bf16.msra.mxu0 %v1900
  %2452 = vmatprep.subr.bf16.mxu0 0
  %2453 = vmatpush1.bf16.msra.mxu0 %v1901
  %2454 = vmatprep.subr.bf16.mxu0 0
  %2455 = vmatpush1.bf16.msra.mxu0 %v1902
  %2456 = vmatprep.subr.bf16.mxu0 0
  %2457 = vmatpush1.bf16.msra.mxu0 %v1903
  %2458 = vmatprep.subr.bf16.mxu0 0
  %2459 = vmatpush1.bf16.msra.mxu0 %v1904
  %2460 = vmatprep.subr.bf16.mxu0 0
  %2461 = vmatpush1.bf16.msra.mxu0 %v1905
  %2462 = vmatprep.subr.bf16.mxu0 0
  %2463 = vmatpush1.bf16.msra.mxu0 %v1906
  %2464 = vmatprep.subr.bf16.mxu0 0
  %2465 = vmatpush1.bf16.msra.mxu0 %v1907
  %2466 = vmatprep.subr.bf16.mxu0 0
  %2467 = vmatpush1.bf16.msra.mxu0 %v1908
  %2468 = vmatprep.subr.bf16.mxu0 0
  %2469 = vmatpush1.bf16.msra.mxu0 %v1909
  %2470 = vmatprep.mubr.bf16.mxu0 %v729
  %2471 = vmatmul.mubr.bf16.gmra.mrb[0].mxu0 %v728
  %v2472 = vpop.f32.mrb[0].mxu0
  %v2473 = vadd.f32 %v2425, %v2472
  %v2474 = vpop.f32.mrb[0].mxu0
  %v2475 = vpop.f32.mrb[0].mxu0
  %v2476 = vadd.f32 %v2428, %v2475
  %v2477 = vpop.f32.mrb[0].mxu0
  %2478 = vmatprep.mubr.bf16.mxu0 %v761
  %2479 = vmatmul.mubr.bf16.gmra.mrb[0].mxu0 %v760
  %v2480 = vpop.f32.mrb[0].mxu0
  %v2481 = vadd.f32 %v2433, %v2480
  %v2482 = vpop.f32.mrb[0].mxu0
  %v2483 = vpop.f32.mrb[0].mxu0
  %v2484 = vpop.f32.mrb[0].mxu0
  %2485 = vdwg.mxu0
  %2486 = vmatprep.subr.bf16.mxu0 0
  %2487 = vmatpush1.bf16.msra.mxu0 %v1910
  %2488 = vmatprep.subr.bf16.mxu0 0
  %2489 = vmatpush1.bf16.msra.mxu0 %v1911
  %2490 = vmatprep.subr.bf16.mxu0 0
  %2491 = vmatpush1.bf16.msra.mxu0 %v1912
  %2492 = vmatprep.subr.bf16.mxu0 0
  %2493 = vmatpush1.bf16.msra.mxu0 %v1913
  %2494 = vmatprep.subr.bf16.mxu0 0
  %2495 = vmatpush1.bf16.msra.mxu0 %v1914
  %2496 = vmatprep.subr.bf16.mxu0 0
  %2497 = vmatpush1.bf16.msra.mxu0 %v1915
  %2498 = vmatprep.subr.bf16.mxu0 0
  %2499 = vmatpush1.bf16.msra.mxu0 %v1916
  %2500 = vmatprep.subr.bf16.mxu0 0
  %2501 = vmatpush1.bf16.msra.mxu0 %v1917
  %2502 = vmatprep.subr.bf16.mxu0 0
  %2503 = vmatpush1.bf16.msra.mxu0 %v1918
  %2504 = vmatprep.subr.bf16.mxu0 0
  %2505 = vmatpush1.bf16.msra.mxu0 %v1919
  %2506 = vmatprep.subr.bf16.mxu0 0
  %2507 = vmatpush1.bf16.msra.mxu0 %v1920
  %2508 = vmatprep.subr.bf16.mxu0 0
  %2509 = vmatpush1.bf16.msra.mxu0 %v1921
  %2510 = vmatprep.subr.bf16.mxu0 0
  %2511 = vmatpush1.bf16.msra.mxu0 %v1922
  %2512 = vmatprep.subr.bf16.mxu0 0
  %2513 = vmatpush1.bf16.msra.mxu0 %v1923
  %2514 = vmatprep.subr.bf16.mxu0 0
  %2515 = vmatpush1.bf16.msra.mxu0 %v1924
  %2516 = vmatprep.subr.bf16.mxu0 0
  %2517 = vmatpush1.bf16.msra.mxu0 %v1925
  %2518 = vmatprep.mubr.bf16.mxu0 %v731
  %2519 = vmatmul.mubr.bf16.gmra.mrb[0].mxu0 %v730
  %v2520 = vpop.f32.mrb[0].mxu0
  %v2521 = vadd.f32 %v2473, %v2520
  %v2522 = vpop.f32.mrb[0].mxu0
  %v2523 = vpop.f32.mrb[0].mxu0
  %v2524 = vadd.f32 %v2476, %v2523
  %v2525 = vpop.f32.mrb[0].mxu0
  %2526 = vmatprep.mubr.bf16.mxu0 %v763
  %2527 = vmatmul.mubr.bf16.gmra.mrb[0].mxu0 %v762
  %v2528 = vpop.f32.mrb[0].mxu0
  %v2529 = vadd.f32 %v2481, %v2528
  %v2530 = vpop.f32.mrb[0].mxu0
  %v2531 = vpop.f32.mrb[0].mxu0
  %v2532 = vpop.f32.mrb[0].mxu0
  %2533 = vdwg.mxu0
  %2534 = vmatprep.subr.bf16.mxu0 0
  %2535 = vmatpush1.bf16.msra.mxu0 %v1926
  %2536 = vmatprep.subr.bf16.mxu0 0
  %2537 = vmatpush1.bf16.msra.mxu0 %v1927
  %2538 = vmatprep.subr.bf16.mxu0 0
  %2539 = vmatpush1.bf16.msra.mxu0 %v1928
  %2540 = vmatprep.subr.bf16.mxu0 0
  %2541 = vmatpush1.bf16.msra.mxu0 %v1929
  %2542 = vmatprep.subr.bf16.mxu0 0
  %2543 = vmatpush1.bf16.msra.mxu0 %v1930
  %2544 = vmatprep.subr.bf16.mxu0 0
  %2545 = vmatpush1.bf16.msra.mxu0 %v1931
  %2546 = vmatprep.subr.bf16.mxu0 0
  %2547 = vmatpush1.bf16.msra.mxu0 %v1932
  %2548 = vmatprep.subr.bf16.mxu0 0
  %2549 = vmatpush1.bf16.msra.mxu0 %v1933
  %2550 = vmatprep.subr.bf16.mxu0 0
  %2551 = vmatpush1.bf16.msra.mxu0 %v1934
  %2552 = vmatprep.subr.bf16.mxu0 0
  %2553 = vmatpush1.bf16.msra.mxu0 %v1935
  %2554 = vmatprep.subr.bf16.mxu0 0
  %2555 = vmatpush1.bf16.msra.mxu0 %v1936
  %2556 = vmatprep.subr.bf16.mxu0 0
  %2557 = vmatpush1.bf16.msra.mxu0 %v1937
  %2558 = vmatprep.subr.bf16.mxu0 0
  %2559 = vmatpush1.bf16.msra.mxu0 %v1938
  %2560 = vmatprep.subr.bf16.mxu0 0
  %2561 = vmatpush1.bf16.msra.mxu0 %v1939
  %2562 = vmatprep.subr.bf16.mxu0 0
  %2563 = vmatpush1.bf16.msra.mxu0 %v1940
  %2564 = vmatprep.subr.bf16.mxu0 0
  %2565 = vmatpush1.bf16.msra.mxu0 %v1941
  %2566 = vmatprep.mubr.bf16.mxu0 %v733
  %2567 = vmatmul.mubr.bf16.gmra.mrb[0].mxu0 %v732
  %v2568 = vpop.f32.mrb[0].mxu0
  %v2569 = vadd.f32 %v2521, %v2568
  %v2570 = vpop.f32.mrb[0].mxu0
  %v2571 = vpop.f32.mrb[0].mxu0
  %v2572 = vadd.f32 %v2524, %v2571
  %v2573 = vpop.f32.mrb[0].mxu0
  %2574 = vmatprep.mubr.bf16.mxu0 %v765
  %2575 = vmatmul.mubr.bf16.gmra.mrb[0].mxu0 %v764
  %v2576 = vpop.f32.mrb[0].mxu0
  %v2577 = vadd.f32 %v2529, %v2576
  %v2578 = vpop.f32.mrb[0].mxu0
  %v2579 = vpop.f32.mrb[0].mxu0
  %v2580 = vpop.f32.mrb[0].mxu0
  %2581 = vdwg.mxu0
  %2582 = vmatprep.subr.bf16.mxu0 0
  %2583 = vmatpush1.bf16.msra.mxu0 %v1942
  %2584 = vmatprep.subr.bf16.mxu0 0
  %2585 = vmatpush1.bf16.msra.mxu0 %v1943
  %2586 = vmatprep.subr.bf16.mxu0 0
  %2587 = vmatpush1.bf16.msra.mxu0 %v1944
  %2588 = vmatprep.subr.bf16.mxu0 0
  %2589 = vmatpush1.bf16.msra.mxu0 %v1945
  %2590 = vmatprep.subr.bf16.mxu0 0
  %2591 = vmatpush1.bf16.msra.mxu0 %v1946
  %2592 = vmatprep.subr.bf16.mxu0 0
  %2593 = vmatpush1.bf16.msra.mxu0 %v1947
  %2594 = vmatprep.subr.bf16.mxu0 0
  %2595 = vmatpush1.bf16.msra.mxu0 %v1948
  %2596 = vmatprep.subr.bf16.mxu0 0
  %2597 = vmatpush1.bf16.msra.mxu0 %v1949
  %2598 = vmatprep.subr.bf16.mxu0 0
  %2599 = vmatpush1.bf16.msra.mxu0 %v1950
  %2600 = vmatprep.subr.bf16.mxu0 0
  %2601 = vmatpush1.bf16.msra.mxu0 %v1951
  %2602 = vmatprep.subr.bf16.mxu0 0
  %2603 = vmatpush1.bf16.msra.mxu0 %v1952
  %2604 = vmatprep.subr.bf16.mxu0 0
  %2605 = vmatpush1.bf16.msra.mxu0 %v1953
  %2606 = vmatprep.subr.bf16.mxu0 0
  %2607 = vmatpush1.bf16.msra.mxu0 %v1954
  %2608 = vmatprep.subr.bf16.mxu0 0
  %2609 = vmatpush1.bf16.msra.mxu0 %v1955
  %2610 = vmatprep.subr.bf16.mxu0 0
  %2611 = vmatpush1.bf16.msra.mxu0 %v1956
  %2612 = vmatprep.subr.bf16.mxu0 0
  %2613 = vmatpush1.bf16.msra.mxu0 %v1957
  %2614 = vmatprep.mubr.bf16.mxu0 %v735
  %2615 = vmatmul.mubr.bf16.gmra.mrb[0].mxu0 %v734
  %v2616 = vpop.f32.mrb[0].mxu0
  %v2617 = vadd.f32 %v2569, %v2616
  %v2618 = vpop.f32.mrb[0].mxu0
  %v2619 = vpop.f32.mrb[0].mxu0
  %v2620 = vadd.f32 %v2572, %v2619
  %v2621 = vpop.f32.mrb[0].mxu0
  %2622 = vmatprep.mubr.bf16.mxu0 %v767
  %2623 = vmatmul.mubr.bf16.gmra.mrb[0].mxu0 %v766
  %v2624 = vpop.f32.mrb[0].mxu0
  %v2625 = vadd.f32 %v2577, %v2624
  %v2626 = vpop.f32.mrb[0].mxu0
  %v2627 = vpop.f32.mrb[0].mxu0
  %v2628 = vpop.f32.mrb[0].mxu0
  %2629 = vdwg.mxu0
  %2630 = vmatprep.subr.bf16.mxu0 0
  %2631 = vmatpush1.bf16.msra.mxu0 %v1958
  %2632 = vmatprep.subr.bf16.mxu0 0
  %2633 = vmatpush1.bf16.msra.mxu0 %v1959
  %2634 = vmatprep.subr.bf16.mxu0 0
  %2635 = vmatpush1.bf16.msra.mxu0 %v1960
  %2636 = vmatprep.subr.bf16.mxu0 0
  %2637 = vmatpush1.bf16.msra.mxu0 %v1961
  %2638 = vmatprep.subr.bf16.mxu0 0
  %2639 = vmatpush1.bf16.msra.mxu0 %v1962
  %2640 = vmatprep.subr.bf16.mxu0 0
  %2641 = vmatpush1.bf16.msra.mxu0 %v1963
  %2642 = vmatprep.subr.bf16.mxu0 0
  %2643 = vmatpush1.bf16.msra.mxu0 %v1964
  %2644 = vmatprep.subr.bf16.mxu0 0
  %2645 = vmatpush1.bf16.msra.mxu0 %v1965
  %2646 = vmatprep.subr.bf16.mxu0 0
  %2647 = vmatpush1.bf16.msra.mxu0 %v1966
  %2648 = vmatprep.subr.bf16.mxu0 0
  %2649 = vmatpush1.bf16.msra.mxu0 %v1967
  %2650 = vmatprep.subr.bf16.mxu0 0
  %2651 = vmatpush1.bf16.msra.mxu0 %v1968
  %2652 = vmatprep.subr.bf16.mxu0 0
  %2653 = vmatpush1.bf16.msra.mxu0 %v1969
  %2654 = vmatprep.subr.bf16.mxu0 0
  %2655 = vmatpush1.bf16.msra.mxu0 %v1970
  %2656 = vmatprep.subr.bf16.mxu0 0
  %2657 = vmatpush1.bf16.msra.mxu0 %v1971
  %2658 = vmatprep.subr.bf16.mxu0 0
  %2659 = vmatpush1.bf16.msra.mxu0 %v1972
  %2660 = vmatprep.subr.bf16.mxu0 0
  %2661 = vmatpush1.bf16.msra.mxu0 %v1973
  %2662 = vmatprep.mubr.bf16.mxu0 %v737
  %2663 = vmatmul.mubr.bf16.gmra.mrb[0].mxu0 %v736
  %v2664 = vpop.f32.mrb[0].mxu0
  %v2665 = vadd.f32 %v2617, %v2664
  %v2666 = vpop.f32.mrb[0].mxu0
  %v2667 = vpop.f32.mrb[0].mxu0
  %v2668 = vadd.f32 %v2620, %v2667
  %v2669 = vpop.f32.mrb[0].mxu0
  %2670 = vmatprep.mubr.bf16.mxu0 %v769
  %2671 = vmatmul.mubr.bf16.gmra.mrb[0].mxu0 %v768
  %v2672 = vpop.f32.mrb[0].mxu0
  %v2673 = vadd.f32 %v2625, %v2672
  %v2674 = vpop.f32.mrb[0].mxu0
  %v2675 = vpop.f32.mrb[0].mxu0
  %v2676 = vpop.f32.mrb[0].mxu0
  %2677 = vdwg.mxu0
  %2678 = vmatprep.subr.bf16.mxu0 0
  %2679 = vmatpush1.bf16.msra.mxu0 %v1974
  %2680 = vmatprep.subr.bf16.mxu0 0
  %2681 = vmatpush1.bf16.msra.mxu0 %v1975
  %2682 = vmatprep.subr.bf16.mxu0 0
  %2683 = vmatpush1.bf16.msra.mxu0 %v1976
  %2684 = vmatprep.subr.bf16.mxu0 0
  %2685 = vmatpush1.bf16.msra.mxu0 %v1977
  %2686 = vmatprep.subr.bf16.mxu0 0
  %2687 = vmatpush1.bf16.msra.mxu0 %v1978
  %2688 = vmatprep.subr.bf16.mxu0 0
  %2689 = vmatpush1.bf16.msra.mxu0 %v1979
  %2690 = vmatprep.subr.bf16.mxu0 0
  %2691 = vmatpush1.bf16.msra.mxu0 %v1980
  %2692 = vmatprep.subr.bf16.mxu0 0
  %2693 = vmatpush1.bf16.msra.mxu0 %v1981
  %2694 = vmatprep.subr.bf16.mxu0 0
  %2695 = vmatpush1.bf16.msra.mxu0 %v1982
  %2696 = vmatprep.subr.bf16.mxu0 0
  %2697 = vmatpush1.bf16.msra.mxu0 %v1983
  %2698 = vmatprep.subr.bf16.mxu0 0
  %2699 = vmatpush1.bf16.msra.mxu0 %v1984
  %2700 = vmatprep.subr.bf16.mxu0 0
  %2701 = vmatpush1.bf16.msra.mxu0 %v1985
  %2702 = vmatprep.subr.bf16.mxu0 0
  %2703 = vmatpush1.bf16.msra.mxu0 %v1986
  %2704 = vmatprep.subr.bf16.mxu0 0
  %2705 = vmatpush1.bf16.msra.mxu0 %v1987
  %2706 = vmatprep.subr.bf16.mxu0 0
  %2707 = vmatpush1.bf16.msra.mxu0 %v1988
  %2708 = vmatprep.subr.bf16.mxu0 0
  %2709 = vmatpush1.bf16.msra.mxu0 %v1989
  %2710 = vmatprep.mubr.bf16.mxu0 %v739
  %2711 = vmatmul.mubr.bf16.gmra.mrb[0].mxu0 %v738
  %v2712 = vpop.f32.mrb[0].mxu0
  %v2713 = vadd.f32 %v2665, %v2712
  %v2714 = vpop.f32.mrb[0].mxu0
  %v2715 = vpop.f32.mrb[0].mxu0
  %v2716 = vadd.f32 %v2668, %v2715
  %v2717 = vpop.f32.mrb[0].mxu0
  %2718 = vmatprep.mubr.bf16.mxu0 %v771
  %2719 = vmatmul.mubr.bf16.gmra.mrb[0].mxu0 %v770
  %v2720 = vpop.f32.mrb[0].mxu0
  %v2721 = vadd.f32 %v2673, %v2720
  %v2722 = vpop.f32.mrb[0].mxu0
  %v2723 = vpop.f32.mrb[0].mxu0
  %v2724 = vpop.f32.mrb[0].mxu0
  %2725 = vdwg.mxu0
  %2726 = vmatprep.subr.bf16.mxu0 0
  %2727 = vmatpush1.bf16.msra.mxu0 %v1990
  %2728 = vmatprep.subr.bf16.mxu0 0
  %2729 = vmatpush1.bf16.msra.mxu0 %v1991
  %2730 = vmatprep.subr.bf16.mxu0 0
  %2731 = vmatpush1.bf16.msra.mxu0 %v1992
  %2732 = vmatprep.subr.bf16.mxu0 0
  %2733 = vmatpush1.bf16.msra.mxu0 %v1993
  %2734 = vmatprep.subr.bf16.mxu0 0
  %2735 = vmatpush1.bf16.msra.mxu0 %v1994
  %2736 = vmatprep.subr.bf16.mxu0 0
  %2737 = vmatpush1.bf16.msra.mxu0 %v1995
  %2738 = vmatprep.subr.bf16.mxu0 0
  %2739 = vmatpush1.bf16.msra.mxu0 %v1996
  %2740 = vmatprep.subr.bf16.mxu0 0
  %2741 = vmatpush1.bf16.msra.mxu0 %v1997
  %2742 = vmatprep.subr.bf16.mxu0 0
  %2743 = vmatpush1.bf16.msra.mxu0 %v1998
  %2744 = vmatprep.subr.bf16.mxu0 0
  %2745 = vmatpush1.bf16.msra.mxu0 %v1999
  %2746 = vmatprep.subr.bf16.mxu0 0
  %2747 = vmatpush1.bf16.msra.mxu0 %v2000
  %2748 = vmatprep.subr.bf16.mxu0 0
  %2749 = vmatpush1.bf16.msra.mxu0 %v2001
  %2750 = vmatprep.subr.bf16.mxu0 0
  %2751 = vmatpush1.bf16.msra.mxu0 %v2002
  %2752 = vmatprep.subr.bf16.mxu0 0
  %2753 = vmatpush1.bf16.msra.mxu0 %v2003
  %2754 = vmatprep.subr.bf16.mxu0 0
  %2755 = vmatpush1.bf16.msra.mxu0 %v2004
  %2756 = vmatprep.subr.bf16.mxu0 0
  %2757 = vmatpush1.bf16.msra.mxu0 %v2005
  %2758 = vmatprep.mubr.bf16.mxu0 %v741
  %2759 = vmatmul.mubr.bf16.gmra.mrb[0].mxu0 %v740
  %v2760 = vpop.f32.mrb[0].mxu0
  %v2761 = vadd.f32 %v2713, %v2760
  %v2762 = vpop.f32.mrb[0].mxu0
  %v2763 = vpop.f32.mrb[0].mxu0
  %v2764 = vadd.f32 %v2716, %v2763
  %v2765 = vpop.f32.mrb[0].mxu0
  %2766 = vmatprep.mubr.bf16.mxu0 %v773
  %2767 = vmatmul.mubr.bf16.gmra.mrb[0].mxu0 %v772
  %v2768 = vpop.f32.mrb[0].mxu0
  %v2769 = vadd.f32 %v2721, %v2768
  %v2770 = vpop.f32.mrb[0].mxu0
  %v2771 = vpop.f32.mrb[0].mxu0
  %v2772 = vpop.f32.mrb[0].mxu0
  %2773 = vdwg.mxu0
  %2774 = vmatprep.subr.bf16.mxu0 0
  %2775 = vmatpush1.bf16.msra.mxu0 %v2006
  %2776 = vmatprep.subr.bf16.mxu0 0
  %2777 = vmatpush1.bf16.msra.mxu0 %v2007
  %2778 = vmatprep.subr.bf16.mxu0 0
  %2779 = vmatpush1.bf16.msra.mxu0 %v2008
  %2780 = vmatprep.subr.bf16.mxu0 0
  %2781 = vmatpush1.bf16.msra.mxu0 %v2009
  %2782 = vmatprep.subr.bf16.mxu0 0
  %2783 = vmatpush1.bf16.msra.mxu0 %v2010
  %2784 = vmatprep.subr.bf16.mxu0 0
  %2785 = vmatpush1.bf16.msra.mxu0 %v2011
  %2786 = vmatprep.subr.bf16.mxu0 0
  %2787 = vmatpush1.bf16.msra.mxu0 %v2012
  %2788 = vmatprep.subr.bf16.mxu0 0
  %2789 = vmatpush1.bf16.msra.mxu0 %v2013
  %2790 = vmatprep.subr.bf16.mxu0 0
  %2791 = vmatpush1.bf16.msra.mxu0 %v2014
  %2792 = vmatprep.subr.bf16.mxu0 0
  %2793 = vmatpush1.bf16.msra.mxu0 %v2015
  %2794 = vmatprep.subr.bf16.mxu0 0
  %2795 = vmatpush1.bf16.msra.mxu0 %v2016
  %2796 = vmatprep.subr.bf16.mxu0 0
  %2797 = vmatpush1.bf16.msra.mxu0 %v2017
  %2798 = vmatprep.subr.bf16.mxu0 0
  %2799 = vmatpush1.bf16.msra.mxu0 %v2018
  %2800 = vmatprep.subr.bf16.mxu0 0
  %2801 = vmatpush1.bf16.msra.mxu0 %v2019
  %2802 = vmatprep.subr.bf16.mxu0 0
  %2803 = vmatpush1.bf16.msra.mxu0 %v2020
  %2804 = vmatprep.subr.bf16.mxu0 0
  %2805 = vmatpush1.bf16.msra.mxu0 %v2021
  %2806 = vmatprep.mubr.bf16.mxu0 %v743
  %2807 = vmatmul.mubr.bf16.gmra.mrb[0].mxu0 %v742
  %v2808 = vpop.f32.mrb[0].mxu0
  %v2809 = vadd.f32 %v2761, %v2808
  %v2810 = vpop.f32.mrb[0].mxu0
  %v2811 = vpop.f32.mrb[0].mxu0
  %v2812 = vadd.f32 %v2764, %v2811
  %v2813 = vpop.f32.mrb[0].mxu0
  %2814 = vmatprep.mubr.bf16.mxu0 %v775
  %2815 = vmatmul.mubr.bf16.gmra.mrb[0].mxu0 %v774
  %v2816 = vpop.f32.mrb[0].mxu0
  %v2817 = vadd.f32 %v2769, %v2816
  %v2818 = vpop.f32.mrb[0].mxu0
  %v2819 = vpop.f32.mrb[0].mxu0
  %v2820 = vpop.f32.mrb[0].mxu0
  %2821 = vdwg.mxu0
  %2822 = vmatprep.subr.bf16.mxu0 0
  %2823 = vmatpush1.bf16.msra.mxu0 %v2022
  %2824 = vmatprep.subr.bf16.mxu0 0
  %2825 = vmatpush1.bf16.msra.mxu0 %v2023
  %2826 = vmatprep.subr.bf16.mxu0 0
  %2827 = vmatpush1.bf16.msra.mxu0 %v2024
  %2828 = vmatprep.subr.bf16.mxu0 0
  %2829 = vmatpush1.bf16.msra.mxu0 %v2025
  %2830 = vmatprep.subr.bf16.mxu0 0
  %2831 = vmatpush1.bf16.msra.mxu0 %v2026
  %2832 = vmatprep.subr.bf16.mxu0 0
  %2833 = vmatpush1.bf16.msra.mxu0 %v2027
  %2834 = vmatprep.subr.bf16.mxu0 0
  %2835 = vmatpush1.bf16.msra.mxu0 %v2028
  %2836 = vmatprep.subr.bf16.mxu0 0
  %2837 = vmatpush1.bf16.msra.mxu0 %v2029
  %2838 = vmatprep.subr.bf16.mxu0 0
  %2839 = vmatpush1.bf16.msra.mxu0 %v2030
  %2840 = vmatprep.subr.bf16.mxu0 0
  %2841 = vmatpush1.bf16.msra.mxu0 %v2031
  %2842 = vmatprep.subr.bf16.mxu0 0
  %2843 = vmatpush1.bf16.msra.mxu0 %v2032
  %2844 = vmatprep.subr.bf16.mxu0 0
  %2845 = vmatpush1.bf16.msra.mxu0 %v2033
  %2846 = vmatprep.subr.bf16.mxu0 0
  %2847 = vmatpush1.bf16.msra.mxu0 %v2034
  %2848 = vmatprep.subr.bf16.mxu0 0
  %2849 = vmatpush1.bf16.msra.mxu0 %v2035
  %2850 = vmatprep.subr.bf16.mxu0 0
  %2851 = vmatpush1.bf16.msra.mxu0 %v2036
  %2852 = vmatprep.subr.bf16.mxu0 0
  %2853 = vmatpush1.bf16.msra.mxu0 %v2037
  %2854 = vmatprep.mubr.bf16.mxu0 %v745
  %2855 = vmatmul.mubr.bf16.gmra.mrb[0].mxu0 %v744
  %v2856 = vpop.f32.mrb[0].mxu0
  %v2857 = vadd.f32 %v2809, %v2856
  %v2858 = vpop.f32.mrb[0].mxu0
  %v2859 = vpop.f32.mrb[0].mxu0
  %v2860 = vadd.f32 %v2812, %v2859
  %v2861 = vpop.f32.mrb[0].mxu0
  %2862 = vmatprep.mubr.bf16.mxu0 %v777
  %2863 = vmatmul.mubr.bf16.gmra.mrb[0].mxu0 %v776
  %v2864 = vpop.f32.mrb[0].mxu0
  %v2865 = vadd.f32 %v2817, %v2864
  %v2866 = vpop.f32.mrb[0].mxu0
  %v2867 = vpop.f32.mrb[0].mxu0
  %v2868 = vpop.f32.mrb[0].mxu0
  %2869 = vdwg.mxu0
  %2870 = vmatprep.subr.bf16.mxu0 0
  %2871 = vmatpush1.bf16.msra.mxu0 %v2038
  %2872 = vmatprep.subr.bf16.mxu0 0
  %2873 = vmatpush1.bf16.msra.mxu0 %v2039
  %2874 = vmatprep.subr.bf16.mxu0 0
  %2875 = vmatpush1.bf16.msra.mxu0 %v2040
  %2876 = vmatprep.subr.bf16.mxu0 0
  %2877 = vmatpush1.bf16.msra.mxu0 %v2041
  %2878 = vmatprep.subr.bf16.mxu0 0
  %2879 = vmatpush1.bf16.msra.mxu0 %v2042
  %2880 = vmatprep.subr.bf16.mxu0 0
  %2881 = vmatpush1.bf16.msra.mxu0 %v2043
  %2882 = vmatprep.subr.bf16.mxu0 0
  %2883 = vmatpush1.bf16.msra.mxu0 %v2044
  %2884 = vmatprep.subr.bf16.mxu0 0
  %2885 = vmatpush1.bf16.msra.mxu0 %v2045
  %2886 = vmatprep.subr.bf16.mxu0 0
  %2887 = vmatpush1.bf16.msra.mxu0 %v2046
  %2888 = vmatprep.subr.bf16.mxu0 0
  %2889 = vmatpush1.bf16.msra.mxu0 %v2047
  %2890 = vmatprep.subr.bf16.mxu0 0
  %2891 = vmatpush1.bf16.msra.mxu0 %v2048
  %2892 = vmatprep.subr.bf16.mxu0 0
  %2893 = vmatpush1.bf16.msra.mxu0 %v2049
  %2894 = vmatprep.subr.bf16.mxu0 0
  %2895 = vmatpush1.bf16.msra.mxu0 %v2050
  %2896 = vmatprep.subr.bf16.mxu0 0
  %2897 = vmatpush1.bf16.msra.mxu0 %v2051
  %2898 = vmatprep.subr.bf16.mxu0 0
  %2899 = vmatpush1.bf16.msra.mxu0 %v2052
  %2900 = vmatprep.subr.bf16.mxu0 0
  %2901 = vmatpush1.bf16.msra.mxu0 %v2053
  %2902 = vmatprep.mubr.bf16.mxu0 %v747
  %2903 = vmatmul.mubr.bf16.gmra.mrb[0].mxu0 %v746
  %v2904 = vpop.f32.mrb[0].mxu0
  %v2905 = vadd.f32 %v2857, %v2904
  %v2906 = vpop.f32.mrb[0].mxu0
  %v2907 = vpop.f32.mrb[0].mxu0
  %v2908 = vadd.f32 %v2860, %v2907
  %v2909 = vpop.f32.mrb[0].mxu0
  %2910 = vmatprep.mubr.bf16.mxu0 %v779
  %2911 = vmatmul.mubr.bf16.gmra.mrb[0].mxu0 %v778
  %v2912 = vpop.f32.mrb[0].mxu0
  %v2913 = vadd.f32 %v2865, %v2912
  %v2914 = vpop.f32.mrb[0].mxu0
  %v2915 = vpop.f32.mrb[0].mxu0
  %v2916 = vpop.f32.mrb[0].mxu0
  %2917 = vdwg.mxu0
  %2918 = vmatprep.subr.bf16.mxu0 0
  %2919 = vmatpush1.bf16.msra.mxu0 %v2054
  %2920 = vmatprep.subr.bf16.mxu0 0
  %2921 = vmatpush1.bf16.msra.mxu0 %v2055
  %2922 = vmatprep.subr.bf16.mxu0 0
  %2923 = vmatpush1.bf16.msra.mxu0 %v2056
  %2924 = vmatprep.subr.bf16.mxu0 0
  %2925 = vmatpush1.bf16.msra.mxu0 %v2057
  %2926 = vmatprep.subr.bf16.mxu0 0
  %2927 = vmatpush1.bf16.msra.mxu0 %v2058
  %2928 = vmatprep.subr.bf16.mxu0 0
  %2929 = vmatpush1.bf16.msra.mxu0 %v2059
  %2930 = vmatprep.subr.bf16.mxu0 0
  %2931 = vmatpush1.bf16.msra.mxu0 %v2060
  %2932 = vmatprep.subr.bf16.mxu0 0
  %2933 = vmatpush1.bf16.msra.mxu0 %v2061
  %2934 = vmatprep.subr.bf16.mxu0 0
  %2935 = vmatpush1.bf16.msra.mxu0 %v2062
  %2936 = vmatprep.subr.bf16.mxu0 0
  %2937 = vmatpush1.bf16.msra.mxu0 %v2063
  %2938 = vmatprep.subr.bf16.mxu0 0
  %2939 = vmatpush1.bf16.msra.mxu0 %v2064
  %2940 = vmatprep.subr.bf16.mxu0 0
  %2941 = vmatpush1.bf16.msra.mxu0 %v2065
  %2942 = vmatprep.subr.bf16.mxu0 0
  %2943 = vmatpush1.bf16.msra.mxu0 %v2066
  %2944 = vmatprep.subr.bf16.mxu0 0
  %2945 = vmatpush1.bf16.msra.mxu0 %v2067
  %2946 = vmatprep.subr.bf16.mxu0 0
  %2947 = vmatpush1.bf16.msra.mxu0 %v2068
  %2948 = vmatprep.subr.bf16.mxu0 0
  %2949 = vmatpush1.bf16.msra.mxu0 %v2069
  %2950 = vmatprep.mubr.bf16.mxu0 %v749
  %2951 = vmatmul.mubr.bf16.gmra.mrb[0].mxu0 %v748
  %v2952 = vpop.f32.mrb[0].mxu0
  %v2953 = vadd.f32 %v2905, %v2952
  %v2954 = vpop.f32.mrb[0].mxu0
  %v2955 = vpop.f32.mrb[0].mxu0
  %v2956 = vadd.f32 %v2908, %v2955
  %v2957 = vpop.f32.mrb[0].mxu0
  %2958 = vmatprep.mubr.bf16.mxu0 %v781
  %2959 = vmatmul.mubr.bf16.gmra.mrb[0].mxu0 %v780
  %v2960 = vpop.f32.mrb[0].mxu0
  %v2961 = vadd.f32 %v2913, %v2960
  %v2962 = vpop.f32.mrb[0].mxu0
  %v2963 = vpop.f32.mrb[0].mxu0
  %v2964 = vpop.f32.mrb[0].mxu0
  %2965 = vdwg.mxu0
  %2966 = vmatprep.subr.bf16.mxu0 0
  %2967 = vmatpush1.bf16.msra.mxu0 %v2070
  %2968 = vmatprep.subr.bf16.mxu0 0
  %2969 = vmatpush1.bf16.msra.mxu0 %v2071
  %2970 = vmatprep.subr.bf16.mxu0 0
  %2971 = vmatpush1.bf16.msra.mxu0 %v2072
  %2972 = vmatprep.subr.bf16.mxu0 0
  %2973 = vmatpush1.bf16.msra.mxu0 %v2073
  %2974 = vmatprep.subr.bf16.mxu0 0
  %2975 = vmatpush1.bf16.msra.mxu0 %v2074
  %2976 = vmatprep.subr.bf16.mxu0 0
  %2977 = vmatpush1.bf16.msra.mxu0 %v2075
  %2978 = vmatprep.subr.bf16.mxu0 0
  %2979 = vmatpush1.bf16.msra.mxu0 %v2076
  %2980 = vmatprep.subr.bf16.mxu0 0
  %2981 = vmatpush1.bf16.msra.mxu0 %v2077
  %2982 = vmatprep.subr.bf16.mxu0 0
  %2983 = vmatpush1.bf16.msra.mxu0 %v2078
  %2984 = vmatprep.subr.bf16.mxu0 0
  %2985 = vmatpush1.bf16.msra.mxu0 %v2079
  %2986 = vmatprep.subr.bf16.mxu0 0
  %2987 = vmatpush1.bf16.msra.mxu0 %v2080
  %2988 = vmatprep.subr.bf16.mxu0 0
  %2989 = vmatpush1.bf16.msra.mxu0 %v2081
  %2990 = vmatprep.subr.bf16.mxu0 0
  %2991 = vmatpush1.bf16.msra.mxu0 %v2082
  %2992 = vmatprep.subr.bf16.mxu0 0
  %2993 = vmatpush1.bf16.msra.mxu0 %v2083
  %2994 = vmatprep.subr.bf16.mxu0 0
  %2995 = vmatpush1.bf16.msra.mxu0 %v2084
  %2996 = vmatprep.subr.bf16.mxu0 0
  %2997 = vmatpush1.bf16.msra.mxu0 %v2085
  %2998 = vmatprep.mubr.bf16.mxu0 %v751
  %2999 = vmatmul.mubr.bf16.gmra.mrb[0].mxu0 %v750
  %v3000 = vpop.f32.mrb[0].mxu0
  %v3001 = vadd.f32 %v2953, %v3000
  %v3002 = vpop.f32.mrb[0].mxu0
  %v3003 = vpop.f32.mrb[0].mxu0
  %v3004 = vadd.f32 %v2956, %v3003
  %v3005 = vpop.f32.mrb[0].mxu0
  %3006 = vmatprep.mubr.bf16.mxu0 %v783
  %3007 = vmatmul.mubr.bf16.gmra.mrb[0].mxu0 %v782
  %v3008 = vpop.f32.mrb[0].mxu0
  %v3009 = vadd.f32 %v2961, %v3008
  %v3010 = vpop.f32.mrb[0].mxu0
  %v3011 = vpop.f32.mrb[0].mxu0
  %v3012 = vpop.f32.mrb[0].mxu0
  %3013 = vdwg.mxu0
  %3014 = vmatprep.subr.bf16.mxu0 0
  %3015 = vmatpush1.bf16.msra.mxu0 %v2086
  %3016 = vmatprep.subr.bf16.mxu0 0
  %3017 = vmatpush1.bf16.msra.mxu0 %v2087
  %3018 = vmatprep.subr.bf16.mxu0 0
  %3019 = vmatpush1.bf16.msra.mxu0 %v2088
  %3020 = vmatprep.subr.bf16.mxu0 0
  %3021 = vmatpush1.bf16.msra.mxu0 %v2089
  %3022 = vmatprep.subr.bf16.mxu0 0
  %3023 = vmatpush1.bf16.msra.mxu0 %v2090
  %3024 = vmatprep.subr.bf16.mxu0 0
  %3025 = vmatpush1.bf16.msra.mxu0 %v2091
  %3026 = vmatprep.subr.bf16.mxu0 0
  %3027 = vmatpush1.bf16.msra.mxu0 %v2092
  %3028 = vmatprep.subr.bf16.mxu0 0
  %3029 = vmatpush1.bf16.msra.mxu0 %v2093
  %3030 = vmatprep.subr.bf16.mxu0 0
  %3031 = vmatpush1.bf16.msra.mxu0 %v2094
  %3032 = vmatprep.subr.bf16.mxu0 0
  %3033 = vmatpush1.bf16.msra.mxu0 %v2095
  %3034 = vmatprep.subr.bf16.mxu0 0
  %3035 = vmatpush1.bf16.msra.mxu0 %v2096
  %3036 = vmatprep.subr.bf16.mxu0 0
  %3037 = vmatpush1.bf16.msra.mxu0 %v2097
  %3038 = vmatprep.subr.bf16.mxu0 0
  %3039 = vmatpush1.bf16.msra.mxu0 %v2098
  %3040 = vmatprep.subr.bf16.mxu0 0
  %3041 = vmatpush1.bf16.msra.mxu0 %v2099
  %3042 = vmatprep.subr.bf16.mxu0 0
  %3043 = vmatpush1.bf16.msra.mxu0 %v2100
  %3044 = vmatprep.subr.bf16.mxu0 0
  %3045 = vmatpush1.bf16.msra.mxu0 %v2101
  %3046 = vmatprep.mubr.bf16.mxu0 %v753
  %3047 = vmatmul.mubr.bf16.gmra.mrb[0].mxu0 %v752
  %v3048 = vpop.f32.mrb[0].mxu0
  %v3049 = vadd.f32 %v3001, %v3048
  %v3050 = vpop.f32.mrb[0].mxu0
  %v3051 = vpop.f32.mrb[0].mxu0
  %v3052 = vadd.f32 %v3004, %v3051
  %v3053 = vpop.f32.mrb[0].mxu0
  %3054 = vmatprep.mubr.bf16.mxu0 %v785
  %3055 = vmatmul.mubr.bf16.gmra.mrb[0].mxu0 %v784
  %v3056 = vpop.f32.mrb[0].mxu0
  %v3057 = vadd.f32 %v3009, %v3056
  %v3058 = vpop.f32.mrb[0].mxu0
  %v3059 = vpop.f32.mrb[0].mxu0
  %v3060 = vpop.f32.mrb[0].mxu0
  %3061 = vdwg.mxu0
  %3062 = vmatprep.subr.bf16.mxu0 0
  %3063 = vmatpush1.bf16.msra.mxu0 %v2102
  %3064 = vmatprep.subr.bf16.mxu0 0
  %3065 = vmatpush1.bf16.msra.mxu0 %v2103
  %3066 = vmatprep.subr.bf16.mxu0 0
  %3067 = vmatpush1.bf16.msra.mxu0 %v2104
  %3068 = vmatprep.subr.bf16.mxu0 0
  %3069 = vmatpush1.bf16.msra.mxu0 %v2105
  %3070 = vmatprep.subr.bf16.mxu0 0
  %3071 = vmatpush1.bf16.msra.mxu0 %v2106
  %3072 = vmatprep.subr.bf16.mxu0 0
  %3073 = vmatpush1.bf16.msra.mxu0 %v2107
  %3074 = vmatprep.subr.bf16.mxu0 0
  %3075 = vmatpush1.bf16.msra.mxu0 %v2108
  %3076 = vmatprep.subr.bf16.mxu0 0
  %3077 = vmatpush1.bf16.msra.mxu0 %v2109
  %3078 = vmatprep.subr.bf16.mxu0 0
  %3079 = vmatpush1.bf16.msra.mxu0 %v2110
  %3080 = vmatprep.subr.bf16.mxu0 0
  %3081 = vmatpush1.bf16.msra.mxu0 %v2111
  %3082 = vmatprep.subr.bf16.mxu0 0
  %3083 = vmatpush1.bf16.msra.mxu0 %v2112
  %3084 = vmatprep.subr.bf16.mxu0 0
  %3085 = vmatpush1.bf16.msra.mxu0 %v2113
  %3086 = vmatprep.subr.bf16.mxu0 0
  %3087 = vmatpush1.bf16.msra.mxu0 %v2114
  %3088 = vmatprep.subr.bf16.mxu0 0
  %3089 = vmatpush1.bf16.msra.mxu0 %v2115
  %3090 = vmatprep.subr.bf16.mxu0 0
  %3091 = vmatpush1.bf16.msra.mxu0 %v2116
  %3092 = vmatprep.subr.bf16.mxu0 0
  %3093 = vmatpush1.bf16.msra.mxu0 %v2117
  %3094 = vmatprep.mubr.bf16.mxu0 %v755
  %3095 = vmatmul.mubr.bf16.gmra.mrb[0].mxu0 %v754
  %v3096 = vpop.f32.mrb[0].mxu0
  %v3097 = vadd.f32 %v3049, %v3096
  %v3098 = vpop.f32.mrb[0].mxu0
  %v3099 = vpop.f32.mrb[0].mxu0
  %v3100 = vadd.f32 %v3052, %v3099
  %v3101 = vpop.f32.mrb[0].mxu0
  %3102 = vmatprep.mubr.bf16.mxu0 %v787
  %3103 = vmatmul.mubr.bf16.gmra.mrb[0].mxu0 %v786
  %v3104 = vpop.f32.mrb[0].mxu0
  %v3105 = vadd.f32 %v3057, %v3104
  %v3106 = vpop.f32.mrb[0].mxu0
  %v3107 = vpop.f32.mrb[0].mxu0
  %v3108 = vpop.f32.mrb[0].mxu0
  %3109 = vdwg.mxu0
  %3110 = vmatprep.subr.bf16.mxu0 0
  %3111 = vmatpush1.bf16.msra.mxu0 %v2118
  %3112 = vmatprep.subr.bf16.mxu0 0
  %3113 = vmatpush1.bf16.msra.mxu0 %v2119
  %3114 = vmatprep.subr.bf16.mxu0 0
  %3115 = vmatpush1.bf16.msra.mxu0 %v2120
  %3116 = vmatprep.subr.bf16.mxu0 0
  %3117 = vmatpush1.bf16.msra.mxu0 %v2121
  %3118 = vmatprep.subr.bf16.mxu0 0
  %3119 = vmatpush1.bf16.msra.mxu0 %v2122
  %3120 = vmatprep.subr.bf16.mxu0 0
  %3121 = vmatpush1.bf16.msra.mxu0 %v2123
  %3122 = vmatprep.subr.bf16.mxu0 0
  %3123 = vmatpush1.bf16.msra.mxu0 %v2124
  %3124 = vmatprep.subr.bf16.mxu0 0
  %3125 = vmatpush1.bf16.msra.mxu0 %v2125
  %3126 = vmatprep.subr.bf16.mxu0 0
  %3127 = vmatpush1.bf16.msra.mxu0 %v2126
  %3128 = vmatprep.subr.bf16.mxu0 0
  %3129 = vmatpush1.bf16.msra.mxu0 %v2127
  %3130 = vmatprep.subr.bf16.mxu0 0
  %3131 = vmatpush1.bf16.msra.mxu0 %v2128
  %3132 = vmatprep.subr.bf16.mxu0 0
  %3133 = vmatpush1.bf16.msra.mxu0 %v2129
  %3134 = vmatprep.subr.bf16.mxu0 0
  %3135 = vmatpush1.bf16.msra.mxu0 %v2130
  %3136 = vmatprep.subr.bf16.mxu0 0
  %3137 = vmatpush1.bf16.msra.mxu0 %v2131
  %3138 = vmatprep.subr.bf16.mxu0 0
  %3139 = vmatpush1.bf16.msra.mxu0 %v2132
  %3140 = vmatprep.subr.bf16.mxu0 0
  %3141 = vmatpush1.bf16.msra.mxu0 %v2133
  %3142 = vmatprep.mubr.bf16.mxu0 %v757
  %3143 = vmatmul.mubr.bf16.gmra.mrb[0].mxu0 %v756
  %v3144 = vpop.f32.mrb[0].mxu0
  %v3145 = vadd.f32 %v3097, %v3144
  %v3146 = vpop.f32.mrb[0].mxu0
  %v3147 = vpop.f32.mrb[0].mxu0
  %v3148 = vadd.f32 %v3100, %v3147
  %v3149 = vpop.f32.mrb[0].mxu0
  %3150 = vmatprep.mubr.bf16.mxu0 %v789
  %3151 = vmatmul.mubr.bf16.gmra.mrb[0].mxu0 %v788
  %v3152 = vpop.f32.mrb[0].mxu0
  %v3153 = vadd.f32 %v3105, %v3152
  %v3154 = vpop.f32.mrb[0].mxu0
  %v3155 = vpop.f32.mrb[0].mxu0
  %v3156 = vpop.f32.mrb[0].mxu0
  %3157 = vdwg.mxu0
  %v3158 = vmax.f32 %v3145, 0.0
  %v3159 = vmax.f32 %v3148, 0.0
  %v3160 = vmax.f32 %v3153, 0.0
  %v3161 = vpack.c.bf16 %v3159, %v3158
  %v3162 = vpack.c.bf16 %v3160, %v3160
  %v3165 = vunpack.c.l.b16 %v3161
  %v3166 = vunpack.c.h.b16 %v3161
  %v3167 = vunpack.c.l.b16 %v3162
  %v3168 = vpack.c.b16 %v3165, %v3165
  %v3169 = vpack.c.b16 %v3166, %v3166
  %v3170 = vpack.c.b16 %v3167, %v3167
  %3174 = vst [vmem:[%s3] sm:$0xf] %v3168
  %3175 = vst [vmem:[%s3 + $0x4] sm:$0xf] %v3169
  %3176 = vst [vmem:[%s3 + $0x8] sm:$0x1] %v3170
  // Predicated region
  $region14: #{fcn_forward.5} parent=0 // pred_check
    _
  $region15: #{fcn_forward.5} parent=0 // pred_check_branch
    %3178 = sbr.rel (0) target = $region17
  $region16: #{fcn_forward.5} parent=0 // pred_region
    _
  $region17: #{fcn_forward.5} parent=0 // pred_fallthru
    _
  // Predicated region
  $region18: #{fcn_forward.5} parent=0 // pred_check
    _
  $region19: #{fcn_forward.5} parent=0 // pred_check_branch
    %3180 = sbr.rel (0) target = $region21
  $region20: #{fcn_forward.5} parent=0 // pred_region
    _
  $region21: #{fcn_forward.5} parent=0 // pred_fallthru
    _

// kernel: fcn_forward.6
$region0: #{fcn_forward.6}
  #allocation0 [shape = 'u32[]', space=smem, size = 0x4, offset = 0x4, fixed_abs, tag = 'smem constant byte address 0x4 - core index']
  #allocation1 [shape = 'u32[144,128]{1,0:T(1,128)}', space=vmem, size = 0x12000, scoped, tag = 'internal scratch']
  %s0 = inlined_call_operand.vmem [shape: bf16[8,3200], index: 0, kind: input, shape index: {}]
  %s1 = inlined_call_operand.vmem [shape: bf16[3200,256], index: 1, kind: input, shape index: {}]
  %s2 = inlined_call_operand.vmem [shape: f32[1,256], index: 2, kind: input, shape index: {}]
  %s3 = inlined_call_operand.vmem [shape: bf16[8,256], index: 3, kind: output, shape index: {}]
  %s4 = sld [smem:[#allocation0]]
  $region22: #{fcn_forward.6} parent=0
    _
  %s6 = ssub.s32 1, %s4
  %s7 = scalar_select 0, %s6, %s4
  // Predicated region
  $region2: #{fcn_forward.6} parent=0 // pred_check
    _
  $region3: #{fcn_forward.6} parent=0 // pred_check_branch
    %9 = sbr.rel (0) target = $region5
  $region4: #{fcn_forward.6} parent=0 // pred_region
    _
  $region5: #{fcn_forward.6} parent=0 // pred_fallthru
    _
  // Predicated region
  $region6: #{fcn_forward.6} parent=0 // pred_check
    _
  $region7: #{fcn_forward.6} parent=0 // pred_check_branch
    %11 = sbr.rel (0) target = $region9
  $region8: #{fcn_forward.6} parent=0 // pred_region
    _
  $region9: #{fcn_forward.6} parent=0 // pred_fallthru
    _
  // Predicated region
  $region10: #{fcn_forward.6} parent=0 // pred_check
    _
  $region11: #{fcn_forward.6} parent=0 // pred_check_branch
    %13 = sbr.rel (0) target = $region13
  $region12: #{fcn_forward.6} parent=0 // pred_region
    _
  $region13: #{fcn_forward.6} parent=0 // pred_fallthru
    _
  %v15 = vld [vmem:[%s0] sm:$0xff]
  %v16 = vld [vmem:[%s0 + $0x8] sm:$0xff]
  %v17 = vld [vmem:[%s0 + $0x10] sm:$0xff]
  %v18 = vld [vmem:[%s0 + $0x18] sm:$0xff]
  %v19 = vld [vmem:[%s0 + $0x20] sm:$0xff]
  %v20 = vld [vmem:[%s0 + $0x28] sm:$0xff]
  %v21 = vld [vmem:[%s0 + $0x30] sm:$0xff]
  %v22 = vld [vmem:[%s0 + $0x38] sm:$0xff]
  %v23 = vld [vmem:[%s0 + $0x40] sm:$0xff]
  %v24 = vld [vmem:[%s0 + $0x48] sm:$0xff]
  %v25 = vld [vmem:[%s0 + $0x50] sm:$0xff]
  %v26 = vld [vmem:[%s0 + $0x58] sm:$0xff]
  %v27 = vld [vmem:[%s0 + $0x60] sm:$0xf]
  %v28 = vld [vmem:[%s1] sm:$0xff]
  %v29 = vld [vmem:[%s1 + $0x8] sm:$0xff]
  %v30 = vld [vmem:[%s1 + $0x10] sm:$0xff]
  %v31 = vld [vmem:[%s1 + $0x18] sm:$0xff]
  %v32 = vld [vmem:[%s1 + $0x20] sm:$0xff]
  %v33 = vld [vmem:[%s1 + $0x28] sm:$0xff]
  %v34 = vld [vmem:[%s1 + $0x30] sm:$0xff]
  %v35 = vld [vmem:[%s1 + $0x38] sm:$0xff]
  %v36 = vld [vmem:[%s1 + $0x40] sm:$0xff]
  %v37 = vld [vmem:[%s1 + $0x48] sm:$0xff]
  %v38 = vld [vmem:[%s1 + $0x50] sm:$0xff]
  %v39 = vld [vmem:[%s1 + $0x58] sm:$0xff]
  %v40 = vld [vmem:[%s1 + $0x60] sm:$0xff]
  %v41 = vld [vmem:[%s1 + $0x68] sm:$0xff]
  %v42 = vld [vmem:[%s1 + $0x70] sm:$0xff]
  %v43 = vld [vmem:[%s1 + $0x78] sm:$0xff]
  %v44 = vld [vmem:[%s1 + $0x80] sm:$0xff]
  %v45 = vld [vmem:[%s1 + $0x88] sm:$0xff]
  %v46 = vld [vmem:[%s1 + $0x90] sm:$0xff]
  %v47 = vld [vmem:[%s1 + $0x98] sm:$0xff]
  %v48 = vld [vmem:[%s1 + $0xa0] sm:$0xff]
  %v49 = vld [vmem:[%s1 + $0xa8] sm:$0xff]
  %v50 = vld [vmem:[%s1 + $0xb0] sm:$0xff]
  %v51 = vld [vmem:[%s1 + $0xb8] sm:$0xff]
  %v52 = vld [vmem:[%s1 + $0xc0] sm:$0xff]
  %v53 = vld [vmem:[%s1 + $0xc8] sm:$0xff]
  %v54 = vld [vmem:[%s1 + $0xd0] sm:$0xff]
  %v55 = vld [vmem:[%s1 + $0xd8] sm:$0xff]
  %v56 = vld [vmem:[%s1 + $0xe0] sm:$0xff]
  %v57 = vld [vmem:[%s1 + $0xe8] sm:$0xff]
  %v58 = vld [vmem:[%s1 + $0xf0] sm:$0xff]
  %v59 = vld [vmem:[%s1 + $0xf8] sm:$0xff]
  %v60 = vld [vmem:[%s1 + $0x100] sm:$0xff]
  %v61 = vld [vmem:[%s1 + $0x108] sm:$0xff]
  %v62 = vld [vmem:[%s1 + $0x110] sm:$0xff]
  %v63 = vld [vmem:[%s1 + $0x118] sm:$0xff]
  %v64 = vld [vmem:[%s1 + $0x120] sm:$0xff]
  %v65 = vld [vmem:[%s1 + $0x128] sm:$0xff]
  %v66 = vld [vmem:[%s1 + $0x130] sm:$0xff]
  %v67 = vld [vmem:[%s1 + $0x138] sm:$0xff]
  %v68 = vld [vmem:[%s1 + $0x140] sm:$0xff]
  %v69 = vld [vmem:[%s1 + $0x148] sm:$0xff]
  %v70 = vld [vmem:[%s1 + $0x150] sm:$0xff]
  %v71 = vld [vmem:[%s1 + $0x158] sm:$0xff]
  %v72 = vld [vmem:[%s1 + $0x160] sm:$0xff]
  %v73 = vld [vmem:[%s1 + $0x168] sm:$0xff]
  %v74 = vld [vmem:[%s1 + $0x170] sm:$0xff]
  %v75 = vld [vmem:[%s1 + $0x178] sm:$0xff]
  %v76 = vld [vmem:[%s1 + $0x180] sm:$0xff]
  %v77 = vld [vmem:[%s1 + $0x188] sm:$0xff]
  %v78 = vld [vmem:[%s1 + $0x190] sm:$0xff]
  %v79 = vld [vmem:[%s1 + $0x198] sm:$0xff]
  %v80 = vld [vmem:[%s1 + $0x1a0] sm:$0xff]
  %v81 = vld [vmem:[%s1 + $0x1a8] sm:$0xff]
  %v82 = vld [vmem:[%s1 + $0x1b0] sm:$0xff]
  %v83 = vld [vmem:[%s1 + $0x1b8] sm:$0xff]
  %v84 = vld [vmem:[%s1 + $0x1c0] sm:$0xff]
  %v85 = vld [vmem:[%s1 + $0x1c8] sm:$0xff]
  %v86 = vld [vmem:[%s1 + $0x1d0] sm:$0xff]
  %v87 = vld [vmem:[%s1 + $0x1d8] sm:$0xff]
  %v88 = vld [vmem:[%s1 + $0x1e0] sm:$0xff]
  %v89 = vld [vmem:[%s1 + $0x1e8] sm:$0xff]
  %v90 = vld [vmem:[%s1 + $0x1f0] sm:$0xff]
  %v91 = vld [vmem:[%s1 + $0x1f8] sm:$0xff]
  %v92 = vld [vmem:[%s1 + $0x200] sm:$0xff]
  %v93 = vld [vmem:[%s1 + $0x208] sm:$0xff]
  %v94 = vld [vmem:[%s1 + $0x210] sm:$0xff]
  %v95 = vld [vmem:[%s1 + $0x218] sm:$0xff]
  %v96 = vld [vmem:[%s1 + $0x220] sm:$0xff]
  %v97 = vld [vmem:[%s1 + $0x228] sm:$0xff]
  %v98 = vld [vmem:[%s1 + $0x230] sm:$0xff]
  %v99 = vld [vmem:[%s1 + $0x238] sm:$0xff]
  %v100 = vld [vmem:[%s1 + $0x240] sm:$0xff]
  %v101 = vld [vmem:[%s1 + $0x248] sm:$0xff]
  %v102 = vld [vmem:[%s1 + $0x250] sm:$0xff]
  %v103 = vld [vmem:[%s1 + $0x258] sm:$0xff]
  %v104 = vld [vmem:[%s1 + $0x260] sm:$0xff]
  %v105 = vld [vmem:[%s1 + $0x268] sm:$0xff]
  %v106 = vld [vmem:[%s1 + $0x270] sm:$0xff]
  %v107 = vld [vmem:[%s1 + $0x278] sm:$0xff]
  %v108 = vld [vmem:[%s1 + $0x280] sm:$0xff]
  %v109 = vld [vmem:[%s1 + $0x288] sm:$0xff]
  %v110 = vld [vmem:[%s1 + $0x290] sm:$0xff]
  %v111 = vld [vmem:[%s1 + $0x298] sm:$0xff]
  %v112 = vld [vmem:[%s1 + $0x2a0] sm:$0xff]
  %v113 = vld [vmem:[%s1 + $0x2a8] sm:$0xff]
  %v114 = vld [vmem:[%s1 + $0x2b0] sm:$0xff]
  %v115 = vld [vmem:[%s1 + $0x2b8] sm:$0xff]
  %v116 = vld [vmem:[%s1 + $0x2c0] sm:$0xff]
  %v117 = vld [vmem:[%s1 + $0x2c8] sm:$0xff]
  %v118 = vld [vmem:[%s1 + $0x2d0] sm:$0xff]
  %v119 = vld [vmem:[%s1 + $0x2d8] sm:$0xff]
  %v120 = vld [vmem:[%s1 + $0x2e0] sm:$0xff]
  %v121 = vld [vmem:[%s1 + $0x2e8] sm:$0xff]
  %v122 = vld [vmem:[%s1 + $0x2f0] sm:$0xff]
  %v123 = vld [vmem:[%s1 + $0x2f8] sm:$0xff]
  %v124 = vld [vmem:[%s1 + $0x300] sm:$0xff]
  %v125 = vld [vmem:[%s1 + $0x308] sm:$0xff]
  %v126 = vld [vmem:[%s1 + $0x310] sm:$0xff]
  %v127 = vld [vmem:[%s1 + $0x318] sm:$0xff]
  %v128 = vld [vmem:[%s1 + $0x320] sm:$0xff]
  %v129 = vld [vmem:[%s1 + $0x328] sm:$0xff]
  %v130 = vld [vmem:[%s1 + $0x330] sm:$0xff]
  %v131 = vld [vmem:[%s1 + $0x338] sm:$0xff]
  %v132 = vld [vmem:[%s1 + $0x340] sm:$0xff]
  %v133 = vld [vmem:[%s1 + $0x348] sm:$0xff]
  %v134 = vld [vmem:[%s1 + $0x350] sm:$0xff]
  %v135 = vld [vmem:[%s1 + $0x358] sm:$0xff]
  %v136 = vld [vmem:[%s1 + $0x360] sm:$0xff]
  %v137 = vld [vmem:[%s1 + $0x368] sm:$0xff]
  %v138 = vld [vmem:[%s1 + $0x370] sm:$0xff]
  %v139 = vld [vmem:[%s1 + $0x378] sm:$0xff]
  %v140 = vld [vmem:[%s1 + $0x380] sm:$0xff]
  %v141 = vld [vmem:[%s1 + $0x388] sm:$0xff]
  %v142 = vld [vmem:[%s1 + $0x390] sm:$0xff]
  %v143 = vld [vmem:[%s1 + $0x398] sm:$0xff]
  %v144 = vld [vmem:[%s1 + $0x3a0] sm:$0xff]
  %v145 = vld [vmem:[%s1 + $0x3a8] sm:$0xff]
  %v146 = vld [vmem:[%s1 + $0x3b0] sm:$0xff]
  %v147 = vld [vmem:[%s1 + $0x3b8] sm:$0xff]
  %v148 = vld [vmem:[%s1 + $0x3c0] sm:$0xff]
  %v149 = vld [vmem:[%s1 + $0x3c8] sm:$0xff]
  %v150 = vld [vmem:[%s1 + $0x3d0] sm:$0xff]
  %v151 = vld [vmem:[%s1 + $0x3d8] sm:$0xff]
  %v152 = vld [vmem:[%s1 + $0x3e0] sm:$0xff]
  %v153 = vld [vmem:[%s1 + $0x3e8] sm:$0xff]
  %v154 = vld [vmem:[%s1 + $0x3f0] sm:$0xff]
  %v155 = vld [vmem:[%s1 + $0x3f8] sm:$0xff]
  %v156 = vld [vmem:[%s1 + $0x400] sm:$0xff]
  %v157 = vld [vmem:[%s1 + $0x408] sm:$0xff]
  %v158 = vld [vmem:[%s1 + $0x410] sm:$0xff]
  %v159 = vld [vmem:[%s1 + $0x418] sm:$0xff]
  %v160 = vld [vmem:[%s1 + $0x420] sm:$0xff]
  %v161 = vld [vmem:[%s1 + $0x428] sm:$0xff]
  %v162 = vld [vmem:[%s1 + $0x430] sm:$0xff]
  %v163 = vld [vmem:[%s1 + $0x438] sm:$0xff]
  %v164 = vld [vmem:[%s1 + $0x440] sm:$0xff]
  %v165 = vld [vmem:[%s1 + $0x448] sm:$0xff]
  %v166 = vld [vmem:[%s1 + $0x450] sm:$0xff]
  %v167 = vld [vmem:[%s1 + $0x458] sm:$0xff]
  %v168 = vld [vmem:[%s1 + $0x460] sm:$0xff]
  %v169 = vld [vmem:[%s1 + $0x468] sm:$0xff]
  %v170 = vld [vmem:[%s1 + $0x470] sm:$0xff]
  %v171 = vld [vmem:[%s1 + $0x478] sm:$0xff]
  %v172 = vld [vmem:[%s1 + $0x480] sm:$0xff]
  %v173 = vld [vmem:[%s1 + $0x488] sm:$0xff]
  %v174 = vld [vmem:[%s1 + $0x490] sm:$0xff]
  %v175 = vld [vmem:[%s1 + $0x498] sm:$0xff]
  %v176 = vld [vmem:[%s1 + $0x4a0] sm:$0xff]
  %v177 = vld [vmem:[%s1 + $0x4a8] sm:$0xff]
  %v178 = vld [vmem:[%s1 + $0x4b0] sm:$0xff]
  %v179 = vld [vmem:[%s1 + $0x4b8] sm:$0xff]
  %v180 = vld [vmem:[%s1 + $0x4c0] sm:$0xff]
  %v181 = vld [vmem:[%s1 + $0x4c8] sm:$0xff]
  %v182 = vld [vmem:[%s1 + $0x4d0] sm:$0xff]
  %v183 = vld [vmem:[%s1 + $0x4d8] sm:$0xff]
  %v184 = vld [vmem:[%s1 + $0x4e0] sm:$0xff]
  %v185 = vld [vmem:[%s1 + $0x4e8] sm:$0xff]
  %v186 = vld [vmem:[%s1 + $0x4f0] sm:$0xff]
  %v187 = vld [vmem:[%s1 + $0x4f8] sm:$0xff]
  %v188 = vld [vmem:[%s1 + $0x500] sm:$0xff]
  %v189 = vld [vmem:[%s1 + $0x508] sm:$0xff]
  %v190 = vld [vmem:[%s1 + $0x510] sm:$0xff]
  %v191 = vld [vmem:[%s1 + $0x518] sm:$0xff]
  %v192 = vld [vmem:[%s1 + $0x520] sm:$0xff]
  %v193 = vld [vmem:[%s1 + $0x528] sm:$0xff]
  %v194 = vld [vmem:[%s1 + $0x530] sm:$0xff]
  %v195 = vld [vmem:[%s1 + $0x538] sm:$0xff]
  %v196 = vld [vmem:[%s1 + $0x540] sm:$0xff]
  %v197 = vld [vmem:[%s1 + $0x548] sm:$0xff]
  %v198 = vld [vmem:[%s1 + $0x550] sm:$0xff]
  %v199 = vld [vmem:[%s1 + $0x558] sm:$0xff]
  %v200 = vld [vmem:[%s1 + $0x560] sm:$0xff]
  %v201 = vld [vmem:[%s1 + $0x568] sm:$0xff]
  %v202 = vld [vmem:[%s1 + $0x570] sm:$0xff]
  %v203 = vld [vmem:[%s1 + $0x578] sm:$0xff]
  %v204 = vld [vmem:[%s1 + $0x580] sm:$0xff]
  %v205 = vld [vmem:[%s1 + $0x588] sm:$0xff]
  %v206 = vld [vmem:[%s1 + $0x590] sm:$0xff]
  %v207 = vld [vmem:[%s1 + $0x598] sm:$0xff]
  %v208 = vld [vmem:[%s1 + $0x5a0] sm:$0xff]
  %v209 = vld [vmem:[%s1 + $0x5a8] sm:$0xff]
  %v210 = vld [vmem:[%s1 + $0x5b0] sm:$0xff]
  %v211 = vld [vmem:[%s1 + $0x5b8] sm:$0xff]
  %v212 = vld [vmem:[%s1 + $0x5c0] sm:$0xff]
  %v213 = vld [vmem:[%s1 + $0x5c8] sm:$0xff]
  %v214 = vld [vmem:[%s1 + $0x5d0] sm:$0xff]
  %v215 = vld [vmem:[%s1 + $0x5d8] sm:$0xff]
  %v216 = vld [vmem:[%s1 + $0x5e0] sm:$0xff]
  %v217 = vld [vmem:[%s1 + $0x5e8] sm:$0xff]
  %v218 = vld [vmem:[%s1 + $0x5f0] sm:$0xff]
  %v219 = vld [vmem:[%s1 + $0x5f8] sm:$0xff]
  %v220 = vld [vmem:[%s1 + $0x600] sm:$0xff]
  %v221 = vld [vmem:[%s1 + $0x608] sm:$0xff]
  %v222 = vld [vmem:[%s1 + $0x610] sm:$0xff]
  %v223 = vld [vmem:[%s1 + $0x618] sm:$0xff]
  %v224 = vld [vmem:[%s1 + $0x620] sm:$0xff]
  %v225 = vld [vmem:[%s1 + $0x628] sm:$0xff]
  %v226 = vld [vmem:[%s1 + $0x630] sm:$0xff]
  %v227 = vld [vmem:[%s1 + $0x638] sm:$0xff]
  %v228 = vld [vmem:[%s1 + $0x640] sm:$0xff]
  %v229 = vld [vmem:[%s1 + $0x648] sm:$0xff]
  %v230 = vld [vmem:[%s1 + $0x650] sm:$0xff]
  %v231 = vld [vmem:[%s1 + $0x658] sm:$0xff]
  %v232 = vld [vmem:[%s1 + $0x660] sm:$0xff]
  %v233 = vld [vmem:[%s1 + $0x668] sm:$0xff]
  %v234 = vld [vmem:[%s1 + $0x670] sm:$0xff]
  %v235 = vld [vmem:[%s1 + $0x678] sm:$0xff]
  %v236 = vld [vmem:[%s1 + $0x680] sm:$0xff]
  %v237 = vld [vmem:[%s1 + $0x688] sm:$0xff]
  %v238 = vld [vmem:[%s1 + $0x690] sm:$0xff]
  %v239 = vld [vmem:[%s1 + $0x698] sm:$0xff]
  %v240 = vld [vmem:[%s1 + $0x6a0] sm:$0xff]
  %v241 = vld [vmem:[%s1 + $0x6a8] sm:$0xff]
  %v242 = vld [vmem:[%s1 + $0x6b0] sm:$0xff]
  %v243 = vld [vmem:[%s1 + $0x6b8] sm:$0xff]
  %v244 = vld [vmem:[%s1 + $0x6c0] sm:$0xff]
  %v245 = vld [vmem:[%s1 + $0x6c8] sm:$0xff]
  %v246 = vld [vmem:[%s1 + $0x6d0] sm:$0xff]
  %v247 = vld [vmem:[%s1 + $0x6d8] sm:$0xff]
  %v248 = vld [vmem:[%s1 + $0x6e0] sm:$0xff]
  %v249 = vld [vmem:[%s1 + $0x6e8] sm:$0xff]
  %v250 = vld [vmem:[%s1 + $0x6f0] sm:$0xff]
  %v251 = vld [vmem:[%s1 + $0x6f8] sm:$0xff]
  %v252 = vld [vmem:[%s1 + $0x700] sm:$0xff]
  %v253 = vld [vmem:[%s1 + $0x708] sm:$0xff]
  %v254 = vld [vmem:[%s1 + $0x710] sm:$0xff]
  %v255 = vld [vmem:[%s1 + $0x718] sm:$0xff]
  %v256 = vld [vmem:[%s1 + $0x720] sm:$0xff]
  %v257 = vld [vmem:[%s1 + $0x728] sm:$0xff]
  %v258 = vld [vmem:[%s1 + $0x730] sm:$0xff]
  %v259 = vld [vmem:[%s1 + $0x738] sm:$0xff]
  %v260 = vld [vmem:[%s1 + $0x740] sm:$0xff]
  %v261 = vld [vmem:[%s1 + $0x748] sm:$0xff]
  %v262 = vld [vmem:[%s1 + $0x750] sm:$0xff]
  %v263 = vld [vmem:[%s1 + $0x758] sm:$0xff]
  %v264 = vld [vmem:[%s1 + $0x760] sm:$0xff]
  %v265 = vld [vmem:[%s1 + $0x768] sm:$0xff]
  %v266 = vld [vmem:[%s1 + $0x770] sm:$0xff]
  %v267 = vld [vmem:[%s1 + $0x778] sm:$0xff]
  %v268 = vld [vmem:[%s1 + $0x780] sm:$0xff]
  %v269 = vld [vmem:[%s1 + $0x788] sm:$0xff]
  %v270 = vld [vmem:[%s1 + $0x790] sm:$0xff]
  %v271 = vld [vmem:[%s1 + $0x798] sm:$0xff]
  %v272 = vld [vmem:[%s1 + $0x7a0] sm:$0xff]
  %v273 = vld [vmem:[%s1 + $0x7a8] sm:$0xff]
  %v274 = vld [vmem:[%s1 + $0x7b0] sm:$0xff]
  %v275 = vld [vmem:[%s1 + $0x7b8] sm:$0xff]
  %v276 = vld [vmem:[%s1 + $0x7c0] sm:$0xff]
  %v277 = vld [vmem:[%s1 + $0x7c8] sm:$0xff]
  %v278 = vld [vmem:[%s1 + $0x7d0] sm:$0xff]
  %v279 = vld [vmem:[%s1 + $0x7d8] sm:$0xff]
  %v280 = vld [vmem:[%s1 + $0x7e0] sm:$0xff]
  %v281 = vld [vmem:[%s1 + $0x7e8] sm:$0xff]
  %v282 = vld [vmem:[%s1 + $0x7f0] sm:$0xff]
  %v283 = vld [vmem:[%s1 + $0x7f8] sm:$0xff]
  %v284 = vld [vmem:[%s1 + $0x800] sm:$0xff]
  %v285 = vld [vmem:[%s1 + $0x808] sm:$0xff]
  %v286 = vld [vmem:[%s1 + $0x810] sm:$0xff]
  %v287 = vld [vmem:[%s1 + $0x818] sm:$0xff]
  %v288 = vld [vmem:[%s1 + $0x820] sm:$0xff]
  %v289 = vld [vmem:[%s1 + $0x828] sm:$0xff]
  %v290 = vld [vmem:[%s1 + $0x830] sm:$0xff]
  %v291 = vld [vmem:[%s1 + $0x838] sm:$0xff]
  %v292 = vld [vmem:[%s1 + $0x840] sm:$0xff]
  %v293 = vld [vmem:[%s1 + $0x848] sm:$0xff]
  %v294 = vld [vmem:[%s1 + $0x850] sm:$0xff]
  %v295 = vld [vmem:[%s1 + $0x858] sm:$0xff]
  %v296 = vld [vmem:[%s1 + $0x860] sm:$0xff]
  %v297 = vld [vmem:[%s1 + $0x868] sm:$0xff]
  %v298 = vld [vmem:[%s1 + $0x870] sm:$0xff]
  %v299 = vld [vmem:[%s1 + $0x878] sm:$0xff]
  %v300 = vld [vmem:[%s1 + $0x880] sm:$0xff]
  %v301 = vld [vmem:[%s1 + $0x888] sm:$0xff]
  %v302 = vld [vmem:[%s1 + $0x890] sm:$0xff]
  %v303 = vld [vmem:[%s1 + $0x898] sm:$0xff]
  %v304 = vld [vmem:[%s1 + $0x8a0] sm:$0xff]
  %v305 = vld [vmem:[%s1 + $0x8a8] sm:$0xff]
  %v306 = vld [vmem:[%s1 + $0x8b0] sm:$0xff]
  %v307 = vld [vmem:[%s1 + $0x8b8] sm:$0xff]
  %v308 = vld [vmem:[%s1 + $0x8c0] sm:$0xff]
  %v309 = vld [vmem:[%s1 + $0x8c8] sm:$0xff]
  %v310 = vld [vmem:[%s1 + $0x8d0] sm:$0xff]
  %v311 = vld [vmem:[%s1 + $0x8d8] sm:$0xff]
  %v312 = vld [vmem:[%s1 + $0x8e0] sm:$0xff]
  %v313 = vld [vmem:[%s1 + $0x8e8] sm:$0xff]
  %v314 = vld [vmem:[%s1 + $0x8f0] sm:$0xff]
  %v315 = vld [vmem:[%s1 + $0x8f8] sm:$0xff]
  %v316 = vld [vmem:[%s1 + $0x900] sm:$0xff]
  %v317 = vld [vmem:[%s1 + $0x908] sm:$0xff]
  %v318 = vld [vmem:[%s1 + $0x910] sm:$0xff]
  %v319 = vld [vmem:[%s1 + $0x918] sm:$0xff]
  %v320 = vld [vmem:[%s1 + $0x920] sm:$0xff]
  %v321 = vld [vmem:[%s1 + $0x928] sm:$0xff]
  %v322 = vld [vmem:[%s1 + $0x930] sm:$0xff]
  %v323 = vld [vmem:[%s1 + $0x938] sm:$0xff]
  %v324 = vld [vmem:[%s1 + $0x940] sm:$0xff]
  %v325 = vld [vmem:[%s1 + $0x948] sm:$0xff]
  %v326 = vld [vmem:[%s1 + $0x950] sm:$0xff]
  %v327 = vld [vmem:[%s1 + $0x958] sm:$0xff]
  %v328 = vld [vmem:[%s1 + $0x960] sm:$0xff]
  %v329 = vld [vmem:[%s1 + $0x968] sm:$0xff]
  %v330 = vld [vmem:[%s1 + $0x970] sm:$0xff]
  %v331 = vld [vmem:[%s1 + $0x978] sm:$0xff]
  %v332 = vld [vmem:[%s1 + $0x980] sm:$0xff]
  %v333 = vld [vmem:[%s1 + $0x988] sm:$0xff]
  %v334 = vld [vmem:[%s1 + $0x990] sm:$0xff]
  %v335 = vld [vmem:[%s1 + $0x998] sm:$0xff]
  %v336 = vld [vmem:[%s1 + $0x9a0] sm:$0xff]
  %v337 = vld [vmem:[%s1 + $0x9a8] sm:$0xff]
  %v338 = vld [vmem:[%s1 + $0x9b0] sm:$0xff]
  %v339 = vld [vmem:[%s1 + $0x9b8] sm:$0xff]
  %v340 = vld [vmem:[%s1 + $0x9c0] sm:$0xff]
  %v341 = vld [vmem:[%s1 + $0x9c8] sm:$0xff]
  %v342 = vld [vmem:[%s1 + $0x9d0] sm:$0xff]
  %v343 = vld [vmem:[%s1 + $0x9d8] sm:$0xff]
  %v344 = vld [vmem:[%s1 + $0x9e0] sm:$0xff]
  %v345 = vld [vmem:[%s1 + $0x9e8] sm:$0xff]
  %v346 = vld [vmem:[%s1 + $0x9f0] sm:$0xff]
  %v347 = vld [vmem:[%s1 + $0x9f8] sm:$0xff]
  %v348 = vld [vmem:[%s1 + $0xa00] sm:$0xff]
  %v349 = vld [vmem:[%s1 + $0xa08] sm:$0xff]
  %v350 = vld [vmem:[%s1 + $0xa10] sm:$0xff]
  %v351 = vld [vmem:[%s1 + $0xa18] sm:$0xff]
  %v352 = vld [vmem:[%s1 + $0xa20] sm:$0xff]
  %v353 = vld [vmem:[%s1 + $0xa28] sm:$0xff]
  %v354 = vld [vmem:[%s1 + $0xa30] sm:$0xff]
  %v355 = vld [vmem:[%s1 + $0xa38] sm:$0xff]
  %v356 = vld [vmem:[%s1 + $0xa40] sm:$0xff]
  %v357 = vld [vmem:[%s1 + $0xa48] sm:$0xff]
  %v358 = vld [vmem:[%s1 + $0xa50] sm:$0xff]
  %v359 = vld [vmem:[%s1 + $0xa58] sm:$0xff]
  %v360 = vld [vmem:[%s1 + $0xa60] sm:$0xff]
  %v361 = vld [vmem:[%s1 + $0xa68] sm:$0xff]
  %v362 = vld [vmem:[%s1 + $0xa70] sm:$0xff]
  %v363 = vld [vmem:[%s1 + $0xa78] sm:$0xff]
  %v364 = vld [vmem:[%s1 + $0xa80] sm:$0xff]
  %v365 = vld [vmem:[%s1 + $0xa88] sm:$0xff]
  %v366 = vld [vmem:[%s1 + $0xa90] sm:$0xff]
  %v367 = vld [vmem:[%s1 + $0xa98] sm:$0xff]
  %v368 = vld [vmem:[%s1 + $0xaa0] sm:$0xff]
  %v369 = vld [vmem:[%s1 + $0xaa8] sm:$0xff]
  %v370 = vld [vmem:[%s1 + $0xab0] sm:$0xff]
  %v371 = vld [vmem:[%s1 + $0xab8] sm:$0xff]
  %v372 = vld [vmem:[%s1 + $0xac0] sm:$0xff]
  %v373 = vld [vmem:[%s1 + $0xac8] sm:$0xff]
  %v374 = vld [vmem:[%s1 + $0xad0] sm:$0xff]
  %v375 = vld [vmem:[%s1 + $0xad8] sm:$0xff]
  %v376 = vld [vmem:[%s1 + $0xae0] sm:$0xff]
  %v377 = vld [vmem:[%s1 + $0xae8] sm:$0xff]
  %v378 = vld [vmem:[%s1 + $0xaf0] sm:$0xff]
  %v379 = vld [vmem:[%s1 + $0xaf8] sm:$0xff]
  %v380 = vld [vmem:[%s1 + $0xb00] sm:$0xff]
  %v381 = vld [vmem:[%s1 + $0xb08] sm:$0xff]
  %v382 = vld [vmem:[%s1 + $0xb10] sm:$0xff]
  %v383 = vld [vmem:[%s1 + $0xb18] sm:$0xff]
  %v384 = vld [vmem:[%s1 + $0xb20] sm:$0xff]
  %v385 = vld [vmem:[%s1 + $0xb28] sm:$0xff]
  %v386 = vld [vmem:[%s1 + $0xb30] sm:$0xff]
  %v387 = vld [vmem:[%s1 + $0xb38] sm:$0xff]
  %v388 = vld [vmem:[%s1 + $0xb40] sm:$0xff]
  %v389 = vld [vmem:[%s1 + $0xb48] sm:$0xff]
  %v390 = vld [vmem:[%s1 + $0xb50] sm:$0xff]
  %v391 = vld [vmem:[%s1 + $0xb58] sm:$0xff]
  %v392 = vld [vmem:[%s1 + $0xb60] sm:$0xff]
  %v393 = vld [vmem:[%s1 + $0xb68] sm:$0xff]
  %v394 = vld [vmem:[%s1 + $0xb70] sm:$0xff]
  %v395 = vld [vmem:[%s1 + $0xb78] sm:$0xff]
  %v396 = vld [vmem:[%s1 + $0xb80] sm:$0xff]
  %v397 = vld [vmem:[%s1 + $0xb88] sm:$0xff]
  %v398 = vld [vmem:[%s1 + $0xb90] sm:$0xff]
  %v399 = vld [vmem:[%s1 + $0xb98] sm:$0xff]
  %v400 = vld [vmem:[%s1 + $0xba0] sm:$0xff]
  %v401 = vld [vmem:[%s1 + $0xba8] sm:$0xff]
  %v402 = vld [vmem:[%s1 + $0xbb0] sm:$0xff]
  %v403 = vld [vmem:[%s1 + $0xbb8] sm:$0xff]
  %v404 = vld [vmem:[%s1 + $0xbc0] sm:$0xff]
  %v405 = vld [vmem:[%s1 + $0xbc8] sm:$0xff]
  %v406 = vld [vmem:[%s1 + $0xbd0] sm:$0xff]
  %v407 = vld [vmem:[%s1 + $0xbd8] sm:$0xff]
  %v408 = vld [vmem:[%s1 + $0xbe0] sm:$0xff]
  %v409 = vld [vmem:[%s1 + $0xbe8] sm:$0xff]
  %v410 = vld [vmem:[%s1 + $0xbf0] sm:$0xff]
  %v411 = vld [vmem:[%s1 + $0xbf8] sm:$0xff]
  %v412 = vld [vmem:[%s1 + $0xc00] sm:$0xff]
  %v413 = vld [vmem:[%s1 + $0xc08] sm:$0xff]
  %v414 = vld [vmem:[%s1 + $0xc10] sm:$0xff]
  %v415 = vld [vmem:[%s1 + $0xc18] sm:$0xff]
  %v416 = vld [vmem:[%s1 + $0xc20] sm:$0xff]
  %v417 = vld [vmem:[%s1 + $0xc28] sm:$0xff]
  %v418 = vld [vmem:[%s1 + $0xc30] sm:$0xff]
  %v419 = vld [vmem:[%s1 + $0xc38] sm:$0xff]
  %v420 = vld [vmem:[%s1 + $0xc40] sm:$0xff]
  %v421 = vld [vmem:[%s1 + $0xc48] sm:$0xff]
  %v422 = vld [vmem:[%s1 + $0xc50] sm:$0xff]
  %v423 = vld [vmem:[%s1 + $0xc58] sm:$0xff]
  %v424 = vld [vmem:[%s1 + $0xc60] sm:$0xff]
  %v425 = vld [vmem:[%s1 + $0xc68] sm:$0xff]
  %v426 = vld [vmem:[%s1 + $0xc70] sm:$0xff]
  %v427 = vld [vmem:[%s1 + $0xc78] sm:$0xff]
  %v428 = vld [vmem:[%s2] sm:$0x3]
  %v430 = vlaneseq
  %v431 = vshrl.u32 %v430, 7
  %v432 = vsub.s32 0, %v431
  %v433 = vrot.slane %v428, %v432
  %v434 = vlaneseq
  %v435 = vshrl.u32 %v434, 7
  %v436 = vsub.s32 1, %v435
  %v437 = vrot.slane %v428, %v436
  %v453 = vunpack.c.l.b16 %v15
  %v454 = vunpack.c.h.b16 %v15
  %v455 = vunpack.c.l.b16 %v16
  %v456 = vunpack.c.h.b16 %v16
  %v457 = vunpack.c.l.b16 %v17
  %v458 = vunpack.c.h.b16 %v17
  %v459 = vunpack.c.l.b16 %v18
  %v460 = vunpack.c.h.b16 %v18
  %v461 = vunpack.c.l.b16 %v19
  %v462 = vunpack.c.h.b16 %v19
  %v463 = vunpack.c.l.b16 %v20
  %v464 = vunpack.c.h.b16 %v20
  %v465 = vunpack.c.l.b16 %v21
  %v466 = vunpack.c.h.b16 %v21
  %v467 = vunpack.c.l.b16 %v22
  %v468 = vunpack.c.h.b16 %v22
  %v469 = vunpack.c.l.b16 %v23
  %v470 = vunpack.c.h.b16 %v23
  %v471 = vunpack.c.l.b16 %v24
  %v472 = vunpack.c.h.b16 %v24
  %v473 = vunpack.c.l.b16 %v25
  %v474 = vunpack.c.h.b16 %v25
  %v475 = vunpack.c.l.b16 %v26
  %v476 = vunpack.c.h.b16 %v26
  %v477 = vunpack.c.l.b16 %v27
  %v478 = vpack.c.b16 %v453, %v453
  %v479 = vpack.c.b16 %v454, %v454
  %v480 = vpack.c.b16 %v455, %v455
  %v481 = vpack.c.b16 %v456, %v456
  %v482 = vpack.c.b16 %v457, %v457
  %v483 = vpack.c.b16 %v458, %v458
  %v484 = vpack.c.b16 %v459, %v459
  %v485 = vpack.c.b16 %v460, %v460
  %v486 = vpack.c.b16 %v461, %v461
  %v487 = vpack.c.b16 %v462, %v462
  %v488 = vpack.c.b16 %v463, %v463
  %v489 = vpack.c.b16 %v464, %v464
  %v490 = vpack.c.b16 %v465, %v465
  %v491 = vpack.c.b16 %v466, %v466
  %v492 = vpack.c.b16 %v467, %v467
  %v493 = vpack.c.b16 %v468, %v468
  %v494 = vpack.c.b16 %v469, %v469
  %v495 = vpack.c.b16 %v470, %v470
  %v496 = vpack.c.b16 %v471, %v471
  %v497 = vpack.c.b16 %v472, %v472
  %v498 = vpack.c.b16 %v473, %v473
  %v499 = vpack.c.b16 %v474, %v474
  %v500 = vpack.c.b16 %v475, %v475
  %v501 = vpack.c.b16 %v476, %v476
  %v502 = vpack.c.b16 %v477, %v477
  %v928 = vunpack.c.l.b16 %v28
  %v929 = vunpack.c.h.b16 %v28
  %v930 = vunpack.c.l.b16 %v29
  %v931 = vunpack.c.h.b16 %v29
  %v932 = vunpack.c.l.b16 %v30
  %v933 = vunpack.c.h.b16 %v30
  %v934 = vunpack.c.l.b16 %v31
  %v935 = vunpack.c.h.b16 %v31
  %v936 = vunpack.c.l.b16 %v32
  %v937 = vunpack.c.h.b16 %v32
  %v938 = vunpack.c.l.b16 %v33
  %v939 = vunpack.c.h.b16 %v33
  %v940 = vunpack.c.l.b16 %v34
  %v941 = vunpack.c.h.b16 %v34
  %v942 = vunpack.c.l.b16 %v35
  %v943 = vunpack.c.h.b16 %v35
  %v944 = vunpack.c.l.b16 %v36
  %v945 = vunpack.c.h.b16 %v36
  %v946 = vunpack.c.l.b16 %v37
  %v947 = vunpack.c.h.b16 %v37
  %v948 = vunpack.c.l.b16 %v38
  %v949 = vunpack.c.h.b16 %v38
  %v950 = vunpack.c.l.b16 %v39
  %v951 = vunpack.c.h.b16 %v39
  %v952 = vunpack.c.l.b16 %v40
  %v953 = vunpack.c.h.b16 %v40
  %v954 = vunpack.c.l.b16 %v41
  %v955 = vunpack.c.h.b16 %v41
  %v956 = vunpack.c.l.b16 %v42
  %v957 = vunpack.c.h.b16 %v42
  %v958 = vunpack.c.l.b16 %v43
  %v959 = vunpack.c.h.b16 %v43
  %v960 = vunpack.c.l.b16 %v44
  %v961 = vunpack.c.h.b16 %v44
  %v962 = vunpack.c.l.b16 %v45
  %v963 = vunpack.c.h.b16 %v45
  %v964 = vunpack.c.l.b16 %v46
  %v965 = vunpack.c.h.b16 %v46
  %v966 = vunpack.c.l.b16 %v47
  %v967 = vunpack.c.h.b16 %v47
  %v968 = vunpack.c.l.b16 %v48
  %v969 = vunpack.c.h.b16 %v48
  %v970 = vunpack.c.l.b16 %v49
  %v971 = vunpack.c.h.b16 %v49
  %v972 = vunpack.c.l.b16 %v50
  %v973 = vunpack.c.h.b16 %v50
  %v974 = vunpack.c.l.b16 %v51
  %v975 = vunpack.c.h.b16 %v51
  %v976 = vunpack.c.l.b16 %v52
  %v977 = vunpack.c.h.b16 %v52
  %v978 = vunpack.c.l.b16 %v53
  %v979 = vunpack.c.h.b16 %v53
  %v980 = vunpack.c.l.b16 %v54
  %v981 = vunpack.c.h.b16 %v54
  %v982 = vunpack.c.l.b16 %v55
  %v983 = vunpack.c.h.b16 %v55
  %v984 = vunpack.c.l.b16 %v56
  %v985 = vunpack.c.h.b16 %v56
  %v986 = vunpack.c.l.b16 %v57
  %v987 = vunpack.c.h.b16 %v57
  %v988 = vunpack.c.l.b16 %v58
  %v989 = vunpack.c.h.b16 %v58
  %v990 = vunpack.c.l.b16 %v59
  %v991 = vunpack.c.h.b16 %v59
  %v992 = vunpack.c.l.b16 %v60
  %v993 = vunpack.c.h.b16 %v60
  %v994 = vunpack.c.l.b16 %v61
  %v995 = vunpack.c.h.b16 %v61
  %v996 = vunpack.c.l.b16 %v62
  %v997 = vunpack.c.h.b16 %v62
  %v998 = vunpack.c.l.b16 %v63
  %v999 = vunpack.c.h.b16 %v63
  %v1000 = vunpack.c.l.b16 %v64
  %v1001 = vunpack.c.h.b16 %v64
  %v1002 = vunpack.c.l.b16 %v65
  %v1003 = vunpack.c.h.b16 %v65
  %v1004 = vunpack.c.l.b16 %v66
  %v1005 = vunpack.c.h.b16 %v66
  %v1006 = vunpack.c.l.b16 %v67
  %v1007 = vunpack.c.h.b16 %v67
  %v1008 = vunpack.c.l.b16 %v68
  %v1009 = vunpack.c.h.b16 %v68
  %v1010 = vunpack.c.l.b16 %v69
  %v1011 = vunpack.c.h.b16 %v69
  %v1012 = vunpack.c.l.b16 %v70
  %v1013 = vunpack.c.h.b16 %v70
  %v1014 = vunpack.c.l.b16 %v71
  %v1015 = vunpack.c.h.b16 %v71
  %v1016 = vunpack.c.l.b16 %v72
  %v1017 = vunpack.c.h.b16 %v72
  %v1018 = vunpack.c.l.b16 %v73
  %v1019 = vunpack.c.h.b16 %v73
  %v1020 = vunpack.c.l.b16 %v74
  %v1021 = vunpack.c.h.b16 %v74
  %v1022 = vunpack.c.l.b16 %v75
  %v1023 = vunpack.c.h.b16 %v75
  %v1024 = vunpack.c.l.b16 %v76
  %v1025 = vunpack.c.h.b16 %v76
  %v1026 = vunpack.c.l.b16 %v77
  %v1027 = vunpack.c.h.b16 %v77
  %v1028 = vunpack.c.l.b16 %v78
  %v1029 = vunpack.c.h.b16 %v78
  %v1030 = vunpack.c.l.b16 %v79
  %v1031 = vunpack.c.h.b16 %v79
  %v1032 = vunpack.c.l.b16 %v80
  %v1033 = vunpack.c.h.b16 %v80
  %v1034 = vunpack.c.l.b16 %v81
  %v1035 = vunpack.c.h.b16 %v81
  %v1036 = vunpack.c.l.b16 %v82
  %v1037 = vunpack.c.h.b16 %v82
  %v1038 = vunpack.c.l.b16 %v83
  %v1039 = vunpack.c.h.b16 %v83
  %v1040 = vunpack.c.l.b16 %v84
  %v1041 = vunpack.c.h.b16 %v84
  %v1042 = vunpack.c.l.b16 %v85
  %v1043 = vunpack.c.h.b16 %v85
  %v1044 = vunpack.c.l.b16 %v86
  %v1045 = vunpack.c.h.b16 %v86
  %v1046 = vunpack.c.l.b16 %v87
  %v1047 = vunpack.c.h.b16 %v87
  %v1048 = vunpack.c.l.b16 %v88
  %v1049 = vunpack.c.h.b16 %v88
  %v1050 = vunpack.c.l.b16 %v89
  %v1051 = vunpack.c.h.b16 %v89
  %v1052 = vunpack.c.l.b16 %v90
  %v1053 = vunpack.c.h.b16 %v90
  %v1054 = vunpack.c.l.b16 %v91
  %v1055 = vunpack.c.h.b16 %v91
  %v1056 = vunpack.c.l.b16 %v92
  %v1057 = vunpack.c.h.b16 %v92
  %v1058 = vunpack.c.l.b16 %v93
  %v1059 = vunpack.c.h.b16 %v93
  %v1060 = vunpack.c.l.b16 %v94
  %v1061 = vunpack.c.h.b16 %v94
  %v1062 = vunpack.c.l.b16 %v95
  %v1063 = vunpack.c.h.b16 %v95
  %v1064 = vunpack.c.l.b16 %v96
  %v1065 = vunpack.c.h.b16 %v96
  %v1066 = vunpack.c.l.b16 %v97
  %v1067 = vunpack.c.h.b16 %v97
  %v1068 = vunpack.c.l.b16 %v98
  %v1069 = vunpack.c.h.b16 %v98
  %v1070 = vunpack.c.l.b16 %v99
  %v1071 = vunpack.c.h.b16 %v99
  %v1072 = vunpack.c.l.b16 %v100
  %v1073 = vunpack.c.h.b16 %v100
  %v1074 = vunpack.c.l.b16 %v101
  %v1075 = vunpack.c.h.b16 %v101
  %v1076 = vunpack.c.l.b16 %v102
  %v1077 = vunpack.c.h.b16 %v102
  %v1078 = vunpack.c.l.b16 %v103
  %v1079 = vunpack.c.h.b16 %v103
  %v1080 = vunpack.c.l.b16 %v104
  %v1081 = vunpack.c.h.b16 %v104
  %v1082 = vunpack.c.l.b16 %v105
  %v1083 = vunpack.c.h.b16 %v105
  %v1084 = vunpack.c.l.b16 %v106
  %v1085 = vunpack.c.h.b16 %v106
  %v1086 = vunpack.c.l.b16 %v107
  %v1087 = vunpack.c.h.b16 %v107
  %v1088 = vunpack.c.l.b16 %v108
  %v1089 = vunpack.c.h.b16 %v108
  %v1090 = vunpack.c.l.b16 %v109
  %v1091 = vunpack.c.h.b16 %v109
  %v1092 = vunpack.c.l.b16 %v110
  %v1093 = vunpack.c.h.b16 %v110
  %v1094 = vunpack.c.l.b16 %v111
  %v1095 = vunpack.c.h.b16 %v111
  %v1096 = vunpack.c.l.b16 %v112
  %v1097 = vunpack.c.h.b16 %v112
  %v1098 = vunpack.c.l.b16 %v113
  %v1099 = vunpack.c.h.b16 %v113
  %v1100 = vunpack.c.l.b16 %v114
  %v1101 = vunpack.c.h.b16 %v114
  %v1102 = vunpack.c.l.b16 %v115
  %v1103 = vunpack.c.h.b16 %v115
  %v1104 = vunpack.c.l.b16 %v116
  %v1105 = vunpack.c.h.b16 %v116
  %v1106 = vunpack.c.l.b16 %v117
  %v1107 = vunpack.c.h.b16 %v117
  %v1108 = vunpack.c.l.b16 %v118
  %v1109 = vunpack.c.h.b16 %v118
  %v1110 = vunpack.c.l.b16 %v119
  %v1111 = vunpack.c.h.b16 %v119
  %v1112 = vunpack.c.l.b16 %v120
  %v1113 = vunpack.c.h.b16 %v120
  %v1114 = vunpack.c.l.b16 %v121
  %v1115 = vunpack.c.h.b16 %v121
  %v1116 = vunpack.c.l.b16 %v122
  %v1117 = vunpack.c.h.b16 %v122
  %v1118 = vunpack.c.l.b16 %v123
  %v1119 = vunpack.c.h.b16 %v123
  %v1120 = vunpack.c.l.b16 %v124
  %v1121 = vunpack.c.h.b16 %v124
  %v1122 = vunpack.c.l.b16 %v125
  %v1123 = vunpack.c.h.b16 %v125
  %v1124 = vunpack.c.l.b16 %v126
  %v1125 = vunpack.c.h.b16 %v126
  %v1126 = vunpack.c.l.b16 %v127
  %v1127 = vunpack.c.h.b16 %v127
  %v1128 = vunpack.c.l.b16 %v128
  %v1129 = vunpack.c.h.b16 %v128
  %v1130 = vunpack.c.l.b16 %v129
  %v1131 = vunpack.c.h.b16 %v129
  %v1132 = vunpack.c.l.b16 %v130
  %v1133 = vunpack.c.h.b16 %v130
  %v1134 = vunpack.c.l.b16 %v131
  %v1135 = vunpack.c.h.b16 %v131
  %v1136 = vunpack.c.l.b16 %v132
  %v1137 = vunpack.c.h.b16 %v132
  %v1138 = vunpack.c.l.b16 %v133
  %v1139 = vunpack.c.h.b16 %v133
  %v1140 = vunpack.c.l.b16 %v134
  %v1141 = vunpack.c.h.b16 %v134
  %v1142 = vunpack.c.l.b16 %v135
  %v1143 = vunpack.c.h.b16 %v135
  %v1144 = vunpack.c.l.b16 %v136
  %v1145 = vunpack.c.h.b16 %v136
  %v1146 = vunpack.c.l.b16 %v137
  %v1147 = vunpack.c.h.b16 %v137
  %v1148 = vunpack.c.l.b16 %v138
  %v1149 = vunpack.c.h.b16 %v138
  %v1150 = vunpack.c.l.b16 %v139
  %v1151 = vunpack.c.h.b16 %v139
  %v1152 = vunpack.c.l.b16 %v140
  %v1153 = vunpack.c.h.b16 %v140
  %v1154 = vunpack.c.l.b16 %v141
  %v1155 = vunpack.c.h.b16 %v141
  %v1156 = vunpack.c.l.b16 %v142
  %v1157 = vunpack.c.h.b16 %v142
  %v1158 = vunpack.c.l.b16 %v143
  %v1159 = vunpack.c.h.b16 %v143
  %v1160 = vunpack.c.l.b16 %v144
  %v1161 = vunpack.c.h.b16 %v144
  %v1162 = vunpack.c.l.b16 %v145
  %v1163 = vunpack.c.h.b16 %v145
  %v1164 = vunpack.c.l.b16 %v146
  %v1165 = vunpack.c.h.b16 %v146
  %v1166 = vunpack.c.l.b16 %v147
  %v1167 = vunpack.c.h.b16 %v147
  %v1168 = vunpack.c.l.b16 %v148
  %v1169 = vunpack.c.h.b16 %v148
  %v1170 = vunpack.c.l.b16 %v149
  %v1171 = vunpack.c.h.b16 %v149
  %v1172 = vunpack.c.l.b16 %v150
  %v1173 = vunpack.c.h.b16 %v150
  %v1174 = vunpack.c.l.b16 %v151
  %v1175 = vunpack.c.h.b16 %v151
  %v1176 = vunpack.c.l.b16 %v152
  %v1177 = vunpack.c.h.b16 %v152
  %v1178 = vunpack.c.l.b16 %v153
  %v1179 = vunpack.c.h.b16 %v153
  %v1180 = vunpack.c.l.b16 %v154
  %v1181 = vunpack.c.h.b16 %v154
  %v1182 = vunpack.c.l.b16 %v155
  %v1183 = vunpack.c.h.b16 %v155
  %v1184 = vunpack.c.l.b16 %v156
  %v1185 = vunpack.c.h.b16 %v156
  %v1186 = vunpack.c.l.b16 %v157
  %v1187 = vunpack.c.h.b16 %v157
  %v1188 = vunpack.c.l.b16 %v158
  %v1189 = vunpack.c.h.b16 %v158
  %v1190 = vunpack.c.l.b16 %v159
  %v1191 = vunpack.c.h.b16 %v159
  %v1192 = vunpack.c.l.b16 %v160
  %v1193 = vunpack.c.h.b16 %v160
  %v1194 = vunpack.c.l.b16 %v161
  %v1195 = vunpack.c.h.b16 %v161
  %v1196 = vunpack.c.l.b16 %v162
  %v1197 = vunpack.c.h.b16 %v162
  %v1198 = vunpack.c.l.b16 %v163
  %v1199 = vunpack.c.h.b16 %v163
  %v1200 = vunpack.c.l.b16 %v164
  %v1201 = vunpack.c.h.b16 %v164
  %v1202 = vunpack.c.l.b16 %v165
  %v1203 = vunpack.c.h.b16 %v165
  %v1204 = vunpack.c.l.b16 %v166
  %v1205 = vunpack.c.h.b16 %v166
  %v1206 = vunpack.c.l.b16 %v167
  %v1207 = vunpack.c.h.b16 %v167
  %v1208 = vunpack.c.l.b16 %v168
  %v1209 = vunpack.c.h.b16 %v168
  %v1210 = vunpack.c.l.b16 %v169
  %v1211 = vunpack.c.h.b16 %v169
  %v1212 = vunpack.c.l.b16 %v170
  %v1213 = vunpack.c.h.b16 %v170
  %v1214 = vunpack.c.l.b16 %v171
  %v1215 = vunpack.c.h.b16 %v171
  %v1216 = vunpack.c.l.b16 %v172
  %v1217 = vunpack.c.h.b16 %v172
  %v1218 = vunpack.c.l.b16 %v173
  %v1219 = vunpack.c.h.b16 %v173
  %v1220 = vunpack.c.l.b16 %v174
  %v1221 = vunpack.c.h.b16 %v174
  %v1222 = vunpack.c.l.b16 %v175
  %v1223 = vunpack.c.h.b16 %v175
  %v1224 = vunpack.c.l.b16 %v176
  %v1225 = vunpack.c.h.b16 %v176
  %v1226 = vunpack.c.l.b16 %v177
  %v1227 = vunpack.c.h.b16 %v177
  %v1228 = vunpack.c.l.b16 %v178
  %v1229 = vunpack.c.h.b16 %v178
  %v1230 = vunpack.c.l.b16 %v179
  %v1231 = vunpack.c.h.b16 %v179
  %v1232 = vunpack.c.l.b16 %v180
  %v1233 = vunpack.c.h.b16 %v180
  %v1234 = vunpack.c.l.b16 %v181
  %v1235 = vunpack.c.h.b16 %v181
  %v1236 = vunpack.c.l.b16 %v182
  %v1237 = vunpack.c.h.b16 %v182
  %v1238 = vunpack.c.l.b16 %v183
  %v1239 = vunpack.c.h.b16 %v183
  %v1240 = vunpack.c.l.b16 %v184
  %v1241 = vunpack.c.h.b16 %v184
  %v1242 = vunpack.c.l.b16 %v185
  %v1243 = vunpack.c.h.b16 %v185
  %v1244 = vunpack.c.l.b16 %v186
  %v1245 = vunpack.c.h.b16 %v186
  %v1246 = vunpack.c.l.b16 %v187
  %v1247 = vunpack.c.h.b16 %v187
  %v1248 = vunpack.c.l.b16 %v188
  %v1249 = vunpack.c.h.b16 %v188
  %v1250 = vunpack.c.l.b16 %v189
  %v1251 = vunpack.c.h.b16 %v189
  %v1252 = vunpack.c.l.b16 %v190
  %v1253 = vunpack.c.h.b16 %v190
  %v1254 = vunpack.c.l.b16 %v191
  %v1255 = vunpack.c.h.b16 %v191
  %v1256 = vunpack.c.l.b16 %v192
  %v1257 = vunpack.c.h.b16 %v192
  %v1258 = vunpack.c.l.b16 %v193
  %v1259 = vunpack.c.h.b16 %v193
  %v1260 = vunpack.c.l.b16 %v194
  %v1261 = vunpack.c.h.b16 %v194
  %v1262 = vunpack.c.l.b16 %v195
  %v1263 = vunpack.c.h.b16 %v195
  %v1264 = vunpack.c.l.b16 %v196
  %v1265 = vunpack.c.h.b16 %v196
  %v1266 = vunpack.c.l.b16 %v197
  %v1267 = vunpack.c.h.b16 %v197
  %v1268 = vunpack.c.l.b16 %v198
  %v1269 = vunpack.c.h.b16 %v198
  %v1270 = vunpack.c.l.b16 %v199
  %v1271 = vunpack.c.h.b16 %v199
  %v1272 = vunpack.c.l.b16 %v200
  %v1273 = vunpack.c.h.b16 %v200
  %v1274 = vunpack.c.l.b16 %v201
  %v1275 = vunpack.c.h.b16 %v201
  %v1276 = vunpack.c.l.b16 %v202
  %v1277 = vunpack.c.h.b16 %v202
  %v1278 = vunpack.c.l.b16 %v203
  %v1279 = vunpack.c.h.b16 %v203
  %v1280 = vunpack.c.l.b16 %v204
  %v1281 = vunpack.c.h.b16 %v204
  %v1282 = vunpack.c.l.b16 %v205
  %v1283 = vunpack.c.h.b16 %v205
  %v1284 = vunpack.c.l.b16 %v206
  %v1285 = vunpack.c.h.b16 %v206
  %v1286 = vunpack.c.l.b16 %v207
  %v1287 = vunpack.c.h.b16 %v207
  %v1288 = vunpack.c.l.b16 %v208
  %v1289 = vunpack.c.h.b16 %v208
  %v1290 = vunpack.c.l.b16 %v209
  %v1291 = vunpack.c.h.b16 %v209
  %v1292 = vunpack.c.l.b16 %v210
  %v1293 = vunpack.c.h.b16 %v210
  %v1294 = vunpack.c.l.b16 %v211
  %v1295 = vunpack.c.h.b16 %v211
  %v1296 = vunpack.c.l.b16 %v212
  %v1297 = vunpack.c.h.b16 %v212
  %v1298 = vunpack.c.l.b16 %v213
  %v1299 = vunpack.c.h.b16 %v213
  %v1300 = vunpack.c.l.b16 %v214
  %v1301 = vunpack.c.h.b16 %v214
  %v1302 = vunpack.c.l.b16 %v215
  %v1303 = vunpack.c.h.b16 %v215
  %v1304 = vunpack.c.l.b16 %v216
  %v1305 = vunpack.c.h.b16 %v216
  %v1306 = vunpack.c.l.b16 %v217
  %v1307 = vunpack.c.h.b16 %v217
  %v1308 = vunpack.c.l.b16 %v218
  %v1309 = vunpack.c.h.b16 %v218
  %v1310 = vunpack.c.l.b16 %v219
  %v1311 = vunpack.c.h.b16 %v219
  %v1312 = vunpack.c.l.b16 %v220
  %v1313 = vunpack.c.h.b16 %v220
  %v1314 = vunpack.c.l.b16 %v221
  %v1315 = vunpack.c.h.b16 %v221
  %v1316 = vunpack.c.l.b16 %v222
  %v1317 = vunpack.c.h.b16 %v222
  %v1318 = vunpack.c.l.b16 %v223
  %v1319 = vunpack.c.h.b16 %v223
  %v1320 = vunpack.c.l.b16 %v224
  %v1321 = vunpack.c.h.b16 %v224
  %v1322 = vunpack.c.l.b16 %v225
  %v1323 = vunpack.c.h.b16 %v225
  %v1324 = vunpack.c.l.b16 %v226
  %v1325 = vunpack.c.h.b16 %v226
  %v1326 = vunpack.c.l.b16 %v227
  %v1327 = vunpack.c.h.b16 %v227
  %v1328 = vunpack.c.l.b16 %v228
  %v1329 = vunpack.c.h.b16 %v228
  %v1330 = vunpack.c.l.b16 %v229
  %v1331 = vunpack.c.h.b16 %v229
  %v1332 = vunpack.c.l.b16 %v230
  %v1333 = vunpack.c.h.b16 %v230
  %v1334 = vunpack.c.l.b16 %v231
  %v1335 = vunpack.c.h.b16 %v231
  %v1336 = vunpack.c.l.b16 %v232
  %v1337 = vunpack.c.h.b16 %v232
  %v1338 = vunpack.c.l.b16 %v233
  %v1339 = vunpack.c.h.b16 %v233
  %v1340 = vunpack.c.l.b16 %v234
  %v1341 = vunpack.c.h.b16 %v234
  %v1342 = vunpack.c.l.b16 %v235
  %v1343 = vunpack.c.h.b16 %v235
  %v1344 = vunpack.c.l.b16 %v236
  %v1345 = vunpack.c.h.b16 %v236
  %v1346 = vunpack.c.l.b16 %v237
  %v1347 = vunpack.c.h.b16 %v237
  %v1348 = vunpack.c.l.b16 %v238
  %v1349 = vunpack.c.h.b16 %v238
  %v1350 = vunpack.c.l.b16 %v239
  %v1351 = vunpack.c.h.b16 %v239
  %v1352 = vunpack.c.l.b16 %v240
  %v1353 = vunpack.c.h.b16 %v240
  %v1354 = vunpack.c.l.b16 %v241
  %v1355 = vunpack.c.h.b16 %v241
  %v1356 = vunpack.c.l.b16 %v242
  %v1357 = vunpack.c.h.b16 %v242
  %v1358 = vunpack.c.l.b16 %v243
  %v1359 = vunpack.c.h.b16 %v243
  %v1360 = vunpack.c.l.b16 %v244
  %v1361 = vunpack.c.h.b16 %v244
  %v1362 = vunpack.c.l.b16 %v245
  %v1363 = vunpack.c.h.b16 %v245
  %v1364 = vunpack.c.l.b16 %v246
  %v1365 = vunpack.c.h.b16 %v246
  %v1366 = vunpack.c.l.b16 %v247
  %v1367 = vunpack.c.h.b16 %v247
  %v1368 = vunpack.c.l.b16 %v248
  %v1369 = vunpack.c.h.b16 %v248
  %v1370 = vunpack.c.l.b16 %v249
  %v1371 = vunpack.c.h.b16 %v249
  %v1372 = vunpack.c.l.b16 %v250
  %v1373 = vunpack.c.h.b16 %v250
  %v1374 = vunpack.c.l.b16 %v251
  %v1375 = vunpack.c.h.b16 %v251
  %v1376 = vunpack.c.l.b16 %v252
  %v1377 = vunpack.c.h.b16 %v252
  %v1378 = vunpack.c.l.b16 %v253
  %v1379 = vunpack.c.h.b16 %v253
  %v1380 = vunpack.c.l.b16 %v254
  %v1381 = vunpack.c.h.b16 %v254
  %v1382 = vunpack.c.l.b16 %v255
  %v1383 = vunpack.c.h.b16 %v255
  %v1384 = vunpack.c.l.b16 %v256
  %v1385 = vunpack.c.h.b16 %v256
  %v1386 = vunpack.c.l.b16 %v257
  %v1387 = vunpack.c.h.b16 %v257
  %v1388 = vunpack.c.l.b16 %v258
  %v1389 = vunpack.c.h.b16 %v258
  %v1390 = vunpack.c.l.b16 %v259
  %v1391 = vunpack.c.h.b16 %v259
  %v1392 = vunpack.c.l.b16 %v260
  %v1393 = vunpack.c.h.b16 %v260
  %v1394 = vunpack.c.l.b16 %v261
  %v1395 = vunpack.c.h.b16 %v261
  %v1396 = vunpack.c.l.b16 %v262
  %v1397 = vunpack.c.h.b16 %v262
  %v1398 = vunpack.c.l.b16 %v263
  %v1399 = vunpack.c.h.b16 %v263
  %v1400 = vunpack.c.l.b16 %v264
  %v1401 = vunpack.c.h.b16 %v264
  %v1402 = vunpack.c.l.b16 %v265
  %v1403 = vunpack.c.h.b16 %v265
  %v1404 = vunpack.c.l.b16 %v266
  %v1405 = vunpack.c.h.b16 %v266
  %v1406 = vunpack.c.l.b16 %v267
  %v1407 = vunpack.c.h.b16 %v267
  %v1408 = vunpack.c.l.b16 %v268
  %v1409 = vunpack.c.h.b16 %v268
  %v1410 = vunpack.c.l.b16 %v269
  %v1411 = vunpack.c.h.b16 %v269
  %v1412 = vunpack.c.l.b16 %v270
  %v1413 = vunpack.c.h.b16 %v270
  %v1414 = vunpack.c.l.b16 %v271
  %v1415 = vunpack.c.h.b16 %v271
  %v1416 = vunpack.c.l.b16 %v272
  %v1417 = vunpack.c.h.b16 %v272
  %v1418 = vunpack.c.l.b16 %v273
  %v1419 = vunpack.c.h.b16 %v273
  %v1420 = vunpack.c.l.b16 %v274
  %v1421 = vunpack.c.h.b16 %v274
  %v1422 = vunpack.c.l.b16 %v275
  %v1423 = vunpack.c.h.b16 %v275
  %v1424 = vunpack.c.l.b16 %v276
  %v1425 = vunpack.c.h.b16 %v276
  %v1426 = vunpack.c.l.b16 %v277
  %v1427 = vunpack.c.h.b16 %v277
  %v1428 = vunpack.c.l.b16 %v278
  %v1429 = vunpack.c.h.b16 %v278
  %v1430 = vunpack.c.l.b16 %v279
  %v1431 = vunpack.c.h.b16 %v279
  %v1432 = vunpack.c.l.b16 %v280
  %v1433 = vunpack.c.h.b16 %v280
  %v1434 = vunpack.c.l.b16 %v281
  %v1435 = vunpack.c.h.b16 %v281
  %v1436 = vunpack.c.l.b16 %v282
  %v1437 = vunpack.c.h.b16 %v282
  %v1438 = vunpack.c.l.b16 %v283
  %v1439 = vunpack.c.h.b16 %v283
  %v1440 = vunpack.c.l.b16 %v284
  %v1441 = vunpack.c.h.b16 %v284
  %v1442 = vunpack.c.l.b16 %v285
  %v1443 = vunpack.c.h.b16 %v285
  %v1444 = vunpack.c.l.b16 %v286
  %v1445 = vunpack.c.h.b16 %v286
  %v1446 = vunpack.c.l.b16 %v287
  %v1447 = vunpack.c.h.b16 %v287
  %v1448 = vunpack.c.l.b16 %v288
  %v1449 = vunpack.c.h.b16 %v288
  %v1450 = vunpack.c.l.b16 %v289
  %v1451 = vunpack.c.h.b16 %v289
  %v1452 = vunpack.c.l.b16 %v290
  %v1453 = vunpack.c.h.b16 %v290
  %v1454 = vunpack.c.l.b16 %v291
  %v1455 = vunpack.c.h.b16 %v291
  %v1456 = vunpack.c.l.b16 %v292
  %v1457 = vunpack.c.h.b16 %v292
  %v1458 = vunpack.c.l.b16 %v293
  %v1459 = vunpack.c.h.b16 %v293
  %v1460 = vunpack.c.l.b16 %v294
  %v1461 = vunpack.c.h.b16 %v294
  %v1462 = vunpack.c.l.b16 %v295
  %v1463 = vunpack.c.h.b16 %v295
  %v1464 = vunpack.c.l.b16 %v296
  %v1465 = vunpack.c.h.b16 %v296
  %v1466 = vunpack.c.l.b16 %v297
  %v1467 = vunpack.c.h.b16 %v297
  %v1468 = vunpack.c.l.b16 %v298
  %v1469 = vunpack.c.h.b16 %v298
  %v1470 = vunpack.c.l.b16 %v299
  %v1471 = vunpack.c.h.b16 %v299
  %v1472 = vunpack.c.l.b16 %v300
  %v1473 = vunpack.c.h.b16 %v300
  %v1474 = vunpack.c.l.b16 %v301
  %v1475 = vunpack.c.h.b16 %v301
  %v1476 = vunpack.c.l.b16 %v302
  %v1477 = vunpack.c.h.b16 %v302
  %v1478 = vunpack.c.l.b16 %v303
  %v1479 = vunpack.c.h.b16 %v303
  %v1480 = vunpack.c.l.b16 %v304
  %v1481 = vunpack.c.h.b16 %v304
  %v1482 = vunpack.c.l.b16 %v305
  %v1483 = vunpack.c.h.b16 %v305
  %v1484 = vunpack.c.l.b16 %v306
  %v1485 = vunpack.c.h.b16 %v306
  %v1486 = vunpack.c.l.b16 %v307
  %v1487 = vunpack.c.h.b16 %v307
  %v1488 = vunpack.c.l.b16 %v308
  %v1489 = vunpack.c.h.b16 %v308
  %v1490 = vunpack.c.l.b16 %v309
  %v1491 = vunpack.c.h.b16 %v309
  %v1492 = vunpack.c.l.b16 %v310
  %v1493 = vunpack.c.h.b16 %v310
  %v1494 = vunpack.c.l.b16 %v311
  %v1495 = vunpack.c.h.b16 %v311
  %v1496 = vunpack.c.l.b16 %v312
  %v1497 = vunpack.c.h.b16 %v312
  %v1498 = vunpack.c.l.b16 %v313
  %v1499 = vunpack.c.h.b16 %v313
  %v1500 = vunpack.c.l.b16 %v314
  %v1501 = vunpack.c.h.b16 %v314
  %v1502 = vunpack.c.l.b16 %v315
  %v1503 = vunpack.c.h.b16 %v315
  %v1504 = vunpack.c.l.b16 %v316
  %v1505 = vunpack.c.h.b16 %v316
  %v1506 = vunpack.c.l.b16 %v317
  %v1507 = vunpack.c.h.b16 %v317
  %v1508 = vunpack.c.l.b16 %v318
  %v1509 = vunpack.c.h.b16 %v318
  %v1510 = vunpack.c.l.b16 %v319
  %v1511 = vunpack.c.h.b16 %v319
  %v1512 = vunpack.c.l.b16 %v320
  %v1513 = vunpack.c.h.b16 %v320
  %v1514 = vunpack.c.l.b16 %v321
  %v1515 = vunpack.c.h.b16 %v321
  %v1516 = vunpack.c.l.b16 %v322
  %v1517 = vunpack.c.h.b16 %v322
  %v1518 = vunpack.c.l.b16 %v323
  %v1519 = vunpack.c.h.b16 %v323
  %v1520 = vunpack.c.l.b16 %v324
  %v1521 = vunpack.c.h.b16 %v324
  %v1522 = vunpack.c.l.b16 %v325
  %v1523 = vunpack.c.h.b16 %v325
  %v1524 = vunpack.c.l.b16 %v326
  %v1525 = vunpack.c.h.b16 %v326
  %v1526 = vunpack.c.l.b16 %v327
  %v1527 = vunpack.c.h.b16 %v327
  %v1528 = vunpack.c.l.b16 %v328
  %v1529 = vunpack.c.h.b16 %v328
  %v1530 = vunpack.c.l.b16 %v329
  %v1531 = vunpack.c.h.b16 %v329
  %v1532 = vunpack.c.l.b16 %v330
  %v1533 = vunpack.c.h.b16 %v330
  %v1534 = vunpack.c.l.b16 %v331
  %v1535 = vunpack.c.h.b16 %v331
  %v1536 = vunpack.c.l.b16 %v332
  %v1537 = vunpack.c.h.b16 %v332
  %v1538 = vunpack.c.l.b16 %v333
  %v1539 = vunpack.c.h.b16 %v333
  %v1540 = vunpack.c.l.b16 %v334
  %v1541 = vunpack.c.h.b16 %v334
  %v1542 = vunpack.c.l.b16 %v335
  %v1543 = vunpack.c.h.b16 %v335
  %v1544 = vunpack.c.l.b16 %v336
  %v1545 = vunpack.c.h.b16 %v336
  %v1546 = vunpack.c.l.b16 %v337
  %v1547 = vunpack.c.h.b16 %v337
  %v1548 = vunpack.c.l.b16 %v338
  %v1549 = vunpack.c.h.b16 %v338
  %v1550 = vunpack.c.l.b16 %v339
  %v1551 = vunpack.c.h.b16 %v339
  %v1552 = vunpack.c.l.b16 %v340
  %v1553 = vunpack.c.h.b16 %v340
  %v1554 = vunpack.c.l.b16 %v341
  %v1555 = vunpack.c.h.b16 %v341
  %v1556 = vunpack.c.l.b16 %v342
  %v1557 = vunpack.c.h.b16 %v342
  %v1558 = vunpack.c.l.b16 %v343
  %v1559 = vunpack.c.h.b16 %v343
  %v1560 = vunpack.c.l.b16 %v344
  %v1561 = vunpack.c.h.b16 %v344
  %v1562 = vunpack.c.l.b16 %v345
  %v1563 = vunpack.c.h.b16 %v345
  %v1564 = vunpack.c.l.b16 %v346
  %v1565 = vunpack.c.h.b16 %v346
  %v1566 = vunpack.c.l.b16 %v347
  %v1567 = vunpack.c.h.b16 %v347
  %v1568 = vunpack.c.l.b16 %v348
  %v1569 = vunpack.c.h.b16 %v348
  %v1570 = vunpack.c.l.b16 %v349
  %v1571 = vunpack.c.h.b16 %v349
  %v1572 = vunpack.c.l.b16 %v350
  %v1573 = vunpack.c.h.b16 %v350
  %v1574 = vunpack.c.l.b16 %v351
  %v1575 = vunpack.c.h.b16 %v351
  %v1576 = vunpack.c.l.b16 %v352
  %v1577 = vunpack.c.h.b16 %v352
  %v1578 = vunpack.c.l.b16 %v353
  %v1579 = vunpack.c.h.b16 %v353
  %v1580 = vunpack.c.l.b16 %v354
  %v1581 = vunpack.c.h.b16 %v354
  %v1582 = vunpack.c.l.b16 %v355
  %v1583 = vunpack.c.h.b16 %v355
  %v1584 = vunpack.c.l.b16 %v356
  %v1585 = vunpack.c.h.b16 %v356
  %v1586 = vunpack.c.l.b16 %v357
  %v1587 = vunpack.c.h.b16 %v357
  %v1588 = vunpack.c.l.b16 %v358
  %v1589 = vunpack.c.h.b16 %v358
  %v1590 = vunpack.c.l.b16 %v359
  %v1591 = vunpack.c.h.b16 %v359
  %v1592 = vunpack.c.l.b16 %v360
  %v1593 = vunpack.c.h.b16 %v360
  %v1594 = vunpack.c.l.b16 %v361
  %v1595 = vunpack.c.h.b16 %v361
  %v1596 = vunpack.c.l.b16 %v362
  %v1597 = vunpack.c.h.b16 %v362
  %v1598 = vunpack.c.l.b16 %v363
  %v1599 = vunpack.c.h.b16 %v363
  %v1600 = vunpack.c.l.b16 %v364
  %v1601 = vunpack.c.h.b16 %v364
  %v1602 = vunpack.c.l.b16 %v365
  %v1603 = vunpack.c.h.b16 %v365
  %v1604 = vunpack.c.l.b16 %v366
  %v1605 = vunpack.c.h.b16 %v366
  %v1606 = vunpack.c.l.b16 %v367
  %v1607 = vunpack.c.h.b16 %v367
  %v1608 = vunpack.c.l.b16 %v368
  %v1609 = vunpack.c.h.b16 %v368
  %v1610 = vunpack.c.l.b16 %v369
  %v1611 = vunpack.c.h.b16 %v369
  %v1612 = vunpack.c.l.b16 %v370
  %v1613 = vunpack.c.h.b16 %v370
  %v1614 = vunpack.c.l.b16 %v371
  %v1615 = vunpack.c.h.b16 %v371
  %v1616 = vunpack.c.l.b16 %v372
  %v1617 = vunpack.c.h.b16 %v372
  %v1618 = vunpack.c.l.b16 %v373
  %v1619 = vunpack.c.h.b16 %v373
  %v1620 = vunpack.c.l.b16 %v374
  %v1621 = vunpack.c.h.b16 %v374
  %v1622 = vunpack.c.l.b16 %v375
  %v1623 = vunpack.c.h.b16 %v375
  %v1624 = vunpack.c.l.b16 %v376
  %v1625 = vunpack.c.h.b16 %v376
  %v1626 = vunpack.c.l.b16 %v377
  %v1627 = vunpack.c.h.b16 %v377
  %v1628 = vunpack.c.l.b16 %v378
  %v1629 = vunpack.c.h.b16 %v378
  %v1630 = vunpack.c.l.b16 %v379
  %v1631 = vunpack.c.h.b16 %v379
  %v1632 = vunpack.c.l.b16 %v380
  %v1633 = vunpack.c.h.b16 %v380
  %v1634 = vunpack.c.l.b16 %v381
  %v1635 = vunpack.c.h.b16 %v381
  %v1636 = vunpack.c.l.b16 %v382
  %v1637 = vunpack.c.h.b16 %v382
  %v1638 = vunpack.c.l.b16 %v383
  %v1639 = vunpack.c.h.b16 %v383
  %v1640 = vunpack.c.l.b16 %v384
  %v1641 = vunpack.c.h.b16 %v384
  %v1642 = vunpack.c.l.b16 %v385
  %v1643 = vunpack.c.h.b16 %v385
  %v1644 = vunpack.c.l.b16 %v386
  %v1645 = vunpack.c.h.b16 %v386
  %v1646 = vunpack.c.l.b16 %v387
  %v1647 = vunpack.c.h.b16 %v387
  %v1648 = vunpack.c.l.b16 %v388
  %v1649 = vunpack.c.h.b16 %v388
  %v1650 = vunpack.c.l.b16 %v389
  %v1651 = vunpack.c.h.b16 %v389
  %v1652 = vunpack.c.l.b16 %v390
  %v1653 = vunpack.c.h.b16 %v390
  %v1654 = vunpack.c.l.b16 %v391
  %v1655 = vunpack.c.h.b16 %v391
  %v1656 = vunpack.c.l.b16 %v392
  %v1657 = vunpack.c.h.b16 %v392
  %v1658 = vunpack.c.l.b16 %v393
  %v1659 = vunpack.c.h.b16 %v393
  %v1660 = vunpack.c.l.b16 %v394
  %v1661 = vunpack.c.h.b16 %v394
  %v1662 = vunpack.c.l.b16 %v395
  %v1663 = vunpack.c.h.b16 %v395
  %v1664 = vunpack.c.l.b16 %v396
  %v1665 = vunpack.c.h.b16 %v396
  %v1666 = vunpack.c.l.b16 %v397
  %v1667 = vunpack.c.h.b16 %v397
  %v1668 = vunpack.c.l.b16 %v398
  %v1669 = vunpack.c.h.b16 %v398
  %v1670 = vunpack.c.l.b16 %v399
  %v1671 = vunpack.c.h.b16 %v399
  %v1672 = vunpack.c.l.b16 %v400
  %v1673 = vunpack.c.h.b16 %v400
  %v1674 = vunpack.c.l.b16 %v401
  %v1675 = vunpack.c.h.b16 %v401
  %v1676 = vunpack.c.l.b16 %v402
  %v1677 = vunpack.c.h.b16 %v402
  %v1678 = vunpack.c.l.b16 %v403
  %v1679 = vunpack.c.h.b16 %v403
  %v1680 = vunpack.c.l.b16 %v404
  %v1681 = vunpack.c.h.b16 %v404
  %v1682 = vunpack.c.l.b16 %v405
  %v1683 = vunpack.c.h.b16 %v405
  %v1684 = vunpack.c.l.b16 %v406
  %v1685 = vunpack.c.h.b16 %v406
  %v1686 = vunpack.c.l.b16 %v407
  %v1687 = vunpack.c.h.b16 %v407
  %v1688 = vunpack.c.l.b16 %v408
  %v1689 = vunpack.c.h.b16 %v408
  %v1690 = vunpack.c.l.b16 %v409
  %v1691 = vunpack.c.h.b16 %v409
  %v1692 = vunpack.c.l.b16 %v410
  %v1693 = vunpack.c.h.b16 %v410
  %v1694 = vunpack.c.l.b16 %v411
  %v1695 = vunpack.c.h.b16 %v411
  %v1696 = vunpack.c.l.b16 %v412
  %v1697 = vunpack.c.h.b16 %v412
  %v1698 = vunpack.c.l.b16 %v413
  %v1699 = vunpack.c.h.b16 %v413
  %v1700 = vunpack.c.l.b16 %v414
  %v1701 = vunpack.c.h.b16 %v414
  %v1702 = vunpack.c.l.b16 %v415
  %v1703 = vunpack.c.h.b16 %v415
  %v1704 = vunpack.c.l.b16 %v416
  %v1705 = vunpack.c.h.b16 %v416
  %v1706 = vunpack.c.l.b16 %v417
  %v1707 = vunpack.c.h.b16 %v417
  %v1708 = vunpack.c.l.b16 %v418
  %v1709 = vunpack.c.h.b16 %v418
  %v1710 = vunpack.c.l.b16 %v419
  %v1711 = vunpack.c.h.b16 %v419
  %v1712 = vunpack.c.l.b16 %v420
  %v1713 = vunpack.c.h.b16 %v420
  %v1714 = vunpack.c.l.b16 %v421
  %v1715 = vunpack.c.h.b16 %v421
  %v1716 = vunpack.c.l.b16 %v422
  %v1717 = vunpack.c.h.b16 %v422
  %v1718 = vunpack.c.l.b16 %v423
  %v1719 = vunpack.c.h.b16 %v423
  %v1720 = vunpack.c.l.b16 %v424
  %v1721 = vunpack.c.h.b16 %v424
  %v1722 = vunpack.c.l.b16 %v425
  %v1723 = vunpack.c.h.b16 %v425
  %v1724 = vunpack.c.l.b16 %v426
  %v1725 = vunpack.c.h.b16 %v426
  %v1726 = vunpack.c.l.b16 %v427
  %v1727 = vunpack.c.h.b16 %v427
  %v1728 = vpack.c.b16 %v930, %v928
  %v1729 = vpack.c.b16 %v931, %v929
  %v1730 = vpack.c.b16 %v934, %v932
  %v1731 = vpack.c.b16 %v935, %v933
  %v1732 = vpack.c.b16 %v938, %v936
  %v1733 = vpack.c.b16 %v939, %v937
  %v1734 = vpack.c.b16 %v942, %v940
  %v1735 = vpack.c.b16 %v943, %v941
  %v1736 = vpack.c.b16 %v946, %v944
  %v1737 = vpack.c.b16 %v947, %v945
  %v1738 = vpack.c.b16 %v950, %v948
  %v1739 = vpack.c.b16 %v951, %v949
  %v1740 = vpack.c.b16 %v954, %v952
  %v1741 = vpack.c.b16 %v955, %v953
  %v1742 = vpack.c.b16 %v958, %v956
  %v1743 = vpack.c.b16 %v959, %v957
  %v1744 = vpack.c.b16 %v962, %v960
  %v1745 = vpack.c.b16 %v963, %v961
  %v1746 = vpack.c.b16 %v966, %v964
  %v1747 = vpack.c.b16 %v967, %v965
  %v1748 = vpack.c.b16 %v970, %v968
  %v1749 = vpack.c.b16 %v971, %v969
  %v1750 = vpack.c.b16 %v974, %v972
  %v1751 = vpack.c.b16 %v975, %v973
  %v1752 = vpack.c.b16 %v978, %v976
  %v1753 = vpack.c.b16 %v979, %v977
  %v1754 = vpack.c.b16 %v982, %v980
  %v1755 = vpack.c.b16 %v983, %v981
  %v1756 = vpack.c.b16 %v986, %v984
  %v1757 = vpack.c.b16 %v987, %v985
  %v1758 = vpack.c.b16 %v990, %v988
  %v1759 = vpack.c.b16 %v991, %v989
  %v1760 = vpack.c.b16 %v994, %v992
  %v1761 = vpack.c.b16 %v995, %v993
  %v1762 = vpack.c.b16 %v998, %v996
  %v1763 = vpack.c.b16 %v999, %v997
  %v1764 = vpack.c.b16 %v1002, %v1000
  %v1765 = vpack.c.b16 %v1003, %v1001
  %v1766 = vpack.c.b16 %v1006, %v1004
  %v1767 = vpack.c.b16 %v1007, %v1005
  %v1768 = vpack.c.b16 %v1010, %v1008
  %v1769 = vpack.c.b16 %v1011, %v1009
  %v1770 = vpack.c.b16 %v1014, %v1012
  %v1771 = vpack.c.b16 %v1015, %v1013
  %v1772 = vpack.c.b16 %v1018, %v1016
  %v1773 = vpack.c.b16 %v1019, %v1017
  %v1774 = vpack.c.b16 %v1022, %v1020
  %v1775 = vpack.c.b16 %v1023, %v1021
  %v1776 = vpack.c.b16 %v1026, %v1024
  %v1777 = vpack.c.b16 %v1027, %v1025
  %v1778 = vpack.c.b16 %v1030, %v1028
  %v1779 = vpack.c.b16 %v1031, %v1029
  %v1780 = vpack.c.b16 %v1034, %v1032
  %v1781 = vpack.c.b16 %v1035, %v1033
  %v1782 = vpack.c.b16 %v1038, %v1036
  %v1783 = vpack.c.b16 %v1039, %v1037
  %v1784 = vpack.c.b16 %v1042, %v1040
  %v1785 = vpack.c.b16 %v1043, %v1041
  %v1786 = vpack.c.b16 %v1046, %v1044
  %v1787 = vpack.c.b16 %v1047, %v1045
  %v1788 = vpack.c.b16 %v1050, %v1048
  %v1789 = vpack.c.b16 %v1051, %v1049
  %v1790 = vpack.c.b16 %v1054, %v1052
  %v1791 = vpack.c.b16 %v1055, %v1053
  %v1792 = vpack.c.b16 %v1058, %v1056
  %v1793 = vpack.c.b16 %v1059, %v1057
  %v1794 = vpack.c.b16 %v1062, %v1060
  %v1795 = vpack.c.b16 %v1063, %v1061
  %v1796 = vpack.c.b16 %v1066, %v1064
  %v1797 = vpack.c.b16 %v1067, %v1065
  %v1798 = vpack.c.b16 %v1070, %v1068
  %v1799 = vpack.c.b16 %v1071, %v1069
  %v1800 = vpack.c.b16 %v1074, %v1072
  %v1801 = vpack.c.b16 %v1075, %v1073
  %v1802 = vpack.c.b16 %v1078, %v1076
  %v1803 = vpack.c.b16 %v1079, %v1077
  %v1804 = vpack.c.b16 %v1082, %v1080
  %v1805 = vpack.c.b16 %v1083, %v1081
  %v1806 = vpack.c.b16 %v1086, %v1084
  %v1807 = vpack.c.b16 %v1087, %v1085
  %v1808 = vpack.c.b16 %v1090, %v1088
  %v1809 = vpack.c.b16 %v1091, %v1089
  %v1810 = vpack.c.b16 %v1094, %v1092
  %v1811 = vpack.c.b16 %v1095, %v1093
  %v1812 = vpack.c.b16 %v1098, %v1096
  %v1813 = vpack.c.b16 %v1099, %v1097
  %v1814 = vpack.c.b16 %v1102, %v1100
  %v1815 = vpack.c.b16 %v1103, %v1101
  %v1816 = vpack.c.b16 %v1106, %v1104
  %v1817 = vpack.c.b16 %v1107, %v1105
  %v1818 = vpack.c.b16 %v1110, %v1108
  %v1819 = vpack.c.b16 %v1111, %v1109
  %v1820 = vpack.c.b16 %v1114, %v1112
  %v1821 = vpack.c.b16 %v1115, %v1113
  %v1822 = vpack.c.b16 %v1118, %v1116
  %v1823 = vpack.c.b16 %v1119, %v1117
  %v1824 = vpack.c.b16 %v1122, %v1120
  %v1825 = vpack.c.b16 %v1123, %v1121
  %v1826 = vpack.c.b16 %v1126, %v1124
  %v1827 = vpack.c.b16 %v1127, %v1125
  %v1828 = vpack.c.b16 %v1130, %v1128
  %v1829 = vpack.c.b16 %v1131, %v1129
  %v1830 = vpack.c.b16 %v1134, %v1132
  %v1831 = vpack.c.b16 %v1135, %v1133
  %v1832 = vpack.c.b16 %v1138, %v1136
  %v1833 = vpack.c.b16 %v1139, %v1137
  %v1834 = vpack.c.b16 %v1142, %v1140
  %v1835 = vpack.c.b16 %v1143, %v1141
  %v1836 = vpack.c.b16 %v1146, %v1144
  %v1837 = vpack.c.b16 %v1147, %v1145
  %v1838 = vpack.c.b16 %v1150, %v1148
  %v1839 = vpack.c.b16 %v1151, %v1149
  %v1840 = vpack.c.b16 %v1154, %v1152
  %v1841 = vpack.c.b16 %v1155, %v1153
  %v1842 = vpack.c.b16 %v1158, %v1156
  %v1843 = vpack.c.b16 %v1159, %v1157
  %v1844 = vpack.c.b16 %v1162, %v1160
  %v1845 = vpack.c.b16 %v1163, %v1161
  %v1846 = vpack.c.b16 %v1166, %v1164
  %v1847 = vpack.c.b16 %v1167, %v1165
  %v1848 = vpack.c.b16 %v1170, %v1168
  %v1849 = vpack.c.b16 %v1171, %v1169
  %v1850 = vpack.c.b16 %v1174, %v1172
  %v1851 = vpack.c.b16 %v1175, %v1173
  %v1852 = vpack.c.b16 %v1178, %v1176
  %v1853 = vpack.c.b16 %v1179, %v1177
  %v1854 = vpack.c.b16 %v1182, %v1180
  %v1855 = vpack.c.b16 %v1183, %v1181
  %v1856 = vpack.c.b16 %v1186, %v1184
  %v1857 = vpack.c.b16 %v1187, %v1185
  %v1858 = vpack.c.b16 %v1190, %v1188
  %v1859 = vpack.c.b16 %v1191, %v1189
  %v1860 = vpack.c.b16 %v1194, %v1192
  %v1861 = vpack.c.b16 %v1195, %v1193
  %v1862 = vpack.c.b16 %v1198, %v1196
  %v1863 = vpack.c.b16 %v1199, %v1197
  %v1864 = vpack.c.b16 %v1202, %v1200
  %v1865 = vpack.c.b16 %v1203, %v1201
  %v1866 = vpack.c.b16 %v1206, %v1204
  %v1867 = vpack.c.b16 %v1207, %v1205
  %v1868 = vpack.c.b16 %v1210, %v1208
  %v1869 = vpack.c.b16 %v1211, %v1209
  %v1870 = vpack.c.b16 %v1214, %v1212
  %v1871 = vpack.c.b16 %v1215, %v1213
  %v1872 = vpack.c.b16 %v1218, %v1216
  %v1873 = vpack.c.b16 %v1219, %v1217
  %v1874 = vpack.c.b16 %v1222, %v1220
  %v1875 = vpack.c.b16 %v1223, %v1221
  %v1876 = vpack.c.b16 %v1226, %v1224
  %v1877 = vpack.c.b16 %v1227, %v1225
  %v1878 = vpack.c.b16 %v1230, %v1228
  %v1879 = vpack.c.b16 %v1231, %v1229
  %v1880 = vpack.c.b16 %v1234, %v1232
  %v1881 = vpack.c.b16 %v1235, %v1233
  %v1882 = vpack.c.b16 %v1238, %v1236
  %v1883 = vpack.c.b16 %v1239, %v1237
  %v1884 = vpack.c.b16 %v1242, %v1240
  %v1885 = vpack.c.b16 %v1243, %v1241
  %v1886 = vpack.c.b16 %v1246, %v1244
  %v1887 = vpack.c.b16 %v1247, %v1245
  %v1888 = vpack.c.b16 %v1250, %v1248
  %v1889 = vpack.c.b16 %v1251, %v1249
  %v1890 = vpack.c.b16 %v1254, %v1252
  %v1891 = vpack.c.b16 %v1255, %v1253
  %v1892 = vpack.c.b16 %v1258, %v1256
  %v1893 = vpack.c.b16 %v1259, %v1257
  %v1894 = vpack.c.b16 %v1262, %v1260
  %v1895 = vpack.c.b16 %v1263, %v1261
  %v1896 = vpack.c.b16 %v1266, %v1264
  %v1897 = vpack.c.b16 %v1267, %v1265
  %v1898 = vpack.c.b16 %v1270, %v1268
  %v1899 = vpack.c.b16 %v1271, %v1269
  %v1900 = vpack.c.b16 %v1274, %v1272
  %v1901 = vpack.c.b16 %v1275, %v1273
  %v1902 = vpack.c.b16 %v1278, %v1276
  %v1903 = vpack.c.b16 %v1279, %v1277
  %v1904 = vpack.c.b16 %v1282, %v1280
  %v1905 = vpack.c.b16 %v1283, %v1281
  %v1906 = vpack.c.b16 %v1286, %v1284
  %v1907 = vpack.c.b16 %v1287, %v1285
  %v1908 = vpack.c.b16 %v1290, %v1288
  %v1909 = vpack.c.b16 %v1291, %v1289
  %v1910 = vpack.c.b16 %v1294, %v1292
  %v1911 = vpack.c.b16 %v1295, %v1293
  %v1912 = vpack.c.b16 %v1298, %v1296
  %v1913 = vpack.c.b16 %v1299, %v1297
  %v1914 = vpack.c.b16 %v1302, %v1300
  %v1915 = vpack.c.b16 %v1303, %v1301
  %v1916 = vpack.c.b16 %v1306, %v1304
  %v1917 = vpack.c.b16 %v1307, %v1305
  %v1918 = vpack.c.b16 %v1310, %v1308
  %v1919 = vpack.c.b16 %v1311, %v1309
  %v1920 = vpack.c.b16 %v1314, %v1312
  %v1921 = vpack.c.b16 %v1315, %v1313
  %v1922 = vpack.c.b16 %v1318, %v1316
  %v1923 = vpack.c.b16 %v1319, %v1317
  %v1924 = vpack.c.b16 %v1322, %v1320
  %v1925 = vpack.c.b16 %v1323, %v1321
  %v1926 = vpack.c.b16 %v1326, %v1324
  %v1927 = vpack.c.b16 %v1327, %v1325
  %v1928 = vpack.c.b16 %v1330, %v1328
  %v1929 = vpack.c.b16 %v1331, %v1329
  %v1930 = vpack.c.b16 %v1334, %v1332
  %v1931 = vpack.c.b16 %v1335, %v1333
  %v1932 = vpack.c.b16 %v1338, %v1336
  %v1933 = vpack.c.b16 %v1339, %v1337
  %v1934 = vpack.c.b16 %v1342, %v1340
  %v1935 = vpack.c.b16 %v1343, %v1341
  %v1936 = vpack.c.b16 %v1346, %v1344
  %v1937 = vpack.c.b16 %v1347, %v1345
  %v1938 = vpack.c.b16 %v1350, %v1348
  %v1939 = vpack.c.b16 %v1351, %v1349
  %v1940 = vpack.c.b16 %v1354, %v1352
  %v1941 = vpack.c.b16 %v1355, %v1353
  %v1942 = vpack.c.b16 %v1358, %v1356
  %v1943 = vpack.c.b16 %v1359, %v1357
  %v1944 = vpack.c.b16 %v1362, %v1360
  %v1945 = vpack.c.b16 %v1363, %v1361
  %v1946 = vpack.c.b16 %v1366, %v1364
  %v1947 = vpack.c.b16 %v1367, %v1365
  %v1948 = vpack.c.b16 %v1370, %v1368
  %v1949 = vpack.c.b16 %v1371, %v1369
  %v1950 = vpack.c.b16 %v1374, %v1372
  %v1951 = vpack.c.b16 %v1375, %v1373
  %v1952 = vpack.c.b16 %v1378, %v1376
  %v1953 = vpack.c.b16 %v1379, %v1377
  %v1954 = vpack.c.b16 %v1382, %v1380
  %v1955 = vpack.c.b16 %v1383, %v1381
  %v1956 = vpack.c.b16 %v1386, %v1384
  %v1957 = vpack.c.b16 %v1387, %v1385
  %v1958 = vpack.c.b16 %v1390, %v1388
  %v1959 = vpack.c.b16 %v1391, %v1389
  %v1960 = vpack.c.b16 %v1394, %v1392
  %v1961 = vpack.c.b16 %v1395, %v1393
  %v1962 = vpack.c.b16 %v1398, %v1396
  %v1963 = vpack.c.b16 %v1399, %v1397
  %v1964 = vpack.c.b16 %v1402, %v1400
  %v1965 = vpack.c.b16 %v1403, %v1401
  %v1966 = vpack.c.b16 %v1406, %v1404
  %v1967 = vpack.c.b16 %v1407, %v1405
  %v1968 = vpack.c.b16 %v1410, %v1408
  %v1969 = vpack.c.b16 %v1411, %v1409
  %v1970 = vpack.c.b16 %v1414, %v1412
  %v1971 = vpack.c.b16 %v1415, %v1413
  %v1972 = vpack.c.b16 %v1418, %v1416
  %v1973 = vpack.c.b16 %v1419, %v1417
  %v1974 = vpack.c.b16 %v1422, %v1420
  %v1975 = vpack.c.b16 %v1423, %v1421
  %v1976 = vpack.c.b16 %v1426, %v1424
  %v1977 = vpack.c.b16 %v1427, %v1425
  %v1978 = vpack.c.b16 %v1430, %v1428
  %v1979 = vpack.c.b16 %v1431, %v1429
  %v1980 = vpack.c.b16 %v1434, %v1432
  %v1981 = vpack.c.b16 %v1435, %v1433
  %v1982 = vpack.c.b16 %v1438, %v1436
  %v1983 = vpack.c.b16 %v1439, %v1437
  %v1984 = vpack.c.b16 %v1442, %v1440
  %v1985 = vpack.c.b16 %v1443, %v1441
  %v1986 = vpack.c.b16 %v1446, %v1444
  %v1987 = vpack.c.b16 %v1447, %v1445
  %v1988 = vpack.c.b16 %v1450, %v1448
  %v1989 = vpack.c.b16 %v1451, %v1449
  %v1990 = vpack.c.b16 %v1454, %v1452
  %v1991 = vpack.c.b16 %v1455, %v1453
  %v1992 = vpack.c.b16 %v1458, %v1456
  %v1993 = vpack.c.b16 %v1459, %v1457
  %v1994 = vpack.c.b16 %v1462, %v1460
  %v1995 = vpack.c.b16 %v1463, %v1461
  %v1996 = vpack.c.b16 %v1466, %v1464
  %v1997 = vpack.c.b16 %v1467, %v1465
  %v1998 = vpack.c.b16 %v1470, %v1468
  %v1999 = vpack.c.b16 %v1471, %v1469
  %v2000 = vpack.c.b16 %v1474, %v1472
  %v2001 = vpack.c.b16 %v1475, %v1473
  %v2002 = vpack.c.b16 %v1478, %v1476
  %v2003 = vpack.c.b16 %v1479, %v1477
  %v2004 = vpack.c.b16 %v1482, %v1480
  %v2005 = vpack.c.b16 %v1483, %v1481
  %v2006 = vpack.c.b16 %v1486, %v1484
  %v2007 = vpack.c.b16 %v1487, %v1485
  %v2008 = vpack.c.b16 %v1490, %v1488
  %v2009 = vpack.c.b16 %v1491, %v1489
  %v2010 = vpack.c.b16 %v1494, %v1492
  %v2011 = vpack.c.b16 %v1495, %v1493
  %v2012 = vpack.c.b16 %v1498, %v1496
  %v2013 = vpack.c.b16 %v1499, %v1497
  %v2014 = vpack.c.b16 %v1502, %v1500
  %v2015 = vpack.c.b16 %v1503, %v1501
  %v2016 = vpack.c.b16 %v1506, %v1504
  %v2017 = vpack.c.b16 %v1507, %v1505
  %v2018 = vpack.c.b16 %v1510, %v1508
  %v2019 = vpack.c.b16 %v1511, %v1509
  %v2020 = vpack.c.b16 %v1514, %v1512
  %v2021 = vpack.c.b16 %v1515, %v1513
  %v2022 = vpack.c.b16 %v1518, %v1516
  %v2023 = vpack.c.b16 %v1519, %v1517
  %v2024 = vpack.c.b16 %v1522, %v1520
  %v2025 = vpack.c.b16 %v1523, %v1521
  %v2026 = vpack.c.b16 %v1526, %v1524
  %v2027 = vpack.c.b16 %v1527, %v1525
  %v2028 = vpack.c.b16 %v1530, %v1528
  %v2029 = vpack.c.b16 %v1531, %v1529
  %v2030 = vpack.c.b16 %v1534, %v1532
  %v2031 = vpack.c.b16 %v1535, %v1533
  %v2032 = vpack.c.b16 %v1538, %v1536
  %v2033 = vpack.c.b16 %v1539, %v1537
  %v2034 = vpack.c.b16 %v1542, %v1540
  %v2035 = vpack.c.b16 %v1543, %v1541
  %v2036 = vpack.c.b16 %v1546, %v1544
  %v2037 = vpack.c.b16 %v1547, %v1545
  %v2038 = vpack.c.b16 %v1550, %v1548
  %v2039 = vpack.c.b16 %v1551, %v1549
  %v2040 = vpack.c.b16 %v1554, %v1552
  %v2041 = vpack.c.b16 %v1555, %v1553
  %v2042 = vpack.c.b16 %v1558, %v1556
  %v2043 = vpack.c.b16 %v1559, %v1557
  %v2044 = vpack.c.b16 %v1562, %v1560
  %v2045 = vpack.c.b16 %v1563, %v1561
  %v2046 = vpack.c.b16 %v1566, %v1564
  %v2047 = vpack.c.b16 %v1567, %v1565
  %v2048 = vpack.c.b16 %v1570, %v1568
  %v2049 = vpack.c.b16 %v1571, %v1569
  %v2050 = vpack.c.b16 %v1574, %v1572
  %v2051 = vpack.c.b16 %v1575, %v1573
  %v2052 = vpack.c.b16 %v1578, %v1576
  %v2053 = vpack.c.b16 %v1579, %v1577
  %v2054 = vpack.c.b16 %v1582, %v1580
  %v2055 = vpack.c.b16 %v1583, %v1581
  %v2056 = vpack.c.b16 %v1586, %v1584
  %v2057 = vpack.c.b16 %v1587, %v1585
  %v2058 = vpack.c.b16 %v1590, %v1588
  %v2059 = vpack.c.b16 %v1591, %v1589
  %v2060 = vpack.c.b16 %v1594, %v1592
  %v2061 = vpack.c.b16 %v1595, %v1593
  %v2062 = vpack.c.b16 %v1598, %v1596
  %v2063 = vpack.c.b16 %v1599, %v1597
  %v2064 = vpack.c.b16 %v1602, %v1600
  %v2065 = vpack.c.b16 %v1603, %v1601
  %v2066 = vpack.c.b16 %v1606, %v1604
  %v2067 = vpack.c.b16 %v1607, %v1605
  %v2068 = vpack.c.b16 %v1610, %v1608
  %v2069 = vpack.c.b16 %v1611, %v1609
  %v2070 = vpack.c.b16 %v1614, %v1612
  %v2071 = vpack.c.b16 %v1615, %v1613
  %v2072 = vpack.c.b16 %v1618, %v1616
  %v2073 = vpack.c.b16 %v1619, %v1617
  %v2074 = vpack.c.b16 %v1622, %v1620
  %v2075 = vpack.c.b16 %v1623, %v1621
  %v2076 = vpack.c.b16 %v1626, %v1624
  %v2077 = vpack.c.b16 %v1627, %v1625
  %v2078 = vpack.c.b16 %v1630, %v1628
  %v2079 = vpack.c.b16 %v1631, %v1629
  %v2080 = vpack.c.b16 %v1634, %v1632
  %v2081 = vpack.c.b16 %v1635, %v1633
  %v2082 = vpack.c.b16 %v1638, %v1636
  %v2083 = vpack.c.b16 %v1639, %v1637
  %v2084 = vpack.c.b16 %v1642, %v1640
  %v2085 = vpack.c.b16 %v1643, %v1641
  %v2086 = vpack.c.b16 %v1646, %v1644
  %v2087 = vpack.c.b16 %v1647, %v1645
  %v2088 = vpack.c.b16 %v1650, %v1648
  %v2089 = vpack.c.b16 %v1651, %v1649
  %v2090 = vpack.c.b16 %v1654, %v1652
  %v2091 = vpack.c.b16 %v1655, %v1653
  %v2092 = vpack.c.b16 %v1658, %v1656
  %v2093 = vpack.c.b16 %v1659, %v1657
  %v2094 = vpack.c.b16 %v1662, %v1660
  %v2095 = vpack.c.b16 %v1663, %v1661
  %v2096 = vpack.c.b16 %v1666, %v1664
  %v2097 = vpack.c.b16 %v1667, %v1665
  %v2098 = vpack.c.b16 %v1670, %v1668
  %v2099 = vpack.c.b16 %v1671, %v1669
  %v2100 = vpack.c.b16 %v1674, %v1672
  %v2101 = vpack.c.b16 %v1675, %v1673
  %v2102 = vpack.c.b16 %v1678, %v1676
  %v2103 = vpack.c.b16 %v1679, %v1677
  %v2104 = vpack.c.b16 %v1682, %v1680
  %v2105 = vpack.c.b16 %v1683, %v1681
  %v2106 = vpack.c.b16 %v1686, %v1684
  %v2107 = vpack.c.b16 %v1687, %v1685
  %v2108 = vpack.c.b16 %v1690, %v1688
  %v2109 = vpack.c.b16 %v1691, %v1689
  %v2110 = vpack.c.b16 %v1694, %v1692
  %v2111 = vpack.c.b16 %v1695, %v1693
  %v2112 = vpack.c.b16 %v1698, %v1696
  %v2113 = vpack.c.b16 %v1699, %v1697
  %v2114 = vpack.c.b16 %v1702, %v1700
  %v2115 = vpack.c.b16 %v1703, %v1701
  %v2116 = vpack.c.b16 %v1706, %v1704
  %v2117 = vpack.c.b16 %v1707, %v1705
  %v2118 = vpack.c.b16 %v1710, %v1708
  %v2119 = vpack.c.b16 %v1711, %v1709
  %v2120 = vpack.c.b16 %v1714, %v1712
  %v2121 = vpack.c.b16 %v1715, %v1713
  %v2122 = vpack.c.b16 %v1718, %v1716
  %v2123 = vpack.c.b16 %v1719, %v1717
  %v2124 = vpack.c.b16 %v1722, %v1720
  %v2125 = vpack.c.b16 %v1723, %v1721
  %v2126 = vpack.c.b16 %v1726, %v1724
  %v2127 = vpack.c.b16 %v1727, %v1725
  %2528 = vmatprep.subr.bf16.mxu0 %v1729
  %2529 = vmatpush1.bf16.msra.mxu0 %v1728
  %2530 = vmatprep.subr.bf16.mxu0 %v1731
  %2531 = vmatpush1.bf16.msra.mxu0 %v1730
  %2532 = vmatprep.subr.bf16.mxu0 %v1733
  %2533 = vmatpush1.bf16.msra.mxu0 %v1732
  %2534 = vmatprep.subr.bf16.mxu0 %v1735
  %2535 = vmatpush1.bf16.msra.mxu0 %v1734
  %2536 = vmatprep.subr.bf16.mxu0 %v1737
  %2537 = vmatpush1.bf16.msra.mxu0 %v1736
  %2538 = vmatprep.subr.bf16.mxu0 %v1739
  %2539 = vmatpush1.bf16.msra.mxu0 %v1738
  %2540 = vmatprep.subr.bf16.mxu0 %v1741
  %2541 = vmatpush1.bf16.msra.mxu0 %v1740
  %2542 = vmatprep.subr.bf16.mxu0 %v1743
  %2543 = vmatpush1.bf16.msra.mxu0 %v1742
  %2544 = vmatprep.subr.bf16.mxu0 %v1745
  %2545 = vmatpush1.bf16.msra.mxu0 %v1744
  %2546 = vmatprep.subr.bf16.mxu0 %v1747
  %2547 = vmatpush1.bf16.msra.mxu0 %v1746
  %2548 = vmatprep.subr.bf16.mxu0 %v1749
  %2549 = vmatpush1.bf16.msra.mxu0 %v1748
  %2550 = vmatprep.subr.bf16.mxu0 %v1751
  %2551 = vmatpush1.bf16.msra.mxu0 %v1750
  %2552 = vmatprep.subr.bf16.mxu0 %v1753
  %2553 = vmatpush1.bf16.msra.mxu0 %v1752
  %2554 = vmatprep.subr.bf16.mxu0 %v1755
  %2555 = vmatpush1.bf16.msra.mxu0 %v1754
  %2556 = vmatprep.subr.bf16.mxu0 %v1757
  %2557 = vmatpush1.bf16.msra.mxu0 %v1756
  %2558 = vmatprep.subr.bf16.mxu0 %v1759
  %2559 = vmatpush1.bf16.msra.mxu0 %v1758
  %2560 = vmatprep.mubr.bf16.mxu0 %v479
  %2561 = vmatmul.mubr.bf16.gmra.mrb[0].mxu0 %v478
  %v2562 = vpop.f32.mrb[0].mxu0
  %v2563 = vadd.f32 %v433, %v2562
  %v2564 = vpop.f32.mrb[0].mxu0
  %v2565 = vadd.f32 %v437, %v2564
  %v2566 = vpop.f32.mrb[0].mxu0
  %v2567 = vpop.f32.mrb[0].mxu0
  %2568 = vdwg.mxu0
  %2569 = vmatprep.subr.bf16.mxu0 %v1761
  %2570 = vmatpush1.bf16.msra.mxu0 %v1760
  %2571 = vmatprep.subr.bf16.mxu0 %v1763
  %2572 = vmatpush1.bf16.msra.mxu0 %v1762
  %2573 = vmatprep.subr.bf16.mxu0 %v1765
  %2574 = vmatpush1.bf16.msra.mxu0 %v1764
  %2575 = vmatprep.subr.bf16.mxu0 %v1767
  %2576 = vmatpush1.bf16.msra.mxu0 %v1766
  %2577 = vmatprep.subr.bf16.mxu0 %v1769
  %2578 = vmatpush1.bf16.msra.mxu0 %v1768
  %2579 = vmatprep.subr.bf16.mxu0 %v1771
  %2580 = vmatpush1.bf16.msra.mxu0 %v1770
  %2581 = vmatprep.subr.bf16.mxu0 %v1773
  %2582 = vmatpush1.bf16.msra.mxu0 %v1772
  %2583 = vmatprep.subr.bf16.mxu0 %v1775
  %2584 = vmatpush1.bf16.msra.mxu0 %v1774
  %2585 = vmatprep.subr.bf16.mxu0 %v1777
  %2586 = vmatpush1.bf16.msra.mxu0 %v1776
  %2587 = vmatprep.subr.bf16.mxu0 %v1779
  %2588 = vmatpush1.bf16.msra.mxu0 %v1778
  %2589 = vmatprep.subr.bf16.mxu0 %v1781
  %2590 = vmatpush1.bf16.msra.mxu0 %v1780
  %2591 = vmatprep.subr.bf16.mxu0 %v1783
  %2592 = vmatpush1.bf16.msra.mxu0 %v1782
  %2593 = vmatprep.subr.bf16.mxu0 %v1785
  %2594 = vmatpush1.bf16.msra.mxu0 %v1784
  %2595 = vmatprep.subr.bf16.mxu0 %v1787
  %2596 = vmatpush1.bf16.msra.mxu0 %v1786
  %2597 = vmatprep.subr.bf16.mxu0 %v1789
  %2598 = vmatpush1.bf16.msra.mxu0 %v1788
  %2599 = vmatprep.subr.bf16.mxu0 %v1791
  %2600 = vmatpush1.bf16.msra.mxu0 %v1790
  %2601 = vmatprep.mubr.bf16.mxu0 %v481
  %2602 = vmatmul.mubr.bf16.gmra.mrb[0].mxu0 %v480
  %v2603 = vpop.f32.mrb[0].mxu0
  %v2604 = vadd.f32 %v2563, %v2603
  %v2605 = vpop.f32.mrb[0].mxu0
  %v2606 = vadd.f32 %v2565, %v2605
  %v2607 = vpop.f32.mrb[0].mxu0
  %v2608 = vpop.f32.mrb[0].mxu0
  %2609 = vdwg.mxu0
  %2610 = vmatprep.subr.bf16.mxu0 %v1793
  %2611 = vmatpush1.bf16.msra.mxu0 %v1792
  %2612 = vmatprep.subr.bf16.mxu0 %v1795
  %2613 = vmatpush1.bf16.msra.mxu0 %v1794
  %2614 = vmatprep.subr.bf16.mxu0 %v1797
  %2615 = vmatpush1.bf16.msra.mxu0 %v1796
  %2616 = vmatprep.subr.bf16.mxu0 %v1799
  %2617 = vmatpush1.bf16.msra.mxu0 %v1798
  %2618 = vmatprep.subr.bf16.mxu0 %v1801
  %2619 = vmatpush1.bf16.msra.mxu0 %v1800
  %2620 = vmatprep.subr.bf16.mxu0 %v1803
  %2621 = vmatpush1.bf16.msra.mxu0 %v1802
  %2622 = vmatprep.subr.bf16.mxu0 %v1805
  %2623 = vmatpush1.bf16.msra.mxu0 %v1804
  %2624 = vmatprep.subr.bf16.mxu0 %v1807
  %2625 = vmatpush1.bf16.msra.mxu0 %v1806
  %2626 = vmatprep.subr.bf16.mxu0 %v1809
  %2627 = vmatpush1.bf16.msra.mxu0 %v1808
  %2628 = vmatprep.subr.bf16.mxu0 %v1811
  %2629 = vmatpush1.bf16.msra.mxu0 %v1810
  %2630 = vmatprep.subr.bf16.mxu0 %v1813
  %2631 = vmatpush1.bf16.msra.mxu0 %v1812
  %2632 = vmatprep.subr.bf16.mxu0 %v1815
  %2633 = vmatpush1.bf16.msra.mxu0 %v1814
  %2634 = vmatprep.subr.bf16.mxu0 %v1817
  %2635 = vmatpush1.bf16.msra.mxu0 %v1816
  %2636 = vmatprep.subr.bf16.mxu0 %v1819
  %2637 = vmatpush1.bf16.msra.mxu0 %v1818
  %2638 = vmatprep.subr.bf16.mxu0 %v1821
  %2639 = vmatpush1.bf16.msra.mxu0 %v1820
  %2640 = vmatprep.subr.bf16.mxu0 %v1823
  %2641 = vmatpush1.bf16.msra.mxu0 %v1822
  %2642 = vmatprep.mubr.bf16.mxu0 %v483
  %2643 = vmatmul.mubr.bf16.gmra.mrb[0].mxu0 %v482
  %v2644 = vpop.f32.mrb[0].mxu0
  %v2645 = vadd.f32 %v2604, %v2644
  %v2646 = vpop.f32.mrb[0].mxu0
  %v2647 = vadd.f32 %v2606, %v2646
  %v2648 = vpop.f32.mrb[0].mxu0
  %v2649 = vpop.f32.mrb[0].mxu0
  %2650 = vdwg.mxu0
  %2651 = vmatprep.subr.bf16.mxu0 %v1825
  %2652 = vmatpush1.bf16.msra.mxu0 %v1824
  %2653 = vmatprep.subr.bf16.mxu0 %v1827
  %2654 = vmatpush1.bf16.msra.mxu0 %v1826
  %2655 = vmatprep.subr.bf16.mxu0 %v1829
  %2656 = vmatpush1.bf16.msra.mxu0 %v1828
  %2657 = vmatprep.subr.bf16.mxu0 %v1831
  %2658 = vmatpush1.bf16.msra.mxu0 %v1830
  %2659 = vmatprep.subr.bf16.mxu0 %v1833
  %2660 = vmatpush1.bf16.msra.mxu0 %v1832
  %2661 = vmatprep.subr.bf16.mxu0 %v1835
  %2662 = vmatpush1.bf16.msra.mxu0 %v1834
  %2663 = vmatprep.subr.bf16.mxu0 %v1837
  %2664 = vmatpush1.bf16.msra.mxu0 %v1836
  %2665 = vmatprep.subr.bf16.mxu0 %v1839
  %2666 = vmatpush1.bf16.msra.mxu0 %v1838
  %2667 = vmatprep.subr.bf16.mxu0 %v1841
  %2668 = vmatpush1.bf16.msra.mxu0 %v1840
  %2669 = vmatprep.subr.bf16.mxu0 %v1843
  %2670 = vmatpush1.bf16.msra.mxu0 %v1842
  %2671 = vmatprep.subr.bf16.mxu0 %v1845
  %2672 = vmatpush1.bf16.msra.mxu0 %v1844
  %2673 = vmatprep.subr.bf16.mxu0 %v1847
  %2674 = vmatpush1.bf16.msra.mxu0 %v1846
  %2675 = vmatprep.subr.bf16.mxu0 %v1849
  %2676 = vmatpush1.bf16.msra.mxu0 %v1848
  %2677 = vmatprep.subr.bf16.mxu0 %v1851
  %2678 = vmatpush1.bf16.msra.mxu0 %v1850
  %2679 = vmatprep.subr.bf16.mxu0 %v1853
  %2680 = vmatpush1.bf16.msra.mxu0 %v1852
  %2681 = vmatprep.subr.bf16.mxu0 %v1855
  %2682 = vmatpush1.bf16.msra.mxu0 %v1854
  %2683 = vmatprep.mubr.bf16.mxu0 %v485
  %2684 = vmatmul.mubr.bf16.gmra.mrb[0].mxu0 %v484
  %v2685 = vpop.f32.mrb[0].mxu0
  %v2686 = vadd.f32 %v2645, %v2685
  %v2687 = vpop.f32.mrb[0].mxu0
  %v2688 = vadd.f32 %v2647, %v2687
  %v2689 = vpop.f32.mrb[0].mxu0
  %v2690 = vpop.f32.mrb[0].mxu0
  %2691 = vdwg.mxu0
  %2692 = vmatprep.subr.bf16.mxu0 %v1857
  %2693 = vmatpush1.bf16.msra.mxu0 %v1856
  %2694 = vmatprep.subr.bf16.mxu0 %v1859
  %2695 = vmatpush1.bf16.msra.mxu0 %v1858
  %2696 = vmatprep.subr.bf16.mxu0 %v1861
  %2697 = vmatpush1.bf16.msra.mxu0 %v1860
  %2698 = vmatprep.subr.bf16.mxu0 %v1863
  %2699 = vmatpush1.bf16.msra.mxu0 %v1862
  %2700 = vmatprep.subr.bf16.mxu0 %v1865
  %2701 = vmatpush1.bf16.msra.mxu0 %v1864
  %2702 = vmatprep.subr.bf16.mxu0 %v1867
  %2703 = vmatpush1.bf16.msra.mxu0 %v1866
  %2704 = vmatprep.subr.bf16.mxu0 %v1869
  %2705 = vmatpush1.bf16.msra.mxu0 %v1868
  %2706 = vmatprep.subr.bf16.mxu0 %v1871
  %2707 = vmatpush1.bf16.msra.mxu0 %v1870
  %2708 = vmatprep.subr.bf16.mxu0 %v1873
  %2709 = vmatpush1.bf16.msra.mxu0 %v1872
  %2710 = vmatprep.subr.bf16.mxu0 %v1875
  %2711 = vmatpush1.bf16.msra.mxu0 %v1874
  %2712 = vmatprep.subr.bf16.mxu0 %v1877
  %2713 = vmatpush1.bf16.msra.mxu0 %v1876
  %2714 = vmatprep.subr.bf16.mxu0 %v1879
  %2715 = vmatpush1.bf16.msra.mxu0 %v1878
  %2716 = vmatprep.subr.bf16.mxu0 %v1881
  %2717 = vmatpush1.bf16.msra.mxu0 %v1880
  %2718 = vmatprep.subr.bf16.mxu0 %v1883
  %2719 = vmatpush1.bf16.msra.mxu0 %v1882
  %2720 = vmatprep.subr.bf16.mxu0 %v1885
  %2721 = vmatpush1.bf16.msra.mxu0 %v1884
  %2722 = vmatprep.subr.bf16.mxu0 %v1887
  %2723 = vmatpush1.bf16.msra.mxu0 %v1886
  %2724 = vmatprep.mubr.bf16.mxu0 %v487
  %2725 = vmatmul.mubr.bf16.gmra.mrb[0].mxu0 %v486
  %v2726 = vpop.f32.mrb[0].mxu0
  %v2727 = vadd.f32 %v2686, %v2726
  %v2728 = vpop.f32.mrb[0].mxu0
  %v2729 = vadd.f32 %v2688, %v2728
  %v2730 = vpop.f32.mrb[0].mxu0
  %v2731 = vpop.f32.mrb[0].mxu0
  %2732 = vdwg.mxu0
  %2733 = vmatprep.subr.bf16.mxu0 %v1889
  %2734 = vmatpush1.bf16.msra.mxu0 %v1888
  %2735 = vmatprep.subr.bf16.mxu0 %v1891
  %2736 = vmatpush1.bf16.msra.mxu0 %v1890
  %2737 = vmatprep.subr.bf16.mxu0 %v1893
  %2738 = vmatpush1.bf16.msra.mxu0 %v1892
  %2739 = vmatprep.subr.bf16.mxu0 %v1895
  %2740 = vmatpush1.bf16.msra.mxu0 %v1894
  %2741 = vmatprep.subr.bf16.mxu0 %v1897
  %2742 = vmatpush1.bf16.msra.mxu0 %v1896
  %2743 = vmatprep.subr.bf16.mxu0 %v1899
  %2744 = vmatpush1.bf16.msra.mxu0 %v1898
  %2745 = vmatprep.subr.bf16.mxu0 %v1901
  %2746 = vmatpush1.bf16.msra.mxu0 %v1900
  %2747 = vmatprep.subr.bf16.mxu0 %v1903
  %2748 = vmatpush1.bf16.msra.mxu0 %v1902
  %2749 = vmatprep.subr.bf16.mxu0 %v1905
  %2750 = vmatpush1.bf16.msra.mxu0 %v1904
  %2751 = vmatprep.subr.bf16.mxu0 %v1907
  %2752 = vmatpush1.bf16.msra.mxu0 %v1906
  %2753 = vmatprep.subr.bf16.mxu0 %v1909
  %2754 = vmatpush1.bf16.msra.mxu0 %v1908
  %2755 = vmatprep.subr.bf16.mxu0 %v1911
  %2756 = vmatpush1.bf16.msra.mxu0 %v1910
  %2757 = vmatprep.subr.bf16.mxu0 %v1913
  %2758 = vmatpush1.bf16.msra.mxu0 %v1912
  %2759 = vmatprep.subr.bf16.mxu0 %v1915
  %2760 = vmatpush1.bf16.msra.mxu0 %v1914
  %2761 = vmatprep.subr.bf16.mxu0 %v1917
  %2762 = vmatpush1.bf16.msra.mxu0 %v1916
  %2763 = vmatprep.subr.bf16.mxu0 %v1919
  %2764 = vmatpush1.bf16.msra.mxu0 %v1918
  %2765 = vmatprep.mubr.bf16.mxu0 %v489
  %2766 = vmatmul.mubr.bf16.gmra.mrb[0].mxu0 %v488
  %v2767 = vpop.f32.mrb[0].mxu0
  %v2768 = vadd.f32 %v2727, %v2767
  %v2769 = vpop.f32.mrb[0].mxu0
  %v2770 = vadd.f32 %v2729, %v2769
  %v2771 = vpop.f32.mrb[0].mxu0
  %v2772 = vpop.f32.mrb[0].mxu0
  %2773 = vdwg.mxu0
  %2774 = vmatprep.subr.bf16.mxu0 %v1921
  %2775 = vmatpush1.bf16.msra.mxu0 %v1920
  %2776 = vmatprep.subr.bf16.mxu0 %v1923
  %2777 = vmatpush1.bf16.msra.mxu0 %v1922
  %2778 = vmatprep.subr.bf16.mxu0 %v1925
  %2779 = vmatpush1.bf16.msra.mxu0 %v1924
  %2780 = vmatprep.subr.bf16.mxu0 %v1927
  %2781 = vmatpush1.bf16.msra.mxu0 %v1926
  %2782 = vmatprep.subr.bf16.mxu0 %v1929
  %2783 = vmatpush1.bf16.msra.mxu0 %v1928
  %2784 = vmatprep.subr.bf16.mxu0 %v1931
  %2785 = vmatpush1.bf16.msra.mxu0 %v1930
  %2786 = vmatprep.subr.bf16.mxu0 %v1933
  %2787 = vmatpush1.bf16.msra.mxu0 %v1932
  %2788 = vmatprep.subr.bf16.mxu0 %v1935
  %2789 = vmatpush1.bf16.msra.mxu0 %v1934
  %2790 = vmatprep.subr.bf16.mxu0 %v1937
  %2791 = vmatpush1.bf16.msra.mxu0 %v1936
  %2792 = vmatprep.subr.bf16.mxu0 %v1939
  %2793 = vmatpush1.bf16.msra.mxu0 %v1938
  %2794 = vmatprep.subr.bf16.mxu0 %v1941
  %2795 = vmatpush1.bf16.msra.mxu0 %v1940
  %2796 = vmatprep.subr.bf16.mxu0 %v1943
  %2797 = vmatpush1.bf16.msra.mxu0 %v1942
  %2798 = vmatprep.subr.bf16.mxu0 %v1945
  %2799 = vmatpush1.bf16.msra.mxu0 %v1944
  %2800 = vmatprep.subr.bf16.mxu0 %v1947
  %2801 = vmatpush1.bf16.msra.mxu0 %v1946
  %2802 = vmatprep.subr.bf16.mxu0 %v1949
  %2803 = vmatpush1.bf16.msra.mxu0 %v1948
  %2804 = vmatprep.subr.bf16.mxu0 %v1951
  %2805 = vmatpush1.bf16.msra.mxu0 %v1950
  %2806 = vmatprep.mubr.bf16.mxu0 %v491
  %2807 = vmatmul.mubr.bf16.gmra.mrb[0].mxu0 %v490
  %v2808 = vpop.f32.mrb[0].mxu0
  %v2809 = vadd.f32 %v2768, %v2808
  %v2810 = vpop.f32.mrb[0].mxu0
  %v2811 = vadd.f32 %v2770, %v2810
  %v2812 = vpop.f32.mrb[0].mxu0
  %v2813 = vpop.f32.mrb[0].mxu0
  %2814 = vdwg.mxu0
  %2815 = vmatprep.subr.bf16.mxu0 %v1953
  %2816 = vmatpush1.bf16.msra.mxu0 %v1952
  %2817 = vmatprep.subr.bf16.mxu0 %v1955
  %2818 = vmatpush1.bf16.msra.mxu0 %v1954
  %2819 = vmatprep.subr.bf16.mxu0 %v1957
  %2820 = vmatpush1.bf16.msra.mxu0 %v1956
  %2821 = vmatprep.subr.bf16.mxu0 %v1959
  %2822 = vmatpush1.bf16.msra.mxu0 %v1958
  %2823 = vmatprep.subr.bf16.mxu0 %v1961
  %2824 = vmatpush1.bf16.msra.mxu0 %v1960
  %2825 = vmatprep.subr.bf16.mxu0 %v1963
  %2826 = vmatpush1.bf16.msra.mxu0 %v1962
  %2827 = vmatprep.subr.bf16.mxu0 %v1965
  %2828 = vmatpush1.bf16.msra.mxu0 %v1964
  %2829 = vmatprep.subr.bf16.mxu0 %v1967
  %2830 = vmatpush1.bf16.msra.mxu0 %v1966
  %2831 = vmatprep.subr.bf16.mxu0 %v1969
  %2832 = vmatpush1.bf16.msra.mxu0 %v1968
  %2833 = vmatprep.subr.bf16.mxu0 %v1971
  %2834 = vmatpush1.bf16.msra.mxu0 %v1970
  %2835 = vmatprep.subr.bf16.mxu0 %v1973
  %2836 = vmatpush1.bf16.msra.mxu0 %v1972
  %2837 = vmatprep.subr.bf16.mxu0 %v1975
  %2838 = vmatpush1.bf16.msra.mxu0 %v1974
  %2839 = vmatprep.subr.bf16.mxu0 %v1977
  %2840 = vmatpush1.bf16.msra.mxu0 %v1976
  %2841 = vmatprep.subr.bf16.mxu0 %v1979
  %2842 = vmatpush1.bf16.msra.mxu0 %v1978
  %2843 = vmatprep.subr.bf16.mxu0 %v1981
  %2844 = vmatpush1.bf16.msra.mxu0 %v1980
  %2845 = vmatprep.subr.bf16.mxu0 %v1983
  %2846 = vmatpush1.bf16.msra.mxu0 %v1982
  %2847 = vmatprep.mubr.bf16.mxu0 %v493
  %2848 = vmatmul.mubr.bf16.gmra.mrb[0].mxu0 %v492
  %v2849 = vpop.f32.mrb[0].mxu0
  %v2850 = vadd.f32 %v2809, %v2849
  %v2851 = vpop.f32.mrb[0].mxu0
  %v2852 = vadd.f32 %v2811, %v2851
  %v2853 = vpop.f32.mrb[0].mxu0
  %v2854 = vpop.f32.mrb[0].mxu0
  %2855 = vdwg.mxu0
  %2856 = vmatprep.subr.bf16.mxu0 %v1985
  %2857 = vmatpush1.bf16.msra.mxu0 %v1984
  %2858 = vmatprep.subr.bf16.mxu0 %v1987
  %2859 = vmatpush1.bf16.msra.mxu0 %v1986
  %2860 = vmatprep.subr.bf16.mxu0 %v1989
  %2861 = vmatpush1.bf16.msra.mxu0 %v1988
  %2862 = vmatprep.subr.bf16.mxu0 %v1991
  %2863 = vmatpush1.bf16.msra.mxu0 %v1990
  %2864 = vmatprep.subr.bf16.mxu0 %v1993
  %2865 = vmatpush1.bf16.msra.mxu0 %v1992
  %2866 = vmatprep.subr.bf16.mxu0 %v1995
  %2867 = vmatpush1.bf16.msra.mxu0 %v1994
  %2868 = vmatprep.subr.bf16.mxu0 %v1997
  %2869 = vmatpush1.bf16.msra.mxu0 %v1996
  %2870 = vmatprep.subr.bf16.mxu0 %v1999
  %2871 = vmatpush1.bf16.msra.mxu0 %v1998
  %2872 = vmatprep.subr.bf16.mxu0 %v2001
  %2873 = vmatpush1.bf16.msra.mxu0 %v2000
  %2874 = vmatprep.subr.bf16.mxu0 %v2003
  %2875 = vmatpush1.bf16.msra.mxu0 %v2002
  %2876 = vmatprep.subr.bf16.mxu0 %v2005
  %2877 = vmatpush1.bf16.msra.mxu0 %v2004
  %2878 = vmatprep.subr.bf16.mxu0 %v2007
  %2879 = vmatpush1.bf16.msra.mxu0 %v2006
  %2880 = vmatprep.subr.bf16.mxu0 %v2009
  %2881 = vmatpush1.bf16.msra.mxu0 %v2008
  %2882 = vmatprep.subr.bf16.mxu0 %v2011
  %2883 = vmatpush1.bf16.msra.mxu0 %v2010
  %2884 = vmatprep.subr.bf16.mxu0 %v2013
  %2885 = vmatpush1.bf16.msra.mxu0 %v2012
  %2886 = vmatprep.subr.bf16.mxu0 %v2015
  %2887 = vmatpush1.bf16.msra.mxu0 %v2014
  %2888 = vmatprep.mubr.bf16.mxu0 %v495
  %2889 = vmatmul.mubr.bf16.gmra.mrb[0].mxu0 %v494
  %v2890 = vpop.f32.mrb[0].mxu0
  %v2891 = vadd.f32 %v2850, %v2890
  %v2892 = vpop.f32.mrb[0].mxu0
  %v2893 = vadd.f32 %v2852, %v2892
  %v2894 = vpop.f32.mrb[0].mxu0
  %v2895 = vpop.f32.mrb[0].mxu0
  %2896 = vdwg.mxu0
  %2897 = vmatprep.subr.bf16.mxu0 %v2017
  %2898 = vmatpush1.bf16.msra.mxu0 %v2016
  %2899 = vmatprep.subr.bf16.mxu0 %v2019
  %2900 = vmatpush1.bf16.msra.mxu0 %v2018
  %2901 = vmatprep.subr.bf16.mxu0 %v2021
  %2902 = vmatpush1.bf16.msra.mxu0 %v2020
  %2903 = vmatprep.subr.bf16.mxu0 %v2023
  %2904 = vmatpush1.bf16.msra.mxu0 %v2022
  %2905 = vmatprep.subr.bf16.mxu0 %v2025
  %2906 = vmatpush1.bf16.msra.mxu0 %v2024
  %2907 = vmatprep.subr.bf16.mxu0 %v2027
  %2908 = vmatpush1.bf16.msra.mxu0 %v2026
  %2909 = vmatprep.subr.bf16.mxu0 %v2029
  %2910 = vmatpush1.bf16.msra.mxu0 %v2028
  %2911 = vmatprep.subr.bf16.mxu0 %v2031
  %2912 = vmatpush1.bf16.msra.mxu0 %v2030
  %2913 = vmatprep.subr.bf16.mxu0 %v2033
  %2914 = vmatpush1.bf16.msra.mxu0 %v2032
  %2915 = vmatprep.subr.bf16.mxu0 %v2035
  %2916 = vmatpush1.bf16.msra.mxu0 %v2034
  %2917 = vmatprep.subr.bf16.mxu0 %v2037
  %2918 = vmatpush1.bf16.msra.mxu0 %v2036
  %2919 = vmatprep.subr.bf16.mxu0 %v2039
  %2920 = vmatpush1.bf16.msra.mxu0 %v2038
  %2921 = vmatprep.subr.bf16.mxu0 %v2041
  %2922 = vmatpush1.bf16.msra.mxu0 %v2040
  %2923 = vmatprep.subr.bf16.mxu0 %v2043
  %2924 = vmatpush1.bf16.msra.mxu0 %v2042
  %2925 = vmatprep.subr.bf16.mxu0 %v2045
  %2926 = vmatpush1.bf16.msra.mxu0 %v2044
  %2927 = vmatprep.subr.bf16.mxu0 %v2047
  %2928 = vmatpush1.bf16.msra.mxu0 %v2046
  %2929 = vmatprep.mubr.bf16.mxu0 %v497
  %2930 = vmatmul.mubr.bf16.gmra.mrb[0].mxu0 %v496
  %v2931 = vpop.f32.mrb[0].mxu0
  %v2932 = vadd.f32 %v2891, %v2931
  %v2933 = vpop.f32.mrb[0].mxu0
  %v2934 = vadd.f32 %v2893, %v2933
  %v2935 = vpop.f32.mrb[0].mxu0
  %v2936 = vpop.f32.mrb[0].mxu0
  %2937 = vdwg.mxu0
  %2938 = vmatprep.subr.bf16.mxu0 %v2049
  %2939 = vmatpush1.bf16.msra.mxu0 %v2048
  %2940 = vmatprep.subr.bf16.mxu0 %v2051
  %2941 = vmatpush1.bf16.msra.mxu0 %v2050
  %2942 = vmatprep.subr.bf16.mxu0 %v2053
  %2943 = vmatpush1.bf16.msra.mxu0 %v2052
  %2944 = vmatprep.subr.bf16.mxu0 %v2055
  %2945 = vmatpush1.bf16.msra.mxu0 %v2054
  %2946 = vmatprep.subr.bf16.mxu0 %v2057
  %2947 = vmatpush1.bf16.msra.mxu0 %v2056
  %2948 = vmatprep.subr.bf16.mxu0 %v2059
  %2949 = vmatpush1.bf16.msra.mxu0 %v2058
  %2950 = vmatprep.subr.bf16.mxu0 %v2061
  %2951 = vmatpush1.bf16.msra.mxu0 %v2060
  %2952 = vmatprep.subr.bf16.mxu0 %v2063
  %2953 = vmatpush1.bf16.msra.mxu0 %v2062
  %2954 = vmatprep.subr.bf16.mxu0 %v2065
  %2955 = vmatpush1.bf16.msra.mxu0 %v2064
  %2956 = vmatprep.subr.bf16.mxu0 %v2067
  %2957 = vmatpush1.bf16.msra.mxu0 %v2066
  %2958 = vmatprep.subr.bf16.mxu0 %v2069
  %2959 = vmatpush1.bf16.msra.mxu0 %v2068
  %2960 = vmatprep.subr.bf16.mxu0 %v2071
  %2961 = vmatpush1.bf16.msra.mxu0 %v2070
  %2962 = vmatprep.subr.bf16.mxu0 %v2073
  %2963 = vmatpush1.bf16.msra.mxu0 %v2072
  %2964 = vmatprep.subr.bf16.mxu0 %v2075
  %2965 = vmatpush1.bf16.msra.mxu0 %v2074
  %2966 = vmatprep.subr.bf16.mxu0 %v2077
  %2967 = vmatpush1.bf16.msra.mxu0 %v2076
  %2968 = vmatprep.subr.bf16.mxu0 %v2079
  %2969 = vmatpush1.bf16.msra.mxu0 %v2078
  %2970 = vmatprep.mubr.bf16.mxu0 %v499
  %2971 = vmatmul.mubr.bf16.gmra.mrb[0].mxu0 %v498
  %v2972 = vpop.f32.mrb[0].mxu0
  %v2973 = vadd.f32 %v2932, %v2972
  %v2974 = vpop.f32.mrb[0].mxu0
  %v2975 = vadd.f32 %v2934, %v2974
  %v2976 = vpop.f32.mrb[0].mxu0
  %v2977 = vpop.f32.mrb[0].mxu0
  %2978 = vdwg.mxu0
  %2979 = vmatprep.subr.bf16.mxu0 %v2081
  %2980 = vmatpush1.bf16.msra.mxu0 %v2080
  %2981 = vmatprep.subr.bf16.mxu0 %v2083
  %2982 = vmatpush1.bf16.msra.mxu0 %v2082
  %2983 = vmatprep.subr.bf16.mxu0 %v2085
  %2984 = vmatpush1.bf16.msra.mxu0 %v2084
  %2985 = vmatprep.subr.bf16.mxu0 %v2087
  %2986 = vmatpush1.bf16.msra.mxu0 %v2086
  %2987 = vmatprep.subr.bf16.mxu0 %v2089
  %2988 = vmatpush1.bf16.msra.mxu0 %v2088
  %2989 = vmatprep.subr.bf16.mxu0 %v2091
  %2990 = vmatpush1.bf16.msra.mxu0 %v2090
  %2991 = vmatprep.subr.bf16.mxu0 %v2093
  %2992 = vmatpush1.bf16.msra.mxu0 %v2092
  %2993 = vmatprep.subr.bf16.mxu0 %v2095
  %2994 = vmatpush1.bf16.msra.mxu0 %v2094
  %2995 = vmatprep.subr.bf16.mxu0 %v2097
  %2996 = vmatpush1.bf16.msra.mxu0 %v2096
  %2997 = vmatprep.subr.bf16.mxu0 %v2099
  %2998 = vmatpush1.bf16.msra.mxu0 %v2098
  %2999 = vmatprep.subr.bf16.mxu0 %v2101
  %3000 = vmatpush1.bf16.msra.mxu0 %v2100
  %3001 = vmatprep.subr.bf16.mxu0 %v2103
  %3002 = vmatpush1.bf16.msra.mxu0 %v2102
  %3003 = vmatprep.subr.bf16.mxu0 %v2105
  %3004 = vmatpush1.bf16.msra.mxu0 %v2104
  %3005 = vmatprep.subr.bf16.mxu0 %v2107
  %3006 = vmatpush1.bf16.msra.mxu0 %v2106
  %3007 = vmatprep.subr.bf16.mxu0 %v2109
  %3008 = vmatpush1.bf16.msra.mxu0 %v2108
  %3009 = vmatprep.subr.bf16.mxu0 %v2111
  %3010 = vmatpush1.bf16.msra.mxu0 %v2110
  %3011 = vmatprep.mubr.bf16.mxu0 %v501
  %3012 = vmatmul.mubr.bf16.gmra.mrb[0].mxu0 %v500
  %v3013 = vpop.f32.mrb[0].mxu0
  %v3014 = vadd.f32 %v2973, %v3013
  %v3015 = vpop.f32.mrb[0].mxu0
  %v3016 = vadd.f32 %v2975, %v3015
  %v3017 = vpop.f32.mrb[0].mxu0
  %v3018 = vpop.f32.mrb[0].mxu0
  %3019 = vdwg.mxu0
  %3020 = vmatprep.subr.bf16.mxu0 %v2113
  %3021 = vmatpush1.bf16.msra.mxu0 %v2112
  %3022 = vmatprep.subr.bf16.mxu0 %v2115
  %3023 = vmatpush1.bf16.msra.mxu0 %v2114
  %3024 = vmatprep.subr.bf16.mxu0 %v2117
  %3025 = vmatpush1.bf16.msra.mxu0 %v2116
  %3026 = vmatprep.subr.bf16.mxu0 %v2119
  %3027 = vmatpush1.bf16.msra.mxu0 %v2118
  %3028 = vmatprep.subr.bf16.mxu0 %v2121
  %3029 = vmatpush1.bf16.msra.mxu0 %v2120
  %3030 = vmatprep.subr.bf16.mxu0 %v2123
  %3031 = vmatpush1.bf16.msra.mxu0 %v2122
  %3032 = vmatprep.subr.bf16.mxu0 %v2125
  %3033 = vmatpush1.bf16.msra.mxu0 %v2124
  %3034 = vmatprep.subr.bf16.mxu0 %v2127
  %3035 = vmatpush1.bf16.msra.mxu0 %v2126
  %3036 = vmatprep.subr.bf16.mxu0 0
  %3037 = vmatpush1.bf16.msra.mxu0 0
  %3038 = vmatprep.subr.bf16.mxu0 0
  %3039 = vmatpush1.bf16.msra.mxu0 0
  %3040 = vmatprep.subr.bf16.mxu0 0
  %3041 = vmatpush1.bf16.msra.mxu0 0
  %3042 = vmatprep.subr.bf16.mxu0 0
  %3043 = vmatpush1.bf16.msra.mxu0 0
  %3044 = vmatprep.subr.bf16.mxu0 0
  %3045 = vmatpush1.bf16.msra.mxu0 0
  %3046 = vmatprep.subr.bf16.mxu0 0
  %3047 = vmatpush1.bf16.msra.mxu0 0
  %3048 = vmatprep.subr.bf16.mxu0 0
  %3049 = vmatpush1.bf16.msra.mxu0 0
  %3050 = vmatprep.subr.bf16.mxu0 0
  %3051 = vmatpush1.bf16.msra.mxu0 0
  %3052 = vmatprep.mubr.bf16.mxu0 0
  %3053 = vmatmul.mubr.bf16.gmra.mrb[0].mxu0 %v502
  %v3054 = vpop.f32.mrb[0].mxu0
  %v3055 = vadd.f32 %v3014, %v3054
  %v3056 = vpop.f32.mrb[0].mxu0
  %v3057 = vadd.f32 %v3016, %v3056
  %v3058 = vpop.f32.mrb[0].mxu0
  %v3059 = vpop.f32.mrb[0].mxu0
  %3060 = vdwg.mxu0
  %v3061 = vmax.f32 %v3055, 0.0
  %v3062 = vmax.f32 %v3057, 0.0
  %v3063 = vpack.c.bf16 %v3061, %v3061
  %v3064 = vpack.c.bf16 %v3062, %v3062
  %v3067 = vunpack.c.l.b16 %v3063
  %v3068 = vunpack.c.l.b16 %v3064
  %v3069 = vpack.c.b16 %v3068, %v3067
  %3071 = vst [vmem:[%s3] sm:$0xff] %v3069
  // Predicated region
  $region14: #{fcn_forward.6} parent=0 // pred_check
    _
  $region15: #{fcn_forward.6} parent=0 // pred_check_branch
    %3073 = sbr.rel (0) target = $region17
  $region16: #{fcn_forward.6} parent=0 // pred_region
    _
  $region17: #{fcn_forward.6} parent=0 // pred_fallthru
    _
  // Predicated region
  $region18: #{fcn_forward.6} parent=0 // pred_check
    _
  $region19: #{fcn_forward.6} parent=0 // pred_check_branch
    %3075 = sbr.rel (0) target = $region21
  $region20: #{fcn_forward.6} parent=0 // pred_region
    _
  $region21: #{fcn_forward.6} parent=0 // pred_fallthru
    _

// kernel: fcn_forward.7
$region0: #{fcn_forward.7}
  #allocation0 [shape = 'u32[]', space=smem, size = 0x4, offset = 0x4, fixed_abs, tag = 'smem constant byte address 0x4 - core index']
  #allocation1 [shape = 'u32[144,128]{1,0:T(1,128)}', space=vmem, size = 0x12000, scoped, tag = 'internal scratch']
  %s0 = inlined_call_operand.vmem [shape: bf16[8,2304], index: 0, kind: input, shape index: {}]
  %s1 = inlined_call_operand.vmem [shape: bf16[2304,128], index: 1, kind: input, shape index: {}]
  %s2 = inlined_call_operand.vmem [shape: f32[1,128], index: 2, kind: input, shape index: {}]
  %s3 = inlined_call_operand.hbm [shape: f32[8,128], index: 3, kind: output, shape index: {}]
  %s4 = sld [smem:[#allocation0]]
  $region22: #{fcn_forward.7} parent=0
    _
  %s6 = ssub.s32 1, %s4
  %s7 = scalar_select 0, %s6, %s4
  $region1: #{fcn_forward.7} parent=0
    #allocation2 [shape = 'u8[4096]{0}', space=vmem, size = 0x1000, scoped, tag = 'output window, operand 0, single buffered']
    #allocation3 [shape = 's32[1]{0}', space=sflag, size = 0x4, scoped, tag = 'scoped memory for fcn_forward.7']
    %8 = vsyncpa [#allocation3], 0
    // Predicated region
    $region2: #{fcn_forward.7} parent=1 // pred_check
      _
    $region3: #{fcn_forward.7} parent=1 // pred_check_branch
      %10 = sbr.rel (0) target = $region5
    $region4: #{fcn_forward.7} parent=1 // pred_region
      _
    $region5: #{fcn_forward.7} parent=1 // pred_fallthru
      _
    // Predicated region
    $region6: #{fcn_forward.7} parent=1 // pred_check
      _
    $region7: #{fcn_forward.7} parent=1 // pred_check_branch
      %12 = sbr.rel (0) target = $region9
    $region8: #{fcn_forward.7} parent=1 // pred_region
      _
    $region9: #{fcn_forward.7} parent=1 // pred_fallthru
      _
    // Predicated region
    $region10: #{fcn_forward.7} parent=1 // pred_check
      _
    $region11: #{fcn_forward.7} parent=1 // pred_check_branch
      %14 = sbr.rel (0) target = $region13
    $region12: #{fcn_forward.7} parent=1 // pred_region
      _
    $region13: #{fcn_forward.7} parent=1 // pred_fallthru
      _
    %v16 = vld [vmem:[%s0] sm:$0xff]
    %v17 = vld [vmem:[%s0 + $0x8] sm:$0xff]
    %v18 = vld [vmem:[%s0 + $0x10] sm:$0xff]
    %v19 = vld [vmem:[%s0 + $0x18] sm:$0xff]
    %v20 = vld [vmem:[%s0 + $0x20] sm:$0xff]
    %v21 = vld [vmem:[%s0 + $0x28] sm:$0xff]
    %v22 = vld [vmem:[%s0 + $0x30] sm:$0xff]
    %v23 = vld [vmem:[%s0 + $0x38] sm:$0xff]
    %v24 = vld [vmem:[%s0 + $0x40] sm:$0xff]
    %v25 = vld [vmem:[%s1] sm:$0xf]
    %v26 = vld [vmem:[%s1 + $0x4] sm:$0xf]
    %v27 = vld [vmem:[%s1 + $0x8] sm:$0xf]
    %v28 = vld [vmem:[%s1 + $0xc] sm:$0xf]
    %v29 = vld [vmem:[%s1 + $0x10] sm:$0xf]
    %v30 = vld [vmem:[%s1 + $0x14] sm:$0xf]
    %v31 = vld [vmem:[%s1 + $0x18] sm:$0xf]
    %v32 = vld [vmem:[%s1 + $0x1c] sm:$0xf]
    %v33 = vld [vmem:[%s1 + $0x20] sm:$0xf]
    %v34 = vld [vmem:[%s1 + $0x24] sm:$0xf]
    %v35 = vld [vmem:[%s1 + $0x28] sm:$0xf]
    %v36 = vld [vmem:[%s1 + $0x2c] sm:$0xf]
    %v37 = vld [vmem:[%s1 + $0x30] sm:$0xf]
    %v38 = vld [vmem:[%s1 + $0x34] sm:$0xf]
    %v39 = vld [vmem:[%s1 + $0x38] sm:$0xf]
    %v40 = vld [vmem:[%s1 + $0x3c] sm:$0xf]
    %v41 = vld [vmem:[%s1 + $0x40] sm:$0xf]
    %v42 = vld [vmem:[%s1 + $0x44] sm:$0xf]
    %v43 = vld [vmem:[%s1 + $0x48] sm:$0xf]
    %v44 = vld [vmem:[%s1 + $0x4c] sm:$0xf]
    %v45 = vld [vmem:[%s1 + $0x50] sm:$0xf]
    %v46 = vld [vmem:[%s1 + $0x54] sm:$0xf]
    %v47 = vld [vmem:[%s1 + $0x58] sm:$0xf]
    %v48 = vld [vmem:[%s1 + $0x5c] sm:$0xf]
    %v49 = vld [vmem:[%s1 + $0x60] sm:$0xf]
    %v50 = vld [vmem:[%s1 + $0x64] sm:$0xf]
    %v51 = vld [vmem:[%s1 + $0x68] sm:$0xf]
    %v52 = vld [vmem:[%s1 + $0x6c] sm:$0xf]
    %v53 = vld [vmem:[%s1 + $0x70] sm:$0xf]
    %v54 = vld [vmem:[%s1 + $0x74] sm:$0xf]
    %v55 = vld [vmem:[%s1 + $0x78] sm:$0xf]
    %v56 = vld [vmem:[%s1 + $0x7c] sm:$0xf]
    %v57 = vld [vmem:[%s1 + $0x80] sm:$0xf]
    %v58 = vld [vmem:[%s1 + $0x84] sm:$0xf]
    %v59 = vld [vmem:[%s1 + $0x88] sm:$0xf]
    %v60 = vld [vmem:[%s1 + $0x8c] sm:$0xf]
    %v61 = vld [vmem:[%s1 + $0x90] sm:$0xf]
    %v62 = vld [vmem:[%s1 + $0x94] sm:$0xf]
    %v63 = vld [vmem:[%s1 + $0x98] sm:$0xf]
    %v64 = vld [vmem:[%s1 + $0x9c] sm:$0xf]
    %v65 = vld [vmem:[%s1 + $0xa0] sm:$0xf]
    %v66 = vld [vmem:[%s1 + $0xa4] sm:$0xf]
    %v67 = vld [vmem:[%s1 + $0xa8] sm:$0xf]
    %v68 = vld [vmem:[%s1 + $0xac] sm:$0xf]
    %v69 = vld [vmem:[%s1 + $0xb0] sm:$0xf]
    %v70 = vld [vmem:[%s1 + $0xb4] sm:$0xf]
    %v71 = vld [vmem:[%s1 + $0xb8] sm:$0xf]
    %v72 = vld [vmem:[%s1 + $0xbc] sm:$0xf]
    %v73 = vld [vmem:[%s1 + $0xc0] sm:$0xf]
    %v74 = vld [vmem:[%s1 + $0xc4] sm:$0xf]
    %v75 = vld [vmem:[%s1 + $0xc8] sm:$0xf]
    %v76 = vld [vmem:[%s1 + $0xcc] sm:$0xf]
    %v77 = vld [vmem:[%s1 + $0xd0] sm:$0xf]
    %v78 = vld [vmem:[%s1 + $0xd4] sm:$0xf]
    %v79 = vld [vmem:[%s1 + $0xd8] sm:$0xf]
    %v80 = vld [vmem:[%s1 + $0xdc] sm:$0xf]
    %v81 = vld [vmem:[%s1 + $0xe0] sm:$0xf]
    %v82 = vld [vmem:[%s1 + $0xe4] sm:$0xf]
    %v83 = vld [vmem:[%s1 + $0xe8] sm:$0xf]
    %v84 = vld [vmem:[%s1 + $0xec] sm:$0xf]
    %v85 = vld [vmem:[%s1 + $0xf0] sm:$0xf]
    %v86 = vld [vmem:[%s1 + $0xf4] sm:$0xf]
    %v87 = vld [vmem:[%s1 + $0xf8] sm:$0xf]
    %v88 = vld [vmem:[%s1 + $0xfc] sm:$0xf]
    %v89 = vld [vmem:[%s1 + $0x100] sm:$0xf]
    %v90 = vld [vmem:[%s1 + $0x104] sm:$0xf]
    %v91 = vld [vmem:[%s1 + $0x108] sm:$0xf]
    %v92 = vld [vmem:[%s1 + $0x10c] sm:$0xf]
    %v93 = vld [vmem:[%s1 + $0x110] sm:$0xf]
    %v94 = vld [vmem:[%s1 + $0x114] sm:$0xf]
    %v95 = vld [vmem:[%s1 + $0x118] sm:$0xf]
    %v96 = vld [vmem:[%s1 + $0x11c] sm:$0xf]
    %v97 = vld [vmem:[%s1 + $0x120] sm:$0xf]
    %v98 = vld [vmem:[%s1 + $0x124] sm:$0xf]
    %v99 = vld [vmem:[%s1 + $0x128] sm:$0xf]
    %v100 = vld [vmem:[%s1 + $0x12c] sm:$0xf]
    %v101 = vld [vmem:[%s1 + $0x130] sm:$0xf]
    %v102 = vld [vmem:[%s1 + $0x134] sm:$0xf]
    %v103 = vld [vmem:[%s1 + $0x138] sm:$0xf]
    %v104 = vld [vmem:[%s1 + $0x13c] sm:$0xf]
    %v105 = vld [vmem:[%s1 + $0x140] sm:$0xf]
    %v106 = vld [vmem:[%s1 + $0x144] sm:$0xf]
    %v107 = vld [vmem:[%s1 + $0x148] sm:$0xf]
    %v108 = vld [vmem:[%s1 + $0x14c] sm:$0xf]
    %v109 = vld [vmem:[%s1 + $0x150] sm:$0xf]
    %v110 = vld [vmem:[%s1 + $0x154] sm:$0xf]
    %v111 = vld [vmem:[%s1 + $0x158] sm:$0xf]
    %v112 = vld [vmem:[%s1 + $0x15c] sm:$0xf]
    %v113 = vld [vmem:[%s1 + $0x160] sm:$0xf]
    %v114 = vld [vmem:[%s1 + $0x164] sm:$0xf]
    %v115 = vld [vmem:[%s1 + $0x168] sm:$0xf]
    %v116 = vld [vmem:[%s1 + $0x16c] sm:$0xf]
    %v117 = vld [vmem:[%s1 + $0x170] sm:$0xf]
    %v118 = vld [vmem:[%s1 + $0x174] sm:$0xf]
    %v119 = vld [vmem:[%s1 + $0x178] sm:$0xf]
    %v120 = vld [vmem:[%s1 + $0x17c] sm:$0xf]
    %v121 = vld [vmem:[%s1 + $0x180] sm:$0xf]
    %v122 = vld [vmem:[%s1 + $0x184] sm:$0xf]
    %v123 = vld [vmem:[%s1 + $0x188] sm:$0xf]
    %v124 = vld [vmem:[%s1 + $0x18c] sm:$0xf]
    %v125 = vld [vmem:[%s1 + $0x190] sm:$0xf]
    %v126 = vld [vmem:[%s1 + $0x194] sm:$0xf]
    %v127 = vld [vmem:[%s1 + $0x198] sm:$0xf]
    %v128 = vld [vmem:[%s1 + $0x19c] sm:$0xf]
    %v129 = vld [vmem:[%s1 + $0x1a0] sm:$0xf]
    %v130 = vld [vmem:[%s1 + $0x1a4] sm:$0xf]
    %v131 = vld [vmem:[%s1 + $0x1a8] sm:$0xf]
    %v132 = vld [vmem:[%s1 + $0x1ac] sm:$0xf]
    %v133 = vld [vmem:[%s1 + $0x1b0] sm:$0xf]
    %v134 = vld [vmem:[%s1 + $0x1b4] sm:$0xf]
    %v135 = vld [vmem:[%s1 + $0x1b8] sm:$0xf]
    %v136 = vld [vmem:[%s1 + $0x1bc] sm:$0xf]
    %v137 = vld [vmem:[%s1 + $0x1c0] sm:$0xf]
    %v138 = vld [vmem:[%s1 + $0x1c4] sm:$0xf]
    %v139 = vld [vmem:[%s1 + $0x1c8] sm:$0xf]
    %v140 = vld [vmem:[%s1 + $0x1cc] sm:$0xf]
    %v141 = vld [vmem:[%s1 + $0x1d0] sm:$0xf]
    %v142 = vld [vmem:[%s1 + $0x1d4] sm:$0xf]
    %v143 = vld [vmem:[%s1 + $0x1d8] sm:$0xf]
    %v144 = vld [vmem:[%s1 + $0x1dc] sm:$0xf]
    %v145 = vld [vmem:[%s1 + $0x1e0] sm:$0xf]
    %v146 = vld [vmem:[%s1 + $0x1e4] sm:$0xf]
    %v147 = vld [vmem:[%s1 + $0x1e8] sm:$0xf]
    %v148 = vld [vmem:[%s1 + $0x1ec] sm:$0xf]
    %v149 = vld [vmem:[%s1 + $0x1f0] sm:$0xf]
    %v150 = vld [vmem:[%s1 + $0x1f4] sm:$0xf]
    %v151 = vld [vmem:[%s1 + $0x1f8] sm:$0xf]
    %v152 = vld [vmem:[%s1 + $0x1fc] sm:$0xf]
    %v153 = vld [vmem:[%s1 + $0x200] sm:$0xf]
    %v154 = vld [vmem:[%s1 + $0x204] sm:$0xf]
    %v155 = vld [vmem:[%s1 + $0x208] sm:$0xf]
    %v156 = vld [vmem:[%s1 + $0x20c] sm:$0xf]
    %v157 = vld [vmem:[%s1 + $0x210] sm:$0xf]
    %v158 = vld [vmem:[%s1 + $0x214] sm:$0xf]
    %v159 = vld [vmem:[%s1 + $0x218] sm:$0xf]
    %v160 = vld [vmem:[%s1 + $0x21c] sm:$0xf]
    %v161 = vld [vmem:[%s1 + $0x220] sm:$0xf]
    %v162 = vld [vmem:[%s1 + $0x224] sm:$0xf]
    %v163 = vld [vmem:[%s1 + $0x228] sm:$0xf]
    %v164 = vld [vmem:[%s1 + $0x22c] sm:$0xf]
    %v165 = vld [vmem:[%s1 + $0x230] sm:$0xf]
    %v166 = vld [vmem:[%s1 + $0x234] sm:$0xf]
    %v167 = vld [vmem:[%s1 + $0x238] sm:$0xf]
    %v168 = vld [vmem:[%s1 + $0x23c] sm:$0xf]
    %v169 = vld [vmem:[%s1 + $0x240] sm:$0xf]
    %v170 = vld [vmem:[%s1 + $0x244] sm:$0xf]
    %v171 = vld [vmem:[%s1 + $0x248] sm:$0xf]
    %v172 = vld [vmem:[%s1 + $0x24c] sm:$0xf]
    %v173 = vld [vmem:[%s1 + $0x250] sm:$0xf]
    %v174 = vld [vmem:[%s1 + $0x254] sm:$0xf]
    %v175 = vld [vmem:[%s1 + $0x258] sm:$0xf]
    %v176 = vld [vmem:[%s1 + $0x25c] sm:$0xf]
    %v177 = vld [vmem:[%s1 + $0x260] sm:$0xf]
    %v178 = vld [vmem:[%s1 + $0x264] sm:$0xf]
    %v179 = vld [vmem:[%s1 + $0x268] sm:$0xf]
    %v180 = vld [vmem:[%s1 + $0x26c] sm:$0xf]
    %v181 = vld [vmem:[%s1 + $0x270] sm:$0xf]
    %v182 = vld [vmem:[%s1 + $0x274] sm:$0xf]
    %v183 = vld [vmem:[%s1 + $0x278] sm:$0xf]
    %v184 = vld [vmem:[%s1 + $0x27c] sm:$0xf]
    %v185 = vld [vmem:[%s1 + $0x280] sm:$0xf]
    %v186 = vld [vmem:[%s1 + $0x284] sm:$0xf]
    %v187 = vld [vmem:[%s1 + $0x288] sm:$0xf]
    %v188 = vld [vmem:[%s1 + $0x28c] sm:$0xf]
    %v189 = vld [vmem:[%s1 + $0x290] sm:$0xf]
    %v190 = vld [vmem:[%s1 + $0x294] sm:$0xf]
    %v191 = vld [vmem:[%s1 + $0x298] sm:$0xf]
    %v192 = vld [vmem:[%s1 + $0x29c] sm:$0xf]
    %v193 = vld [vmem:[%s1 + $0x2a0] sm:$0xf]
    %v194 = vld [vmem:[%s1 + $0x2a4] sm:$0xf]
    %v195 = vld [vmem:[%s1 + $0x2a8] sm:$0xf]
    %v196 = vld [vmem:[%s1 + $0x2ac] sm:$0xf]
    %v197 = vld [vmem:[%s1 + $0x2b0] sm:$0xf]
    %v198 = vld [vmem:[%s1 + $0x2b4] sm:$0xf]
    %v199 = vld [vmem:[%s1 + $0x2b8] sm:$0xf]
    %v200 = vld [vmem:[%s1 + $0x2bc] sm:$0xf]
    %v201 = vld [vmem:[%s1 + $0x2c0] sm:$0xf]
    %v202 = vld [vmem:[%s1 + $0x2c4] sm:$0xf]
    %v203 = vld [vmem:[%s1 + $0x2c8] sm:$0xf]
    %v204 = vld [vmem:[%s1 + $0x2cc] sm:$0xf]
    %v205 = vld [vmem:[%s1 + $0x2d0] sm:$0xf]
    %v206 = vld [vmem:[%s1 + $0x2d4] sm:$0xf]
    %v207 = vld [vmem:[%s1 + $0x2d8] sm:$0xf]
    %v208 = vld [vmem:[%s1 + $0x2dc] sm:$0xf]
    %v209 = vld [vmem:[%s1 + $0x2e0] sm:$0xf]
    %v210 = vld [vmem:[%s1 + $0x2e4] sm:$0xf]
    %v211 = vld [vmem:[%s1 + $0x2e8] sm:$0xf]
    %v212 = vld [vmem:[%s1 + $0x2ec] sm:$0xf]
    %v213 = vld [vmem:[%s1 + $0x2f0] sm:$0xf]
    %v214 = vld [vmem:[%s1 + $0x2f4] sm:$0xf]
    %v215 = vld [vmem:[%s1 + $0x2f8] sm:$0xf]
    %v216 = vld [vmem:[%s1 + $0x2fc] sm:$0xf]
    %v217 = vld [vmem:[%s1 + $0x300] sm:$0xf]
    %v218 = vld [vmem:[%s1 + $0x304] sm:$0xf]
    %v219 = vld [vmem:[%s1 + $0x308] sm:$0xf]
    %v220 = vld [vmem:[%s1 + $0x30c] sm:$0xf]
    %v221 = vld [vmem:[%s1 + $0x310] sm:$0xf]
    %v222 = vld [vmem:[%s1 + $0x314] sm:$0xf]
    %v223 = vld [vmem:[%s1 + $0x318] sm:$0xf]
    %v224 = vld [vmem:[%s1 + $0x31c] sm:$0xf]
    %v225 = vld [vmem:[%s1 + $0x320] sm:$0xf]
    %v226 = vld [vmem:[%s1 + $0x324] sm:$0xf]
    %v227 = vld [vmem:[%s1 + $0x328] sm:$0xf]
    %v228 = vld [vmem:[%s1 + $0x32c] sm:$0xf]
    %v229 = vld [vmem:[%s1 + $0x330] sm:$0xf]
    %v230 = vld [vmem:[%s1 + $0x334] sm:$0xf]
    %v231 = vld [vmem:[%s1 + $0x338] sm:$0xf]
    %v232 = vld [vmem:[%s1 + $0x33c] sm:$0xf]
    %v233 = vld [vmem:[%s1 + $0x340] sm:$0xf]
    %v234 = vld [vmem:[%s1 + $0x344] sm:$0xf]
    %v235 = vld [vmem:[%s1 + $0x348] sm:$0xf]
    %v236 = vld [vmem:[%s1 + $0x34c] sm:$0xf]
    %v237 = vld [vmem:[%s1 + $0x350] sm:$0xf]
    %v238 = vld [vmem:[%s1 + $0x354] sm:$0xf]
    %v239 = vld [vmem:[%s1 + $0x358] sm:$0xf]
    %v240 = vld [vmem:[%s1 + $0x35c] sm:$0xf]
    %v241 = vld [vmem:[%s1 + $0x360] sm:$0xf]
    %v242 = vld [vmem:[%s1 + $0x364] sm:$0xf]
    %v243 = vld [vmem:[%s1 + $0x368] sm:$0xf]
    %v244 = vld [vmem:[%s1 + $0x36c] sm:$0xf]
    %v245 = vld [vmem:[%s1 + $0x370] sm:$0xf]
    %v246 = vld [vmem:[%s1 + $0x374] sm:$0xf]
    %v247 = vld [vmem:[%s1 + $0x378] sm:$0xf]
    %v248 = vld [vmem:[%s1 + $0x37c] sm:$0xf]
    %v249 = vld [vmem:[%s1 + $0x380] sm:$0xf]
    %v250 = vld [vmem:[%s1 + $0x384] sm:$0xf]
    %v251 = vld [vmem:[%s1 + $0x388] sm:$0xf]
    %v252 = vld [vmem:[%s1 + $0x38c] sm:$0xf]
    %v253 = vld [vmem:[%s1 + $0x390] sm:$0xf]
    %v254 = vld [vmem:[%s1 + $0x394] sm:$0xf]
    %v255 = vld [vmem:[%s1 + $0x398] sm:$0xf]
    %v256 = vld [vmem:[%s1 + $0x39c] sm:$0xf]
    %v257 = vld [vmem:[%s1 + $0x3a0] sm:$0xf]
    %v258 = vld [vmem:[%s1 + $0x3a4] sm:$0xf]
    %v259 = vld [vmem:[%s1 + $0x3a8] sm:$0xf]
    %v260 = vld [vmem:[%s1 + $0x3ac] sm:$0xf]
    %v261 = vld [vmem:[%s1 + $0x3b0] sm:$0xf]
    %v262 = vld [vmem:[%s1 + $0x3b4] sm:$0xf]
    %v263 = vld [vmem:[%s1 + $0x3b8] sm:$0xf]
    %v264 = vld [vmem:[%s1 + $0x3bc] sm:$0xf]
    %v265 = vld [vmem:[%s1 + $0x3c0] sm:$0xf]
    %v266 = vld [vmem:[%s1 + $0x3c4] sm:$0xf]
    %v267 = vld [vmem:[%s1 + $0x3c8] sm:$0xf]
    %v268 = vld [vmem:[%s1 + $0x3cc] sm:$0xf]
    %v269 = vld [vmem:[%s1 + $0x3d0] sm:$0xf]
    %v270 = vld [vmem:[%s1 + $0x3d4] sm:$0xf]
    %v271 = vld [vmem:[%s1 + $0x3d8] sm:$0xf]
    %v272 = vld [vmem:[%s1 + $0x3dc] sm:$0xf]
    %v273 = vld [vmem:[%s1 + $0x3e0] sm:$0xf]
    %v274 = vld [vmem:[%s1 + $0x3e4] sm:$0xf]
    %v275 = vld [vmem:[%s1 + $0x3e8] sm:$0xf]
    %v276 = vld [vmem:[%s1 + $0x3ec] sm:$0xf]
    %v277 = vld [vmem:[%s1 + $0x3f0] sm:$0xf]
    %v278 = vld [vmem:[%s1 + $0x3f4] sm:$0xf]
    %v279 = vld [vmem:[%s1 + $0x3f8] sm:$0xf]
    %v280 = vld [vmem:[%s1 + $0x3fc] sm:$0xf]
    %v281 = vld [vmem:[%s1 + $0x400] sm:$0xf]
    %v282 = vld [vmem:[%s1 + $0x404] sm:$0xf]
    %v283 = vld [vmem:[%s1 + $0x408] sm:$0xf]
    %v284 = vld [vmem:[%s1 + $0x40c] sm:$0xf]
    %v285 = vld [vmem:[%s1 + $0x410] sm:$0xf]
    %v286 = vld [vmem:[%s1 + $0x414] sm:$0xf]
    %v287 = vld [vmem:[%s1 + $0x418] sm:$0xf]
    %v288 = vld [vmem:[%s1 + $0x41c] sm:$0xf]
    %v289 = vld [vmem:[%s1 + $0x420] sm:$0xf]
    %v290 = vld [vmem:[%s1 + $0x424] sm:$0xf]
    %v291 = vld [vmem:[%s1 + $0x428] sm:$0xf]
    %v292 = vld [vmem:[%s1 + $0x42c] sm:$0xf]
    %v293 = vld [vmem:[%s1 + $0x430] sm:$0xf]
    %v294 = vld [vmem:[%s1 + $0x434] sm:$0xf]
    %v295 = vld [vmem:[%s1 + $0x438] sm:$0xf]
    %v296 = vld [vmem:[%s1 + $0x43c] sm:$0xf]
    %v297 = vld [vmem:[%s1 + $0x440] sm:$0xf]
    %v298 = vld [vmem:[%s1 + $0x444] sm:$0xf]
    %v299 = vld [vmem:[%s1 + $0x448] sm:$0xf]
    %v300 = vld [vmem:[%s1 + $0x44c] sm:$0xf]
    %v301 = vld [vmem:[%s1 + $0x450] sm:$0xf]
    %v302 = vld [vmem:[%s1 + $0x454] sm:$0xf]
    %v303 = vld [vmem:[%s1 + $0x458] sm:$0xf]
    %v304 = vld [vmem:[%s1 + $0x45c] sm:$0xf]
    %v305 = vld [vmem:[%s1 + $0x460] sm:$0xf]
    %v306 = vld [vmem:[%s1 + $0x464] sm:$0xf]
    %v307 = vld [vmem:[%s1 + $0x468] sm:$0xf]
    %v308 = vld [vmem:[%s1 + $0x46c] sm:$0xf]
    %v309 = vld [vmem:[%s1 + $0x470] sm:$0xf]
    %v310 = vld [vmem:[%s1 + $0x474] sm:$0xf]
    %v311 = vld [vmem:[%s1 + $0x478] sm:$0xf]
    %v312 = vld [vmem:[%s1 + $0x47c] sm:$0xf]
    %v313 = vld [vmem:[%s2] sm:$0x1]
    %v315 = vlaneseq
    %v316 = vshrl.u32 %v315, 7
    %v317 = vsub.s32 0, %v316
    %v318 = vrot.slane %v313, %v317
    %v329 = vunpack.c.l.b16 %v16
    %v330 = vunpack.c.h.b16 %v16
    %v331 = vunpack.c.l.b16 %v17
    %v332 = vunpack.c.h.b16 %v17
    %v333 = vunpack.c.l.b16 %v18
    %v334 = vunpack.c.h.b16 %v18
    %v335 = vunpack.c.l.b16 %v19
    %v336 = vunpack.c.h.b16 %v19
    %v337 = vunpack.c.l.b16 %v20
    %v338 = vunpack.c.h.b16 %v20
    %v339 = vunpack.c.l.b16 %v21
    %v340 = vunpack.c.h.b16 %v21
    %v341 = vunpack.c.l.b16 %v22
    %v342 = vunpack.c.h.b16 %v22
    %v343 = vunpack.c.l.b16 %v23
    %v344 = vunpack.c.h.b16 %v23
    %v345 = vunpack.c.l.b16 %v24
    %v346 = vunpack.c.h.b16 %v24
    %v347 = vpack.c.b16 %v329, %v329
    %v348 = vpack.c.b16 %v330, %v330
    %v349 = vpack.c.b16 %v331, %v331
    %v350 = vpack.c.b16 %v332, %v332
    %v351 = vpack.c.b16 %v333, %v333
    %v352 = vpack.c.b16 %v334, %v334
    %v353 = vpack.c.b16 %v335, %v335
    %v354 = vpack.c.b16 %v336, %v336
    %v355 = vpack.c.b16 %v337, %v337
    %v356 = vpack.c.b16 %v338, %v338
    %v357 = vpack.c.b16 %v339, %v339
    %v358 = vpack.c.b16 %v340, %v340
    %v359 = vpack.c.b16 %v341, %v341
    %v360 = vpack.c.b16 %v342, %v342
    %v361 = vpack.c.b16 %v343, %v343
    %v362 = vpack.c.b16 %v344, %v344
    %v363 = vpack.c.b16 %v345, %v345
    %v364 = vpack.c.b16 %v346, %v346
    %v671 = vunpack.c.l.b16 %v25
    %v672 = vunpack.c.l.b16 %v26
    %v673 = vunpack.c.l.b16 %v27
    %v674 = vunpack.c.l.b16 %v28
    %v675 = vunpack.c.l.b16 %v29
    %v676 = vunpack.c.l.b16 %v30
    %v677 = vunpack.c.l.b16 %v31
    %v678 = vunpack.c.l.b16 %v32
    %v679 = vunpack.c.l.b16 %v33
    %v680 = vunpack.c.l.b16 %v34
    %v681 = vunpack.c.l.b16 %v35
    %v682 = vunpack.c.l.b16 %v36
    %v683 = vunpack.c.l.b16 %v37
    %v684 = vunpack.c.l.b16 %v38
    %v685 = vunpack.c.l.b16 %v39
    %v686 = vunpack.c.l.b16 %v40
    %v687 = vunpack.c.l.b16 %v41
    %v688 = vunpack.c.l.b16 %v42
    %v689 = vunpack.c.l.b16 %v43
    %v690 = vunpack.c.l.b16 %v44
    %v691 = vunpack.c.l.b16 %v45
    %v692 = vunpack.c.l.b16 %v46
    %v693 = vunpack.c.l.b16 %v47
    %v694 = vunpack.c.l.b16 %v48
    %v695 = vunpack.c.l.b16 %v49
    %v696 = vunpack.c.l.b16 %v50
    %v697 = vunpack.c.l.b16 %v51
    %v698 = vunpack.c.l.b16 %v52
    %v699 = vunpack.c.l.b16 %v53
    %v700 = vunpack.c.l.b16 %v54
    %v701 = vunpack.c.l.b16 %v55
    %v702 = vunpack.c.l.b16 %v56
    %v703 = vunpack.c.l.b16 %v57
    %v704 = vunpack.c.l.b16 %v58
    %v705 = vunpack.c.l.b16 %v59
    %v706 = vunpack.c.l.b16 %v60
    %v707 = vunpack.c.l.b16 %v61
    %v708 = vunpack.c.l.b16 %v62
    %v709 = vunpack.c.l.b16 %v63
    %v710 = vunpack.c.l.b16 %v64
    %v711 = vunpack.c.l.b16 %v65
    %v712 = vunpack.c.l.b16 %v66
    %v713 = vunpack.c.l.b16 %v67
    %v714 = vunpack.c.l.b16 %v68
    %v715 = vunpack.c.l.b16 %v69
    %v716 = vunpack.c.l.b16 %v70
    %v717 = vunpack.c.l.b16 %v71
    %v718 = vunpack.c.l.b16 %v72
    %v719 = vunpack.c.l.b16 %v73
    %v720 = vunpack.c.l.b16 %v74
    %v721 = vunpack.c.l.b16 %v75
    %v722 = vunpack.c.l.b16 %v76
    %v723 = vunpack.c.l.b16 %v77
    %v724 = vunpack.c.l.b16 %v78
    %v725 = vunpack.c.l.b16 %v79
    %v726 = vunpack.c.l.b16 %v80
    %v727 = vunpack.c.l.b16 %v81
    %v728 = vunpack.c.l.b16 %v82
    %v729 = vunpack.c.l.b16 %v83
    %v730 = vunpack.c.l.b16 %v84
    %v731 = vunpack.c.l.b16 %v85
    %v732 = vunpack.c.l.b16 %v86
    %v733 = vunpack.c.l.b16 %v87
    %v734 = vunpack.c.l.b16 %v88
    %v735 = vunpack.c.l.b16 %v89
    %v736 = vunpack.c.l.b16 %v90
    %v737 = vunpack.c.l.b16 %v91
    %v738 = vunpack.c.l.b16 %v92
    %v739 = vunpack.c.l.b16 %v93
    %v740 = vunpack.c.l.b16 %v94
    %v741 = vunpack.c.l.b16 %v95
    %v742 = vunpack.c.l.b16 %v96
    %v743 = vunpack.c.l.b16 %v97
    %v744 = vunpack.c.l.b16 %v98
    %v745 = vunpack.c.l.b16 %v99
    %v746 = vunpack.c.l.b16 %v100
    %v747 = vunpack.c.l.b16 %v101
    %v748 = vunpack.c.l.b16 %v102
    %v749 = vunpack.c.l.b16 %v103
    %v750 = vunpack.c.l.b16 %v104
    %v751 = vunpack.c.l.b16 %v105
    %v752 = vunpack.c.l.b16 %v106
    %v753 = vunpack.c.l.b16 %v107
    %v754 = vunpack.c.l.b16 %v108
    %v755 = vunpack.c.l.b16 %v109
    %v756 = vunpack.c.l.b16 %v110
    %v757 = vunpack.c.l.b16 %v111
    %v758 = vunpack.c.l.b16 %v112
    %v759 = vunpack.c.l.b16 %v113
    %v760 = vunpack.c.l.b16 %v114
    %v761 = vunpack.c.l.b16 %v115
    %v762 = vunpack.c.l.b16 %v116
    %v763 = vunpack.c.l.b16 %v117
    %v764 = vunpack.c.l.b16 %v118
    %v765 = vunpack.c.l.b16 %v119
    %v766 = vunpack.c.l.b16 %v120
    %v767 = vunpack.c.l.b16 %v121
    %v768 = vunpack.c.l.b16 %v122
    %v769 = vunpack.c.l.b16 %v123
    %v770 = vunpack.c.l.b16 %v124
    %v771 = vunpack.c.l.b16 %v125
    %v772 = vunpack.c.l.b16 %v126
    %v773 = vunpack.c.l.b16 %v127
    %v774 = vunpack.c.l.b16 %v128
    %v775 = vunpack.c.l.b16 %v129
    %v776 = vunpack.c.l.b16 %v130
    %v777 = vunpack.c.l.b16 %v131
    %v778 = vunpack.c.l.b16 %v132
    %v779 = vunpack.c.l.b16 %v133
    %v780 = vunpack.c.l.b16 %v134
    %v781 = vunpack.c.l.b16 %v135
    %v782 = vunpack.c.l.b16 %v136
    %v783 = vunpack.c.l.b16 %v137
    %v784 = vunpack.c.l.b16 %v138
    %v785 = vunpack.c.l.b16 %v139
    %v786 = vunpack.c.l.b16 %v140
    %v787 = vunpack.c.l.b16 %v141
    %v788 = vunpack.c.l.b16 %v142
    %v789 = vunpack.c.l.b16 %v143
    %v790 = vunpack.c.l.b16 %v144
    %v791 = vunpack.c.l.b16 %v145
    %v792 = vunpack.c.l.b16 %v146
    %v793 = vunpack.c.l.b16 %v147
    %v794 = vunpack.c.l.b16 %v148
    %v795 = vunpack.c.l.b16 %v149
    %v796 = vunpack.c.l.b16 %v150
    %v797 = vunpack.c.l.b16 %v151
    %v798 = vunpack.c.l.b16 %v152
    %v799 = vunpack.c.l.b16 %v153
    %v800 = vunpack.c.l.b16 %v154
    %v801 = vunpack.c.l.b16 %v155
    %v802 = vunpack.c.l.b16 %v156
    %v803 = vunpack.c.l.b16 %v157
    %v804 = vunpack.c.l.b16 %v158
    %v805 = vunpack.c.l.b16 %v159
    %v806 = vunpack.c.l.b16 %v160
    %v807 = vunpack.c.l.b16 %v161
    %v808 = vunpack.c.l.b16 %v162
    %v809 = vunpack.c.l.b16 %v163
    %v810 = vunpack.c.l.b16 %v164
    %v811 = vunpack.c.l.b16 %v165
    %v812 = vunpack.c.l.b16 %v166
    %v813 = vunpack.c.l.b16 %v167
    %v814 = vunpack.c.l.b16 %v168
    %v815 = vunpack.c.l.b16 %v169
    %v816 = vunpack.c.l.b16 %v170
    %v817 = vunpack.c.l.b16 %v171
    %v818 = vunpack.c.l.b16 %v172
    %v819 = vunpack.c.l.b16 %v173
    %v820 = vunpack.c.l.b16 %v174
    %v821 = vunpack.c.l.b16 %v175
    %v822 = vunpack.c.l.b16 %v176
    %v823 = vunpack.c.l.b16 %v177
    %v824 = vunpack.c.l.b16 %v178
    %v825 = vunpack.c.l.b16 %v179
    %v826 = vunpack.c.l.b16 %v180
    %v827 = vunpack.c.l.b16 %v181
    %v828 = vunpack.c.l.b16 %v182
    %v829 = vunpack.c.l.b16 %v183
    %v830 = vunpack.c.l.b16 %v184
    %v831 = vunpack.c.l.b16 %v185
    %v832 = vunpack.c.l.b16 %v186
    %v833 = vunpack.c.l.b16 %v187
    %v834 = vunpack.c.l.b16 %v188
    %v835 = vunpack.c.l.b16 %v189
    %v836 = vunpack.c.l.b16 %v190
    %v837 = vunpack.c.l.b16 %v191
    %v838 = vunpack.c.l.b16 %v192
    %v839 = vunpack.c.l.b16 %v193
    %v840 = vunpack.c.l.b16 %v194
    %v841 = vunpack.c.l.b16 %v195
    %v842 = vunpack.c.l.b16 %v196
    %v843 = vunpack.c.l.b16 %v197
    %v844 = vunpack.c.l.b16 %v198
    %v845 = vunpack.c.l.b16 %v199
    %v846 = vunpack.c.l.b16 %v200
    %v847 = vunpack.c.l.b16 %v201
    %v848 = vunpack.c.l.b16 %v202
    %v849 = vunpack.c.l.b16 %v203
    %v850 = vunpack.c.l.b16 %v204
    %v851 = vunpack.c.l.b16 %v205
    %v852 = vunpack.c.l.b16 %v206
    %v853 = vunpack.c.l.b16 %v207
    %v854 = vunpack.c.l.b16 %v208
    %v855 = vunpack.c.l.b16 %v209
    %v856 = vunpack.c.l.b16 %v210
    %v857 = vunpack.c.l.b16 %v211
    %v858 = vunpack.c.l.b16 %v212
    %v859 = vunpack.c.l.b16 %v213
    %v860 = vunpack.c.l.b16 %v214
    %v861 = vunpack.c.l.b16 %v215
    %v862 = vunpack.c.l.b16 %v216
    %v863 = vunpack.c.l.b16 %v217
    %v864 = vunpack.c.l.b16 %v218
    %v865 = vunpack.c.l.b16 %v219
    %v866 = vunpack.c.l.b16 %v220
    %v867 = vunpack.c.l.b16 %v221
    %v868 = vunpack.c.l.b16 %v222
    %v869 = vunpack.c.l.b16 %v223
    %v870 = vunpack.c.l.b16 %v224
    %v871 = vunpack.c.l.b16 %v225
    %v872 = vunpack.c.l.b16 %v226
    %v873 = vunpack.c.l.b16 %v227
    %v874 = vunpack.c.l.b16 %v228
    %v875 = vunpack.c.l.b16 %v229
    %v876 = vunpack.c.l.b16 %v230
    %v877 = vunpack.c.l.b16 %v231
    %v878 = vunpack.c.l.b16 %v232
    %v879 = vunpack.c.l.b16 %v233
    %v880 = vunpack.c.l.b16 %v234
    %v881 = vunpack.c.l.b16 %v235
    %v882 = vunpack.c.l.b16 %v236
    %v883 = vunpack.c.l.b16 %v237
    %v884 = vunpack.c.l.b16 %v238
    %v885 = vunpack.c.l.b16 %v239
    %v886 = vunpack.c.l.b16 %v240
    %v887 = vunpack.c.l.b16 %v241
    %v888 = vunpack.c.l.b16 %v242
    %v889 = vunpack.c.l.b16 %v243
    %v890 = vunpack.c.l.b16 %v244
    %v891 = vunpack.c.l.b16 %v245
    %v892 = vunpack.c.l.b16 %v246
    %v893 = vunpack.c.l.b16 %v247
    %v894 = vunpack.c.l.b16 %v248
    %v895 = vunpack.c.l.b16 %v249
    %v896 = vunpack.c.l.b16 %v250
    %v897 = vunpack.c.l.b16 %v251
    %v898 = vunpack.c.l.b16 %v252
    %v899 = vunpack.c.l.b16 %v253
    %v900 = vunpack.c.l.b16 %v254
    %v901 = vunpack.c.l.b16 %v255
    %v902 = vunpack.c.l.b16 %v256
    %v903 = vunpack.c.l.b16 %v257
    %v904 = vunpack.c.l.b16 %v258
    %v905 = vunpack.c.l.b16 %v259
    %v906 = vunpack.c.l.b16 %v260
    %v907 = vunpack.c.l.b16 %v261
    %v908 = vunpack.c.l.b16 %v262
    %v909 = vunpack.c.l.b16 %v263
    %v910 = vunpack.c.l.b16 %v264
    %v911 = vunpack.c.l.b16 %v265
    %v912 = vunpack.c.l.b16 %v266
    %v913 = vunpack.c.l.b16 %v267
    %v914 = vunpack.c.l.b16 %v268
    %v915 = vunpack.c.l.b16 %v269
    %v916 = vunpack.c.l.b16 %v270
    %v917 = vunpack.c.l.b16 %v271
    %v918 = vunpack.c.l.b16 %v272
    %v919 = vunpack.c.l.b16 %v273
    %v920 = vunpack.c.l.b16 %v274
    %v921 = vunpack.c.l.b16 %v275
    %v922 = vunpack.c.l.b16 %v276
    %v923 = vunpack.c.l.b16 %v277
    %v924 = vunpack.c.l.b16 %v278
    %v925 = vunpack.c.l.b16 %v279
    %v926 = vunpack.c.l.b16 %v280
    %v927 = vunpack.c.l.b16 %v281
    %v928 = vunpack.c.l.b16 %v282
    %v929 = vunpack.c.l.b16 %v283
    %v930 = vunpack.c.l.b16 %v284
    %v931 = vunpack.c.l.b16 %v285
    %v932 = vunpack.c.l.b16 %v286
    %v933 = vunpack.c.l.b16 %v287
    %v934 = vunpack.c.l.b16 %v288
    %v935 = vunpack.c.l.b16 %v289
    %v936 = vunpack.c.l.b16 %v290
    %v937 = vunpack.c.l.b16 %v291
    %v938 = vunpack.c.l.b16 %v292
    %v939 = vunpack.c.l.b16 %v293
    %v940 = vunpack.c.l.b16 %v294
    %v941 = vunpack.c.l.b16 %v295
    %v942 = vunpack.c.l.b16 %v296
    %v943 = vunpack.c.l.b16 %v297
    %v944 = vunpack.c.l.b16 %v298
    %v945 = vunpack.c.l.b16 %v299
    %v946 = vunpack.c.l.b16 %v300
    %v947 = vunpack.c.l.b16 %v301
    %v948 = vunpack.c.l.b16 %v302
    %v949 = vunpack.c.l.b16 %v303
    %v950 = vunpack.c.l.b16 %v304
    %v951 = vunpack.c.l.b16 %v305
    %v952 = vunpack.c.l.b16 %v306
    %v953 = vunpack.c.l.b16 %v307
    %v954 = vunpack.c.l.b16 %v308
    %v955 = vunpack.c.l.b16 %v309
    %v956 = vunpack.c.l.b16 %v310
    %v957 = vunpack.c.l.b16 %v311
    %v958 = vunpack.c.l.b16 %v312
    %v959 = vpack.c.b16 %v672, %v671
    %v960 = vpack.c.b16 %v674, %v673
    %v961 = vpack.c.b16 %v676, %v675
    %v962 = vpack.c.b16 %v678, %v677
    %v963 = vpack.c.b16 %v680, %v679
    %v964 = vpack.c.b16 %v682, %v681
    %v965 = vpack.c.b16 %v684, %v683
    %v966 = vpack.c.b16 %v686, %v685
    %v967 = vpack.c.b16 %v688, %v687
    %v968 = vpack.c.b16 %v690, %v689
    %v969 = vpack.c.b16 %v692, %v691
    %v970 = vpack.c.b16 %v694, %v693
    %v971 = vpack.c.b16 %v696, %v695
    %v972 = vpack.c.b16 %v698, %v697
    %v973 = vpack.c.b16 %v700, %v699
    %v974 = vpack.c.b16 %v702, %v701
    %v975 = vpack.c.b16 %v704, %v703
    %v976 = vpack.c.b16 %v706, %v705
    %v977 = vpack.c.b16 %v708, %v707
    %v978 = vpack.c.b16 %v710, %v709
    %v979 = vpack.c.b16 %v712, %v711
    %v980 = vpack.c.b16 %v714, %v713
    %v981 = vpack.c.b16 %v716, %v715
    %v982 = vpack.c.b16 %v718, %v717
    %v983 = vpack.c.b16 %v720, %v719
    %v984 = vpack.c.b16 %v722, %v721
    %v985 = vpack.c.b16 %v724, %v723
    %v986 = vpack.c.b16 %v726, %v725
    %v987 = vpack.c.b16 %v728, %v727
    %v988 = vpack.c.b16 %v730, %v729
    %v989 = vpack.c.b16 %v732, %v731
    %v990 = vpack.c.b16 %v734, %v733
    %v991 = vpack.c.b16 %v736, %v735
    %v992 = vpack.c.b16 %v738, %v737
    %v993 = vpack.c.b16 %v740, %v739
    %v994 = vpack.c.b16 %v742, %v741
    %v995 = vpack.c.b16 %v744, %v743
    %v996 = vpack.c.b16 %v746, %v745
    %v997 = vpack.c.b16 %v748, %v747
    %v998 = vpack.c.b16 %v750, %v749
    %v999 = vpack.c.b16 %v752, %v751
    %v1000 = vpack.c.b16 %v754, %v753
    %v1001 = vpack.c.b16 %v756, %v755
    %v1002 = vpack.c.b16 %v758, %v757
    %v1003 = vpack.c.b16 %v760, %v759
    %v1004 = vpack.c.b16 %v762, %v761
    %v1005 = vpack.c.b16 %v764, %v763
    %v1006 = vpack.c.b16 %v766, %v765
    %v1007 = vpack.c.b16 %v768, %v767
    %v1008 = vpack.c.b16 %v770, %v769
    %v1009 = vpack.c.b16 %v772, %v771
    %v1010 = vpack.c.b16 %v774, %v773
    %v1011 = vpack.c.b16 %v776, %v775
    %v1012 = vpack.c.b16 %v778, %v777
    %v1013 = vpack.c.b16 %v780, %v779
    %v1014 = vpack.c.b16 %v782, %v781
    %v1015 = vpack.c.b16 %v784, %v783
    %v1016 = vpack.c.b16 %v786, %v785
    %v1017 = vpack.c.b16 %v788, %v787
    %v1018 = vpack.c.b16 %v790, %v789
    %v1019 = vpack.c.b16 %v792, %v791
    %v1020 = vpack.c.b16 %v794, %v793
    %v1021 = vpack.c.b16 %v796, %v795
    %v1022 = vpack.c.b16 %v798, %v797
    %v1023 = vpack.c.b16 %v800, %v799
    %v1024 = vpack.c.b16 %v802, %v801
    %v1025 = vpack.c.b16 %v804, %v803
    %v1026 = vpack.c.b16 %v806, %v805
    %v1027 = vpack.c.b16 %v808, %v807
    %v1028 = vpack.c.b16 %v810, %v809
    %v1029 = vpack.c.b16 %v812, %v811
    %v1030 = vpack.c.b16 %v814, %v813
    %v1031 = vpack.c.b16 %v816, %v815
    %v1032 = vpack.c.b16 %v818, %v817
    %v1033 = vpack.c.b16 %v820, %v819
    %v1034 = vpack.c.b16 %v822, %v821
    %v1035 = vpack.c.b16 %v824, %v823
    %v1036 = vpack.c.b16 %v826, %v825
    %v1037 = vpack.c.b16 %v828, %v827
    %v1038 = vpack.c.b16 %v830, %v829
    %v1039 = vpack.c.b16 %v832, %v831
    %v1040 = vpack.c.b16 %v834, %v833
    %v1041 = vpack.c.b16 %v836, %v835
    %v1042 = vpack.c.b16 %v838, %v837
    %v1043 = vpack.c.b16 %v840, %v839
    %v1044 = vpack.c.b16 %v842, %v841
    %v1045 = vpack.c.b16 %v844, %v843
    %v1046 = vpack.c.b16 %v846, %v845
    %v1047 = vpack.c.b16 %v848, %v847
    %v1048 = vpack.c.b16 %v850, %v849
    %v1049 = vpack.c.b16 %v852, %v851
    %v1050 = vpack.c.b16 %v854, %v853
    %v1051 = vpack.c.b16 %v856, %v855
    %v1052 = vpack.c.b16 %v858, %v857
    %v1053 = vpack.c.b16 %v860, %v859
    %v1054 = vpack.c.b16 %v862, %v861
    %v1055 = vpack.c.b16 %v864, %v863
    %v1056 = vpack.c.b16 %v866, %v865
    %v1057 = vpack.c.b16 %v868, %v867
    %v1058 = vpack.c.b16 %v870, %v869
    %v1059 = vpack.c.b16 %v872, %v871
    %v1060 = vpack.c.b16 %v874, %v873
    %v1061 = vpack.c.b16 %v876, %v875
    %v1062 = vpack.c.b16 %v878, %v877
    %v1063 = vpack.c.b16 %v880, %v879
    %v1064 = vpack.c.b16 %v882, %v881
    %v1065 = vpack.c.b16 %v884, %v883
    %v1066 = vpack.c.b16 %v886, %v885
    %v1067 = vpack.c.b16 %v888, %v887
    %v1068 = vpack.c.b16 %v890, %v889
    %v1069 = vpack.c.b16 %v892, %v891
    %v1070 = vpack.c.b16 %v894, %v893
    %v1071 = vpack.c.b16 %v896, %v895
    %v1072 = vpack.c.b16 %v898, %v897
    %v1073 = vpack.c.b16 %v900, %v899
    %v1074 = vpack.c.b16 %v902, %v901
    %v1075 = vpack.c.b16 %v904, %v903
    %v1076 = vpack.c.b16 %v906, %v905
    %v1077 = vpack.c.b16 %v908, %v907
    %v1078 = vpack.c.b16 %v910, %v909
    %v1079 = vpack.c.b16 %v912, %v911
    %v1080 = vpack.c.b16 %v914, %v913
    %v1081 = vpack.c.b16 %v916, %v915
    %v1082 = vpack.c.b16 %v918, %v917
    %v1083 = vpack.c.b16 %v920, %v919
    %v1084 = vpack.c.b16 %v922, %v921
    %v1085 = vpack.c.b16 %v924, %v923
    %v1086 = vpack.c.b16 %v926, %v925
    %v1087 = vpack.c.b16 %v928, %v927
    %v1088 = vpack.c.b16 %v930, %v929
    %v1089 = vpack.c.b16 %v932, %v931
    %v1090 = vpack.c.b16 %v934, %v933
    %v1091 = vpack.c.b16 %v936, %v935
    %v1092 = vpack.c.b16 %v938, %v937
    %v1093 = vpack.c.b16 %v940, %v939
    %v1094 = vpack.c.b16 %v942, %v941
    %v1095 = vpack.c.b16 %v944, %v943
    %v1096 = vpack.c.b16 %v946, %v945
    %v1097 = vpack.c.b16 %v948, %v947
    %v1098 = vpack.c.b16 %v950, %v949
    %v1099 = vpack.c.b16 %v952, %v951
    %v1100 = vpack.c.b16 %v954, %v953
    %v1101 = vpack.c.b16 %v956, %v955
    %v1102 = vpack.c.b16 %v958, %v957
    %1247 = vmatprep.subr.bf16.mxu0 0
    %1248 = vmatpush1.bf16.msra.mxu0 %v959
    %1249 = vmatprep.subr.bf16.mxu0 0
    %1250 = vmatpush1.bf16.msra.mxu0 %v960
    %1251 = vmatprep.subr.bf16.mxu0 0
    %1252 = vmatpush1.bf16.msra.mxu0 %v961
    %1253 = vmatprep.subr.bf16.mxu0 0
    %1254 = vmatpush1.bf16.msra.mxu0 %v962
    %1255 = vmatprep.subr.bf16.mxu0 0
    %1256 = vmatpush1.bf16.msra.mxu0 %v963
    %1257 = vmatprep.subr.bf16.mxu0 0
    %1258 = vmatpush1.bf16.msra.mxu0 %v964
    %1259 = vmatprep.subr.bf16.mxu0 0
    %1260 = vmatpush1.bf16.msra.mxu0 %v965
    %1261 = vmatprep.subr.bf16.mxu0 0
    %1262 = vmatpush1.bf16.msra.mxu0 %v966
    %1263 = vmatprep.subr.bf16.mxu0 0
    %1264 = vmatpush1.bf16.msra.mxu0 %v967
    %1265 = vmatprep.subr.bf16.mxu0 0
    %1266 = vmatpush1.bf16.msra.mxu0 %v968
    %1267 = vmatprep.subr.bf16.mxu0 0
    %1268 = vmatpush1.bf16.msra.mxu0 %v969
    %1269 = vmatprep.subr.bf16.mxu0 0
    %1270 = vmatpush1.bf16.msra.mxu0 %v970
    %1271 = vmatprep.subr.bf16.mxu0 0
    %1272 = vmatpush1.bf16.msra.mxu0 %v971
    %1273 = vmatprep.subr.bf16.mxu0 0
    %1274 = vmatpush1.bf16.msra.mxu0 %v972
    %1275 = vmatprep.subr.bf16.mxu0 0
    %1276 = vmatpush1.bf16.msra.mxu0 %v973
    %1277 = vmatprep.subr.bf16.mxu0 0
    %1278 = vmatpush1.bf16.msra.mxu0 %v974
    %1279 = vmatprep.mubr.bf16.mxu0 %v348
    %1280 = vmatmul.mubr.bf16.gmra.mrb[0].mxu0 %v347
    %v1281 = vpop.f32.mrb[0].mxu0
    %v1282 = vadd.f32 %v318, %v1281
    %v1283 = vpop.f32.mrb[0].mxu0
    %v1284 = vpop.f32.mrb[0].mxu0
    %v1285 = vpop.f32.mrb[0].mxu0
    %1286 = vdwg.mxu0
    %1287 = vmatprep.subr.bf16.mxu0 0
    %1288 = vmatpush1.bf16.msra.mxu0 %v975
    %1289 = vmatprep.subr.bf16.mxu0 0
    %1290 = vmatpush1.bf16.msra.mxu0 %v976
    %1291 = vmatprep.subr.bf16.mxu0 0
    %1292 = vmatpush1.bf16.msra.mxu0 %v977
    %1293 = vmatprep.subr.bf16.mxu0 0
    %1294 = vmatpush1.bf16.msra.mxu0 %v978
    %1295 = vmatprep.subr.bf16.mxu0 0
    %1296 = vmatpush1.bf16.msra.mxu0 %v979
    %1297 = vmatprep.subr.bf16.mxu0 0
    %1298 = vmatpush1.bf16.msra.mxu0 %v980
    %1299 = vmatprep.subr.bf16.mxu0 0
    %1300 = vmatpush1.bf16.msra.mxu0 %v981
    %1301 = vmatprep.subr.bf16.mxu0 0
    %1302 = vmatpush1.bf16.msra.mxu0 %v982
    %1303 = vmatprep.subr.bf16.mxu0 0
    %1304 = vmatpush1.bf16.msra.mxu0 %v983
    %1305 = vmatprep.subr.bf16.mxu0 0
    %1306 = vmatpush1.bf16.msra.mxu0 %v984
    %1307 = vmatprep.subr.bf16.mxu0 0
    %1308 = vmatpush1.bf16.msra.mxu0 %v985
    %1309 = vmatprep.subr.bf16.mxu0 0
    %1310 = vmatpush1.bf16.msra.mxu0 %v986
    %1311 = vmatprep.subr.bf16.mxu0 0
    %1312 = vmatpush1.bf16.msra.mxu0 %v987
    %1313 = vmatprep.subr.bf16.mxu0 0
    %1314 = vmatpush1.bf16.msra.mxu0 %v988
    %1315 = vmatprep.subr.bf16.mxu0 0
    %1316 = vmatpush1.bf16.msra.mxu0 %v989
    %1317 = vmatprep.subr.bf16.mxu0 0
    %1318 = vmatpush1.bf16.msra.mxu0 %v990
    %1319 = vmatprep.mubr.bf16.mxu0 %v350
    %1320 = vmatmul.mubr.bf16.gmra.mrb[0].mxu0 %v349
    %v1321 = vpop.f32.mrb[0].mxu0
    %v1322 = vadd.f32 %v1282, %v1321
    %v1323 = vpop.f32.mrb[0].mxu0
    %v1324 = vpop.f32.mrb[0].mxu0
    %v1325 = vpop.f32.mrb[0].mxu0
    %1326 = vdwg.mxu0
    %1327 = vmatprep.subr.bf16.mxu0 0
    %1328 = vmatpush1.bf16.msra.mxu0 %v991
    %1329 = vmatprep.subr.bf16.mxu0 0
    %1330 = vmatpush1.bf16.msra.mxu0 %v992
    %1331 = vmatprep.subr.bf16.mxu0 0
    %1332 = vmatpush1.bf16.msra.mxu0 %v993
    %1333 = vmatprep.subr.bf16.mxu0 0
    %1334 = vmatpush1.bf16.msra.mxu0 %v994
    %1335 = vmatprep.subr.bf16.mxu0 0
    %1336 = vmatpush1.bf16.msra.mxu0 %v995
    %1337 = vmatprep.subr.bf16.mxu0 0
    %1338 = vmatpush1.bf16.msra.mxu0 %v996
    %1339 = vmatprep.subr.bf16.mxu0 0
    %1340 = vmatpush1.bf16.msra.mxu0 %v997
    %1341 = vmatprep.subr.bf16.mxu0 0
    %1342 = vmatpush1.bf16.msra.mxu0 %v998
    %1343 = vmatprep.subr.bf16.mxu0 0
    %1344 = vmatpush1.bf16.msra.mxu0 %v999
    %1345 = vmatprep.subr.bf16.mxu0 0
    %1346 = vmatpush1.bf16.msra.mxu0 %v1000
    %1347 = vmatprep.subr.bf16.mxu0 0
    %1348 = vmatpush1.bf16.msra.mxu0 %v1001
    %1349 = vmatprep.subr.bf16.mxu0 0
    %1350 = vmatpush1.bf16.msra.mxu0 %v1002
    %1351 = vmatprep.subr.bf16.mxu0 0
    %1352 = vmatpush1.bf16.msra.mxu0 %v1003
    %1353 = vmatprep.subr.bf16.mxu0 0
    %1354 = vmatpush1.bf16.msra.mxu0 %v1004
    %1355 = vmatprep.subr.bf16.mxu0 0
    %1356 = vmatpush1.bf16.msra.mxu0 %v1005
    %1357 = vmatprep.subr.bf16.mxu0 0
    %1358 = vmatpush1.bf16.msra.mxu0 %v1006
    %1359 = vmatprep.mubr.bf16.mxu0 %v352
    %1360 = vmatmul.mubr.bf16.gmra.mrb[0].mxu0 %v351
    %v1361 = vpop.f32.mrb[0].mxu0
    %v1362 = vadd.f32 %v1322, %v1361
    %v1363 = vpop.f32.mrb[0].mxu0
    %v1364 = vpop.f32.mrb[0].mxu0
    %v1365 = vpop.f32.mrb[0].mxu0
    %1366 = vdwg.mxu0
    %1367 = vmatprep.subr.bf16.mxu0 0
    %1368 = vmatpush1.bf16.msra.mxu0 %v1007
    %1369 = vmatprep.subr.bf16.mxu0 0
    %1370 = vmatpush1.bf16.msra.mxu0 %v1008
    %1371 = vmatprep.subr.bf16.mxu0 0
    %1372 = vmatpush1.bf16.msra.mxu0 %v1009
    %1373 = vmatprep.subr.bf16.mxu0 0
    %1374 = vmatpush1.bf16.msra.mxu0 %v1010
    %1375 = vmatprep.subr.bf16.mxu0 0
    %1376 = vmatpush1.bf16.msra.mxu0 %v1011
    %1377 = vmatprep.subr.bf16.mxu0 0
    %1378 = vmatpush1.bf16.msra.mxu0 %v1012
    %1379 = vmatprep.subr.bf16.mxu0 0
    %1380 = vmatpush1.bf16.msra.mxu0 %v1013
    %1381 = vmatprep.subr.bf16.mxu0 0
    %1382 = vmatpush1.bf16.msra.mxu0 %v1014
    %1383 = vmatprep.subr.bf16.mxu0 0
    %1384 = vmatpush1.bf16.msra.mxu0 %v1015
    %1385 = vmatprep.subr.bf16.mxu0 0
    %1386 = vmatpush1.bf16.msra.mxu0 %v1016
    %1387 = vmatprep.subr.bf16.mxu0 0
    %1388 = vmatpush1.bf16.msra.mxu0 %v1017
    %1389 = vmatprep.subr.bf16.mxu0 0
    %1390 = vmatpush1.bf16.msra.mxu0 %v1018
    %1391 = vmatprep.subr.bf16.mxu0 0
    %1392 = vmatpush1.bf16.msra.mxu0 %v1019
    %1393 = vmatprep.subr.bf16.mxu0 0
    %1394 = vmatpush1.bf16.msra.mxu0 %v1020
    %1395 = vmatprep.subr.bf16.mxu0 0
    %1396 = vmatpush1.bf16.msra.mxu0 %v1021
    %1397 = vmatprep.subr.bf16.mxu0 0
    %1398 = vmatpush1.bf16.msra.mxu0 %v1022
    %1399 = vmatprep.mubr.bf16.mxu0 %v354
    %1400 = vmatmul.mubr.bf16.gmra.mrb[0].mxu0 %v353
    %v1401 = vpop.f32.mrb[0].mxu0
    %v1402 = vadd.f32 %v1362, %v1401
    %v1403 = vpop.f32.mrb[0].mxu0
    %v1404 = vpop.f32.mrb[0].mxu0
    %v1405 = vpop.f32.mrb[0].mxu0
    %1406 = vdwg.mxu0
    %1407 = vmatprep.subr.bf16.mxu0 0
    %1408 = vmatpush1.bf16.msra.mxu0 %v1023
    %1409 = vmatprep.subr.bf16.mxu0 0
    %1410 = vmatpush1.bf16.msra.mxu0 %v1024
    %1411 = vmatprep.subr.bf16.mxu0 0
    %1412 = vmatpush1.bf16.msra.mxu0 %v1025
    %1413 = vmatprep.subr.bf16.mxu0 0
    %1414 = vmatpush1.bf16.msra.mxu0 %v1026
    %1415 = vmatprep.subr.bf16.mxu0 0
    %1416 = vmatpush1.bf16.msra.mxu0 %v1027
    %1417 = vmatprep.subr.bf16.mxu0 0
    %1418 = vmatpush1.bf16.msra.mxu0 %v1028
    %1419 = vmatprep.subr.bf16.mxu0 0
    %1420 = vmatpush1.bf16.msra.mxu0 %v1029
    %1421 = vmatprep.subr.bf16.mxu0 0
    %1422 = vmatpush1.bf16.msra.mxu0 %v1030
    %1423 = vmatprep.subr.bf16.mxu0 0
    %1424 = vmatpush1.bf16.msra.mxu0 %v1031
    %1425 = vmatprep.subr.bf16.mxu0 0
    %1426 = vmatpush1.bf16.msra.mxu0 %v1032
    %1427 = vmatprep.subr.bf16.mxu0 0
    %1428 = vmatpush1.bf16.msra.mxu0 %v1033
    %1429 = vmatprep.subr.bf16.mxu0 0
    %1430 = vmatpush1.bf16.msra.mxu0 %v1034
    %1431 = vmatprep.subr.bf16.mxu0 0
    %1432 = vmatpush1.bf16.msra.mxu0 %v1035
    %1433 = vmatprep.subr.bf16.mxu0 0
    %1434 = vmatpush1.bf16.msra.mxu0 %v1036
    %1435 = vmatprep.subr.bf16.mxu0 0
    %1436 = vmatpush1.bf16.msra.mxu0 %v1037
    %1437 = vmatprep.subr.bf16.mxu0 0
    %1438 = vmatpush1.bf16.msra.mxu0 %v1038
    %1439 = vmatprep.mubr.bf16.mxu0 %v356
    %1440 = vmatmul.mubr.bf16.gmra.mrb[0].mxu0 %v355
    %v1441 = vpop.f32.mrb[0].mxu0
    %v1442 = vadd.f32 %v1402, %v1441
    %v1443 = vpop.f32.mrb[0].mxu0
    %v1444 = vpop.f32.mrb[0].mxu0
    %v1445 = vpop.f32.mrb[0].mxu0
    %1446 = vdwg.mxu0
    %1447 = vmatprep.subr.bf16.mxu0 0
    %1448 = vmatpush1.bf16.msra.mxu0 %v1039
    %1449 = vmatprep.subr.bf16.mxu0 0
    %1450 = vmatpush1.bf16.msra.mxu0 %v1040
    %1451 = vmatprep.subr.bf16.mxu0 0
    %1452 = vmatpush1.bf16.msra.mxu0 %v1041
    %1453 = vmatprep.subr.bf16.mxu0 0
    %1454 = vmatpush1.bf16.msra.mxu0 %v1042
    %1455 = vmatprep.subr.bf16.mxu0 0
    %1456 = vmatpush1.bf16.msra.mxu0 %v1043
    %1457 = vmatprep.subr.bf16.mxu0 0
    %1458 = vmatpush1.bf16.msra.mxu0 %v1044
    %1459 = vmatprep.subr.bf16.mxu0 0
    %1460 = vmatpush1.bf16.msra.mxu0 %v1045
    %1461 = vmatprep.subr.bf16.mxu0 0
    %1462 = vmatpush1.bf16.msra.mxu0 %v1046
    %1463 = vmatprep.subr.bf16.mxu0 0
    %1464 = vmatpush1.bf16.msra.mxu0 %v1047
    %1465 = vmatprep.subr.bf16.mxu0 0
    %1466 = vmatpush1.bf16.msra.mxu0 %v1048
    %1467 = vmatprep.subr.bf16.mxu0 0
    %1468 = vmatpush1.bf16.msra.mxu0 %v1049
    %1469 = vmatprep.subr.bf16.mxu0 0
    %1470 = vmatpush1.bf16.msra.mxu0 %v1050
    %1471 = vmatprep.subr.bf16.mxu0 0
    %1472 = vmatpush1.bf16.msra.mxu0 %v1051
    %1473 = vmatprep.subr.bf16.mxu0 0
    %1474 = vmatpush1.bf16.msra.mxu0 %v1052
    %1475 = vmatprep.subr.bf16.mxu0 0
    %1476 = vmatpush1.bf16.msra.mxu0 %v1053
    %1477 = vmatprep.subr.bf16.mxu0 0
    %1478 = vmatpush1.bf16.msra.mxu0 %v1054
    %1479 = vmatprep.mubr.bf16.mxu0 %v358
    %1480 = vmatmul.mubr.bf16.gmra.mrb[0].mxu0 %v357
    %v1481 = vpop.f32.mrb[0].mxu0
    %v1482 = vadd.f32 %v1442, %v1481
    %v1483 = vpop.f32.mrb[0].mxu0
    %v1484 = vpop.f32.mrb[0].mxu0
    %v1485 = vpop.f32.mrb[0].mxu0
    %1486 = vdwg.mxu0
    %1487 = vmatprep.subr.bf16.mxu0 0
    %1488 = vmatpush1.bf16.msra.mxu0 %v1055
    %1489 = vmatprep.subr.bf16.mxu0 0
    %1490 = vmatpush1.bf16.msra.mxu0 %v1056
    %1491 = vmatprep.subr.bf16.mxu0 0
    %1492 = vmatpush1.bf16.msra.mxu0 %v1057
    %1493 = vmatprep.subr.bf16.mxu0 0
    %1494 = vmatpush1.bf16.msra.mxu0 %v1058
    %1495 = vmatprep.subr.bf16.mxu0 0
    %1496 = vmatpush1.bf16.msra.mxu0 %v1059
    %1497 = vmatprep.subr.bf16.mxu0 0
    %1498 = vmatpush1.bf16.msra.mxu0 %v1060
    %1499 = vmatprep.subr.bf16.mxu0 0
    %1500 = vmatpush1.bf16.msra.mxu0 %v1061
    %1501 = vmatprep.subr.bf16.mxu0 0
    %1502 = vmatpush1.bf16.msra.mxu0 %v1062
    %1503 = vmatprep.subr.bf16.mxu0 0
    %1504 = vmatpush1.bf16.msra.mxu0 %v1063
    %1505 = vmatprep.subr.bf16.mxu0 0
    %1506 = vmatpush1.bf16.msra.mxu0 %v1064
    %1507 = vmatprep.subr.bf16.mxu0 0
    %1508 = vmatpush1.bf16.msra.mxu0 %v1065
    %1509 = vmatprep.subr.bf16.mxu0 0
    %1510 = vmatpush1.bf16.msra.mxu0 %v1066
    %1511 = vmatprep.subr.bf16.mxu0 0
    %1512 = vmatpush1.bf16.msra.mxu0 %v1067
    %1513 = vmatprep.subr.bf16.mxu0 0
    %1514 = vmatpush1.bf16.msra.mxu0 %v1068
    %1515 = vmatprep.subr.bf16.mxu0 0
    %1516 = vmatpush1.bf16.msra.mxu0 %v1069
    %1517 = vmatprep.subr.bf16.mxu0 0
    %1518 = vmatpush1.bf16.msra.mxu0 %v1070
    %1519 = vmatprep.mubr.bf16.mxu0 %v360
    %1520 = vmatmul.mubr.bf16.gmra.mrb[0].mxu0 %v359
    %v1521 = vpop.f32.mrb[0].mxu0
    %v1522 = vadd.f32 %v1482, %v1521
    %v1523 = vpop.f32.mrb[0].mxu0
    %v1524 = vpop.f32.mrb[0].mxu0
    %v1525 = vpop.f32.mrb[0].mxu0
    %1526 = vdwg.mxu0
    %1527 = vmatprep.subr.bf16.mxu0 0
    %1528 = vmatpush1.bf16.msra.mxu0 %v1071
    %1529 = vmatprep.subr.bf16.mxu0 0
    %1530 = vmatpush1.bf16.msra.mxu0 %v1072
    %1531 = vmatprep.subr.bf16.mxu0 0
    %1532 = vmatpush1.bf16.msra.mxu0 %v1073
    %1533 = vmatprep.subr.bf16.mxu0 0
    %1534 = vmatpush1.bf16.msra.mxu0 %v1074
    %1535 = vmatprep.subr.bf16.mxu0 0
    %1536 = vmatpush1.bf16.msra.mxu0 %v1075
    %1537 = vmatprep.subr.bf16.mxu0 0
    %1538 = vmatpush1.bf16.msra.mxu0 %v1076
    %1539 = vmatprep.subr.bf16.mxu0 0
    %1540 = vmatpush1.bf16.msra.mxu0 %v1077
    %1541 = vmatprep.subr.bf16.mxu0 0
    %1542 = vmatpush1.bf16.msra.mxu0 %v1078
    %1543 = vmatprep.subr.bf16.mxu0 0
    %1544 = vmatpush1.bf16.msra.mxu0 %v1079
    %1545 = vmatprep.subr.bf16.mxu0 0
    %1546 = vmatpush1.bf16.msra.mxu0 %v1080
    %1547 = vmatprep.subr.bf16.mxu0 0
    %1548 = vmatpush1.bf16.msra.mxu0 %v1081
    %1549 = vmatprep.subr.bf16.mxu0 0
    %1550 = vmatpush1.bf16.msra.mxu0 %v1082
    %1551 = vmatprep.subr.bf16.mxu0 0
    %1552 = vmatpush1.bf16.msra.mxu0 %v1083
    %1553 = vmatprep.subr.bf16.mxu0 0
    %1554 = vmatpush1.bf16.msra.mxu0 %v1084
    %1555 = vmatprep.subr.bf16.mxu0 0
    %1556 = vmatpush1.bf16.msra.mxu0 %v1085
    %1557 = vmatprep.subr.bf16.mxu0 0
    %1558 = vmatpush1.bf16.msra.mxu0 %v1086
    %1559 = vmatprep.mubr.bf16.mxu0 %v362
    %1560 = vmatmul.mubr.bf16.gmra.mrb[0].mxu0 %v361
    %v1561 = vpop.f32.mrb[0].mxu0
    %v1562 = vadd.f32 %v1522, %v1561
    %v1563 = vpop.f32.mrb[0].mxu0
    %v1564 = vpop.f32.mrb[0].mxu0
    %v1565 = vpop.f32.mrb[0].mxu0
    %1566 = vdwg.mxu0
    %1567 = vmatprep.subr.bf16.mxu0 0
    %1568 = vmatpush1.bf16.msra.mxu0 %v1087
    %1569 = vmatprep.subr.bf16.mxu0 0
    %1570 = vmatpush1.bf16.msra.mxu0 %v1088
    %1571 = vmatprep.subr.bf16.mxu0 0
    %1572 = vmatpush1.bf16.msra.mxu0 %v1089
    %1573 = vmatprep.subr.bf16.mxu0 0
    %1574 = vmatpush1.bf16.msra.mxu0 %v1090
    %1575 = vmatprep.subr.bf16.mxu0 0
    %1576 = vmatpush1.bf16.msra.mxu0 %v1091
    %1577 = vmatprep.subr.bf16.mxu0 0
    %1578 = vmatpush1.bf16.msra.mxu0 %v1092
    %1579 = vmatprep.subr.bf16.mxu0 0
    %1580 = vmatpush1.bf16.msra.mxu0 %v1093
    %1581 = vmatprep.subr.bf16.mxu0 0
    %1582 = vmatpush1.bf16.msra.mxu0 %v1094
    %1583 = vmatprep.subr.bf16.mxu0 0
    %1584 = vmatpush1.bf16.msra.mxu0 %v1095
    %1585 = vmatprep.subr.bf16.mxu0 0
    %1586 = vmatpush1.bf16.msra.mxu0 %v1096
    %1587 = vmatprep.subr.bf16.mxu0 0
    %1588 = vmatpush1.bf16.msra.mxu0 %v1097
    %1589 = vmatprep.subr.bf16.mxu0 0
    %1590 = vmatpush1.bf16.msra.mxu0 %v1098
    %1591 = vmatprep.subr.bf16.mxu0 0
    %1592 = vmatpush1.bf16.msra.mxu0 %v1099
    %1593 = vmatprep.subr.bf16.mxu0 0
    %1594 = vmatpush1.bf16.msra.mxu0 %v1100
    %1595 = vmatprep.subr.bf16.mxu0 0
    %1596 = vmatpush1.bf16.msra.mxu0 %v1101
    %1597 = vmatprep.subr.bf16.mxu0 0
    %1598 = vmatpush1.bf16.msra.mxu0 %v1102
    %1599 = vmatprep.mubr.bf16.mxu0 %v364
    %1600 = vmatmul.mubr.bf16.gmra.mrb[0].mxu0 %v363
    %v1601 = vpop.f32.mrb[0].mxu0
    %v1602 = vadd.f32 %v1562, %v1601
    %v1603 = vpop.f32.mrb[0].mxu0
    %v1604 = vpop.f32.mrb[0].mxu0
    %v1605 = vpop.f32.mrb[0].mxu0
    %1606 = vdwg.mxu0
    %v1607 = vmax.f32 %v1602, 0.0
    %1608 = vst [vmem:[#allocation2] sm:$0xff] %v1607
    // Predicated region
    $region14: #{fcn_forward.7} parent=1 // pred_check
      _
    $region15: #{fcn_forward.7} parent=1 // pred_check_branch
      %1610 = sbr.rel (0) target = $region17
    $region16: #{fcn_forward.7} parent=1 // pred_region
      %s1612 = ssub.s32 128, 128
      %1613 = vsyncadd [#allocation3], %s1612
      %s1615 = sshll.u32 [#allocation2], 4
      %s1616 = int_to_ptr.vmem [resolvable:$true] %s1615
      %1618 = dma.vmem_to_hbm [thread:$0]  %s1616, 128, %s3, [#allocation3]
    $region17: #{fcn_forward.7} parent=1 // pred_fallthru
      _
    // Predicated region
    $region18: #{fcn_forward.7} parent=1 // pred_check
      _
    $region19: #{fcn_forward.7} parent=1 // pred_check_branch
      %1620 = sbr.rel (0) target = $region21
    $region20: #{fcn_forward.7} parent=1 // pred_region
      %1621 = dma.done [#allocation3], 128
    $region21: #{fcn_forward.7} parent=1 // pred_fallthru
      _
    %1622 = vsyncpa [#allocation3], 1

</llo_original>
